<compile_context>
chip_gen: v7x
topology: tpu7x:2x2x1
jax: 0.10.0
libtpu: 0.0.40
codegen_flags: <defaults>
</compile_context>

<pallas_src>
import numpy as np
import jax
import jax.numpy as jnp
from jax import lax
from jax.experimental import pallas as pl
from jax.experimental.pallas import tpu as pltpu

D = 3       # dimension of the "vector" irrep of the synthetic group
LANE = 128  # TPU lane width


def _round_up(x, m):
    return ((x + m - 1) // m) * m


def _pad2(a, rows, cols):
    a = np.asarray(a, np.float32)
    out = np.zeros((rows, cols), np.float32)
    out[:a.shape[0], :a.shape[1]] = a
    return out


# ----------------------------------------------------------------------------
# Representation bookkeeping (host-side glue, done once).
# A rep is a list of 's' (scalar irrep, dim 1) and 'v' (vector irrep, dim D).
# ----------------------------------------------------------------------------
def irrep_offsets(rep):
    offs, o = [], 0
    for t in rep:
        offs.append(o)
        o += 1 if t == 's' else D
    return offs, o


def rep_dim(rep):
    return irrep_offsets(rep)[1]


def gated(rep):
    """emlp's gated(): append one gate scalar per non-scalar irrep."""
    return list(rep) + ['s'] * sum(1 for t in rep if t == 'v')


def gate_indices_list(rep):
    """emlp's gate_indices: scalars gate themselves, vectors use appended gates."""
    offs, n = irrep_offsets(rep)
    idx = np.arange(n)
    vcount = 0
    for off, t in zip(offs, rep):
        if t == 'v':
            idx[off:off + D] = n + vcount
            vcount += 1
    return idx


def gate_onehot(rep):
    """One-hot G (gated_dim, rep_dim) so gates = preact @ G (gather as matmul)."""
    offs, n = irrep_offsets(rep)
    nv = sum(1 for t in rep if t == 'v')
    G = np.zeros((n + nv, n), np.float32)
    for j, src in enumerate(gate_indices_list(rep)):
        G[src, j] = 1.0
    return G


def project_linear_params(raw_w, raw_b, rep_in, rep_out):
    """EquivLinear.proj_w / proj_b: project raw weight/bias onto the equivariant subspace."""
    offs_in, nin = irrep_offsets(rep_in)
    offs_out, nout = irrep_offsets(rep_out)
    W = np.zeros((nout, nin), np.float32)
    for oi, to in zip(offs_out, rep_out):
        for ij, ti in zip(offs_in, rep_in):
            if to == 's' and ti == 's':
                W[oi, ij] = raw_w[oi, ij]
            elif to == 'v' and ti == 'v':
                blk = raw_w[oi:oi + D, ij:ij + D]
                W[oi:oi + D, ij:ij + D] = (np.trace(blk) / D) * np.eye(D, dtype=np.float32)
    b = np.zeros((nout,), np.float32)
    for oi, to in zip(offs_out, rep_out):
        if to == 's':
            b[oi] = raw_b[oi]
    return W, b


def build_bilinear_mats(rep_g, bi_params):
    """EquivBiLinear.weight_proj factorized into constants so the bilinear map
       0.1 * W(x) @ x  becomes  ((x@BL) * (x@BR)) @ (0.1*BC)."""
    offs, ng = irrep_offsets(rep_g)
    scalar_pos = [o for o, t in zip(offs, rep_g) if t == 's']
    vec_off = [o for o, t in zip(offs, rep_g) if t == 'v']
    a, b = len(scalar_pos), len(vec_off)
    n = min(b, D)                          # reduced number of input vectors
    bnd = b * n * D
    wdim = 2 * a * b * n                   # == emlp's active_dims for this rep
    assert bi_params.shape[0] == wdim
    P_sv = np.asarray(bi_params[:a * b * n], np.float32).reshape(a, b, n)   # scalar-out path
    P_vs = np.asarray(bi_params[a * b * n:], np.float32).reshape(b, a, n)   # vector-out path

    U1 = np.zeros((ng, bnd), np.float32)   # picks x_vec[j, d]
    U2 = np.zeros((ng, bnd), np.float32)   # picks x_vec[k, d]   (selected vectors)
    Cs = np.zeros((bnd, ng), np.float32)   # contracts with P_sv into scalar channels
    Cm = np.zeros((ng, bnd), np.float32)   # mixes scalars with P_vs
    V2 = np.zeros((ng, bnd), np.float32)   # picks x_vec[k, d]
    Cv = np.zeros((bnd, ng), np.float32)   # scatters into vector channels
    for j in range(b):
        for k in range(n):
            for dd in range(D):
                c = (j * n + k) * D + dd
                U1[vec_off[j] + dd, c] = 1.0
                U2[vec_off[k] + dd, c] = 1.0
                for i in range(a):
                    Cs[c, scalar_pos[i]] = P_sv[i, j, k]
    for o in range(b):
        for k in range(n):
            for dd in range(D):
                c = (o * n + k) * D + dd
                for s in range(a):
                    Cm[scalar_pos[s], c] = P_vs[o, s, k]
                V2[vec_off[k] + dd, c] = 1.0
                Cv[c, vec_off[o] + dd] = 1.0
    BL = np.concatenate([U1, Cm], axis=1)   # (ng, 2*bnd)
    BR = np.concatenate([U2, V2], axis=1)   # (ng, 2*bnd)
    BC = np.concatenate([Cs, Cv], axis=0)   # (2*bnd, ng)
    return BL, BR, BC, P_sv, P_vs


# ----------------------------------------------------------------------------
# Deterministic parameter construction (matches the PyTorch module's init).
# ----------------------------------------------------------------------------
def make_block_params(key, rep_in, rep_hid):
    rep_g = gated(rep_hid)
    nin, ng, nh = rep_dim(rep_in), rep_dim(rep_g), rep_dim(rep_hid)
    k1, k2, k3 = jax.random.split(key, 3)
    raw_w = np.asarray(jax.random.normal(k1, (ng, nin)) / np.sqrt(nin), np.float32)
    raw_b = np.asarray(jax.random.normal(k2, (ng,)) * 0.1, np.float32)
    W, b = project_linear_params(raw_w, raw_b, rep_in, rep_g)       # proj_w / proj_b
    a = sum(1 for t in rep_g if t == 's')
    bv = sum(1 for t in rep_g if t == 'v')
    wdim = 2 * a * bv * min(bv, D)
    bi_params = np.asarray(jax.random.normal(k3, (wdim,)), np.float32)  # torch.randn(Wdim)
    BL, BR, BC, P_sv, P_vs = build_bilinear_mats(rep_g, bi_params)
    return dict(W=W, b=b, BL=BL, BR=BR, BC=BC, nh=nh, ng=ng,
                rep_g=rep_g, rep_hid=rep_hid,
                # jnp copies for the pure-JAX reference
                Wj=jnp.asarray(W), bj=jnp.asarray(b),
                P_sv=jnp.asarray(P_sv), P_vs=jnp.asarray(P_vs))


def make_final_params(key, rep_in, rep_out):
    nin, nout = rep_dim(rep_in), rep_dim(rep_out)
    k1, k2 = jax.random.split(key, 2)
    raw_w = np.asarray(jax.random.normal(k1, (nout, nin)) / np.sqrt(nin), np.float32)
    raw_b = np.asarray(jax.random.normal(k2, (nout,)) * 0.1, np.float32)
    W, b = project_linear_params(raw_w, raw_b, rep_in, rep_out)
    return dict(W=W, b=b, Wj=jnp.asarray(W), bj=jnp.asarray(b))


# ----------------------------------------------------------------------------
# One-time host-side fusion of per-block parameters into kernel-ready,
# 128-lane-aligned matrices (hoisted out of the forward pass).
# ----------------------------------------------------------------------------
def fuse_block_params(p, kin_pad, compute_dtype):
    W, b, BL, BR, BC = p['W'], p['b'], p['BL'], p['BR'], p['BC']
    ng, kin_real = W.shape
    two_bnd = BC.shape[0]
    png = _round_up(ng, LANE)
    p2b = _round_up(two_bnd, LANE)

    wt = np.zeros((kin_pad, ng), np.float32)
    wt[:kin_real] = W.T                       # zero rows kill garbage pad lanes of h
    # Fused weight: one matmul produces [lin | left | right], each 128-aligned.
    wc = np.concatenate([_pad2(wt, kin_pad, png),
                         _pad2(wt @ BL, kin_pad, p2b),
                         _pad2(wt @ BR, kin_pad, p2b)], axis=1)
    bias_c = np.concatenate([_pad2(b[None, :], 1, png),
                             _pad2(b[None, :] @ BL, 1, p2b),
                             _pad2(b[None, :] @ BR, 1, p2b)], axis=1)
    bc = _pad2(0.1 * BC, p2b, png)            # 0.1 bilinear scale folded in
    g = _pad2(gate_onehot(p['rep_hid']), png, png)
    return dict(wc=jnp.asarray(wc, compute_dtype),
                bias_c=jnp.asarray(bias_c, jnp.float32),
                bc=jnp.asarray(bc, compute_dtype),
                g=jnp.asarray(g, compute_dtype))


def fuse_final_params(p, kin_pad, nout_pad, compute_dtype):
    W, b = p['W'], p['b']
    wt = np.zeros((kin_pad, nout_pad), np.float32)
    wt[:W.shape[1], :W.shape[0]] = W.T
    bias = np.zeros((1, nout_pad), np.float32)
    bias[0, :b.shape[0]] = b
    return dict(w=jnp.asarray(wt, compute_dtype), b=jnp.asarray(bias, jnp.float32))


def fuse_emlp_params(blocks, final, nin, compute_dtype):
    fused, kin = [], nin
    for p in blocks:
        fp = fuse_block_params(p, kin, compute_dtype)
        fused.append(fp)
        kin = fp['g'].shape[1]                # padded activation width out of this block
    nout = final['W'].shape[0]
    nout_pad = _round_up(max(nout, LANE), LANE)
    ff = fuse_final_params(final, kin, nout_pad, compute_dtype)
    return fused, ff, nout


# ----------------------------------------------------------------------------
# Fused Pallas kernel: all EMLPBlocks + final EquivLinear in one launch.
# ----------------------------------------------------------------------------
def _make_fused_kernel(num_blocks, compute_dtype):
    f32 = jnp.float32
    prec = lax.Precision.HIGHEST if compute_dtype == jnp.float32 else None

    def kernel(*refs):
        # refs: x, (wc, bias_c, bc, g) * num_blocks, wf, bf, out
        x_ref = refs[0]
        o_ref = refs[-1]
        h = x_ref[...].astype(compute_dtype)
        idx = 1
        for _ in range(num_blocks):
            wc = refs[idx][...]
            bias_c = refs[idx + 1][...]
            bcm = refs[idx + 2][...]
            g = refs[idx + 3][...]
            idx += 4
            p2b, png = bcm.shape               # both 128-multiples
            # Fused EquivLinear + bilinear factors: one matmul -> [lin|left|right]
            combo = jnp.dot(h, wc, preferred_element_type=f32, precision=prec) + bias_c
            lin = combo[:, :png]
            left = combo[:, png:png + p2b]
            right = combo[:, png + p2b:png + 2 * p2b]
            # EquivBiLinear (0.1 folded into bcm) + residual
            prod = (left * right).astype(compute_dtype)
            pre = jnp.dot(prod, bcm, preferred_element_type=f32, precision=prec) + lin
            # GatedNonlinearity: sigmoid(pre[..., gate_indices]) * pre[..., :nh]
            # (gate gather as a one-hot matmul; garbage pad lanes are killed by
            #  the zero weight rows of the next layer's matmul)
            gates = jnp.dot(pre.astype(compute_dtype), g,
                            preferred_element_type=f32, precision=prec)
            h = (jax.nn.sigmoid(gates) * pre).astype(compute_dtype)
        # Final EquivLinear (weights lane-padded to 128 output lanes).
        wf = refs[idx][...]
        bf = refs[idx + 1][...]
        o_ref[...] = (jnp.dot(h, wf, preferred_element_type=f32, precision=prec)
                      + bf).astype(o_ref.dtype)
    return kernel


def emlp_forward(x, fused_blocks, fused_final, *, nout, tile_b=512):
    """Run the whole EMLP forward pass in a single fused pallas_call."""
    B, nin = x.shape
    compute_dtype = fused_blocks[0]['wc'].dtype
    nout_pad = fused_final['w'].shape[1]

    # Batch tiling: single step for small B; padded parallel grid for large B.
    tile_b = min(tile_b, _round_up(B, 8))
    Bp = _round_up(B, tile_b)
    xp = x if Bp == B else jnp.zeros((Bp, nin), x.dtype).at[:B].set(x)

    args = [xp]
    in_specs = [pl.BlockSpec((tile_b, nin), lambda i: (i, 0))]
    for p in fused_blocks:
        for name in ('wc', 'bias_c', 'bc', 'g'):
            a = p[name]
            args.append(a)
            in_specs.append(pl.BlockSpec(a.shape, lambda i: (0, 0)))
    for a in (fused_final['w'], fused_final['b']):
        args.append(a)
        in_specs.append(pl.BlockSpec(a.shape, lambda i: (0, 0)))

    out = pl.pallas_call(
        _make_fused_kernel(len(fused_blocks), compute_dtype),
        out_shape=jax.ShapeDtypeStruct((Bp, nout_pad), jnp.float32),
        grid_spec=pltpu.PrefetchScalarGridSpec(
            num_scalar_prefetch=0,
            grid=(Bp // tile_b,),
            in_specs=in_specs,
            out_specs=pl.BlockSpec((tile_b, nout_pad), lambda i: (i, 0)),
        ),
        compiler_params=pltpu.CompilerParams(dimension_semantics=("parallel",)),
    )(*args)
    return out[:B, :nout]


# ----------------------------------------------------------------------------
# Pure-JAX reference (direct, un-factorized formulation) for correctness check.
# ----------------------------------------------------------------------------
_HI = lax.Precision.HIGHEST


def reference_block(x, p):
    lin = jnp.dot(x, p['Wj'].T, precision=_HI) + p['bj']
    rep_g, rep_hid = p['rep_g'], p['rep_hid']
    offs, _ = irrep_offsets(rep_g)
    scalar_pos = np.array([o for o, t in zip(offs, rep_g) if t == 's'])
    vec_off = [o for o, t in zip(offs, rep_g) if t == 'v']
    xs = lin[:, scalar_pos]
    xv = jnp.stack([lin[:, o:o + D] for o in vec_off], axis=1)      # (B, b, D)
    n = min(len(vec_off), D)
    xv_sel = xv[:, :n]
    bil_s = jnp.einsum('ivk,Bvd,Bkd->Bi', p['P_sv'], xv, xv_sel, precision=_HI)
    bil_v = jnp.einsum('osk,Bs,Bkd->Bod', p['P_vs'], xs, xv_sel, precision=_HI)
    bil = jnp.zeros_like(lin)
    bil = bil.at[:, scalar_pos].set(bil_s)
    for oi, o in enumerate(vec_off):
        bil = bil.at[:, o:o + D].set(bil_v[:, oi])
    pre = 0.1 * bil + lin
    gates = pre[:, gate_indices_list(rep_hid)]
    return jax.nn.sigmoid(gates) * pre[:, :rep_dim(rep_hid)]


def reference_forward(x, block_params, final_params):
    h = x
    for p in block_params:
        h = reference_block(h, p)
    return jnp.dot(h, final_params['Wj'].T, precision=_HI) + final_params['bj']


# ----------------------------------------------------------------------------
if __name__ == "__main__":
    # reps: rep_in -> 3 hidden EMLPBlocks (same hidden rep) -> final EquivLinear
    REP_IN = ['s'] * 3 + ['v'] * 2     # dim 9
    REP_HID = ['s'] * 4 + ['v'] * 3    # dim 13, gated dim 16
    REP_OUT = ['s'] * 2 + ['v'] * 1    # dim 5
    NUM_LAYERS = 3
    B = 16

    key = jax.random.PRNGKey(0)
    keys = jax.random.split(key, NUM_LAYERS + 2)
    kx, pkeys, kfinal = keys[0], keys[1:1 + NUM_LAYERS], keys[-1]

    x = jax.random.normal(kx, (B, rep_dim(REP_IN)), jnp.float32)

    reps = [REP_IN] + [REP_HID] * NUM_LAYERS
    blocks = [make_block_params(pk, rin, rh)
              for pk, rin, rh in zip(pkeys, reps[:-1], reps[1:])]
    final = make_final_params(kfinal, reps[-1], REP_OUT)

    ref = reference_forward(x, blocks, final)

    # f32 path (HIGHEST-precision dots): exact match with the reference.
    fb32, ff32, nout = fuse_emlp_params(blocks, final, rep_dim(REP_IN), jnp.float32)
    out32 = jax.block_until_ready(emlp_forward(x, fb32, ff32, nout=nout))
    np.testing.assert_allclose(np.asarray(out32), np.asarray(ref), rtol=1e-3, atol=1e-3)

    # bf16 matmul-operand path (f32 accumulation, f32 elementwise): looser check.
    fb16, ff16, _ = fuse_emlp_params(blocks, final, rep_dim(REP_IN), jnp.bfloat16)
    out16 = jax.block_until_ready(emlp_forward(x, fb16, ff16, nout=nout))
    np.testing.assert_allclose(np.asarray(out16), np.asarray(ref), rtol=1e-1, atol=1e-1)

    print("KERNEL_OK")
</pallas_src>

<mosaic_0001>
module attributes {stable_mosaic.version = 11 : i64} {
  func.func @kernel(%arg0: i32, %arg1: memref<16x9xf32, #tpu.memory_space<vmem>>, %arg2: memref<9x384xf32, #tpu.memory_space<vmem>>, %arg3: memref<1x384xf32, #tpu.memory_space<vmem>>, %arg4: memref<128x128xf32, #tpu.memory_space<vmem>>, %arg5: memref<128x128xf32, #tpu.memory_space<vmem>>, %arg6: memref<128x384xf32, #tpu.memory_space<vmem>>, %arg7: memref<1x384xf32, #tpu.memory_space<vmem>>, %arg8: memref<128x128xf32, #tpu.memory_space<vmem>>, %arg9: memref<128x128xf32, #tpu.memory_space<vmem>>, %arg10: memref<128x384xf32, #tpu.memory_space<vmem>>, %arg11: memref<1x384xf32, #tpu.memory_space<vmem>>, %arg12: memref<128x128xf32, #tpu.memory_space<vmem>>, %arg13: memref<128x128xf32, #tpu.memory_space<vmem>>, %arg14: memref<128x128xf32, #tpu.memory_space<vmem>>, %arg15: memref<1x128xf32, #tpu.memory_space<vmem>>, %arg16: memref<16x128xf32, #tpu.memory_space<vmem>>) attributes {dimension_semantics = [#tpu.dimension_semantics<parallel>], iteration_bounds = array<i64: 1>, scalar_prefetch = 0 : i64, scratch_operands = 0 : i64, tpu.core_type = #tpu.core_type<tc>, window_params = [{transform_indices = @transform_0, window_bounds = array<i64: 16, 9>}, {pipeline_mode = #tpu.pipeline_mode<synchronous>, transform_indices = @transform_1, window_bounds = array<i64: 9, 384>}, {pipeline_mode = #tpu.pipeline_mode<synchronous>, transform_indices = @transform_2, window_bounds = array<i64: 1, 384>}, {pipeline_mode = #tpu.pipeline_mode<synchronous>, transform_indices = @transform_3, window_bounds = array<i64: 128, 128>}, {pipeline_mode = #tpu.pipeline_mode<synchronous>, transform_indices = @transform_4, window_bounds = array<i64: 128, 128>}, {pipeline_mode = #tpu.pipeline_mode<synchronous>, transform_indices = @transform_5, window_bounds = array<i64: 128, 384>}, {pipeline_mode = #tpu.pipeline_mode<synchronous>, transform_indices = @transform_6, window_bounds = array<i64: 1, 384>}, {pipeline_mode = #tpu.pipeline_mode<synchronous>, transform_indices = @transform_7, window_bounds = array<i64: 128, 128>}, {pipeline_mode = #tpu.pipeline_mode<synchronous>, transform_indices = @transform_8, window_bounds = array<i64: 128, 128>}, {pipeline_mode = #tpu.pipeline_mode<synchronous>, transform_indices = @transform_9, window_bounds = array<i64: 128, 384>}, {pipeline_mode = #tpu.pipeline_mode<synchronous>, transform_indices = @transform_10, window_bounds = array<i64: 1, 384>}, {pipeline_mode = #tpu.pipeline_mode<synchronous>, transform_indices = @transform_11, window_bounds = array<i64: 128, 128>}, {pipeline_mode = #tpu.pipeline_mode<synchronous>, transform_indices = @transform_12, window_bounds = array<i64: 128, 128>}, {pipeline_mode = #tpu.pipeline_mode<synchronous>, transform_indices = @transform_13, window_bounds = array<i64: 128, 128>}, {pipeline_mode = #tpu.pipeline_mode<synchronous>, transform_indices = @transform_14, window_bounds = array<i64: 1, 128>}, {transform_indices = @transform_15, window_bounds = array<i64: 16, 128>}]} {
    %c0 = arith.constant 0 : index
    %c0_0 = arith.constant 0 : index
    %0 = vector.load %arg1[%c0, %c0_0] : memref<16x9xf32, #tpu.memory_space<vmem>>, vector<16x9xf32>
    %c0_1 = arith.constant 0 : index
    %c0_2 = arith.constant 0 : index
    %1 = vector.load %arg2[%c0_1, %c0_2] : memref<9x384xf32, #tpu.memory_space<vmem>>, vector<9x384xf32>
    %c0_3 = arith.constant 0 : index
    %c0_4 = arith.constant 0 : index
    %2 = vector.load %arg3[%c0_3, %c0_4] : memref<1x384xf32, #tpu.memory_space<vmem>>, vector<1x384xf32>
    %c0_5 = arith.constant 0 : index
    %c0_6 = arith.constant 0 : index
    %3 = vector.load %arg4[%c0_5, %c0_6] : memref<128x128xf32, #tpu.memory_space<vmem>>, vector<128x128xf32>
    %c0_7 = arith.constant 0 : index
    %c0_8 = arith.constant 0 : index
    %4 = vector.load %arg5[%c0_7, %c0_8] : memref<128x128xf32, #tpu.memory_space<vmem>>, vector<128x128xf32>
    %cst = arith.constant dense<0.000000e+00> : vector<16x384xf32>
    %5 = tpu.matmul %0, %1, %cst {dimension_numbers = #tpu.dot_dimension_numbers<[1], [0], [0], [1], [0, 0, 1, 1], [], []>, precision = #tpu.contract_precision<fp32>} : vector<16x9xf32>, vector<9x384xf32>, vector<16x384xf32> -> vector<16x384xf32>
    %6 = vector.broadcast %2 : vector<1x384xf32> to vector<16x384xf32>
    %7 = arith.addf %5, %6 : vector<16x384xf32>
    %8 = vector.extract_strided_slice %7 {offsets = [0, 0], sizes = [16, 128], strides = [1, 1]} : vector<16x384xf32> to vector<16x128xf32>
    %9 = vector.extract_strided_slice %7 {offsets = [0, 128], sizes = [16, 128], strides = [1, 1]} : vector<16x384xf32> to vector<16x128xf32>
    %10 = vector.extract_strided_slice %7 {offsets = [0, 256], sizes = [16, 128], strides = [1, 1]} : vector<16x384xf32> to vector<16x128xf32>
    %11 = arith.mulf %9, %10 : vector<16x128xf32>
    %cst_9 = arith.constant dense<0.000000e+00> : vector<16x128xf32>
    %12 = tpu.matmul %11, %3, %cst_9 {dimension_numbers = #tpu.dot_dimension_numbers<[1], [0], [0], [1], [0, 0, 1, 1], [], []>, precision = #tpu.contract_precision<fp32>} : vector<16x128xf32>, vector<128x128xf32>, vector<16x128xf32> -> vector<16x128xf32>
    %13 = arith.addf %12, %8 : vector<16x128xf32>
    %cst_10 = arith.constant dense<0.000000e+00> : vector<16x128xf32>
    %14 = tpu.matmul %13, %4, %cst_10 {dimension_numbers = #tpu.dot_dimension_numbers<[1], [0], [0], [1], [0, 0, 1, 1], [], []>, precision = #tpu.contract_precision<fp32>} : vector<16x128xf32>, vector<128x128xf32>, vector<16x128xf32> -> vector<16x128xf32>
    %15 = arith.negf %14 : vector<16x128xf32>
    %16 = math.exp %15 : vector<16x128xf32>
    %cst_11 = arith.constant 1.000000e+00 : f32
    %17 = vector.broadcast %cst_11 : f32 to vector<16x128xf32>
    %18 = arith.addf %17, %16 : vector<16x128xf32>
    %19 = arith.divf %17, %18 : vector<16x128xf32>
    %20 = arith.mulf %19, %13 : vector<16x128xf32>
    %c0_12 = arith.constant 0 : index
    %c0_13 = arith.constant 0 : index
    %21 = vector.load %arg6[%c0_12, %c0_13] : memref<128x384xf32, #tpu.memory_space<vmem>>, vector<128x384xf32>
    %c0_14 = arith.constant 0 : index
    %c0_15 = arith.constant 0 : index
    %22 = vector.load %arg7[%c0_14, %c0_15] : memref<1x384xf32, #tpu.memory_space<vmem>>, vector<1x384xf32>
    %c0_16 = arith.constant 0 : index
    %c0_17 = arith.constant 0 : index
    %23 = vector.load %arg8[%c0_16, %c0_17] : memref<128x128xf32, #tpu.memory_space<vmem>>, vector<128x128xf32>
    %c0_18 = arith.constant 0 : index
    %c0_19 = arith.constant 0 : index
    %24 = vector.load %arg9[%c0_18, %c0_19] : memref<128x128xf32, #tpu.memory_space<vmem>>, vector<128x128xf32>
    %cst_20 = arith.constant dense<0.000000e+00> : vector<16x384xf32>
    %25 = tpu.matmul %20, %21, %cst_20 {dimension_numbers = #tpu.dot_dimension_numbers<[1], [0], [0], [1], [0, 0, 1, 1], [], []>, precision = #tpu.contract_precision<fp32>} : vector<16x128xf32>, vector<128x384xf32>, vector<16x384xf32> -> vector<16x384xf32>
    %26 = vector.broadcast %22 : vector<1x384xf32> to vector<16x384xf32>
    %27 = arith.addf %25, %26 : vector<16x384xf32>
    %28 = vector.extract_strided_slice %27 {offsets = [0, 0], sizes = [16, 128], strides = [1, 1]} : vector<16x384xf32> to vector<16x128xf32>
    %29 = vector.extract_strided_slice %27 {offsets = [0, 128], sizes = [16, 128], strides = [1, 1]} : vector<16x384xf32> to vector<16x128xf32>
    %30 = vector.extract_strided_slice %27 {offsets = [0, 256], sizes = [16, 128], strides = [1, 1]} : vector<16x384xf32> to vector<16x128xf32>
    %31 = arith.mulf %29, %30 : vector<16x128xf32>
    %cst_21 = arith.constant dense<0.000000e+00> : vector<16x128xf32>
    %32 = tpu.matmul %31, %23, %cst_21 {dimension_numbers = #tpu.dot_dimension_numbers<[1], [0], [0], [1], [0, 0, 1, 1], [], []>, precision = #tpu.contract_precision<fp32>} : vector<16x128xf32>, vector<128x128xf32>, vector<16x128xf32> -> vector<16x128xf32>
    %33 = arith.addf %32, %28 : vector<16x128xf32>
    %cst_22 = arith.constant dense<0.000000e+00> : vector<16x128xf32>
    %34 = tpu.matmul %33, %24, %cst_22 {dimension_numbers = #tpu.dot_dimension_numbers<[1], [0], [0], [1], [0, 0, 1, 1], [], []>, precision = #tpu.contract_precision<fp32>} : vector<16x128xf32>, vector<128x128xf32>, vector<16x128xf32> -> vector<16x128xf32>
    %35 = arith.negf %34 : vector<16x128xf32>
    %36 = math.exp %35 : vector<16x128xf32>
    %cst_23 = arith.constant 1.000000e+00 : f32
    %37 = vector.broadcast %cst_23 : f32 to vector<16x128xf32>
    %38 = arith.addf %37, %36 : vector<16x128xf32>
    %39 = arith.divf %37, %38 : vector<16x128xf32>
    %40 = arith.mulf %39, %33 : vector<16x128xf32>
    %c0_24 = arith.constant 0 : index
    %c0_25 = arith.constant 0 : index
    %41 = vector.load %arg10[%c0_24, %c0_25] : memref<128x384xf32, #tpu.memory_space<vmem>>, vector<128x384xf32>
    %c0_26 = arith.constant 0 : index
    %c0_27 = arith.constant 0 : index
    %42 = vector.load %arg11[%c0_26, %c0_27] : memref<1x384xf32, #tpu.memory_space<vmem>>, vector<1x384xf32>
    %c0_28 = arith.constant 0 : index
    %c0_29 = arith.constant 0 : index
    %43 = vector.load %arg12[%c0_28, %c0_29] : memref<128x128xf32, #tpu.memory_space<vmem>>, vector<128x128xf32>
    %c0_30 = arith.constant 0 : index
    %c0_31 = arith.constant 0 : index
    %44 = vector.load %arg13[%c0_30, %c0_31] : memref<128x128xf32, #tpu.memory_space<vmem>>, vector<128x128xf32>
    %cst_32 = arith.constant dense<0.000000e+00> : vector<16x384xf32>
    %45 = tpu.matmul %40, %41, %cst_32 {dimension_numbers = #tpu.dot_dimension_numbers<[1], [0], [0], [1], [0, 0, 1, 1], [], []>, precision = #tpu.contract_precision<fp32>} : vector<16x128xf32>, vector<128x384xf32>, vector<16x384xf32> -> vector<16x384xf32>
    %46 = vector.broadcast %42 : vector<1x384xf32> to vector<16x384xf32>
    %47 = arith.addf %45, %46 : vector<16x384xf32>
    %48 = vector.extract_strided_slice %47 {offsets = [0, 0], sizes = [16, 128], strides = [1, 1]} : vector<16x384xf32> to vector<16x128xf32>
    %49 = vector.extract_strided_slice %47 {offsets = [0, 128], sizes = [16, 128], strides = [1, 1]} : vector<16x384xf32> to vector<16x128xf32>
    %50 = vector.extract_strided_slice %47 {offsets = [0, 256], sizes = [16, 128], strides = [1, 1]} : vector<16x384xf32> to vector<16x128xf32>
    %51 = arith.mulf %49, %50 : vector<16x128xf32>
    %cst_33 = arith.constant dense<0.000000e+00> : vector<16x128xf32>
    %52 = tpu.matmul %51, %43, %cst_33 {dimension_numbers = #tpu.dot_dimension_numbers<[1], [0], [0], [1], [0, 0, 1, 1], [], []>, precision = #tpu.contract_precision<fp32>} : vector<16x128xf32>, vector<128x128xf32>, vector<16x128xf32> -> vector<16x128xf32>
    %53 = arith.addf %52, %48 : vector<16x128xf32>
    %cst_34 = arith.constant dense<0.000000e+00> : vector<16x128xf32>
    %54 = tpu.matmul %53, %44, %cst_34 {dimension_numbers = #tpu.dot_dimension_numbers<[1], [0], [0], [1], [0, 0, 1, 1], [], []>, precision = #tpu.contract_precision<fp32>} : vector<16x128xf32>, vector<128x128xf32>, vector<16x128xf32> -> vector<16x128xf32>
    %55 = arith.negf %54 : vector<16x128xf32>
    %56 = math.exp %55 : vector<16x128xf32>
    %cst_35 = arith.constant 1.000000e+00 : f32
    %57 = vector.broadcast %cst_35 : f32 to vector<16x128xf32>
    %58 = arith.addf %57, %56 : vector<16x128xf32>
    %59 = arith.divf %57, %58 : vector<16x128xf32>
    %60 = arith.mulf %59, %53 : vector<16x128xf32>
    %c0_36 = arith.constant 0 : index
    %c0_37 = arith.constant 0 : index
    %61 = vector.load %arg14[%c0_36, %c0_37] : memref<128x128xf32, #tpu.memory_space<vmem>>, vector<128x128xf32>
    %c0_38 = arith.constant 0 : index
    %c0_39 = arith.constant 0 : index
    %62 = vector.load %arg15[%c0_38, %c0_39] : memref<1x128xf32, #tpu.memory_space<vmem>>, vector<1x128xf32>
    %cst_40 = arith.constant dense<0.000000e+00> : vector<16x128xf32>
    %63 = tpu.matmul %60, %61, %cst_40 {dimension_numbers = #tpu.dot_dimension_numbers<[1], [0], [0], [1], [0, 0, 1, 1], [], []>, precision = #tpu.contract_precision<fp32>} : vector<16x128xf32>, vector<128x128xf32>, vector<16x128xf32> -> vector<16x128xf32>
    %64 = vector.broadcast %62 : vector<1x128xf32> to vector<16x128xf32>
    %65 = arith.addf %63, %64 : vector<16x128xf32>
    %c0_41 = arith.constant 0 : index
    %c0_42 = arith.constant 0 : index
    %66 = vector.load %arg16[%c0_41, %c0_42] : memref<16x128xf32, #tpu.memory_space<vmem>>, vector<16x128xf32>
    tpu.vector_store %arg16[%c0_41, %c0_42], %65 {strides = array<i32>} : memref<16x128xf32, #tpu.memory_space<vmem>>, vector<16x128xf32>,
    return
  }
  func.func @transform_0(%arg0: i32) -> (i32, i32) {
    %c0_i32 = arith.constant 0 : i32
    %c0_i32_0 = arith.constant 0 : i32
    return %arg0, %c0_i32 : i32, i32
  }
  func.func @transform_1(%arg0: i32) -> (i32, i32) {
    %c0_i32 = arith.constant 0 : i32
    %c0_i32_0 = arith.constant 0 : i32
    %c0_i32_1 = arith.constant 0 : i32
    return %c0_i32, %c0_i32_0 : i32, i32
  }
  func.func @transform_2(%arg0: i32) -> (i32, i32) {
    %c0_i32 = arith.constant 0 : i32
    %c0_i32_0 = arith.constant 0 : i32
    %c0_i32_1 = arith.constant 0 : i32
    return %c0_i32, %c0_i32_0 : i32, i32
  }
  func.func @transform_3(%arg0: i32) -> (i32, i32) {
    %c0_i32 = arith.constant 0 : i32
    %c0_i32_0 = arith.constant 0 : i32
    %c0_i32_1 = arith.constant 0 : i32
    return %c0_i32, %c0_i32_0 : i32, i32
  }
  func.func @transform_4(%arg0: i32) -> (i32, i32) {
    %c0_i32 = arith.constant 0 : i32
    %c0_i32_0 = arith.constant 0 : i32
    %c0_i32_1 = arith.constant 0 : i32
    return %c0_i32, %c0_i32_0 : i32, i32
  }
  func.func @transform_5(%arg0: i32) -> (i32, i32) {
    %c0_i32 = arith.constant 0 : i32
    %c0_i32_0 = arith.constant 0 : i32
    %c0_i32_1 = arith.constant 0 : i32
    return %c0_i32, %c0_i32_0 : i32, i32
  }
  func.func @transform_6(%arg0: i32) -> (i32, i32) {
    %c0_i32 = arith.constant 0 : i32
    %c0_i32_0 = arith.constant 0 : i32
    %c0_i32_1 = arith.constant 0 : i32
    return %c0_i32, %c0_i32_0 : i32, i32
  }
  func.func @transform_7(%arg0: i32) -> (i32, i32) {
    %c0_i32 = arith.constant 0 : i32
    %c0_i32_0 = arith.constant 0 : i32
    %c0_i32_1 = arith.constant 0 : i32
    return %c0_i32, %c0_i32_0 : i32, i32
  }
  func.func @transform_8(%arg0: i32) -> (i32, i32) {
    %c0_i32 = arith.constant 0 : i32
    %c0_i32_0 = arith.constant 0 : i32
    %c0_i32_1 = arith.constant 0 : i32
    return %c0_i32, %c0_i32_0 : i32, i32
  }
  func.func @transform_9(%arg0: i32) -> (i32, i32) {
    %c0_i32 = arith.constant 0 : i32
    %c0_i32_0 = arith.constant 0 : i32
    %c0_i32_1 = arith.constant 0 : i32
    return %c0_i32, %c0_i32_0 : i32, i32
  }
  func.func @transform_10(%arg0: i32) -> (i32, i32) {
    %c0_i32 = arith.constant 0 : i32
    %c0_i32_0 = arith.constant 0 : i32
    %c0_i32_1 = arith.constant 0 : i32
    return %c0_i32, %c0_i32_0 : i32, i32
  }
  func.func @transform_11(%arg0: i32) -> (i32, i32) {
    %c0_i32 = arith.constant 0 : i32
    %c0_i32_0 = arith.constant 0 : i32
    %c0_i32_1 = arith.constant 0 : i32
    return %c0_i32, %c0_i32_0 : i32, i32
  }
  func.func @transform_12(%arg0: i32) -> (i32, i32) {
    %c0_i32 = arith.constant 0 : i32
    %c0_i32_0 = arith.constant 0 : i32
    %c0_i32_1 = arith.constant 0 : i32
    return %c0_i32, %c0_i32_0 : i32, i32
  }
  func.func @transform_13(%arg0: i32) -> (i32, i32) {
    %c0_i32 = arith.constant 0 : i32
    %c0_i32_0 = arith.constant 0 : i32
    %c0_i32_1 = arith.constant 0 : i32
    return %c0_i32, %c0_i32_0 : i32, i32
  }
  func.func @transform_14(%arg0: i32) -> (i32, i32) {
    %c0_i32 = arith.constant 0 : i32
    %c0_i32_0 = arith.constant 0 : i32
    %c0_i32_1 = arith.constant 0 : i32
    return %c0_i32, %c0_i32_0 : i32, i32
  }
  func.func @transform_15(%arg0: i32) -> (i32, i32) {
    %c0_i32 = arith.constant 0 : i32
    %c0_i32_0 = arith.constant 0 : i32
    return %arg0, %c0_i32 : i32, i32
  }
}

</mosaic_0001>

<llo_original>
// kernel: tpu_custom_call.1
$region0: #{tpu_custom_call.1}
  #allocation0 [shape = 'u32[]', space=smem, size = 0x4, offset = 0x4, fixed_abs, tag = 'smem constant byte address 0x4 - core index']
  #allocation1 [shape = 'u32[144,128]{1,0:T(1,128)}', space=vmem, size = 0x12000, scoped, tag = 'internal scratch']
  %s0 = inlined_call_operand.hbm [shape: f32[16,9], index: 0, kind: input, shape index: {}]
  %s1 = inlined_call_operand.hbm [shape: f32[9,384], index: 1, kind: input, shape index: {}]
  %s2 = inlined_call_operand.vmem [shape: f32[1,384], index: 2, kind: input, shape index: {}]
  %s3 = inlined_call_operand.hbm [shape: f32[128,128], index: 3, kind: input, shape index: {}]
  %s4 = inlined_call_operand.hbm [shape: f32[128,128], index: 4, kind: input, shape index: {}]
  %s5 = inlined_call_operand.hbm [shape: f32[128,384], index: 5, kind: input, shape index: {}]
  %s6 = inlined_call_operand.vmem [shape: f32[1,384], index: 6, kind: input, shape index: {}]
  %s7 = inlined_call_operand.hbm [shape: f32[128,128], index: 7, kind: input, shape index: {}]
  %s8 = inlined_call_operand.hbm [shape: f32[128,128], index: 8, kind: input, shape index: {}]
  %s9 = inlined_call_operand.hbm [shape: f32[128,384], index: 9, kind: input, shape index: {}]
  %s10 = inlined_call_operand.vmem [shape: f32[1,384], index: 10, kind: input, shape index: {}]
  %s11 = inlined_call_operand.hbm [shape: f32[128,128], index: 11, kind: input, shape index: {}]
  %s12 = inlined_call_operand.hbm [shape: f32[128,128], index: 12, kind: input, shape index: {}]
  %s13 = inlined_call_operand.hbm [shape: f32[128,128], index: 13, kind: input, shape index: {}]
  %s14 = inlined_call_operand.vmem [shape: f32[1,128], index: 14, kind: input, shape index: {}]
  %s15 = inlined_call_operand.hbm [shape: f32[16,128], index: 15, kind: output, shape index: {}]
  %s16 = sld [smem:[#allocation0]]
  $region114: #{tpu_custom_call.1} parent=0
    _
  %s18 = ssub.s32 1, %s16
  %s19 = scalar_select 0, %s18, %s16
  $region1: #{tpu_custom_call.1} parent=0
    #allocation2 [shape = 'u8[8192]{0}', space=vmem, size = 0x2000, scoped, tag = 'input window, operand 0, single buffered']
    #allocation3 [shape = 's32[1]{0}', space=sflag, size = 0x4, scoped, tag = 'scoped memory for tpu_custom_call.1']
    #allocation4 [shape = 's32[1]{0}', space=sflag, size = 0x4, scoped, tag = 'scoped memory for tpu_custom_call.1']
    #allocation5 [shape = 'u8[24576]{0}', space=vmem, size = 0x6000, scoped, tag = 'input window, operand 1, single buffered']
    #allocation6 [shape = 's32[1]{0}', space=sflag, size = 0x4, scoped, tag = 'scoped memory for tpu_custom_call.1']
    #allocation7 [shape = 'u8[65536]{0}', space=vmem, size = 0x10000, scoped, tag = 'input window, operand 3, single buffered']
    #allocation8 [shape = 'u8[65536]{0}', space=vmem, size = 0x10000, scoped, tag = 'input window, operand 4, single buffered']
    #allocation9 [shape = 's32[1]{0}', space=sflag, size = 0x4, scoped, tag = 'scoped memory for tpu_custom_call.1']
    #allocation10 [shape = 'u8[196608]{0}', space=vmem, size = 0x30000, scoped, tag = 'input window, operand 5, single buffered']
    #allocation11 [shape = 'u8[65536]{0}', space=vmem, size = 0x10000, scoped, tag = 'input window, operand 7, single buffered']
    #allocation12 [shape = 's32[1]{0}', space=sflag, size = 0x4, scoped, tag = 'scoped memory for tpu_custom_call.1']
    #allocation13 [shape = 'u8[65536]{0}', space=vmem, size = 0x10000, scoped, tag = 'input window, operand 8, single buffered']
    #allocation14 [shape = 'u8[196608]{0}', space=vmem, size = 0x30000, scoped, tag = 'input window, operand 9, single buffered']
    #allocation15 [shape = 's32[1]{0}', space=sflag, size = 0x4, scoped, tag = 'scoped memory for tpu_custom_call.1']
    #allocation16 [shape = 'u8[65536]{0}', space=vmem, size = 0x10000, scoped, tag = 'input window, operand 11, single buffered']
    #allocation17 [shape = 'u8[65536]{0}', space=vmem, size = 0x10000, scoped, tag = 'input window, operand 12, single buffered']
    #allocation18 [shape = 's32[1]{0}', space=sflag, size = 0x4, scoped, tag = 'scoped memory for tpu_custom_call.1']
    #allocation19 [shape = 'u8[65536]{0}', space=vmem, size = 0x10000, scoped, tag = 'input window, operand 13, single buffered']
    #allocation20 [shape = 'u8[8192]{0}', space=vmem, size = 0x2000, scoped, tag = 'output window, operand 0, single buffered']
    %20 = vsyncpa [#allocation3], 0
    %21 = vsyncpa [#allocation6], 0
    %22 = vsyncpa [#allocation9], 0
    %23 = vsyncpa [#allocation12], 0
    %24 = vsyncpa [#allocation15], 0
    %25 = vsyncpa [#allocation18], 0
    %26 = vsyncpa [#allocation4], 0
    // Predicated region
    $region2: #{tpu_custom_call.1} parent=1 // pred_check
      _
    $region3: #{tpu_custom_call.1} parent=1 // pred_check_branch
      %28 = sbr.rel (0) target = $region5
    $region4: #{tpu_custom_call.1} parent=1 // pred_region
      %s30 = ssub.s32 256, 256
      %31 = vsyncadd [#allocation3], %s30
      %s32 = sshll.u32 [#allocation2], 4
      %s33 = int_to_ptr.vmem [resolvable:$true] %s32
      %38 = dma.hbm_to_vmem [thread:$0]  %s0, 256, %s33, [#allocation3], 128, 128, 8
    $region5: #{tpu_custom_call.1} parent=1 // pred_fallthru
      _
    // Predicated region
    $region6: #{tpu_custom_call.1} parent=1 // pred_check
      _
    $region7: #{tpu_custom_call.1} parent=1 // pred_check_branch
      %40 = sbr.rel (0) target = $region9
    $region8: #{tpu_custom_call.1} parent=1 // pred_region
      %s42 = ssub.s32 768, 768
      %43 = vsyncadd [#allocation6], %s42
      %s44 = sshll.u32 [#allocation5], 4
      %s45 = int_to_ptr.vmem [resolvable:$true] %s44
      %50 = dma.hbm_to_vmem [thread:$0]  %s1, 768, %s45, [#allocation6], 384, 384, 24
    $region9: #{tpu_custom_call.1} parent=1 // pred_fallthru
      _
    // Predicated region
    $region10: #{tpu_custom_call.1} parent=1 // pred_check
      _
    $region11: #{tpu_custom_call.1} parent=1 // pred_check_branch
      %52 = sbr.rel (0) target = $region13
    $region12: #{tpu_custom_call.1} parent=1 // pred_region
      _
    $region13: #{tpu_custom_call.1} parent=1 // pred_fallthru
      _
    // Predicated region
    $region14: #{tpu_custom_call.1} parent=1 // pred_check
      _
    $region15: #{tpu_custom_call.1} parent=1 // pred_check_branch
      %54 = sbr.rel (0) target = $region17
    $region16: #{tpu_custom_call.1} parent=1 // pred_region
      %s56 = ssub.s32 2048, 2048
      %57 = vsyncadd [#allocation6], %s56
      %s58 = sshll.u32 [#allocation7], 4
      %s59 = int_to_ptr.vmem [resolvable:$true] %s58
      %64 = dma.hbm_to_vmem [thread:$0]  %s3, 2048, %s59, [#allocation6], 128, 128, 8
    $region17: #{tpu_custom_call.1} parent=1 // pred_fallthru
      _
    // Predicated region
    $region18: #{tpu_custom_call.1} parent=1 // pred_check
      _
    $region19: #{tpu_custom_call.1} parent=1 // pred_check_branch
      %66 = sbr.rel (0) target = $region21
    $region20: #{tpu_custom_call.1} parent=1 // pred_region
      %s68 = ssub.s32 2048, 2048
      %69 = vsyncadd [#allocation9], %s68
      %s70 = sshll.u32 [#allocation8], 4
      %s71 = int_to_ptr.vmem [resolvable:$true] %s70
      %76 = dma.hbm_to_vmem [thread:$0]  %s4, 2048, %s71, [#allocation9], 128, 128, 8
    $region21: #{tpu_custom_call.1} parent=1 // pred_fallthru
      _
    // Predicated region
    $region22: #{tpu_custom_call.1} parent=1 // pred_check
      _
    $region23: #{tpu_custom_call.1} parent=1 // pred_check_branch
      %78 = sbr.rel (0) target = $region25
    $region24: #{tpu_custom_call.1} parent=1 // pred_region
      %s80 = ssub.s32 6144, 6144
      %81 = vsyncadd [#allocation9], %s80
      %s82 = sshll.u32 [#allocation10], 4
      %s83 = int_to_ptr.vmem [resolvable:$true] %s82
      %88 = dma.hbm_to_vmem [thread:$0]  %s5, 6144, %s83, [#allocation9], 384, 384, 24
    $region25: #{tpu_custom_call.1} parent=1 // pred_fallthru
      _
    // Predicated region
    $region26: #{tpu_custom_call.1} parent=1 // pred_check
      _
    $region27: #{tpu_custom_call.1} parent=1 // pred_check_branch
      %90 = sbr.rel (0) target = $region29
    $region28: #{tpu_custom_call.1} parent=1 // pred_region
      _
    $region29: #{tpu_custom_call.1} parent=1 // pred_fallthru
      _
    // Predicated region
    $region30: #{tpu_custom_call.1} parent=1 // pred_check
      _
    $region31: #{tpu_custom_call.1} parent=1 // pred_check_branch
      %92 = sbr.rel (0) target = $region33
    $region32: #{tpu_custom_call.1} parent=1 // pred_region
      %s94 = ssub.s32 2048, 2048
      %95 = vsyncadd [#allocation12], %s94
      %s96 = sshll.u32 [#allocation11], 4
      %s97 = int_to_ptr.vmem [resolvable:$true] %s96
      %102 = dma.hbm_to_vmem [thread:$0]  %s7, 2048, %s97, [#allocation12], 128, 128, 8
    $region33: #{tpu_custom_call.1} parent=1 // pred_fallthru
      _
    // Predicated region
    $region34: #{tpu_custom_call.1} parent=1 // pred_check
      _
    $region35: #{tpu_custom_call.1} parent=1 // pred_check_branch
      %104 = sbr.rel (0) target = $region37
    $region36: #{tpu_custom_call.1} parent=1 // pred_region
      %s106 = ssub.s32 2048, 2048
      %107 = vsyncadd [#allocation12], %s106
      %s108 = sshll.u32 [#allocation13], 4
      %s109 = int_to_ptr.vmem [resolvable:$true] %s108
      %114 = dma.hbm_to_vmem [thread:$0]  %s8, 2048, %s109, [#allocation12], 128, 128, 8
    $region37: #{tpu_custom_call.1} parent=1 // pred_fallthru
      _
    // Predicated region
    $region38: #{tpu_custom_call.1} parent=1 // pred_check
      _
    $region39: #{tpu_custom_call.1} parent=1 // pred_check_branch
      %116 = sbr.rel (0) target = $region41
    $region40: #{tpu_custom_call.1} parent=1 // pred_region
      %s118 = ssub.s32 6144, 6144
      %119 = vsyncadd [#allocation15], %s118
      %s120 = sshll.u32 [#allocation14], 4
      %s121 = int_to_ptr.vmem [resolvable:$true] %s120
      %126 = dma.hbm_to_vmem [thread:$0]  %s9, 6144, %s121, [#allocation15], 384, 384, 24
    $region41: #{tpu_custom_call.1} parent=1 // pred_fallthru
      _
    // Predicated region
    $region42: #{tpu_custom_call.1} parent=1 // pred_check
      _
    $region43: #{tpu_custom_call.1} parent=1 // pred_check_branch
      %128 = sbr.rel (0) target = $region45
    $region44: #{tpu_custom_call.1} parent=1 // pred_region
      _
    $region45: #{tpu_custom_call.1} parent=1 // pred_fallthru
      _
    // Predicated region
    $region46: #{tpu_custom_call.1} parent=1 // pred_check
      _
    $region47: #{tpu_custom_call.1} parent=1 // pred_check_branch
      %130 = sbr.rel (0) target = $region49
    $region48: #{tpu_custom_call.1} parent=1 // pred_region
      %s132 = ssub.s32 2048, 2048
      %133 = vsyncadd [#allocation15], %s132
      %s134 = sshll.u32 [#allocation16], 4
      %s135 = int_to_ptr.vmem [resolvable:$true] %s134
      %140 = dma.hbm_to_vmem [thread:$0]  %s11, 2048, %s135, [#allocation15], 128, 128, 8
    $region49: #{tpu_custom_call.1} parent=1 // pred_fallthru
      _
    // Predicated region
    $region50: #{tpu_custom_call.1} parent=1 // pred_check
      _
    $region51: #{tpu_custom_call.1} parent=1 // pred_check_branch
      %142 = sbr.rel (0) target = $region53
    $region52: #{tpu_custom_call.1} parent=1 // pred_region
      %s144 = ssub.s32 2048, 2048
      %145 = vsyncadd [#allocation18], %s144
      %s146 = sshll.u32 [#allocation17], 4
      %s147 = int_to_ptr.vmem [resolvable:$true] %s146
      %152 = dma.hbm_to_vmem [thread:$0]  %s12, 2048, %s147, [#allocation18], 128, 128, 8
    $region53: #{tpu_custom_call.1} parent=1 // pred_fallthru
      _
    // Predicated region
    $region54: #{tpu_custom_call.1} parent=1 // pred_check
      _
    $region55: #{tpu_custom_call.1} parent=1 // pred_check_branch
      %154 = sbr.rel (0) target = $region57
    $region56: #{tpu_custom_call.1} parent=1 // pred_region
      %s156 = ssub.s32 2048, 2048
      %157 = vsyncadd [#allocation18], %s156
      %s158 = sshll.u32 [#allocation19], 4
      %s159 = int_to_ptr.vmem [resolvable:$true] %s158
      %164 = dma.hbm_to_vmem [thread:$0]  %s13, 2048, %s159, [#allocation18], 128, 128, 8
    $region57: #{tpu_custom_call.1} parent=1 // pred_fallthru
      _
    // Predicated region
    $region58: #{tpu_custom_call.1} parent=1 // pred_check
      _
    $region59: #{tpu_custom_call.1} parent=1 // pred_check_branch
      %166 = sbr.rel (0) target = $region61
    $region60: #{tpu_custom_call.1} parent=1 // pred_region
      _
    $region61: #{tpu_custom_call.1} parent=1 // pred_fallthru
      _
    // Predicated region
    $region62: #{tpu_custom_call.1} parent=1 // pred_check
      _
    $region63: #{tpu_custom_call.1} parent=1 // pred_check_branch
      %168 = sbr.rel (0) target = $region65
    $region64: #{tpu_custom_call.1} parent=1 // pred_region
      %169 = dma.done [#allocation3], 256
    $region65: #{tpu_custom_call.1} parent=1 // pred_fallthru
      _
    // Predicated region
    $region66: #{tpu_custom_call.1} parent=1 // pred_check
      _
    $region67: #{tpu_custom_call.1} parent=1 // pred_check_branch
      %171 = sbr.rel (0) target = $region69
    $region68: #{tpu_custom_call.1} parent=1 // pred_region
      %172 = dma.done [#allocation6], 768
    $region69: #{tpu_custom_call.1} parent=1 // pred_fallthru
      _
    // Predicated region
    $region70: #{tpu_custom_call.1} parent=1 // pred_check
      _
    $region71: #{tpu_custom_call.1} parent=1 // pred_check_branch
      %174 = sbr.rel (0) target = $region73
    $region72: #{tpu_custom_call.1} parent=1 // pred_region
      %175 = dma.done [#allocation6], 2048
    $region73: #{tpu_custom_call.1} parent=1 // pred_fallthru
      _
    // Predicated region
    $region74: #{tpu_custom_call.1} parent=1 // pred_check
      _
    $region75: #{tpu_custom_call.1} parent=1 // pred_check_branch
      %177 = sbr.rel (0) target = $region77
    $region76: #{tpu_custom_call.1} parent=1 // pred_region
      %178 = dma.done [#allocation9], 2048
    $region77: #{tpu_custom_call.1} parent=1 // pred_fallthru
      _
    // Predicated region
    $region78: #{tpu_custom_call.1} parent=1 // pred_check
      _
    $region79: #{tpu_custom_call.1} parent=1 // pred_check_branch
      %180 = sbr.rel (0) target = $region81
    $region80: #{tpu_custom_call.1} parent=1 // pred_region
      %181 = dma.done [#allocation9], 6144
    $region81: #{tpu_custom_call.1} parent=1 // pred_fallthru
      _
    // Predicated region
    $region82: #{tpu_custom_call.1} parent=1 // pred_check
      _
    $region83: #{tpu_custom_call.1} parent=1 // pred_check_branch
      %183 = sbr.rel (0) target = $region85
    $region84: #{tpu_custom_call.1} parent=1 // pred_region
      %184 = dma.done [#allocation12], 2048
    $region85: #{tpu_custom_call.1} parent=1 // pred_fallthru
      _
    // Predicated region
    $region86: #{tpu_custom_call.1} parent=1 // pred_check
      _
    $region87: #{tpu_custom_call.1} parent=1 // pred_check_branch
      %186 = sbr.rel (0) target = $region89
    $region88: #{tpu_custom_call.1} parent=1 // pred_region
      %187 = dma.done [#allocation12], 2048
    $region89: #{tpu_custom_call.1} parent=1 // pred_fallthru
      _
    // Predicated region
    $region90: #{tpu_custom_call.1} parent=1 // pred_check
      _
    $region91: #{tpu_custom_call.1} parent=1 // pred_check_branch
      %189 = sbr.rel (0) target = $region93
    $region92: #{tpu_custom_call.1} parent=1 // pred_region
      %190 = dma.done [#allocation15], 6144
    $region93: #{tpu_custom_call.1} parent=1 // pred_fallthru
      _
    // Predicated region
    $region94: #{tpu_custom_call.1} parent=1 // pred_check
      _
    $region95: #{tpu_custom_call.1} parent=1 // pred_check_branch
      %192 = sbr.rel (0) target = $region97
    $region96: #{tpu_custom_call.1} parent=1 // pred_region
      %193 = dma.done [#allocation15], 2048
    $region97: #{tpu_custom_call.1} parent=1 // pred_fallthru
      _
    // Predicated region
    $region98: #{tpu_custom_call.1} parent=1 // pred_check
      _
    $region99: #{tpu_custom_call.1} parent=1 // pred_check_branch
      %195 = sbr.rel (0) target = $region101
    $region100: #{tpu_custom_call.1} parent=1 // pred_region
      %196 = dma.done [#allocation18], 2048
    $region101: #{tpu_custom_call.1} parent=1 // pred_fallthru
      _
    // Predicated region
    $region102: #{tpu_custom_call.1} parent=1 // pred_check
      _
    $region103: #{tpu_custom_call.1} parent=1 // pred_check_branch
      %198 = sbr.rel (0) target = $region105
    $region104: #{tpu_custom_call.1} parent=1 // pred_region
      %199 = dma.done [#allocation18], 2048
    $region105: #{tpu_custom_call.1} parent=1 // pred_fallthru
      _
    %v200 = vld [vmem:[#allocation2] sm:$0xff]
    %v201 = vld [vmem:[#allocation2 + $0x8] sm:$0xff]
    %v202 = vld [vmem:[#allocation5] sm:$0xff]
    %v203 = vld [vmem:[#allocation5 + $0x8] sm:$0xff]
    %v204 = vld [vmem:[#allocation5 + $0x10] sm:$0xff]
    %v205 = vld [vmem:[#allocation5 + $0x18] sm:$0x1]
    %v206 = vld [vmem:[#allocation5 + $0x20] sm:$0x1]
    %v207 = vld [vmem:[#allocation5 + $0x28] sm:$0x1]
    %v208 = vld [vmem:[%s2] sm:$0x7]
    %v209 = vld [vmem:[#allocation7] sm:$0xff]
    %v210 = vld [vmem:[#allocation7 + $0x8] sm:$0xff]
    %v211 = vld [vmem:[#allocation7 + $0x10] sm:$0xff]
    %v212 = vld [vmem:[#allocation7 + $0x18] sm:$0xff]
    %v213 = vld [vmem:[#allocation7 + $0x20] sm:$0xff]
    %v214 = vld [vmem:[#allocation7 + $0x28] sm:$0xff]
    %v215 = vld [vmem:[#allocation7 + $0x30] sm:$0xff]
    %v216 = vld [vmem:[#allocation7 + $0x38] sm:$0xff]
    %v217 = vld [vmem:[#allocation7 + $0x40] sm:$0xff]
    %v218 = vld [vmem:[#allocation7 + $0x48] sm:$0xff]
    %v219 = vld [vmem:[#allocation7 + $0x50] sm:$0xff]
    %v220 = vld [vmem:[#allocation7 + $0x58] sm:$0xff]
    %v221 = vld [vmem:[#allocation7 + $0x60] sm:$0xff]
    %v222 = vld [vmem:[#allocation7 + $0x68] sm:$0xff]
    %v223 = vld [vmem:[#allocation7 + $0x70] sm:$0xff]
    %v224 = vld [vmem:[#allocation7 + $0x78] sm:$0xff]
    %v225 = vld [vmem:[#allocation8] sm:$0xff]
    %v226 = vld [vmem:[#allocation8 + $0x8] sm:$0xff]
    %v227 = vld [vmem:[#allocation8 + $0x10] sm:$0xff]
    %v228 = vld [vmem:[#allocation8 + $0x18] sm:$0xff]
    %v229 = vld [vmem:[#allocation8 + $0x20] sm:$0xff]
    %v230 = vld [vmem:[#allocation8 + $0x28] sm:$0xff]
    %v231 = vld [vmem:[#allocation8 + $0x30] sm:$0xff]
    %v232 = vld [vmem:[#allocation8 + $0x38] sm:$0xff]
    %v233 = vld [vmem:[#allocation8 + $0x40] sm:$0xff]
    %v234 = vld [vmem:[#allocation8 + $0x48] sm:$0xff]
    %v235 = vld [vmem:[#allocation8 + $0x50] sm:$0xff]
    %v236 = vld [vmem:[#allocation8 + $0x58] sm:$0xff]
    %v237 = vld [vmem:[#allocation8 + $0x60] sm:$0xff]
    %v238 = vld [vmem:[#allocation8 + $0x68] sm:$0xff]
    %v239 = vld [vmem:[#allocation8 + $0x70] sm:$0xff]
    %v240 = vld [vmem:[#allocation8 + $0x78] sm:$0xff]
    %v242 = vlaneseq
    %v243 = vshrl.u32 %v242, 7
    %v244 = vsub.s32 0, %v243
    %v245 = vrot.slane %v208, %v244
    %v246 = vlaneseq
    %v247 = vshrl.u32 %v246, 7
    %v248 = vsub.s32 1, %v247
    %v249 = vrot.slane %v208, %v248
    %v250 = vlaneseq
    %v251 = vshrl.u32 %v250, 7
    %v252 = vsub.s32 2, %v251
    %v253 = vrot.slane %v208, %v252
    %vm257 = vcmask 72704
    %v259 = vsel %vm257, %v200, 0
    %v262 = vsel %vm257, %v201, 0
    %vm264 = vcmask 1040384
    %v266 = vsel %vm264, %v205, 0
    %v269 = vsel %vm264, %v206, 0
    %v272 = vsel %vm264, %v207, 0
    %v274 = vand.u32 %v203, 4294901760
    %275 = vmatprep.subr.mxu0 %v274
    %v276 = vand.u32 %v202, 4294901760
    %277 = vmatpush1.msra.mxu0 %v276
    %v278 = vand.u32 %v269, 4294901760
    %279 = vmatprep.subr.mxu0 %v278
    %v280 = vand.u32 %v266, 4294901760
    %281 = vmatpush1.msra.mxu0 %v280
    %282 = vmatprep.subr.mxu0 0.0
    %283 = vmatpush1.msra.mxu0 0.0
    %284 = vmatprep.subr.mxu0 0.0
    %285 = vmatpush1.msra.mxu0 0.0
    %286 = vmatprep.subr.mxu0 0.0
    %287 = vmatpush1.msra.mxu0 0.0
    %288 = vmatprep.subr.mxu0 0.0
    %289 = vmatpush1.msra.mxu0 0.0
    %290 = vmatprep.subr.mxu0 0.0
    %291 = vmatpush1.msra.mxu0 0.0
    %292 = vmatprep.subr.mxu0 0.0
    %293 = vmatpush1.msra.mxu0 0.0
    %294 = vmatprep.subr.mxu0 0.0
    %295 = vmatpush1.msra.mxu0 0.0
    %296 = vmatprep.subr.mxu0 0.0
    %297 = vmatpush1.msra.mxu0 0.0
    %298 = vmatprep.subr.mxu0 0.0
    %299 = vmatpush1.msra.mxu0 0.0
    %300 = vmatprep.subr.mxu0 0.0
    %301 = vmatpush1.msra.mxu0 0.0
    %302 = vmatprep.subr.mxu0 0.0
    %303 = vmatpush1.msra.mxu0 0.0
    %304 = vmatprep.subr.mxu0 0.0
    %305 = vmatpush1.msra.mxu0 0.0
    %306 = vmatprep.subr.mxu0 0.0
    %307 = vmatpush1.msra.mxu0 0.0
    %308 = vmatprep.subr.mxu0 0.0
    %309 = vmatpush1.msra.mxu0 0.0
    %310 = vmatprep.subr.mxu0 0.0
    %311 = vmatpush1.msra.mxu0 0.0
    %312 = vmatprep.subr.mxu0 0.0
    %313 = vmatpush1.msra.mxu0 0.0
    %314 = vmatprep.subr.mxu0 0.0
    %315 = vmatpush1.msra.mxu0 0.0
    %316 = vmatprep.subr.mxu0 0.0
    %317 = vmatpush1.msra.mxu0 0.0
    %318 = vmatprep.subr.mxu0 0.0
    %319 = vmatpush1.msra.mxu0 0.0
    %320 = vmatprep.subr.mxu0 0.0
    %321 = vmatpush1.msra.mxu0 0.0
    %322 = vmatprep.subr.mxu0 0.0
    %323 = vmatpush1.msra.mxu0 0.0
    %324 = vmatprep.subr.mxu0 0.0
    %325 = vmatpush1.msra.mxu0 0.0
    %326 = vmatprep.subr.mxu0 0.0
    %327 = vmatpush1.msra.mxu0 0.0
    %328 = vmatprep.subr.mxu0 0.0
    %329 = vmatpush1.msra.mxu0 0.0
    %330 = vmatprep.subr.mxu0 0.0
    %331 = vmatpush1.msra.mxu0 0.0
    %332 = vmatprep.subr.mxu0 0.0
    %333 = vmatpush1.msra.mxu0 0.0
    %334 = vmatprep.subr.mxu0 0.0
    %335 = vmatpush1.msra.mxu0 0.0
    %336 = vmatprep.subr.mxu0 0.0
    %337 = vmatpush1.msra.mxu0 0.0
    %338 = vmatprep.subr.mxu0 0.0
    %339 = vmatpush1.msra.mxu0 0.0
    %340 = vmatprep.subr.mxu0 0.0
    %341 = vmatpush1.msra.mxu0 0.0
    %342 = vmatprep.mubr.f32.mxu0 0.0
    %v343 = vand.u32 %v259, 4294901760
    %v344 = vsub.f32 %v259, %v343
    %v345 = vand.u32 %v344, 4294901760
    %v346 = vsub.f32 %v344, %v345
    %v347 = vand.u32 %v346, 4294901760
    %348 = vmatmul.mubr.f32.gmra.mrb[0].mxu0 %v347
    %v349 = vpop.f32.mrb[0].mxu0
    %v350 = vadd.f32 %v245, %v349
    %v351 = vpop.f32.mrb[0].mxu0
    %v352 = vadd.f32 %v249, %v351
    %353 = vmatprep.mubr.f32.mxu0 0.0
    %v354 = vand.u32 %v262, 4294901760
    %v355 = vsub.f32 %v262, %v354
    %v356 = vand.u32 %v355, 4294901760
    %v357 = vsub.f32 %v355, %v356
    %v358 = vand.u32 %v357, 4294901760
    %359 = vmatmul.mubr.f32.gmra.mrb[0].mxu0 %v358
    %v360 = vpop.f32.mrb[0].mxu0
    %v361 = vadd.f32 %v245, %v360
    %v362 = vpop.f32.mrb[0].mxu0
    %v363 = vadd.f32 %v249, %v362
    %364 = vdwg.mxu0
    %v365 = vand.u32 %v203, 4294901760
    %v366 = vsub.f32 %v203, %v365
    %v367 = vand.u32 %v366, 4294901760
    %v368 = vsub.f32 %v366, %v367
    %v369 = vand.u32 %v368, 4294901760
    %370 = vmatprep.subr.mxu0 %v369
    %v371 = vand.u32 %v202, 4294901760
    %v372 = vsub.f32 %v202, %v371
    %v373 = vand.u32 %v372, 4294901760
    %v374 = vsub.f32 %v372, %v373
    %v375 = vand.u32 %v374, 4294901760
    %376 = vmatpush1.msra.mxu0 %v375
    %v377 = vand.u32 %v269, 4294901760
    %v378 = vsub.f32 %v269, %v377
    %v379 = vand.u32 %v378, 4294901760
    %v380 = vsub.f32 %v378, %v379
    %v381 = vand.u32 %v380, 4294901760
    %382 = vmatprep.subr.mxu0 %v381
    %v383 = vand.u32 %v266, 4294901760
    %v384 = vsub.f32 %v266, %v383
    %v385 = vand.u32 %v384, 4294901760
    %v386 = vsub.f32 %v384, %v385
    %v387 = vand.u32 %v386, 4294901760
    %388 = vmatpush1.msra.mxu0 %v387
    %389 = vmatprep.subr.mxu0 0.0
    %390 = vmatpush1.msra.mxu0 0.0
    %391 = vmatprep.subr.mxu0 0.0
    %392 = vmatpush1.msra.mxu0 0.0
    %393 = vmatprep.subr.mxu0 0.0
    %394 = vmatpush1.msra.mxu0 0.0
    %395 = vmatprep.subr.mxu0 0.0
    %396 = vmatpush1.msra.mxu0 0.0
    %397 = vmatprep.subr.mxu0 0.0
    %398 = vmatpush1.msra.mxu0 0.0
    %399 = vmatprep.subr.mxu0 0.0
    %400 = vmatpush1.msra.mxu0 0.0
    %401 = vmatprep.subr.mxu0 0.0
    %402 = vmatpush1.msra.mxu0 0.0
    %403 = vmatprep.subr.mxu0 0.0
    %404 = vmatpush1.msra.mxu0 0.0
    %405 = vmatprep.subr.mxu0 0.0
    %406 = vmatpush1.msra.mxu0 0.0
    %407 = vmatprep.subr.mxu0 0.0
    %408 = vmatpush1.msra.mxu0 0.0
    %409 = vmatprep.subr.mxu0 0.0
    %410 = vmatpush1.msra.mxu0 0.0
    %411 = vmatprep.subr.mxu0 0.0
    %412 = vmatpush1.msra.mxu0 0.0
    %413 = vmatprep.subr.mxu0 0.0
    %414 = vmatpush1.msra.mxu0 0.0
    %415 = vmatprep.subr.mxu0 0.0
    %416 = vmatpush1.msra.mxu0 0.0
    %417 = vmatprep.subr.mxu0 0.0
    %418 = vmatpush1.msra.mxu0 0.0
    %419 = vmatprep.subr.mxu0 0.0
    %420 = vmatpush1.msra.mxu0 0.0
    %421 = vmatprep.subr.mxu0 0.0
    %422 = vmatpush1.msra.mxu0 0.0
    %423 = vmatprep.subr.mxu0 0.0
    %424 = vmatpush1.msra.mxu0 0.0
    %425 = vmatprep.subr.mxu0 0.0
    %426 = vmatpush1.msra.mxu0 0.0
    %427 = vmatprep.subr.mxu0 0.0
    %428 = vmatpush1.msra.mxu0 0.0
    %429 = vmatprep.subr.mxu0 0.0
    %430 = vmatpush1.msra.mxu0 0.0
    %431 = vmatprep.subr.mxu0 0.0
    %432 = vmatpush1.msra.mxu0 0.0
    %433 = vmatprep.subr.mxu0 0.0
    %434 = vmatpush1.msra.mxu0 0.0
    %435 = vmatprep.subr.mxu0 0.0
    %436 = vmatpush1.msra.mxu0 0.0
    %437 = vmatprep.subr.mxu0 0.0
    %438 = vmatpush1.msra.mxu0 0.0
    %439 = vmatprep.subr.mxu0 0.0
    %440 = vmatpush1.msra.mxu0 0.0
    %441 = vmatprep.subr.mxu0 0.0
    %442 = vmatpush1.msra.mxu0 0.0
    %443 = vmatprep.subr.mxu0 0.0
    %444 = vmatpush1.msra.mxu0 0.0
    %445 = vmatprep.subr.mxu0 0.0
    %446 = vmatpush1.msra.mxu0 0.0
    %447 = vmatprep.subr.mxu0 0.0
    %448 = vmatpush1.msra.mxu0 0.0
    %449 = vmatprep.mubr.f32.mxu0 0.0
    %v450 = vand.u32 %v259, 4294901760
    %451 = vmatmul.mubr.f32.gmra.mrb[0].mxu0 %v450
    %v452 = vpop.f32.mrb[0].mxu0
    %v453 = vadd.f32 %v350, %v452
    %v454 = vpop.f32.mrb[0].mxu0
    %v455 = vadd.f32 %v352, %v454
    %456 = vmatprep.mubr.f32.mxu0 0.0
    %v457 = vand.u32 %v262, 4294901760
    %458 = vmatmul.mubr.f32.gmra.mrb[0].mxu0 %v457
    %v459 = vpop.f32.mrb[0].mxu0
    %v460 = vadd.f32 %v361, %v459
    %v461 = vpop.f32.mrb[0].mxu0
    %v462 = vadd.f32 %v363, %v461
    %463 = vdwg.mxu0
    %v464 = vand.u32 %v203, 4294901760
    %v465 = vsub.f32 %v203, %v464
    %466 = vmatprep.subr.mxu0 %v465
    %v467 = vand.u32 %v202, 4294901760
    %v468 = vsub.f32 %v202, %v467
    %469 = vmatpush1.msra.mxu0 %v468
    %v470 = vand.u32 %v269, 4294901760
    %v471 = vsub.f32 %v269, %v470
    %472 = vmatprep.subr.mxu0 %v471
    %v473 = vand.u32 %v266, 4294901760
    %v474 = vsub.f32 %v266, %v473
    %475 = vmatpush1.msra.mxu0 %v474
    %476 = vmatprep.subr.mxu0 0.0
    %477 = vmatpush1.msra.mxu0 0.0
    %478 = vmatprep.subr.mxu0 0.0
    %479 = vmatpush1.msra.mxu0 0.0
    %480 = vmatprep.subr.mxu0 0.0
    %481 = vmatpush1.msra.mxu0 0.0
    %482 = vmatprep.subr.mxu0 0.0
    %483 = vmatpush1.msra.mxu0 0.0
    %484 = vmatprep.subr.mxu0 0.0
    %485 = vmatpush1.msra.mxu0 0.0
    %486 = vmatprep.subr.mxu0 0.0
    %487 = vmatpush1.msra.mxu0 0.0
    %488 = vmatprep.subr.mxu0 0.0
    %489 = vmatpush1.msra.mxu0 0.0
    %490 = vmatprep.subr.mxu0 0.0
    %491 = vmatpush1.msra.mxu0 0.0
    %492 = vmatprep.subr.mxu0 0.0
    %493 = vmatpush1.msra.mxu0 0.0
    %494 = vmatprep.subr.mxu0 0.0
    %495 = vmatpush1.msra.mxu0 0.0
    %496 = vmatprep.subr.mxu0 0.0
    %497 = vmatpush1.msra.mxu0 0.0
    %498 = vmatprep.subr.mxu0 0.0
    %499 = vmatpush1.msra.mxu0 0.0
    %500 = vmatprep.subr.mxu0 0.0
    %501 = vmatpush1.msra.mxu0 0.0
    %502 = vmatprep.subr.mxu0 0.0
    %503 = vmatpush1.msra.mxu0 0.0
    %504 = vmatprep.subr.mxu0 0.0
    %505 = vmatpush1.msra.mxu0 0.0
    %506 = vmatprep.subr.mxu0 0.0
    %507 = vmatpush1.msra.mxu0 0.0
    %508 = vmatprep.subr.mxu0 0.0
    %509 = vmatpush1.msra.mxu0 0.0
    %510 = vmatprep.subr.mxu0 0.0
    %511 = vmatpush1.msra.mxu0 0.0
    %512 = vmatprep.subr.mxu0 0.0
    %513 = vmatpush1.msra.mxu0 0.0
    %514 = vmatprep.subr.mxu0 0.0
    %515 = vmatpush1.msra.mxu0 0.0
    %516 = vmatprep.subr.mxu0 0.0
    %517 = vmatpush1.msra.mxu0 0.0
    %518 = vmatprep.subr.mxu0 0.0
    %519 = vmatpush1.msra.mxu0 0.0
    %520 = vmatprep.subr.mxu0 0.0
    %521 = vmatpush1.msra.mxu0 0.0
    %522 = vmatprep.subr.mxu0 0.0
    %523 = vmatpush1.msra.mxu0 0.0
    %524 = vmatprep.subr.mxu0 0.0
    %525 = vmatpush1.msra.mxu0 0.0
    %526 = vmatprep.subr.mxu0 0.0
    %527 = vmatpush1.msra.mxu0 0.0
    %528 = vmatprep.subr.mxu0 0.0
    %529 = vmatpush1.msra.mxu0 0.0
    %530 = vmatprep.subr.mxu0 0.0
    %531 = vmatpush1.msra.mxu0 0.0
    %532 = vmatprep.subr.mxu0 0.0
    %533 = vmatpush1.msra.mxu0 0.0
    %534 = vmatprep.subr.mxu0 0.0
    %535 = vmatpush1.msra.mxu0 0.0
    %536 = vmatprep.mubr.f32.mxu0 0.0
    %v537 = vand.u32 %v259, 4294901760
    %v538 = vsub.f32 %v259, %v537
    %539 = vmatmul.mubr.f32.gmra.mrb[0].mxu0 %v538
    %v540 = vpop.f32.mrb[0].mxu0
    %v541 = vadd.f32 %v453, %v540
    %v542 = vpop.f32.mrb[0].mxu0
    %v543 = vadd.f32 %v455, %v542
    %544 = vmatprep.mubr.f32.mxu0 0.0
    %v545 = vand.u32 %v262, 4294901760
    %v546 = vsub.f32 %v262, %v545
    %547 = vmatmul.mubr.f32.gmra.mrb[0].mxu0 %v546
    %v548 = vpop.f32.mrb[0].mxu0
    %v549 = vadd.f32 %v460, %v548
    %v550 = vpop.f32.mrb[0].mxu0
    %v551 = vadd.f32 %v462, %v550
    %552 = vdwg.mxu0
    %v553 = vand.u32 %v203, 4294901760
    %554 = vmatprep.subr.mxu0 %v553
    %v555 = vand.u32 %v202, 4294901760
    %556 = vmatpush1.msra.mxu0 %v555
    %v557 = vand.u32 %v269, 4294901760
    %558 = vmatprep.subr.mxu0 %v557
    %v559 = vand.u32 %v266, 4294901760
    %560 = vmatpush1.msra.mxu0 %v559
    %561 = vmatprep.subr.mxu0 0.0
    %562 = vmatpush1.msra.mxu0 0.0
    %563 = vmatprep.subr.mxu0 0.0
    %564 = vmatpush1.msra.mxu0 0.0
    %565 = vmatprep.subr.mxu0 0.0
    %566 = vmatpush1.msra.mxu0 0.0
    %567 = vmatprep.subr.mxu0 0.0
    %568 = vmatpush1.msra.mxu0 0.0
    %569 = vmatprep.subr.mxu0 0.0
    %570 = vmatpush1.msra.mxu0 0.0
    %571 = vmatprep.subr.mxu0 0.0
    %572 = vmatpush1.msra.mxu0 0.0
    %573 = vmatprep.subr.mxu0 0.0
    %574 = vmatpush1.msra.mxu0 0.0
    %575 = vmatprep.subr.mxu0 0.0
    %576 = vmatpush1.msra.mxu0 0.0
    %577 = vmatprep.subr.mxu0 0.0
    %578 = vmatpush1.msra.mxu0 0.0
    %579 = vmatprep.subr.mxu0 0.0
    %580 = vmatpush1.msra.mxu0 0.0
    %581 = vmatprep.subr.mxu0 0.0
    %582 = vmatpush1.msra.mxu0 0.0
    %583 = vmatprep.subr.mxu0 0.0
    %584 = vmatpush1.msra.mxu0 0.0
    %585 = vmatprep.subr.mxu0 0.0
    %586 = vmatpush1.msra.mxu0 0.0
    %587 = vmatprep.subr.mxu0 0.0
    %588 = vmatpush1.msra.mxu0 0.0
    %589 = vmatprep.subr.mxu0 0.0
    %590 = vmatpush1.msra.mxu0 0.0
    %591 = vmatprep.subr.mxu0 0.0
    %592 = vmatpush1.msra.mxu0 0.0
    %593 = vmatprep.subr.mxu0 0.0
    %594 = vmatpush1.msra.mxu0 0.0
    %595 = vmatprep.subr.mxu0 0.0
    %596 = vmatpush1.msra.mxu0 0.0
    %597 = vmatprep.subr.mxu0 0.0
    %598 = vmatpush1.msra.mxu0 0.0
    %599 = vmatprep.subr.mxu0 0.0
    %600 = vmatpush1.msra.mxu0 0.0
    %601 = vmatprep.subr.mxu0 0.0
    %602 = vmatpush1.msra.mxu0 0.0
    %603 = vmatprep.subr.mxu0 0.0
    %604 = vmatpush1.msra.mxu0 0.0
    %605 = vmatprep.subr.mxu0 0.0
    %606 = vmatpush1.msra.mxu0 0.0
    %607 = vmatprep.subr.mxu0 0.0
    %608 = vmatpush1.msra.mxu0 0.0
    %609 = vmatprep.subr.mxu0 0.0
    %610 = vmatpush1.msra.mxu0 0.0
    %611 = vmatprep.subr.mxu0 0.0
    %612 = vmatpush1.msra.mxu0 0.0
    %613 = vmatprep.subr.mxu0 0.0
    %614 = vmatpush1.msra.mxu0 0.0
    %615 = vmatprep.subr.mxu0 0.0
    %616 = vmatpush1.msra.mxu0 0.0
    %617 = vmatprep.subr.mxu0 0.0
    %618 = vmatpush1.msra.mxu0 0.0
    %619 = vmatprep.subr.mxu0 0.0
    %620 = vmatpush1.msra.mxu0 0.0
    %621 = vmatprep.mubr.f32.mxu0 0.0
    %v622 = vand.u32 %v259, 4294901760
    %v623 = vsub.f32 %v259, %v622
    %v624 = vand.u32 %v623, 4294901760
    %625 = vmatmul.mubr.f32.gmra.mrb[0].mxu0 %v624
    %v626 = vpop.f32.mrb[0].mxu0
    %v627 = vadd.f32 %v541, %v626
    %v628 = vpop.f32.mrb[0].mxu0
    %v629 = vadd.f32 %v543, %v628
    %630 = vmatprep.mubr.f32.mxu0 0.0
    %v631 = vand.u32 %v262, 4294901760
    %v632 = vsub.f32 %v262, %v631
    %v633 = vand.u32 %v632, 4294901760
    %634 = vmatmul.mubr.f32.gmra.mrb[0].mxu0 %v633
    %v635 = vpop.f32.mrb[0].mxu0
    %v636 = vadd.f32 %v549, %v635
    %v637 = vpop.f32.mrb[0].mxu0
    %v638 = vadd.f32 %v551, %v637
    %639 = vdwg.mxu0
    %v640 = vand.u32 %v203, 4294901760
    %v641 = vsub.f32 %v203, %v640
    %v642 = vand.u32 %v641, 4294901760
    %643 = vmatprep.subr.mxu0 %v642
    %v644 = vand.u32 %v202, 4294901760
    %v645 = vsub.f32 %v202, %v644
    %v646 = vand.u32 %v645, 4294901760
    %647 = vmatpush1.msra.mxu0 %v646
    %v648 = vand.u32 %v269, 4294901760
    %v649 = vsub.f32 %v269, %v648
    %v650 = vand.u32 %v649, 4294901760
    %651 = vmatprep.subr.mxu0 %v650
    %v652 = vand.u32 %v266, 4294901760
    %v653 = vsub.f32 %v266, %v652
    %v654 = vand.u32 %v653, 4294901760
    %655 = vmatpush1.msra.mxu0 %v654
    %656 = vmatprep.subr.mxu0 0.0
    %657 = vmatpush1.msra.mxu0 0.0
    %658 = vmatprep.subr.mxu0 0.0
    %659 = vmatpush1.msra.mxu0 0.0
    %660 = vmatprep.subr.mxu0 0.0
    %661 = vmatpush1.msra.mxu0 0.0
    %662 = vmatprep.subr.mxu0 0.0
    %663 = vmatpush1.msra.mxu0 0.0
    %664 = vmatprep.subr.mxu0 0.0
    %665 = vmatpush1.msra.mxu0 0.0
    %666 = vmatprep.subr.mxu0 0.0
    %667 = vmatpush1.msra.mxu0 0.0
    %668 = vmatprep.subr.mxu0 0.0
    %669 = vmatpush1.msra.mxu0 0.0
    %670 = vmatprep.subr.mxu0 0.0
    %671 = vmatpush1.msra.mxu0 0.0
    %672 = vmatprep.subr.mxu0 0.0
    %673 = vmatpush1.msra.mxu0 0.0
    %674 = vmatprep.subr.mxu0 0.0
    %675 = vmatpush1.msra.mxu0 0.0
    %676 = vmatprep.subr.mxu0 0.0
    %677 = vmatpush1.msra.mxu0 0.0
    %678 = vmatprep.subr.mxu0 0.0
    %679 = vmatpush1.msra.mxu0 0.0
    %680 = vmatprep.subr.mxu0 0.0
    %681 = vmatpush1.msra.mxu0 0.0
    %682 = vmatprep.subr.mxu0 0.0
    %683 = vmatpush1.msra.mxu0 0.0
    %684 = vmatprep.subr.mxu0 0.0
    %685 = vmatpush1.msra.mxu0 0.0
    %686 = vmatprep.subr.mxu0 0.0
    %687 = vmatpush1.msra.mxu0 0.0
    %688 = vmatprep.subr.mxu0 0.0
    %689 = vmatpush1.msra.mxu0 0.0
    %690 = vmatprep.subr.mxu0 0.0
    %691 = vmatpush1.msra.mxu0 0.0
    %692 = vmatprep.subr.mxu0 0.0
    %693 = vmatpush1.msra.mxu0 0.0
    %694 = vmatprep.subr.mxu0 0.0
    %695 = vmatpush1.msra.mxu0 0.0
    %696 = vmatprep.subr.mxu0 0.0
    %697 = vmatpush1.msra.mxu0 0.0
    %698 = vmatprep.subr.mxu0 0.0
    %699 = vmatpush1.msra.mxu0 0.0
    %700 = vmatprep.subr.mxu0 0.0
    %701 = vmatpush1.msra.mxu0 0.0
    %702 = vmatprep.subr.mxu0 0.0
    %703 = vmatpush1.msra.mxu0 0.0
    %704 = vmatprep.subr.mxu0 0.0
    %705 = vmatpush1.msra.mxu0 0.0
    %706 = vmatprep.subr.mxu0 0.0
    %707 = vmatpush1.msra.mxu0 0.0
    %708 = vmatprep.subr.mxu0 0.0
    %709 = vmatpush1.msra.mxu0 0.0
    %710 = vmatprep.subr.mxu0 0.0
    %711 = vmatpush1.msra.mxu0 0.0
    %712 = vmatprep.subr.mxu0 0.0
    %713 = vmatpush1.msra.mxu0 0.0
    %714 = vmatprep.subr.mxu0 0.0
    %715 = vmatpush1.msra.mxu0 0.0
    %716 = vmatprep.mubr.f32.mxu0 0.0
    %v717 = vand.u32 %v259, 4294901760
    %718 = vmatmul.mubr.f32.gmra.mrb[0].mxu0 %v717
    %v719 = vpop.f32.mrb[0].mxu0
    %v720 = vadd.f32 %v627, %v719
    %v721 = vpop.f32.mrb[0].mxu0
    %v722 = vadd.f32 %v629, %v721
    %723 = vmatprep.mubr.f32.mxu0 0.0
    %v724 = vand.u32 %v262, 4294901760
    %725 = vmatmul.mubr.f32.gmra.mrb[0].mxu0 %v724
    %v726 = vpop.f32.mrb[0].mxu0
    %v727 = vadd.f32 %v636, %v726
    %v728 = vpop.f32.mrb[0].mxu0
    %v729 = vadd.f32 %v638, %v728
    %730 = vdwg.mxu0
    %v731 = vand.u32 %v203, 4294901760
    %732 = vmatprep.subr.mxu0 %v731
    %v733 = vand.u32 %v202, 4294901760
    %734 = vmatpush1.msra.mxu0 %v733
    %v735 = vand.u32 %v269, 4294901760
    %736 = vmatprep.subr.mxu0 %v735
    %v737 = vand.u32 %v266, 4294901760
    %738 = vmatpush1.msra.mxu0 %v737
    %739 = vmatprep.subr.mxu0 0.0
    %740 = vmatpush1.msra.mxu0 0.0
    %741 = vmatprep.subr.mxu0 0.0
    %742 = vmatpush1.msra.mxu0 0.0
    %743 = vmatprep.subr.mxu0 0.0
    %744 = vmatpush1.msra.mxu0 0.0
    %745 = vmatprep.subr.mxu0 0.0
    %746 = vmatpush1.msra.mxu0 0.0
    %747 = vmatprep.subr.mxu0 0.0
    %748 = vmatpush1.msra.mxu0 0.0
    %749 = vmatprep.subr.mxu0 0.0
    %750 = vmatpush1.msra.mxu0 0.0
    %751 = vmatprep.subr.mxu0 0.0
    %752 = vmatpush1.msra.mxu0 0.0
    %753 = vmatprep.subr.mxu0 0.0
    %754 = vmatpush1.msra.mxu0 0.0
    %755 = vmatprep.subr.mxu0 0.0
    %756 = vmatpush1.msra.mxu0 0.0
    %757 = vmatprep.subr.mxu0 0.0
    %758 = vmatpush1.msra.mxu0 0.0
    %759 = vmatprep.subr.mxu0 0.0
    %760 = vmatpush1.msra.mxu0 0.0
    %761 = vmatprep.subr.mxu0 0.0
    %762 = vmatpush1.msra.mxu0 0.0
    %763 = vmatprep.subr.mxu0 0.0
    %764 = vmatpush1.msra.mxu0 0.0
    %765 = vmatprep.subr.mxu0 0.0
    %766 = vmatpush1.msra.mxu0 0.0
    %767 = vmatprep.subr.mxu0 0.0
    %768 = vmatpush1.msra.mxu0 0.0
    %769 = vmatprep.subr.mxu0 0.0
    %770 = vmatpush1.msra.mxu0 0.0
    %771 = vmatprep.subr.mxu0 0.0
    %772 = vmatpush1.msra.mxu0 0.0
    %773 = vmatprep.subr.mxu0 0.0
    %774 = vmatpush1.msra.mxu0 0.0
    %775 = vmatprep.subr.mxu0 0.0
    %776 = vmatpush1.msra.mxu0 0.0
    %777 = vmatprep.subr.mxu0 0.0
    %778 = vmatpush1.msra.mxu0 0.0
    %779 = vmatprep.subr.mxu0 0.0
    %780 = vmatpush1.msra.mxu0 0.0
    %781 = vmatprep.subr.mxu0 0.0
    %782 = vmatpush1.msra.mxu0 0.0
    %783 = vmatprep.subr.mxu0 0.0
    %784 = vmatpush1.msra.mxu0 0.0
    %785 = vmatprep.subr.mxu0 0.0
    %786 = vmatpush1.msra.mxu0 0.0
    %787 = vmatprep.subr.mxu0 0.0
    %788 = vmatpush1.msra.mxu0 0.0
    %789 = vmatprep.subr.mxu0 0.0
    %790 = vmatpush1.msra.mxu0 0.0
    %791 = vmatprep.subr.mxu0 0.0
    %792 = vmatpush1.msra.mxu0 0.0
    %793 = vmatprep.subr.mxu0 0.0
    %794 = vmatpush1.msra.mxu0 0.0
    %795 = vmatprep.subr.mxu0 0.0
    %796 = vmatpush1.msra.mxu0 0.0
    %797 = vmatprep.subr.mxu0 0.0
    %798 = vmatpush1.msra.mxu0 0.0
    %799 = vmatprep.mubr.f32.mxu0 0.0
    %v800 = vand.u32 %v259, 4294901760
    %801 = vmatmul.mubr.f32.gmra.mrb[0].mxu0 %v800
    %v802 = vpop.f32.mrb[0].mxu0
    %v803 = vadd.f32 %v720, %v802
    %v804 = vpop.f32.mrb[0].mxu0
    %v805 = vadd.f32 %v722, %v804
    %806 = vmatprep.mubr.f32.mxu0 0.0
    %v807 = vand.u32 %v262, 4294901760
    %808 = vmatmul.mubr.f32.gmra.mrb[0].mxu0 %v807
    %v809 = vpop.f32.mrb[0].mxu0
    %v810 = vadd.f32 %v727, %v809
    %v811 = vpop.f32.mrb[0].mxu0
    %v812 = vadd.f32 %v729, %v811
    %813 = vdwg.mxu0
    %814 = vmatprep.subr.mxu0 0.0
    %v815 = vand.u32 %v204, 4294901760
    %816 = vmatpush1.msra.mxu0 %v815
    %817 = vmatprep.subr.mxu0 0.0
    %v818 = vand.u32 %v272, 4294901760
    %819 = vmatpush1.msra.mxu0 %v818
    %820 = vmatprep.subr.mxu0 0.0
    %821 = vmatpush1.msra.mxu0 0.0
    %822 = vmatprep.subr.mxu0 0.0
    %823 = vmatpush1.msra.mxu0 0.0
    %824 = vmatprep.subr.mxu0 0.0
    %825 = vmatpush1.msra.mxu0 0.0
    %826 = vmatprep.subr.mxu0 0.0
    %827 = vmatpush1.msra.mxu0 0.0
    %828 = vmatprep.subr.mxu0 0.0
    %829 = vmatpush1.msra.mxu0 0.0
    %830 = vmatprep.subr.mxu0 0.0
    %831 = vmatpush1.msra.mxu0 0.0
    %832 = vmatprep.subr.mxu0 0.0
    %833 = vmatpush1.msra.mxu0 0.0
    %834 = vmatprep.subr.mxu0 0.0
    %835 = vmatpush1.msra.mxu0 0.0
    %836 = vmatprep.subr.mxu0 0.0
    %837 = vmatpush1.msra.mxu0 0.0
    %838 = vmatprep.subr.mxu0 0.0
    %839 = vmatpush1.msra.mxu0 0.0
    %840 = vmatprep.subr.mxu0 0.0
    %841 = vmatpush1.msra.mxu0 0.0
    %842 = vmatprep.subr.mxu0 0.0
    %843 = vmatpush1.msra.mxu0 0.0
    %844 = vmatprep.subr.mxu0 0.0
    %845 = vmatpush1.msra.mxu0 0.0
    %846 = vmatprep.subr.mxu0 0.0
    %847 = vmatpush1.msra.mxu0 0.0
    %848 = vmatprep.subr.mxu0 0.0
    %849 = vmatpush1.msra.mxu0 0.0
    %850 = vmatprep.subr.mxu0 0.0
    %851 = vmatpush1.msra.mxu0 0.0
    %852 = vmatprep.subr.mxu0 0.0
    %853 = vmatpush1.msra.mxu0 0.0
    %854 = vmatprep.subr.mxu0 0.0
    %855 = vmatpush1.msra.mxu0 0.0
    %856 = vmatprep.subr.mxu0 0.0
    %857 = vmatpush1.msra.mxu0 0.0
    %858 = vmatprep.subr.mxu0 0.0
    %859 = vmatpush1.msra.mxu0 0.0
    %860 = vmatprep.subr.mxu0 0.0
    %861 = vmatpush1.msra.mxu0 0.0
    %862 = vmatprep.subr.mxu0 0.0
    %863 = vmatpush1.msra.mxu0 0.0
    %864 = vmatprep.subr.mxu0 0.0
    %865 = vmatpush1.msra.mxu0 0.0
    %866 = vmatprep.subr.mxu0 0.0
    %867 = vmatpush1.msra.mxu0 0.0
    %868 = vmatprep.subr.mxu0 0.0
    %869 = vmatpush1.msra.mxu0 0.0
    %870 = vmatprep.subr.mxu0 0.0
    %871 = vmatpush1.msra.mxu0 0.0
    %872 = vmatprep.subr.mxu0 0.0
    %873 = vmatpush1.msra.mxu0 0.0
    %874 = vmatprep.subr.mxu0 0.0
    %875 = vmatpush1.msra.mxu0 0.0
    %876 = vmatprep.subr.mxu0 0.0
    %877 = vmatpush1.msra.mxu0 0.0
    %878 = vmatprep.subr.mxu0 0.0
    %879 = vmatpush1.msra.mxu0 0.0
    %880 = vmatprep.mubr.f32.mxu0 0.0
    %v881 = vand.u32 %v259, 4294901760
    %v882 = vsub.f32 %v259, %v881
    %v883 = vand.u32 %v882, 4294901760
    %v884 = vsub.f32 %v882, %v883
    %v885 = vand.u32 %v884, 4294901760
    %886 = vmatmul.mubr.f32.gmra.mrb[0].mxu0 %v885
    %v887 = vpop.f32.mrb[0].mxu0
    %v888 = vadd.f32 %v253, %v887
    %v889 = vpop.f32.mrb[0].mxu0
    %890 = vmatprep.mubr.f32.mxu0 0.0
    %v891 = vand.u32 %v262, 4294901760
    %v892 = vsub.f32 %v262, %v891
    %v893 = vand.u32 %v892, 4294901760
    %v894 = vsub.f32 %v892, %v893
    %v895 = vand.u32 %v894, 4294901760
    %896 = vmatmul.mubr.f32.gmra.mrb[0].mxu0 %v895
    %v897 = vpop.f32.mrb[0].mxu0
    %v898 = vadd.f32 %v253, %v897
    %v899 = vpop.f32.mrb[0].mxu0
    %900 = vdwg.mxu0
    %901 = vmatprep.subr.mxu0 0.0
    %v902 = vand.u32 %v204, 4294901760
    %v903 = vsub.f32 %v204, %v902
    %v904 = vand.u32 %v903, 4294901760
    %v905 = vsub.f32 %v903, %v904
    %v906 = vand.u32 %v905, 4294901760
    %907 = vmatpush1.msra.mxu0 %v906
    %908 = vmatprep.subr.mxu0 0.0
    %v909 = vand.u32 %v272, 4294901760
    %v910 = vsub.f32 %v272, %v909
    %v911 = vand.u32 %v910, 4294901760
    %v912 = vsub.f32 %v910, %v911
    %v913 = vand.u32 %v912, 4294901760
    %914 = vmatpush1.msra.mxu0 %v913
    %915 = vmatprep.subr.mxu0 0.0
    %916 = vmatpush1.msra.mxu0 0.0
    %917 = vmatprep.subr.mxu0 0.0
    %918 = vmatpush1.msra.mxu0 0.0
    %919 = vmatprep.subr.mxu0 0.0
    %920 = vmatpush1.msra.mxu0 0.0
    %921 = vmatprep.subr.mxu0 0.0
    %922 = vmatpush1.msra.mxu0 0.0
    %923 = vmatprep.subr.mxu0 0.0
    %924 = vmatpush1.msra.mxu0 0.0
    %925 = vmatprep.subr.mxu0 0.0
    %926 = vmatpush1.msra.mxu0 0.0
    %927 = vmatprep.subr.mxu0 0.0
    %928 = vmatpush1.msra.mxu0 0.0
    %929 = vmatprep.subr.mxu0 0.0
    %930 = vmatpush1.msra.mxu0 0.0
    %931 = vmatprep.subr.mxu0 0.0
    %932 = vmatpush1.msra.mxu0 0.0
    %933 = vmatprep.subr.mxu0 0.0
    %934 = vmatpush1.msra.mxu0 0.0
    %935 = vmatprep.subr.mxu0 0.0
    %936 = vmatpush1.msra.mxu0 0.0
    %937 = vmatprep.subr.mxu0 0.0
    %938 = vmatpush1.msra.mxu0 0.0
    %939 = vmatprep.subr.mxu0 0.0
    %940 = vmatpush1.msra.mxu0 0.0
    %941 = vmatprep.subr.mxu0 0.0
    %942 = vmatpush1.msra.mxu0 0.0
    %943 = vmatprep.subr.mxu0 0.0
    %944 = vmatpush1.msra.mxu0 0.0
    %945 = vmatprep.subr.mxu0 0.0
    %946 = vmatpush1.msra.mxu0 0.0
    %947 = vmatprep.subr.mxu0 0.0
    %948 = vmatpush1.msra.mxu0 0.0
    %949 = vmatprep.subr.mxu0 0.0
    %950 = vmatpush1.msra.mxu0 0.0
    %951 = vmatprep.subr.mxu0 0.0
    %952 = vmatpush1.msra.mxu0 0.0
    %953 = vmatprep.subr.mxu0 0.0
    %954 = vmatpush1.msra.mxu0 0.0
    %955 = vmatprep.subr.mxu0 0.0
    %956 = vmatpush1.msra.mxu0 0.0
    %957 = vmatprep.subr.mxu0 0.0
    %958 = vmatpush1.msra.mxu0 0.0
    %959 = vmatprep.subr.mxu0 0.0
    %960 = vmatpush1.msra.mxu0 0.0
    %961 = vmatprep.subr.mxu0 0.0
    %962 = vmatpush1.msra.mxu0 0.0
    %963 = vmatprep.subr.mxu0 0.0
    %964 = vmatpush1.msra.mxu0 0.0
    %965 = vmatprep.subr.mxu0 0.0
    %966 = vmatpush1.msra.mxu0 0.0
    %967 = vmatprep.subr.mxu0 0.0
    %968 = vmatpush1.msra.mxu0 0.0
    %969 = vmatprep.subr.mxu0 0.0
    %970 = vmatpush1.msra.mxu0 0.0
    %971 = vmatprep.subr.mxu0 0.0
    %972 = vmatpush1.msra.mxu0 0.0
    %973 = vmatprep.subr.mxu0 0.0
    %974 = vmatpush1.msra.mxu0 0.0
    %975 = vmatprep.mubr.f32.mxu0 0.0
    %v976 = vand.u32 %v259, 4294901760
    %977 = vmatmul.mubr.f32.gmra.mrb[0].mxu0 %v976
    %v978 = vpop.f32.mrb[0].mxu0
    %v979 = vadd.f32 %v888, %v978
    %v980 = vpop.f32.mrb[0].mxu0
    %981 = vmatprep.mubr.f32.mxu0 0.0
    %v982 = vand.u32 %v262, 4294901760
    %983 = vmatmul.mubr.f32.gmra.mrb[0].mxu0 %v982
    %v984 = vpop.f32.mrb[0].mxu0
    %v985 = vadd.f32 %v898, %v984
    %v986 = vpop.f32.mrb[0].mxu0
    %987 = vdwg.mxu0
    %988 = vmatprep.subr.mxu0 0.0
    %v989 = vand.u32 %v204, 4294901760
    %v990 = vsub.f32 %v204, %v989
    %991 = vmatpush1.msra.mxu0 %v990
    %992 = vmatprep.subr.mxu0 0.0
    %v993 = vand.u32 %v272, 4294901760
    %v994 = vsub.f32 %v272, %v993
    %995 = vmatpush1.msra.mxu0 %v994
    %996 = vmatprep.subr.mxu0 0.0
    %997 = vmatpush1.msra.mxu0 0.0
    %998 = vmatprep.subr.mxu0 0.0
    %999 = vmatpush1.msra.mxu0 0.0
    %1000 = vmatprep.subr.mxu0 0.0
    %1001 = vmatpush1.msra.mxu0 0.0
    %1002 = vmatprep.subr.mxu0 0.0
    %1003 = vmatpush1.msra.mxu0 0.0
    %1004 = vmatprep.subr.mxu0 0.0
    %1005 = vmatpush1.msra.mxu0 0.0
    %1006 = vmatprep.subr.mxu0 0.0
    %1007 = vmatpush1.msra.mxu0 0.0
    %1008 = vmatprep.subr.mxu0 0.0
    %1009 = vmatpush1.msra.mxu0 0.0
    %1010 = vmatprep.subr.mxu0 0.0
    %1011 = vmatpush1.msra.mxu0 0.0
    %1012 = vmatprep.subr.mxu0 0.0
    %1013 = vmatpush1.msra.mxu0 0.0
    %1014 = vmatprep.subr.mxu0 0.0
    %1015 = vmatpush1.msra.mxu0 0.0
    %1016 = vmatprep.subr.mxu0 0.0
    %1017 = vmatpush1.msra.mxu0 0.0
    %1018 = vmatprep.subr.mxu0 0.0
    %1019 = vmatpush1.msra.mxu0 0.0
    %1020 = vmatprep.subr.mxu0 0.0
    %1021 = vmatpush1.msra.mxu0 0.0
    %1022 = vmatprep.subr.mxu0 0.0
    %1023 = vmatpush1.msra.mxu0 0.0
    %1024 = vmatprep.subr.mxu0 0.0
    %1025 = vmatpush1.msra.mxu0 0.0
    %1026 = vmatprep.subr.mxu0 0.0
    %1027 = vmatpush1.msra.mxu0 0.0
    %1028 = vmatprep.subr.mxu0 0.0
    %1029 = vmatpush1.msra.mxu0 0.0
    %1030 = vmatprep.subr.mxu0 0.0
    %1031 = vmatpush1.msra.mxu0 0.0
    %1032 = vmatprep.subr.mxu0 0.0
    %1033 = vmatpush1.msra.mxu0 0.0
    %1034 = vmatprep.subr.mxu0 0.0
    %1035 = vmatpush1.msra.mxu0 0.0
    %1036 = vmatprep.subr.mxu0 0.0
    %1037 = vmatpush1.msra.mxu0 0.0
    %1038 = vmatprep.subr.mxu0 0.0
    %1039 = vmatpush1.msra.mxu0 0.0
    %1040 = vmatprep.subr.mxu0 0.0
    %1041 = vmatpush1.msra.mxu0 0.0
    %1042 = vmatprep.subr.mxu0 0.0
    %1043 = vmatpush1.msra.mxu0 0.0
    %1044 = vmatprep.subr.mxu0 0.0
    %1045 = vmatpush1.msra.mxu0 0.0
    %1046 = vmatprep.subr.mxu0 0.0
    %1047 = vmatpush1.msra.mxu0 0.0
    %1048 = vmatprep.subr.mxu0 0.0
    %1049 = vmatpush1.msra.mxu0 0.0
    %1050 = vmatprep.subr.mxu0 0.0
    %1051 = vmatpush1.msra.mxu0 0.0
    %1052 = vmatprep.subr.mxu0 0.0
    %1053 = vmatpush1.msra.mxu0 0.0
    %1054 = vmatprep.subr.mxu0 0.0
    %1055 = vmatpush1.msra.mxu0 0.0
    %1056 = vmatprep.mubr.f32.mxu0 0.0
    %v1057 = vand.u32 %v259, 4294901760
    %v1058 = vsub.f32 %v259, %v1057
    %1059 = vmatmul.mubr.f32.gmra.mrb[0].mxu0 %v1058
    %v1060 = vpop.f32.mrb[0].mxu0
    %v1061 = vadd.f32 %v979, %v1060
    %v1062 = vpop.f32.mrb[0].mxu0
    %1063 = vmatprep.mubr.f32.mxu0 0.0
    %v1064 = vand.u32 %v262, 4294901760
    %v1065 = vsub.f32 %v262, %v1064
    %1066 = vmatmul.mubr.f32.gmra.mrb[0].mxu0 %v1065
    %v1067 = vpop.f32.mrb[0].mxu0
    %v1068 = vadd.f32 %v985, %v1067
    %v1069 = vpop.f32.mrb[0].mxu0
    %1070 = vdwg.mxu0
    %1071 = vmatprep.subr.mxu0 0.0
    %v1072 = vand.u32 %v204, 4294901760
    %1073 = vmatpush1.msra.mxu0 %v1072
    %1074 = vmatprep.subr.mxu0 0.0
    %v1075 = vand.u32 %v272, 4294901760
    %1076 = vmatpush1.msra.mxu0 %v1075
    %1077 = vmatprep.subr.mxu0 0.0
    %1078 = vmatpush1.msra.mxu0 0.0
    %1079 = vmatprep.subr.mxu0 0.0
    %1080 = vmatpush1.msra.mxu0 0.0
    %1081 = vmatprep.subr.mxu0 0.0
    %1082 = vmatpush1.msra.mxu0 0.0
    %1083 = vmatprep.subr.mxu0 0.0
    %1084 = vmatpush1.msra.mxu0 0.0
    %1085 = vmatprep.subr.mxu0 0.0
    %1086 = vmatpush1.msra.mxu0 0.0
    %1087 = vmatprep.subr.mxu0 0.0
    %1088 = vmatpush1.msra.mxu0 0.0
    %1089 = vmatprep.subr.mxu0 0.0
    %1090 = vmatpush1.msra.mxu0 0.0
    %1091 = vmatprep.subr.mxu0 0.0
    %1092 = vmatpush1.msra.mxu0 0.0
    %1093 = vmatprep.subr.mxu0 0.0
    %1094 = vmatpush1.msra.mxu0 0.0
    %1095 = vmatprep.subr.mxu0 0.0
    %1096 = vmatpush1.msra.mxu0 0.0
    %1097 = vmatprep.subr.mxu0 0.0
    %1098 = vmatpush1.msra.mxu0 0.0
    %1099 = vmatprep.subr.mxu0 0.0
    %1100 = vmatpush1.msra.mxu0 0.0
    %1101 = vmatprep.subr.mxu0 0.0
    %1102 = vmatpush1.msra.mxu0 0.0
    %1103 = vmatprep.subr.mxu0 0.0
    %1104 = vmatpush1.msra.mxu0 0.0
    %1105 = vmatprep.subr.mxu0 0.0
    %1106 = vmatpush1.msra.mxu0 0.0
    %1107 = vmatprep.subr.mxu0 0.0
    %1108 = vmatpush1.msra.mxu0 0.0
    %1109 = vmatprep.subr.mxu0 0.0
    %1110 = vmatpush1.msra.mxu0 0.0
    %1111 = vmatprep.subr.mxu0 0.0
    %1112 = vmatpush1.msra.mxu0 0.0
    %1113 = vmatprep.subr.mxu0 0.0
    %1114 = vmatpush1.msra.mxu0 0.0
    %1115 = vmatprep.subr.mxu0 0.0
    %1116 = vmatpush1.msra.mxu0 0.0
    %1117 = vmatprep.subr.mxu0 0.0
    %1118 = vmatpush1.msra.mxu0 0.0
    %1119 = vmatprep.subr.mxu0 0.0
    %1120 = vmatpush1.msra.mxu0 0.0
    %1121 = vmatprep.subr.mxu0 0.0
    %1122 = vmatpush1.msra.mxu0 0.0
    %1123 = vmatprep.subr.mxu0 0.0
    %1124 = vmatpush1.msra.mxu0 0.0
    %1125 = vmatprep.subr.mxu0 0.0
    %1126 = vmatpush1.msra.mxu0 0.0
    %1127 = vmatprep.subr.mxu0 0.0
    %1128 = vmatpush1.msra.mxu0 0.0
    %1129 = vmatprep.subr.mxu0 0.0
    %1130 = vmatpush1.msra.mxu0 0.0
    %1131 = vmatprep.subr.mxu0 0.0
    %1132 = vmatpush1.msra.mxu0 0.0
    %1133 = vmatprep.subr.mxu0 0.0
    %1134 = vmatpush1.msra.mxu0 0.0
    %1135 = vmatprep.subr.mxu0 0.0
    %1136 = vmatpush1.msra.mxu0 0.0
    %1137 = vmatprep.mubr.f32.mxu0 0.0
    %v1138 = vand.u32 %v259, 4294901760
    %v1139 = vsub.f32 %v259, %v1138
    %v1140 = vand.u32 %v1139, 4294901760
    %1141 = vmatmul.mubr.f32.gmra.mrb[0].mxu0 %v1140
    %v1142 = vpop.f32.mrb[0].mxu0
    %v1143 = vadd.f32 %v1061, %v1142
    %v1144 = vpop.f32.mrb[0].mxu0
    %1145 = vmatprep.mubr.f32.mxu0 0.0
    %v1146 = vand.u32 %v262, 4294901760
    %v1147 = vsub.f32 %v262, %v1146
    %v1148 = vand.u32 %v1147, 4294901760
    %1149 = vmatmul.mubr.f32.gmra.mrb[0].mxu0 %v1148
    %v1150 = vpop.f32.mrb[0].mxu0
    %v1151 = vadd.f32 %v1068, %v1150
    %v1152 = vpop.f32.mrb[0].mxu0
    %1153 = vdwg.mxu0
    %1154 = vmatprep.subr.mxu0 0.0
    %v1155 = vand.u32 %v204, 4294901760
    %v1156 = vsub.f32 %v204, %v1155
    %v1157 = vand.u32 %v1156, 4294901760
    %1158 = vmatpush1.msra.mxu0 %v1157
    %1159 = vmatprep.subr.mxu0 0.0
    %v1160 = vand.u32 %v272, 4294901760
    %v1161 = vsub.f32 %v272, %v1160
    %v1162 = vand.u32 %v1161, 4294901760
    %1163 = vmatpush1.msra.mxu0 %v1162
    %1164 = vmatprep.subr.mxu0 0.0
    %1165 = vmatpush1.msra.mxu0 0.0
    %1166 = vmatprep.subr.mxu0 0.0
    %1167 = vmatpush1.msra.mxu0 0.0
    %1168 = vmatprep.subr.mxu0 0.0
    %1169 = vmatpush1.msra.mxu0 0.0
    %1170 = vmatprep.subr.mxu0 0.0
    %1171 = vmatpush1.msra.mxu0 0.0
    %1172 = vmatprep.subr.mxu0 0.0
    %1173 = vmatpush1.msra.mxu0 0.0
    %1174 = vmatprep.subr.mxu0 0.0
    %1175 = vmatpush1.msra.mxu0 0.0
    %1176 = vmatprep.subr.mxu0 0.0
    %1177 = vmatpush1.msra.mxu0 0.0
    %1178 = vmatprep.subr.mxu0 0.0
    %1179 = vmatpush1.msra.mxu0 0.0
    %1180 = vmatprep.subr.mxu0 0.0
    %1181 = vmatpush1.msra.mxu0 0.0
    %1182 = vmatprep.subr.mxu0 0.0
    %1183 = vmatpush1.msra.mxu0 0.0
    %1184 = vmatprep.subr.mxu0 0.0
    %1185 = vmatpush1.msra.mxu0 0.0
    %1186 = vmatprep.subr.mxu0 0.0
    %1187 = vmatpush1.msra.mxu0 0.0
    %1188 = vmatprep.subr.mxu0 0.0
    %1189 = vmatpush1.msra.mxu0 0.0
    %1190 = vmatprep.subr.mxu0 0.0
    %1191 = vmatpush1.msra.mxu0 0.0
    %1192 = vmatprep.subr.mxu0 0.0
    %1193 = vmatpush1.msra.mxu0 0.0
    %1194 = vmatprep.subr.mxu0 0.0
    %1195 = vmatpush1.msra.mxu0 0.0
    %1196 = vmatprep.subr.mxu0 0.0
    %1197 = vmatpush1.msra.mxu0 0.0
    %1198 = vmatprep.subr.mxu0 0.0
    %1199 = vmatpush1.msra.mxu0 0.0
    %1200 = vmatprep.subr.mxu0 0.0
    %1201 = vmatpush1.msra.mxu0 0.0
    %1202 = vmatprep.subr.mxu0 0.0
    %1203 = vmatpush1.msra.mxu0 0.0
    %1204 = vmatprep.subr.mxu0 0.0
    %1205 = vmatpush1.msra.mxu0 0.0
    %1206 = vmatprep.subr.mxu0 0.0
    %1207 = vmatpush1.msra.mxu0 0.0
    %1208 = vmatprep.subr.mxu0 0.0
    %1209 = vmatpush1.msra.mxu0 0.0
    %1210 = vmatprep.subr.mxu0 0.0
    %1211 = vmatpush1.msra.mxu0 0.0
    %1212 = vmatprep.subr.mxu0 0.0
    %1213 = vmatpush1.msra.mxu0 0.0
    %1214 = vmatprep.subr.mxu0 0.0
    %1215 = vmatpush1.msra.mxu0 0.0
    %1216 = vmatprep.subr.mxu0 0.0
    %1217 = vmatpush1.msra.mxu0 0.0
    %1218 = vmatprep.subr.mxu0 0.0
    %1219 = vmatpush1.msra.mxu0 0.0
    %1220 = vmatprep.subr.mxu0 0.0
    %1221 = vmatpush1.msra.mxu0 0.0
    %1222 = vmatprep.subr.mxu0 0.0
    %1223 = vmatpush1.msra.mxu0 0.0
    %1224 = vmatprep.mubr.f32.mxu0 0.0
    %v1225 = vand.u32 %v259, 4294901760
    %1226 = vmatmul.mubr.f32.gmra.mrb[0].mxu0 %v1225
    %v1227 = vpop.f32.mrb[0].mxu0
    %v1228 = vadd.f32 %v1143, %v1227
    %v1229 = vpop.f32.mrb[0].mxu0
    %1230 = vmatprep.mubr.f32.mxu0 0.0
    %v1231 = vand.u32 %v262, 4294901760
    %1232 = vmatmul.mubr.f32.gmra.mrb[0].mxu0 %v1231
    %v1233 = vpop.f32.mrb[0].mxu0
    %v1234 = vadd.f32 %v1151, %v1233
    %v1235 = vpop.f32.mrb[0].mxu0
    %1236 = vdwg.mxu0
    %1237 = vmatprep.subr.mxu0 0.0
    %v1238 = vand.u32 %v204, 4294901760
    %1239 = vmatpush1.msra.mxu0 %v1238
    %1240 = vmatprep.subr.mxu0 0.0
    %v1241 = vand.u32 %v272, 4294901760
    %1242 = vmatpush1.msra.mxu0 %v1241
    %1243 = vmatprep.subr.mxu0 0.0
    %1244 = vmatpush1.msra.mxu0 0.0
    %1245 = vmatprep.subr.mxu0 0.0
    %1246 = vmatpush1.msra.mxu0 0.0
    %1247 = vmatprep.subr.mxu0 0.0
    %1248 = vmatpush1.msra.mxu0 0.0
    %1249 = vmatprep.subr.mxu0 0.0
    %1250 = vmatpush1.msra.mxu0 0.0
    %1251 = vmatprep.subr.mxu0 0.0
    %1252 = vmatpush1.msra.mxu0 0.0
    %1253 = vmatprep.subr.mxu0 0.0
    %1254 = vmatpush1.msra.mxu0 0.0
    %1255 = vmatprep.subr.mxu0 0.0
    %1256 = vmatpush1.msra.mxu0 0.0
    %1257 = vmatprep.subr.mxu0 0.0
    %1258 = vmatpush1.msra.mxu0 0.0
    %1259 = vmatprep.subr.mxu0 0.0
    %1260 = vmatpush1.msra.mxu0 0.0
    %1261 = vmatprep.subr.mxu0 0.0
    %1262 = vmatpush1.msra.mxu0 0.0
    %1263 = vmatprep.subr.mxu0 0.0
    %1264 = vmatpush1.msra.mxu0 0.0
    %1265 = vmatprep.subr.mxu0 0.0
    %1266 = vmatpush1.msra.mxu0 0.0
    %1267 = vmatprep.subr.mxu0 0.0
    %1268 = vmatpush1.msra.mxu0 0.0
    %1269 = vmatprep.subr.mxu0 0.0
    %1270 = vmatpush1.msra.mxu0 0.0
    %1271 = vmatprep.subr.mxu0 0.0
    %1272 = vmatpush1.msra.mxu0 0.0
    %1273 = vmatprep.subr.mxu0 0.0
    %1274 = vmatpush1.msra.mxu0 0.0
    %1275 = vmatprep.subr.mxu0 0.0
    %1276 = vmatpush1.msra.mxu0 0.0
    %1277 = vmatprep.subr.mxu0 0.0
    %1278 = vmatpush1.msra.mxu0 0.0
    %1279 = vmatprep.subr.mxu0 0.0
    %1280 = vmatpush1.msra.mxu0 0.0
    %1281 = vmatprep.subr.mxu0 0.0
    %1282 = vmatpush1.msra.mxu0 0.0
    %1283 = vmatprep.subr.mxu0 0.0
    %1284 = vmatpush1.msra.mxu0 0.0
    %1285 = vmatprep.subr.mxu0 0.0
    %1286 = vmatpush1.msra.mxu0 0.0
    %1287 = vmatprep.subr.mxu0 0.0
    %1288 = vmatpush1.msra.mxu0 0.0
    %1289 = vmatprep.subr.mxu0 0.0
    %1290 = vmatpush1.msra.mxu0 0.0
    %1291 = vmatprep.subr.mxu0 0.0
    %1292 = vmatpush1.msra.mxu0 0.0
    %1293 = vmatprep.subr.mxu0 0.0
    %1294 = vmatpush1.msra.mxu0 0.0
    %1295 = vmatprep.subr.mxu0 0.0
    %1296 = vmatpush1.msra.mxu0 0.0
    %1297 = vmatprep.subr.mxu0 0.0
    %1298 = vmatpush1.msra.mxu0 0.0
    %1299 = vmatprep.subr.mxu0 0.0
    %1300 = vmatpush1.msra.mxu0 0.0
    %1301 = vmatprep.subr.mxu0 0.0
    %1302 = vmatpush1.msra.mxu0 0.0
    %1303 = vmatprep.mubr.f32.mxu0 0.0
    %v1304 = vand.u32 %v259, 4294901760
    %1305 = vmatmul.mubr.f32.gmra.mrb[0].mxu0 %v1304
    %v1306 = vpop.f32.mrb[0].mxu0
    %v1307 = vadd.f32 %v1228, %v1306
    %v1308 = vpop.f32.mrb[0].mxu0
    %1309 = vmatprep.mubr.f32.mxu0 0.0
    %v1310 = vand.u32 %v262, 4294901760
    %1311 = vmatmul.mubr.f32.gmra.mrb[0].mxu0 %v1310
    %v1312 = vpop.f32.mrb[0].mxu0
    %v1313 = vadd.f32 %v1234, %v1312
    %v1314 = vpop.f32.mrb[0].mxu0
    %1315 = vdwg.mxu0
    %v1316 = vmul.f32 %v805, %v1307
    %v1317 = vmul.f32 %v812, %v1313
    %1318 = vmatprep.subr.mxu0 0.0
    %v1319 = vand.u32 %v209, 4294901760
    %1320 = vmatpush1.msra.mxu0 %v1319
    %1321 = vmatprep.subr.mxu0 0.0
    %v1322 = vand.u32 %v210, 4294901760
    %1323 = vmatpush1.msra.mxu0 %v1322
    %1324 = vmatprep.subr.mxu0 0.0
    %v1325 = vand.u32 %v211, 4294901760
    %1326 = vmatpush1.msra.mxu0 %v1325
    %1327 = vmatprep.subr.mxu0 0.0
    %v1328 = vand.u32 %v212, 4294901760
    %1329 = vmatpush1.msra.mxu0 %v1328
    %1330 = vmatprep.subr.mxu0 0.0
    %v1331 = vand.u32 %v213, 4294901760
    %1332 = vmatpush1.msra.mxu0 %v1331
    %1333 = vmatprep.subr.mxu0 0.0
    %v1334 = vand.u32 %v214, 4294901760
    %1335 = vmatpush1.msra.mxu0 %v1334
    %1336 = vmatprep.subr.mxu0 0.0
    %v1337 = vand.u32 %v215, 4294901760
    %1338 = vmatpush1.msra.mxu0 %v1337
    %1339 = vmatprep.subr.mxu0 0.0
    %v1340 = vand.u32 %v216, 4294901760
    %1341 = vmatpush1.msra.mxu0 %v1340
    %1342 = vmatprep.subr.mxu0 0.0
    %v1343 = vand.u32 %v217, 4294901760
    %1344 = vmatpush1.msra.mxu0 %v1343
    %1345 = vmatprep.subr.mxu0 0.0
    %v1346 = vand.u32 %v218, 4294901760
    %1347 = vmatpush1.msra.mxu0 %v1346
    %1348 = vmatprep.subr.mxu0 0.0
    %v1349 = vand.u32 %v219, 4294901760
    %1350 = vmatpush1.msra.mxu0 %v1349
    %1351 = vmatprep.subr.mxu0 0.0
    %v1352 = vand.u32 %v220, 4294901760
    %1353 = vmatpush1.msra.mxu0 %v1352
    %1354 = vmatprep.subr.mxu0 0.0
    %v1355 = vand.u32 %v221, 4294901760
    %1356 = vmatpush1.msra.mxu0 %v1355
    %1357 = vmatprep.subr.mxu0 0.0
    %v1358 = vand.u32 %v222, 4294901760
    %1359 = vmatpush1.msra.mxu0 %v1358
    %1360 = vmatprep.subr.mxu0 0.0
    %v1361 = vand.u32 %v223, 4294901760
    %1362 = vmatpush1.msra.mxu0 %v1361
    %1363 = vmatprep.subr.mxu0 0.0
    %v1364 = vand.u32 %v224, 4294901760
    %1365 = vmatpush1.msra.mxu0 %v1364
    %1366 = vmatprep.subr.mxu0 0.0
    %1367 = vmatpush1.msra.mxu0 0.0
    %1368 = vmatprep.subr.mxu0 0.0
    %1369 = vmatpush1.msra.mxu0 0.0
    %1370 = vmatprep.subr.mxu0 0.0
    %1371 = vmatpush1.msra.mxu0 0.0
    %1372 = vmatprep.subr.mxu0 0.0
    %1373 = vmatpush1.msra.mxu0 0.0
    %1374 = vmatprep.subr.mxu0 0.0
    %1375 = vmatpush1.msra.mxu0 0.0
    %1376 = vmatprep.subr.mxu0 0.0
    %1377 = vmatpush1.msra.mxu0 0.0
    %1378 = vmatprep.subr.mxu0 0.0
    %1379 = vmatpush1.msra.mxu0 0.0
    %1380 = vmatprep.subr.mxu0 0.0
    %1381 = vmatpush1.msra.mxu0 0.0
    %1382 = vmatprep.subr.mxu0 0.0
    %1383 = vmatpush1.msra.mxu0 0.0
    %1384 = vmatprep.subr.mxu0 0.0
    %1385 = vmatpush1.msra.mxu0 0.0
    %1386 = vmatprep.subr.mxu0 0.0
    %1387 = vmatpush1.msra.mxu0 0.0
    %1388 = vmatprep.subr.mxu0 0.0
    %1389 = vmatpush1.msra.mxu0 0.0
    %1390 = vmatprep.subr.mxu0 0.0
    %1391 = vmatpush1.msra.mxu0 0.0
    %1392 = vmatprep.subr.mxu0 0.0
    %1393 = vmatpush1.msra.mxu0 0.0
    %1394 = vmatprep.subr.mxu0 0.0
    %1395 = vmatpush1.msra.mxu0 0.0
    %1396 = vmatprep.subr.mxu0 0.0
    %1397 = vmatpush1.msra.mxu0 0.0
    %1398 = vmatprep.mubr.f32.mxu0 0.0
    %v1399 = vand.u32 %v1316, 4294901760
    %v1400 = vsub.f32 %v1316, %v1399
    %v1401 = vand.u32 %v1400, 4294901760
    %v1402 = vsub.f32 %v1400, %v1401
    %v1403 = vand.u32 %v1402, 4294901760
    %1404 = vmatmul.mubr.f32.gmra.mrb[0].mxu0 %v1403
    %v1405 = vpop.f32.mrb[0].mxu0
    %v1406 = vadd.f32 %v803, %v1405
    %v1407 = vpop.f32.mrb[0].mxu0
    %1408 = vmatprep.mubr.f32.mxu0 0.0
    %v1409 = vand.u32 %v1317, 4294901760
    %v1410 = vsub.f32 %v1317, %v1409
    %v1411 = vand.u32 %v1410, 4294901760
    %v1412 = vsub.f32 %v1410, %v1411
    %v1413 = vand.u32 %v1412, 4294901760
    %1414 = vmatmul.mubr.f32.gmra.mrb[0].mxu0 %v1413
    %v1415 = vpop.f32.mrb[0].mxu0
    %v1416 = vadd.f32 %v810, %v1415
    %v1417 = vpop.f32.mrb[0].mxu0
    %1418 = vdwg.mxu0
    %1419 = vmatprep.subr.mxu0 0.0
    %v1420 = vand.u32 %v209, 4294901760
    %v1421 = vsub.f32 %v209, %v1420
    %v1422 = vand.u32 %v1421, 4294901760
    %v1423 = vsub.f32 %v1421, %v1422
    %v1424 = vand.u32 %v1423, 4294901760
    %1425 = vmatpush1.msra.mxu0 %v1424
    %1426 = vmatprep.subr.mxu0 0.0
    %v1427 = vand.u32 %v210, 4294901760
    %v1428 = vsub.f32 %v210, %v1427
    %v1429 = vand.u32 %v1428, 4294901760
    %v1430 = vsub.f32 %v1428, %v1429
    %v1431 = vand.u32 %v1430, 4294901760
    %1432 = vmatpush1.msra.mxu0 %v1431
    %1433 = vmatprep.subr.mxu0 0.0
    %v1434 = vand.u32 %v211, 4294901760
    %v1435 = vsub.f32 %v211, %v1434
    %v1436 = vand.u32 %v1435, 4294901760
    %v1437 = vsub.f32 %v1435, %v1436
    %v1438 = vand.u32 %v1437, 4294901760
    %1439 = vmatpush1.msra.mxu0 %v1438
    %1440 = vmatprep.subr.mxu0 0.0
    %v1441 = vand.u32 %v212, 4294901760
    %v1442 = vsub.f32 %v212, %v1441
    %v1443 = vand.u32 %v1442, 4294901760
    %v1444 = vsub.f32 %v1442, %v1443
    %v1445 = vand.u32 %v1444, 4294901760
    %1446 = vmatpush1.msra.mxu0 %v1445
    %1447 = vmatprep.subr.mxu0 0.0
    %v1448 = vand.u32 %v213, 4294901760
    %v1449 = vsub.f32 %v213, %v1448
    %v1450 = vand.u32 %v1449, 4294901760
    %v1451 = vsub.f32 %v1449, %v1450
    %v1452 = vand.u32 %v1451, 4294901760
    %1453 = vmatpush1.msra.mxu0 %v1452
    %1454 = vmatprep.subr.mxu0 0.0
    %v1455 = vand.u32 %v214, 4294901760
    %v1456 = vsub.f32 %v214, %v1455
    %v1457 = vand.u32 %v1456, 4294901760
    %v1458 = vsub.f32 %v1456, %v1457
    %v1459 = vand.u32 %v1458, 4294901760
    %1460 = vmatpush1.msra.mxu0 %v1459
    %1461 = vmatprep.subr.mxu0 0.0
    %v1462 = vand.u32 %v215, 4294901760
    %v1463 = vsub.f32 %v215, %v1462
    %v1464 = vand.u32 %v1463, 4294901760
    %v1465 = vsub.f32 %v1463, %v1464
    %v1466 = vand.u32 %v1465, 4294901760
    %1467 = vmatpush1.msra.mxu0 %v1466
    %1468 = vmatprep.subr.mxu0 0.0
    %v1469 = vand.u32 %v216, 4294901760
    %v1470 = vsub.f32 %v216, %v1469
    %v1471 = vand.u32 %v1470, 4294901760
    %v1472 = vsub.f32 %v1470, %v1471
    %v1473 = vand.u32 %v1472, 4294901760
    %1474 = vmatpush1.msra.mxu0 %v1473
    %1475 = vmatprep.subr.mxu0 0.0
    %v1476 = vand.u32 %v217, 4294901760
    %v1477 = vsub.f32 %v217, %v1476
    %v1478 = vand.u32 %v1477, 4294901760
    %v1479 = vsub.f32 %v1477, %v1478
    %v1480 = vand.u32 %v1479, 4294901760
    %1481 = vmatpush1.msra.mxu0 %v1480
    %1482 = vmatprep.subr.mxu0 0.0
    %v1483 = vand.u32 %v218, 4294901760
    %v1484 = vsub.f32 %v218, %v1483
    %v1485 = vand.u32 %v1484, 4294901760
    %v1486 = vsub.f32 %v1484, %v1485
    %v1487 = vand.u32 %v1486, 4294901760
    %1488 = vmatpush1.msra.mxu0 %v1487
    %1489 = vmatprep.subr.mxu0 0.0
    %v1490 = vand.u32 %v219, 4294901760
    %v1491 = vsub.f32 %v219, %v1490
    %v1492 = vand.u32 %v1491, 4294901760
    %v1493 = vsub.f32 %v1491, %v1492
    %v1494 = vand.u32 %v1493, 4294901760
    %1495 = vmatpush1.msra.mxu0 %v1494
    %1496 = vmatprep.subr.mxu0 0.0
    %v1497 = vand.u32 %v220, 4294901760
    %v1498 = vsub.f32 %v220, %v1497
    %v1499 = vand.u32 %v1498, 4294901760
    %v1500 = vsub.f32 %v1498, %v1499
    %v1501 = vand.u32 %v1500, 4294901760
    %1502 = vmatpush1.msra.mxu0 %v1501
    %1503 = vmatprep.subr.mxu0 0.0
    %v1504 = vand.u32 %v221, 4294901760
    %v1505 = vsub.f32 %v221, %v1504
    %v1506 = vand.u32 %v1505, 4294901760
    %v1507 = vsub.f32 %v1505, %v1506
    %v1508 = vand.u32 %v1507, 4294901760
    %1509 = vmatpush1.msra.mxu0 %v1508
    %1510 = vmatprep.subr.mxu0 0.0
    %v1511 = vand.u32 %v222, 4294901760
    %v1512 = vsub.f32 %v222, %v1511
    %v1513 = vand.u32 %v1512, 4294901760
    %v1514 = vsub.f32 %v1512, %v1513
    %v1515 = vand.u32 %v1514, 4294901760
    %1516 = vmatpush1.msra.mxu0 %v1515
    %1517 = vmatprep.subr.mxu0 0.0
    %v1518 = vand.u32 %v223, 4294901760
    %v1519 = vsub.f32 %v223, %v1518
    %v1520 = vand.u32 %v1519, 4294901760
    %v1521 = vsub.f32 %v1519, %v1520
    %v1522 = vand.u32 %v1521, 4294901760
    %1523 = vmatpush1.msra.mxu0 %v1522
    %1524 = vmatprep.subr.mxu0 0.0
    %v1525 = vand.u32 %v224, 4294901760
    %v1526 = vsub.f32 %v224, %v1525
    %v1527 = vand.u32 %v1526, 4294901760
    %v1528 = vsub.f32 %v1526, %v1527
    %v1529 = vand.u32 %v1528, 4294901760
    %1530 = vmatpush1.msra.mxu0 %v1529
    %1531 = vmatprep.subr.mxu0 0.0
    %1532 = vmatpush1.msra.mxu0 0.0
    %1533 = vmatprep.subr.mxu0 0.0
    %1534 = vmatpush1.msra.mxu0 0.0
    %1535 = vmatprep.subr.mxu0 0.0
    %1536 = vmatpush1.msra.mxu0 0.0
    %1537 = vmatprep.subr.mxu0 0.0
    %1538 = vmatpush1.msra.mxu0 0.0
    %1539 = vmatprep.subr.mxu0 0.0
    %1540 = vmatpush1.msra.mxu0 0.0
    %1541 = vmatprep.subr.mxu0 0.0
    %1542 = vmatpush1.msra.mxu0 0.0
    %1543 = vmatprep.subr.mxu0 0.0
    %1544 = vmatpush1.msra.mxu0 0.0
    %1545 = vmatprep.subr.mxu0 0.0
    %1546 = vmatpush1.msra.mxu0 0.0
    %1547 = vmatprep.subr.mxu0 0.0
    %1548 = vmatpush1.msra.mxu0 0.0
    %1549 = vmatprep.subr.mxu0 0.0
    %1550 = vmatpush1.msra.mxu0 0.0
    %1551 = vmatprep.subr.mxu0 0.0
    %1552 = vmatpush1.msra.mxu0 0.0
    %1553 = vmatprep.subr.mxu0 0.0
    %1554 = vmatpush1.msra.mxu0 0.0
    %1555 = vmatprep.subr.mxu0 0.0
    %1556 = vmatpush1.msra.mxu0 0.0
    %1557 = vmatprep.subr.mxu0 0.0
    %1558 = vmatpush1.msra.mxu0 0.0
    %1559 = vmatprep.subr.mxu0 0.0
    %1560 = vmatpush1.msra.mxu0 0.0
    %1561 = vmatprep.subr.mxu0 0.0
    %1562 = vmatpush1.msra.mxu0 0.0
    %1563 = vmatprep.mubr.f32.mxu0 0.0
    %v1564 = vand.u32 %v1316, 4294901760
    %1565 = vmatmul.mubr.f32.gmra.mrb[0].mxu0 %v1564
    %v1566 = vpop.f32.mrb[0].mxu0
    %v1567 = vadd.f32 %v1406, %v1566
    %v1568 = vpop.f32.mrb[0].mxu0
    %1569 = vmatprep.mubr.f32.mxu0 0.0
    %v1570 = vand.u32 %v1317, 4294901760
    %1571 = vmatmul.mubr.f32.gmra.mrb[0].mxu0 %v1570
    %v1572 = vpop.f32.mrb[0].mxu0
    %v1573 = vadd.f32 %v1416, %v1572
    %v1574 = vpop.f32.mrb[0].mxu0
    %1575 = vdwg.mxu0
    %1576 = vmatprep.subr.mxu0 0.0
    %v1577 = vand.u32 %v209, 4294901760
    %v1578 = vsub.f32 %v209, %v1577
    %1579 = vmatpush1.msra.mxu0 %v1578
    %1580 = vmatprep.subr.mxu0 0.0
    %v1581 = vand.u32 %v210, 4294901760
    %v1582 = vsub.f32 %v210, %v1581
    %1583 = vmatpush1.msra.mxu0 %v1582
    %1584 = vmatprep.subr.mxu0 0.0
    %v1585 = vand.u32 %v211, 4294901760
    %v1586 = vsub.f32 %v211, %v1585
    %1587 = vmatpush1.msra.mxu0 %v1586
    %1588 = vmatprep.subr.mxu0 0.0
    %v1589 = vand.u32 %v212, 4294901760
    %v1590 = vsub.f32 %v212, %v1589
    %1591 = vmatpush1.msra.mxu0 %v1590
    %1592 = vmatprep.subr.mxu0 0.0
    %v1593 = vand.u32 %v213, 4294901760
    %v1594 = vsub.f32 %v213, %v1593
    %1595 = vmatpush1.msra.mxu0 %v1594
    %1596 = vmatprep.subr.mxu0 0.0
    %v1597 = vand.u32 %v214, 4294901760
    %v1598 = vsub.f32 %v214, %v1597
    %1599 = vmatpush1.msra.mxu0 %v1598
    %1600 = vmatprep.subr.mxu0 0.0
    %v1601 = vand.u32 %v215, 4294901760
    %v1602 = vsub.f32 %v215, %v1601
    %1603 = vmatpush1.msra.mxu0 %v1602
    %1604 = vmatprep.subr.mxu0 0.0
    %v1605 = vand.u32 %v216, 4294901760
    %v1606 = vsub.f32 %v216, %v1605
    %1607 = vmatpush1.msra.mxu0 %v1606
    %1608 = vmatprep.subr.mxu0 0.0
    %v1609 = vand.u32 %v217, 4294901760
    %v1610 = vsub.f32 %v217, %v1609
    %1611 = vmatpush1.msra.mxu0 %v1610
    %1612 = vmatprep.subr.mxu0 0.0
    %v1613 = vand.u32 %v218, 4294901760
    %v1614 = vsub.f32 %v218, %v1613
    %1615 = vmatpush1.msra.mxu0 %v1614
    %1616 = vmatprep.subr.mxu0 0.0
    %v1617 = vand.u32 %v219, 4294901760
    %v1618 = vsub.f32 %v219, %v1617
    %1619 = vmatpush1.msra.mxu0 %v1618
    %1620 = vmatprep.subr.mxu0 0.0
    %v1621 = vand.u32 %v220, 4294901760
    %v1622 = vsub.f32 %v220, %v1621
    %1623 = vmatpush1.msra.mxu0 %v1622
    %1624 = vmatprep.subr.mxu0 0.0
    %v1625 = vand.u32 %v221, 4294901760
    %v1626 = vsub.f32 %v221, %v1625
    %1627 = vmatpush1.msra.mxu0 %v1626
    %1628 = vmatprep.subr.mxu0 0.0
    %v1629 = vand.u32 %v222, 4294901760
    %v1630 = vsub.f32 %v222, %v1629
    %1631 = vmatpush1.msra.mxu0 %v1630
    %1632 = vmatprep.subr.mxu0 0.0
    %v1633 = vand.u32 %v223, 4294901760
    %v1634 = vsub.f32 %v223, %v1633
    %1635 = vmatpush1.msra.mxu0 %v1634
    %1636 = vmatprep.subr.mxu0 0.0
    %v1637 = vand.u32 %v224, 4294901760
    %v1638 = vsub.f32 %v224, %v1637
    %1639 = vmatpush1.msra.mxu0 %v1638
    %1640 = vmatprep.subr.mxu0 0.0
    %1641 = vmatpush1.msra.mxu0 0.0
    %1642 = vmatprep.subr.mxu0 0.0
    %1643 = vmatpush1.msra.mxu0 0.0
    %1644 = vmatprep.subr.mxu0 0.0
    %1645 = vmatpush1.msra.mxu0 0.0
    %1646 = vmatprep.subr.mxu0 0.0
    %1647 = vmatpush1.msra.mxu0 0.0
    %1648 = vmatprep.subr.mxu0 0.0
    %1649 = vmatpush1.msra.mxu0 0.0
    %1650 = vmatprep.subr.mxu0 0.0
    %1651 = vmatpush1.msra.mxu0 0.0
    %1652 = vmatprep.subr.mxu0 0.0
    %1653 = vmatpush1.msra.mxu0 0.0
    %1654 = vmatprep.subr.mxu0 0.0
    %1655 = vmatpush1.msra.mxu0 0.0
    %1656 = vmatprep.subr.mxu0 0.0
    %1657 = vmatpush1.msra.mxu0 0.0
    %1658 = vmatprep.subr.mxu0 0.0
    %1659 = vmatpush1.msra.mxu0 0.0
    %1660 = vmatprep.subr.mxu0 0.0
    %1661 = vmatpush1.msra.mxu0 0.0
    %1662 = vmatprep.subr.mxu0 0.0
    %1663 = vmatpush1.msra.mxu0 0.0
    %1664 = vmatprep.subr.mxu0 0.0
    %1665 = vmatpush1.msra.mxu0 0.0
    %1666 = vmatprep.subr.mxu0 0.0
    %1667 = vmatpush1.msra.mxu0 0.0
    %1668 = vmatprep.subr.mxu0 0.0
    %1669 = vmatpush1.msra.mxu0 0.0
    %1670 = vmatprep.subr.mxu0 0.0
    %1671 = vmatpush1.msra.mxu0 0.0
    %1672 = vmatprep.mubr.f32.mxu0 0.0
    %v1673 = vand.u32 %v1316, 4294901760
    %v1674 = vsub.f32 %v1316, %v1673
    %1675 = vmatmul.mubr.f32.gmra.mrb[0].mxu0 %v1674
    %v1676 = vpop.f32.mrb[0].mxu0
    %v1677 = vadd.f32 %v1567, %v1676
    %v1678 = vpop.f32.mrb[0].mxu0
    %1679 = vmatprep.mubr.f32.mxu0 0.0
    %v1680 = vand.u32 %v1317, 4294901760
    %v1681 = vsub.f32 %v1317, %v1680
    %1682 = vmatmul.mubr.f32.gmra.mrb[0].mxu0 %v1681
    %v1683 = vpop.f32.mrb[0].mxu0
    %v1684 = vadd.f32 %v1573, %v1683
    %v1685 = vpop.f32.mrb[0].mxu0
    %1686 = vdwg.mxu0
    %1687 = vmatprep.subr.mxu0 0.0
    %v1688 = vand.u32 %v209, 4294901760
    %1689 = vmatpush1.msra.mxu0 %v1688
    %1690 = vmatprep.subr.mxu0 0.0
    %v1691 = vand.u32 %v210, 4294901760
    %1692 = vmatpush1.msra.mxu0 %v1691
    %1693 = vmatprep.subr.mxu0 0.0
    %v1694 = vand.u32 %v211, 4294901760
    %1695 = vmatpush1.msra.mxu0 %v1694
    %1696 = vmatprep.subr.mxu0 0.0
    %v1697 = vand.u32 %v212, 4294901760
    %1698 = vmatpush1.msra.mxu0 %v1697
    %1699 = vmatprep.subr.mxu0 0.0
    %v1700 = vand.u32 %v213, 4294901760
    %1701 = vmatpush1.msra.mxu0 %v1700
    %1702 = vmatprep.subr.mxu0 0.0
    %v1703 = vand.u32 %v214, 4294901760
    %1704 = vmatpush1.msra.mxu0 %v1703
    %1705 = vmatprep.subr.mxu0 0.0
    %v1706 = vand.u32 %v215, 4294901760
    %1707 = vmatpush1.msra.mxu0 %v1706
    %1708 = vmatprep.subr.mxu0 0.0
    %v1709 = vand.u32 %v216, 4294901760
    %1710 = vmatpush1.msra.mxu0 %v1709
    %1711 = vmatprep.subr.mxu0 0.0
    %v1712 = vand.u32 %v217, 4294901760
    %1713 = vmatpush1.msra.mxu0 %v1712
    %1714 = vmatprep.subr.mxu0 0.0
    %v1715 = vand.u32 %v218, 4294901760
    %1716 = vmatpush1.msra.mxu0 %v1715
    %1717 = vmatprep.subr.mxu0 0.0
    %v1718 = vand.u32 %v219, 4294901760
    %1719 = vmatpush1.msra.mxu0 %v1718
    %1720 = vmatprep.subr.mxu0 0.0
    %v1721 = vand.u32 %v220, 4294901760
    %1722 = vmatpush1.msra.mxu0 %v1721
    %1723 = vmatprep.subr.mxu0 0.0
    %v1724 = vand.u32 %v221, 4294901760
    %1725 = vmatpush1.msra.mxu0 %v1724
    %1726 = vmatprep.subr.mxu0 0.0
    %v1727 = vand.u32 %v222, 4294901760
    %1728 = vmatpush1.msra.mxu0 %v1727
    %1729 = vmatprep.subr.mxu0 0.0
    %v1730 = vand.u32 %v223, 4294901760
    %1731 = vmatpush1.msra.mxu0 %v1730
    %1732 = vmatprep.subr.mxu0 0.0
    %v1733 = vand.u32 %v224, 4294901760
    %1734 = vmatpush1.msra.mxu0 %v1733
    %1735 = vmatprep.subr.mxu0 0.0
    %1736 = vmatpush1.msra.mxu0 0.0
    %1737 = vmatprep.subr.mxu0 0.0
    %1738 = vmatpush1.msra.mxu0 0.0
    %1739 = vmatprep.subr.mxu0 0.0
    %1740 = vmatpush1.msra.mxu0 0.0
    %1741 = vmatprep.subr.mxu0 0.0
    %1742 = vmatpush1.msra.mxu0 0.0
    %1743 = vmatprep.subr.mxu0 0.0
    %1744 = vmatpush1.msra.mxu0 0.0
    %1745 = vmatprep.subr.mxu0 0.0
    %1746 = vmatpush1.msra.mxu0 0.0
    %1747 = vmatprep.subr.mxu0 0.0
    %1748 = vmatpush1.msra.mxu0 0.0
    %1749 = vmatprep.subr.mxu0 0.0
    %1750 = vmatpush1.msra.mxu0 0.0
    %1751 = vmatprep.subr.mxu0 0.0
    %1752 = vmatpush1.msra.mxu0 0.0
    %1753 = vmatprep.subr.mxu0 0.0
    %1754 = vmatpush1.msra.mxu0 0.0
    %1755 = vmatprep.subr.mxu0 0.0
    %1756 = vmatpush1.msra.mxu0 0.0
    %1757 = vmatprep.subr.mxu0 0.0
    %1758 = vmatpush1.msra.mxu0 0.0
    %1759 = vmatprep.subr.mxu0 0.0
    %1760 = vmatpush1.msra.mxu0 0.0
    %1761 = vmatprep.subr.mxu0 0.0
    %1762 = vmatpush1.msra.mxu0 0.0
    %1763 = vmatprep.subr.mxu0 0.0
    %1764 = vmatpush1.msra.mxu0 0.0
    %1765 = vmatprep.subr.mxu0 0.0
    %1766 = vmatpush1.msra.mxu0 0.0
    %1767 = vmatprep.mubr.f32.mxu0 0.0
    %v1768 = vand.u32 %v1316, 4294901760
    %v1769 = vsub.f32 %v1316, %v1768
    %v1770 = vand.u32 %v1769, 4294901760
    %1771 = vmatmul.mubr.f32.gmra.mrb[0].mxu0 %v1770
    %v1772 = vpop.f32.mrb[0].mxu0
    %v1773 = vadd.f32 %v1677, %v1772
    %v1774 = vpop.f32.mrb[0].mxu0
    %1775 = vmatprep.mubr.f32.mxu0 0.0
    %v1776 = vand.u32 %v1317, 4294901760
    %v1777 = vsub.f32 %v1317, %v1776
    %v1778 = vand.u32 %v1777, 4294901760
    %1779 = vmatmul.mubr.f32.gmra.mrb[0].mxu0 %v1778
    %v1780 = vpop.f32.mrb[0].mxu0
    %v1781 = vadd.f32 %v1684, %v1780
    %v1782 = vpop.f32.mrb[0].mxu0
    %1783 = vdwg.mxu0
    %1784 = vmatprep.subr.mxu0 0.0
    %v1785 = vand.u32 %v209, 4294901760
    %v1786 = vsub.f32 %v209, %v1785
    %v1787 = vand.u32 %v1786, 4294901760
    %1788 = vmatpush1.msra.mxu0 %v1787
    %1789 = vmatprep.subr.mxu0 0.0
    %v1790 = vand.u32 %v210, 4294901760
    %v1791 = vsub.f32 %v210, %v1790
    %v1792 = vand.u32 %v1791, 4294901760
    %1793 = vmatpush1.msra.mxu0 %v1792
    %1794 = vmatprep.subr.mxu0 0.0
    %v1795 = vand.u32 %v211, 4294901760
    %v1796 = vsub.f32 %v211, %v1795
    %v1797 = vand.u32 %v1796, 4294901760
    %1798 = vmatpush1.msra.mxu0 %v1797
    %1799 = vmatprep.subr.mxu0 0.0
    %v1800 = vand.u32 %v212, 4294901760
    %v1801 = vsub.f32 %v212, %v1800
    %v1802 = vand.u32 %v1801, 4294901760
    %1803 = vmatpush1.msra.mxu0 %v1802
    %1804 = vmatprep.subr.mxu0 0.0
    %v1805 = vand.u32 %v213, 4294901760
    %v1806 = vsub.f32 %v213, %v1805
    %v1807 = vand.u32 %v1806, 4294901760
    %1808 = vmatpush1.msra.mxu0 %v1807
    %1809 = vmatprep.subr.mxu0 0.0
    %v1810 = vand.u32 %v214, 4294901760
    %v1811 = vsub.f32 %v214, %v1810
    %v1812 = vand.u32 %v1811, 4294901760
    %1813 = vmatpush1.msra.mxu0 %v1812
    %1814 = vmatprep.subr.mxu0 0.0
    %v1815 = vand.u32 %v215, 4294901760
    %v1816 = vsub.f32 %v215, %v1815
    %v1817 = vand.u32 %v1816, 4294901760
    %1818 = vmatpush1.msra.mxu0 %v1817
    %1819 = vmatprep.subr.mxu0 0.0
    %v1820 = vand.u32 %v216, 4294901760
    %v1821 = vsub.f32 %v216, %v1820
    %v1822 = vand.u32 %v1821, 4294901760
    %1823 = vmatpush1.msra.mxu0 %v1822
    %1824 = vmatprep.subr.mxu0 0.0
    %v1825 = vand.u32 %v217, 4294901760
    %v1826 = vsub.f32 %v217, %v1825
    %v1827 = vand.u32 %v1826, 4294901760
    %1828 = vmatpush1.msra.mxu0 %v1827
    %1829 = vmatprep.subr.mxu0 0.0
    %v1830 = vand.u32 %v218, 4294901760
    %v1831 = vsub.f32 %v218, %v1830
    %v1832 = vand.u32 %v1831, 4294901760
    %1833 = vmatpush1.msra.mxu0 %v1832
    %1834 = vmatprep.subr.mxu0 0.0
    %v1835 = vand.u32 %v219, 4294901760
    %v1836 = vsub.f32 %v219, %v1835
    %v1837 = vand.u32 %v1836, 4294901760
    %1838 = vmatpush1.msra.mxu0 %v1837
    %1839 = vmatprep.subr.mxu0 0.0
    %v1840 = vand.u32 %v220, 4294901760
    %v1841 = vsub.f32 %v220, %v1840
    %v1842 = vand.u32 %v1841, 4294901760
    %1843 = vmatpush1.msra.mxu0 %v1842
    %1844 = vmatprep.subr.mxu0 0.0
    %v1845 = vand.u32 %v221, 4294901760
    %v1846 = vsub.f32 %v221, %v1845
    %v1847 = vand.u32 %v1846, 4294901760
    %1848 = vmatpush1.msra.mxu0 %v1847
    %1849 = vmatprep.subr.mxu0 0.0
    %v1850 = vand.u32 %v222, 4294901760
    %v1851 = vsub.f32 %v222, %v1850
    %v1852 = vand.u32 %v1851, 4294901760
    %1853 = vmatpush1.msra.mxu0 %v1852
    %1854 = vmatprep.subr.mxu0 0.0
    %v1855 = vand.u32 %v223, 4294901760
    %v1856 = vsub.f32 %v223, %v1855
    %v1857 = vand.u32 %v1856, 4294901760
    %1858 = vmatpush1.msra.mxu0 %v1857
    %1859 = vmatprep.subr.mxu0 0.0
    %v1860 = vand.u32 %v224, 4294901760
    %v1861 = vsub.f32 %v224, %v1860
    %v1862 = vand.u32 %v1861, 4294901760
    %1863 = vmatpush1.msra.mxu0 %v1862
    %1864 = vmatprep.subr.mxu0 0.0
    %1865 = vmatpush1.msra.mxu0 0.0
    %1866 = vmatprep.subr.mxu0 0.0
    %1867 = vmatpush1.msra.mxu0 0.0
    %1868 = vmatprep.subr.mxu0 0.0
    %1869 = vmatpush1.msra.mxu0 0.0
    %1870 = vmatprep.subr.mxu0 0.0
    %1871 = vmatpush1.msra.mxu0 0.0
    %1872 = vmatprep.subr.mxu0 0.0
    %1873 = vmatpush1.msra.mxu0 0.0
    %1874 = vmatprep.subr.mxu0 0.0
    %1875 = vmatpush1.msra.mxu0 0.0
    %1876 = vmatprep.subr.mxu0 0.0
    %1877 = vmatpush1.msra.mxu0 0.0
    %1878 = vmatprep.subr.mxu0 0.0
    %1879 = vmatpush1.msra.mxu0 0.0
    %1880 = vmatprep.subr.mxu0 0.0
    %1881 = vmatpush1.msra.mxu0 0.0
    %1882 = vmatprep.subr.mxu0 0.0
    %1883 = vmatpush1.msra.mxu0 0.0
    %1884 = vmatprep.subr.mxu0 0.0
    %1885 = vmatpush1.msra.mxu0 0.0
    %1886 = vmatprep.subr.mxu0 0.0
    %1887 = vmatpush1.msra.mxu0 0.0
    %1888 = vmatprep.subr.mxu0 0.0
    %1889 = vmatpush1.msra.mxu0 0.0
    %1890 = vmatprep.subr.mxu0 0.0
    %1891 = vmatpush1.msra.mxu0 0.0
    %1892 = vmatprep.subr.mxu0 0.0
    %1893 = vmatpush1.msra.mxu0 0.0
    %1894 = vmatprep.subr.mxu0 0.0
    %1895 = vmatpush1.msra.mxu0 0.0
    %1896 = vmatprep.mubr.f32.mxu0 0.0
    %v1897 = vand.u32 %v1316, 4294901760
    %1898 = vmatmul.mubr.f32.gmra.mrb[0].mxu0 %v1897
    %v1899 = vpop.f32.mrb[0].mxu0
    %v1900 = vadd.f32 %v1773, %v1899
    %v1901 = vpop.f32.mrb[0].mxu0
    %1902 = vmatprep.mubr.f32.mxu0 0.0
    %v1903 = vand.u32 %v1317, 4294901760
    %1904 = vmatmul.mubr.f32.gmra.mrb[0].mxu0 %v1903
    %v1905 = vpop.f32.mrb[0].mxu0
    %v1906 = vadd.f32 %v1781, %v1905
    %v1907 = vpop.f32.mrb[0].mxu0
    %1908 = vdwg.mxu0
    %1909 = vmatprep.subr.mxu0 0.0
    %v1910 = vand.u32 %v209, 4294901760
    %1911 = vmatpush1.msra.mxu0 %v1910
    %1912 = vmatprep.subr.mxu0 0.0
    %v1913 = vand.u32 %v210, 4294901760
    %1914 = vmatpush1.msra.mxu0 %v1913
    %1915 = vmatprep.subr.mxu0 0.0
    %v1916 = vand.u32 %v211, 4294901760
    %1917 = vmatpush1.msra.mxu0 %v1916
    %1918 = vmatprep.subr.mxu0 0.0
    %v1919 = vand.u32 %v212, 4294901760
    %1920 = vmatpush1.msra.mxu0 %v1919
    %1921 = vmatprep.subr.mxu0 0.0
    %v1922 = vand.u32 %v213, 4294901760
    %1923 = vmatpush1.msra.mxu0 %v1922
    %1924 = vmatprep.subr.mxu0 0.0
    %v1925 = vand.u32 %v214, 4294901760
    %1926 = vmatpush1.msra.mxu0 %v1925
    %1927 = vmatprep.subr.mxu0 0.0
    %v1928 = vand.u32 %v215, 4294901760
    %1929 = vmatpush1.msra.mxu0 %v1928
    %1930 = vmatprep.subr.mxu0 0.0
    %v1931 = vand.u32 %v216, 4294901760
    %1932 = vmatpush1.msra.mxu0 %v1931
    %1933 = vmatprep.subr.mxu0 0.0
    %v1934 = vand.u32 %v217, 4294901760
    %1935 = vmatpush1.msra.mxu0 %v1934
    %1936 = vmatprep.subr.mxu0 0.0
    %v1937 = vand.u32 %v218, 4294901760
    %1938 = vmatpush1.msra.mxu0 %v1937
    %1939 = vmatprep.subr.mxu0 0.0
    %v1940 = vand.u32 %v219, 4294901760
    %1941 = vmatpush1.msra.mxu0 %v1940
    %1942 = vmatprep.subr.mxu0 0.0
    %v1943 = vand.u32 %v220, 4294901760
    %1944 = vmatpush1.msra.mxu0 %v1943
    %1945 = vmatprep.subr.mxu0 0.0
    %v1946 = vand.u32 %v221, 4294901760
    %1947 = vmatpush1.msra.mxu0 %v1946
    %1948 = vmatprep.subr.mxu0 0.0
    %v1949 = vand.u32 %v222, 4294901760
    %1950 = vmatpush1.msra.mxu0 %v1949
    %1951 = vmatprep.subr.mxu0 0.0
    %v1952 = vand.u32 %v223, 4294901760
    %1953 = vmatpush1.msra.mxu0 %v1952
    %1954 = vmatprep.subr.mxu0 0.0
    %v1955 = vand.u32 %v224, 4294901760
    %1956 = vmatpush1.msra.mxu0 %v1955
    %1957 = vmatprep.subr.mxu0 0.0
    %1958 = vmatpush1.msra.mxu0 0.0
    %1959 = vmatprep.subr.mxu0 0.0
    %1960 = vmatpush1.msra.mxu0 0.0
    %1961 = vmatprep.subr.mxu0 0.0
    %1962 = vmatpush1.msra.mxu0 0.0
    %1963 = vmatprep.subr.mxu0 0.0
    %1964 = vmatpush1.msra.mxu0 0.0
    %1965 = vmatprep.subr.mxu0 0.0
    %1966 = vmatpush1.msra.mxu0 0.0
    %1967 = vmatprep.subr.mxu0 0.0
    %1968 = vmatpush1.msra.mxu0 0.0
    %1969 = vmatprep.subr.mxu0 0.0
    %1970 = vmatpush1.msra.mxu0 0.0
    %1971 = vmatprep.subr.mxu0 0.0
    %1972 = vmatpush1.msra.mxu0 0.0
    %1973 = vmatprep.subr.mxu0 0.0
    %1974 = vmatpush1.msra.mxu0 0.0
    %1975 = vmatprep.subr.mxu0 0.0
    %1976 = vmatpush1.msra.mxu0 0.0
    %1977 = vmatprep.subr.mxu0 0.0
    %1978 = vmatpush1.msra.mxu0 0.0
    %1979 = vmatprep.subr.mxu0 0.0
    %1980 = vmatpush1.msra.mxu0 0.0
    %1981 = vmatprep.subr.mxu0 0.0
    %1982 = vmatpush1.msra.mxu0 0.0
    %1983 = vmatprep.subr.mxu0 0.0
    %1984 = vmatpush1.msra.mxu0 0.0
    %1985 = vmatprep.subr.mxu0 0.0
    %1986 = vmatpush1.msra.mxu0 0.0
    %1987 = vmatprep.subr.mxu0 0.0
    %1988 = vmatpush1.msra.mxu0 0.0
    %1989 = vmatprep.mubr.f32.mxu0 0.0
    %v1990 = vand.u32 %v1316, 4294901760
    %1991 = vmatmul.mubr.f32.gmra.mrb[0].mxu0 %v1990
    %v1992 = vpop.f32.mrb[0].mxu0
    %v1993 = vadd.f32 %v1900, %v1992
    %v1994 = vpop.f32.mrb[0].mxu0
    %1995 = vmatprep.mubr.f32.mxu0 0.0
    %v1996 = vand.u32 %v1317, 4294901760
    %1997 = vmatmul.mubr.f32.gmra.mrb[0].mxu0 %v1996
    %v1998 = vpop.f32.mrb[0].mxu0
    %v1999 = vadd.f32 %v1906, %v1998
    %v2000 = vpop.f32.mrb[0].mxu0
    %2001 = vdwg.mxu0
    %2002 = vmatprep.subr.mxu0 0.0
    %v2003 = vand.u32 %v225, 4294901760
    %2004 = vmatpush1.msra.mxu0 %v2003
    %2005 = vmatprep.subr.mxu0 0.0
    %v2006 = vand.u32 %v226, 4294901760
    %2007 = vmatpush1.msra.mxu0 %v2006
    %2008 = vmatprep.subr.mxu0 0.0
    %v2009 = vand.u32 %v227, 4294901760
    %2010 = vmatpush1.msra.mxu0 %v2009
    %2011 = vmatprep.subr.mxu0 0.0
    %v2012 = vand.u32 %v228, 4294901760
    %2013 = vmatpush1.msra.mxu0 %v2012
    %2014 = vmatprep.subr.mxu0 0.0
    %v2015 = vand.u32 %v229, 4294901760
    %2016 = vmatpush1.msra.mxu0 %v2015
    %2017 = vmatprep.subr.mxu0 0.0
    %v2018 = vand.u32 %v230, 4294901760
    %2019 = vmatpush1.msra.mxu0 %v2018
    %2020 = vmatprep.subr.mxu0 0.0
    %v2021 = vand.u32 %v231, 4294901760
    %2022 = vmatpush1.msra.mxu0 %v2021
    %2023 = vmatprep.subr.mxu0 0.0
    %v2024 = vand.u32 %v232, 4294901760
    %2025 = vmatpush1.msra.mxu0 %v2024
    %2026 = vmatprep.subr.mxu0 0.0
    %v2027 = vand.u32 %v233, 4294901760
    %2028 = vmatpush1.msra.mxu0 %v2027
    %2029 = vmatprep.subr.mxu0 0.0
    %v2030 = vand.u32 %v234, 4294901760
    %2031 = vmatpush1.msra.mxu0 %v2030
    %2032 = vmatprep.subr.mxu0 0.0
    %v2033 = vand.u32 %v235, 4294901760
    %2034 = vmatpush1.msra.mxu0 %v2033
    %2035 = vmatprep.subr.mxu0 0.0
    %v2036 = vand.u32 %v236, 4294901760
    %2037 = vmatpush1.msra.mxu0 %v2036
    %2038 = vmatprep.subr.mxu0 0.0
    %v2039 = vand.u32 %v237, 4294901760
    %2040 = vmatpush1.msra.mxu0 %v2039
    %2041 = vmatprep.subr.mxu0 0.0
    %v2042 = vand.u32 %v238, 4294901760
    %2043 = vmatpush1.msra.mxu0 %v2042
    %2044 = vmatprep.subr.mxu0 0.0
    %v2045 = vand.u32 %v239, 4294901760
    %2046 = vmatpush1.msra.mxu0 %v2045
    %2047 = vmatprep.subr.mxu0 0.0
    %v2048 = vand.u32 %v240, 4294901760
    %2049 = vmatpush1.msra.mxu0 %v2048
    %2050 = vmatprep.subr.mxu0 0.0
    %2051 = vmatpush1.msra.mxu0 0.0
    %2052 = vmatprep.subr.mxu0 0.0
    %2053 = vmatpush1.msra.mxu0 0.0
    %2054 = vmatprep.subr.mxu0 0.0
    %2055 = vmatpush1.msra.mxu0 0.0
    %2056 = vmatprep.subr.mxu0 0.0
    %2057 = vmatpush1.msra.mxu0 0.0
    %2058 = vmatprep.subr.mxu0 0.0
    %2059 = vmatpush1.msra.mxu0 0.0
    %2060 = vmatprep.subr.mxu0 0.0
    %2061 = vmatpush1.msra.mxu0 0.0
    %2062 = vmatprep.subr.mxu0 0.0
    %2063 = vmatpush1.msra.mxu0 0.0
    %2064 = vmatprep.subr.mxu0 0.0
    %2065 = vmatpush1.msra.mxu0 0.0
    %2066 = vmatprep.subr.mxu0 0.0
    %2067 = vmatpush1.msra.mxu0 0.0
    %2068 = vmatprep.subr.mxu0 0.0
    %2069 = vmatpush1.msra.mxu0 0.0
    %2070 = vmatprep.subr.mxu0 0.0
    %2071 = vmatpush1.msra.mxu0 0.0
    %2072 = vmatprep.subr.mxu0 0.0
    %2073 = vmatpush1.msra.mxu0 0.0
    %2074 = vmatprep.subr.mxu0 0.0
    %2075 = vmatpush1.msra.mxu0 0.0
    %2076 = vmatprep.subr.mxu0 0.0
    %2077 = vmatpush1.msra.mxu0 0.0
    %2078 = vmatprep.subr.mxu0 0.0
    %2079 = vmatpush1.msra.mxu0 0.0
    %2080 = vmatprep.subr.mxu0 0.0
    %2081 = vmatpush1.msra.mxu0 0.0
    %2082 = vmatprep.mubr.f32.mxu0 0.0
    %v2083 = vand.u32 %v1993, 4294901760
    %v2084 = vsub.f32 %v1993, %v2083
    %v2085 = vand.u32 %v2084, 4294901760
    %v2086 = vsub.f32 %v2084, %v2085
    %v2087 = vand.u32 %v2086, 4294901760
    %2088 = vmatmul.mubr.f32.gmra.mrb[0].mxu0 %v2087
    %v2089 = vpop.f32.mrb[0].mxu0
    %v2090 = vadd.f32 0.0, %v2089
    %v2091 = vpop.f32.mrb[0].mxu0
    %2092 = vmatprep.mubr.f32.mxu0 0.0
    %v2093 = vand.u32 %v1999, 4294901760
    %v2094 = vsub.f32 %v1999, %v2093
    %v2095 = vand.u32 %v2094, 4294901760
    %v2096 = vsub.f32 %v2094, %v2095
    %v2097 = vand.u32 %v2096, 4294901760
    %2098 = vmatmul.mubr.f32.gmra.mrb[0].mxu0 %v2097
    %v2099 = vpop.f32.mrb[0].mxu0
    %v2100 = vadd.f32 0.0, %v2099
    %v2101 = vpop.f32.mrb[0].mxu0
    %2102 = vdwg.mxu0
    %2103 = vmatprep.subr.mxu0 0.0
    %v2104 = vand.u32 %v225, 4294901760
    %v2105 = vsub.f32 %v225, %v2104
    %v2106 = vand.u32 %v2105, 4294901760
    %v2107 = vsub.f32 %v2105, %v2106
    %v2108 = vand.u32 %v2107, 4294901760
    %2109 = vmatpush1.msra.mxu0 %v2108
    %2110 = vmatprep.subr.mxu0 0.0
    %v2111 = vand.u32 %v226, 4294901760
    %v2112 = vsub.f32 %v226, %v2111
    %v2113 = vand.u32 %v2112, 4294901760
    %v2114 = vsub.f32 %v2112, %v2113
    %v2115 = vand.u32 %v2114, 4294901760
    %2116 = vmatpush1.msra.mxu0 %v2115
    %2117 = vmatprep.subr.mxu0 0.0
    %v2118 = vand.u32 %v227, 4294901760
    %v2119 = vsub.f32 %v227, %v2118
    %v2120 = vand.u32 %v2119, 4294901760
    %v2121 = vsub.f32 %v2119, %v2120
    %v2122 = vand.u32 %v2121, 4294901760
    %2123 = vmatpush1.msra.mxu0 %v2122
    %2124 = vmatprep.subr.mxu0 0.0
    %v2125 = vand.u32 %v228, 4294901760
    %v2126 = vsub.f32 %v228, %v2125
    %v2127 = vand.u32 %v2126, 4294901760
    %v2128 = vsub.f32 %v2126, %v2127
    %v2129 = vand.u32 %v2128, 4294901760
    %2130 = vmatpush1.msra.mxu0 %v2129
    %2131 = vmatprep.subr.mxu0 0.0
    %v2132 = vand.u32 %v229, 4294901760
    %v2133 = vsub.f32 %v229, %v2132
    %v2134 = vand.u32 %v2133, 4294901760
    %v2135 = vsub.f32 %v2133, %v2134
    %v2136 = vand.u32 %v2135, 4294901760
    %2137 = vmatpush1.msra.mxu0 %v2136
    %2138 = vmatprep.subr.mxu0 0.0
    %v2139 = vand.u32 %v230, 4294901760
    %v2140 = vsub.f32 %v230, %v2139
    %v2141 = vand.u32 %v2140, 4294901760
    %v2142 = vsub.f32 %v2140, %v2141
    %v2143 = vand.u32 %v2142, 4294901760
    %2144 = vmatpush1.msra.mxu0 %v2143
    %2145 = vmatprep.subr.mxu0 0.0
    %v2146 = vand.u32 %v231, 4294901760
    %v2147 = vsub.f32 %v231, %v2146
    %v2148 = vand.u32 %v2147, 4294901760
    %v2149 = vsub.f32 %v2147, %v2148
    %v2150 = vand.u32 %v2149, 4294901760
    %2151 = vmatpush1.msra.mxu0 %v2150
    %2152 = vmatprep.subr.mxu0 0.0
    %v2153 = vand.u32 %v232, 4294901760
    %v2154 = vsub.f32 %v232, %v2153
    %v2155 = vand.u32 %v2154, 4294901760
    %v2156 = vsub.f32 %v2154, %v2155
    %v2157 = vand.u32 %v2156, 4294901760
    %2158 = vmatpush1.msra.mxu0 %v2157
    %2159 = vmatprep.subr.mxu0 0.0
    %v2160 = vand.u32 %v233, 4294901760
    %v2161 = vsub.f32 %v233, %v2160
    %v2162 = vand.u32 %v2161, 4294901760
    %v2163 = vsub.f32 %v2161, %v2162
    %v2164 = vand.u32 %v2163, 4294901760
    %2165 = vmatpush1.msra.mxu0 %v2164
    %2166 = vmatprep.subr.mxu0 0.0
    %v2167 = vand.u32 %v234, 4294901760
    %v2168 = vsub.f32 %v234, %v2167
    %v2169 = vand.u32 %v2168, 4294901760
    %v2170 = vsub.f32 %v2168, %v2169
    %v2171 = vand.u32 %v2170, 4294901760
    %2172 = vmatpush1.msra.mxu0 %v2171
    %2173 = vmatprep.subr.mxu0 0.0
    %v2174 = vand.u32 %v235, 4294901760
    %v2175 = vsub.f32 %v235, %v2174
    %v2176 = vand.u32 %v2175, 4294901760
    %v2177 = vsub.f32 %v2175, %v2176
    %v2178 = vand.u32 %v2177, 4294901760
    %2179 = vmatpush1.msra.mxu0 %v2178
    %2180 = vmatprep.subr.mxu0 0.0
    %v2181 = vand.u32 %v236, 4294901760
    %v2182 = vsub.f32 %v236, %v2181
    %v2183 = vand.u32 %v2182, 4294901760
    %v2184 = vsub.f32 %v2182, %v2183
    %v2185 = vand.u32 %v2184, 4294901760
    %2186 = vmatpush1.msra.mxu0 %v2185
    %2187 = vmatprep.subr.mxu0 0.0
    %v2188 = vand.u32 %v237, 4294901760
    %v2189 = vsub.f32 %v237, %v2188
    %v2190 = vand.u32 %v2189, 4294901760
    %v2191 = vsub.f32 %v2189, %v2190
    %v2192 = vand.u32 %v2191, 4294901760
    %2193 = vmatpush1.msra.mxu0 %v2192
    %2194 = vmatprep.subr.mxu0 0.0
    %v2195 = vand.u32 %v238, 4294901760
    %v2196 = vsub.f32 %v238, %v2195
    %v2197 = vand.u32 %v2196, 4294901760
    %v2198 = vsub.f32 %v2196, %v2197
    %v2199 = vand.u32 %v2198, 4294901760
    %2200 = vmatpush1.msra.mxu0 %v2199
    %2201 = vmatprep.subr.mxu0 0.0
    %v2202 = vand.u32 %v239, 4294901760
    %v2203 = vsub.f32 %v239, %v2202
    %v2204 = vand.u32 %v2203, 4294901760
    %v2205 = vsub.f32 %v2203, %v2204
    %v2206 = vand.u32 %v2205, 4294901760
    %2207 = vmatpush1.msra.mxu0 %v2206
    %2208 = vmatprep.subr.mxu0 0.0
    %v2209 = vand.u32 %v240, 4294901760
    %v2210 = vsub.f32 %v240, %v2209
    %v2211 = vand.u32 %v2210, 4294901760
    %v2212 = vsub.f32 %v2210, %v2211
    %v2213 = vand.u32 %v2212, 4294901760
    %2214 = vmatpush1.msra.mxu0 %v2213
    %2215 = vmatprep.subr.mxu0 0.0
    %2216 = vmatpush1.msra.mxu0 0.0
    %2217 = vmatprep.subr.mxu0 0.0
    %2218 = vmatpush1.msra.mxu0 0.0
    %2219 = vmatprep.subr.mxu0 0.0
    %2220 = vmatpush1.msra.mxu0 0.0
    %2221 = vmatprep.subr.mxu0 0.0
    %2222 = vmatpush1.msra.mxu0 0.0
    %2223 = vmatprep.subr.mxu0 0.0
    %2224 = vmatpush1.msra.mxu0 0.0
    %2225 = vmatprep.subr.mxu0 0.0
    %2226 = vmatpush1.msra.mxu0 0.0
    %2227 = vmatprep.subr.mxu0 0.0
    %2228 = vmatpush1.msra.mxu0 0.0
    %2229 = vmatprep.subr.mxu0 0.0
    %2230 = vmatpush1.msra.mxu0 0.0
    %2231 = vmatprep.subr.mxu0 0.0
    %2232 = vmatpush1.msra.mxu0 0.0
    %2233 = vmatprep.subr.mxu0 0.0
    %2234 = vmatpush1.msra.mxu0 0.0
    %2235 = vmatprep.subr.mxu0 0.0
    %2236 = vmatpush1.msra.mxu0 0.0
    %2237 = vmatprep.subr.mxu0 0.0
    %2238 = vmatpush1.msra.mxu0 0.0
    %2239 = vmatprep.subr.mxu0 0.0
    %2240 = vmatpush1.msra.mxu0 0.0
    %2241 = vmatprep.subr.mxu0 0.0
    %2242 = vmatpush1.msra.mxu0 0.0
    %2243 = vmatprep.subr.mxu0 0.0
    %2244 = vmatpush1.msra.mxu0 0.0
    %2245 = vmatprep.subr.mxu0 0.0
    %2246 = vmatpush1.msra.mxu0 0.0
    %2247 = vmatprep.mubr.f32.mxu0 0.0
    %v2248 = vand.u32 %v1993, 4294901760
    %2249 = vmatmul.mubr.f32.gmra.mrb[0].mxu0 %v2248
    %v2250 = vpop.f32.mrb[0].mxu0
    %v2251 = vadd.f32 %v2090, %v2250
    %v2252 = vpop.f32.mrb[0].mxu0
    %2253 = vmatprep.mubr.f32.mxu0 0.0
    %v2254 = vand.u32 %v1999, 4294901760
    %2255 = vmatmul.mubr.f32.gmra.mrb[0].mxu0 %v2254
    %v2256 = vpop.f32.mrb[0].mxu0
    %v2257 = vadd.f32 %v2100, %v2256
    %v2258 = vpop.f32.mrb[0].mxu0
    %2259 = vdwg.mxu0
    %2260 = vmatprep.subr.mxu0 0.0
    %v2261 = vand.u32 %v225, 4294901760
    %v2262 = vsub.f32 %v225, %v2261
    %2263 = vmatpush1.msra.mxu0 %v2262
    %2264 = vmatprep.subr.mxu0 0.0
    %v2265 = vand.u32 %v226, 4294901760
    %v2266 = vsub.f32 %v226, %v2265
    %2267 = vmatpush1.msra.mxu0 %v2266
    %2268 = vmatprep.subr.mxu0 0.0
    %v2269 = vand.u32 %v227, 4294901760
    %v2270 = vsub.f32 %v227, %v2269
    %2271 = vmatpush1.msra.mxu0 %v2270
    %2272 = vmatprep.subr.mxu0 0.0
    %v2273 = vand.u32 %v228, 4294901760
    %v2274 = vsub.f32 %v228, %v2273
    %2275 = vmatpush1.msra.mxu0 %v2274
    %2276 = vmatprep.subr.mxu0 0.0
    %v2277 = vand.u32 %v229, 4294901760
    %v2278 = vsub.f32 %v229, %v2277
    %2279 = vmatpush1.msra.mxu0 %v2278
    %2280 = vmatprep.subr.mxu0 0.0
    %v2281 = vand.u32 %v230, 4294901760
    %v2282 = vsub.f32 %v230, %v2281
    %2283 = vmatpush1.msra.mxu0 %v2282
    %2284 = vmatprep.subr.mxu0 0.0
    %v2285 = vand.u32 %v231, 4294901760
    %v2286 = vsub.f32 %v231, %v2285
    %2287 = vmatpush1.msra.mxu0 %v2286
    %2288 = vmatprep.subr.mxu0 0.0
    %v2289 = vand.u32 %v232, 4294901760
    %v2290 = vsub.f32 %v232, %v2289
    %2291 = vmatpush1.msra.mxu0 %v2290
    %2292 = vmatprep.subr.mxu0 0.0
    %v2293 = vand.u32 %v233, 4294901760
    %v2294 = vsub.f32 %v233, %v2293
    %2295 = vmatpush1.msra.mxu0 %v2294
    %2296 = vmatprep.subr.mxu0 0.0
    %v2297 = vand.u32 %v234, 4294901760
    %v2298 = vsub.f32 %v234, %v2297
    %2299 = vmatpush1.msra.mxu0 %v2298
    %2300 = vmatprep.subr.mxu0 0.0
    %v2301 = vand.u32 %v235, 4294901760
    %v2302 = vsub.f32 %v235, %v2301
    %2303 = vmatpush1.msra.mxu0 %v2302
    %2304 = vmatprep.subr.mxu0 0.0
    %v2305 = vand.u32 %v236, 4294901760
    %v2306 = vsub.f32 %v236, %v2305
    %2307 = vmatpush1.msra.mxu0 %v2306
    %2308 = vmatprep.subr.mxu0 0.0
    %v2309 = vand.u32 %v237, 4294901760
    %v2310 = vsub.f32 %v237, %v2309
    %2311 = vmatpush1.msra.mxu0 %v2310
    %2312 = vmatprep.subr.mxu0 0.0
    %v2313 = vand.u32 %v238, 4294901760
    %v2314 = vsub.f32 %v238, %v2313
    %2315 = vmatpush1.msra.mxu0 %v2314
    %2316 = vmatprep.subr.mxu0 0.0
    %v2317 = vand.u32 %v239, 4294901760
    %v2318 = vsub.f32 %v239, %v2317
    %2319 = vmatpush1.msra.mxu0 %v2318
    %2320 = vmatprep.subr.mxu0 0.0
    %v2321 = vand.u32 %v240, 4294901760
    %v2322 = vsub.f32 %v240, %v2321
    %2323 = vmatpush1.msra.mxu0 %v2322
    %2324 = vmatprep.subr.mxu0 0.0
    %2325 = vmatpush1.msra.mxu0 0.0
    %2326 = vmatprep.subr.mxu0 0.0
    %2327 = vmatpush1.msra.mxu0 0.0
    %2328 = vmatprep.subr.mxu0 0.0
    %2329 = vmatpush1.msra.mxu0 0.0
    %2330 = vmatprep.subr.mxu0 0.0
    %2331 = vmatpush1.msra.mxu0 0.0
    %2332 = vmatprep.subr.mxu0 0.0
    %2333 = vmatpush1.msra.mxu0 0.0
    %2334 = vmatprep.subr.mxu0 0.0
    %2335 = vmatpush1.msra.mxu0 0.0
    %2336 = vmatprep.subr.mxu0 0.0
    %2337 = vmatpush1.msra.mxu0 0.0
    %2338 = vmatprep.subr.mxu0 0.0
    %2339 = vmatpush1.msra.mxu0 0.0
    %2340 = vmatprep.subr.mxu0 0.0
    %2341 = vmatpush1.msra.mxu0 0.0
    %2342 = vmatprep.subr.mxu0 0.0
    %2343 = vmatpush1.msra.mxu0 0.0
    %2344 = vmatprep.subr.mxu0 0.0
    %2345 = vmatpush1.msra.mxu0 0.0
    %2346 = vmatprep.subr.mxu0 0.0
    %2347 = vmatpush1.msra.mxu0 0.0
    %2348 = vmatprep.subr.mxu0 0.0
    %2349 = vmatpush1.msra.mxu0 0.0
    %2350 = vmatprep.subr.mxu0 0.0
    %2351 = vmatpush1.msra.mxu0 0.0
    %2352 = vmatprep.subr.mxu0 0.0
    %2353 = vmatpush1.msra.mxu0 0.0
    %2354 = vmatprep.subr.mxu0 0.0
    %2355 = vmatpush1.msra.mxu0 0.0
    %2356 = vmatprep.mubr.f32.mxu0 0.0
    %v2357 = vand.u32 %v1993, 4294901760
    %v2358 = vsub.f32 %v1993, %v2357
    %2359 = vmatmul.mubr.f32.gmra.mrb[0].mxu0 %v2358
    %v2360 = vpop.f32.mrb[0].mxu0
    %v2361 = vadd.f32 %v2251, %v2360
    %v2362 = vpop.f32.mrb[0].mxu0
    %2363 = vmatprep.mubr.f32.mxu0 0.0
    %v2364 = vand.u32 %v1999, 4294901760
    %v2365 = vsub.f32 %v1999, %v2364
    %2366 = vmatmul.mubr.f32.gmra.mrb[0].mxu0 %v2365
    %v2367 = vpop.f32.mrb[0].mxu0
    %v2368 = vadd.f32 %v2257, %v2367
    %v2369 = vpop.f32.mrb[0].mxu0
    %2370 = vdwg.mxu0
    %2371 = vmatprep.subr.mxu0 0.0
    %v2372 = vand.u32 %v225, 4294901760
    %2373 = vmatpush1.msra.mxu0 %v2372
    %2374 = vmatprep.subr.mxu0 0.0
    %v2375 = vand.u32 %v226, 4294901760
    %2376 = vmatpush1.msra.mxu0 %v2375
    %2377 = vmatprep.subr.mxu0 0.0
    %v2378 = vand.u32 %v227, 4294901760
    %2379 = vmatpush1.msra.mxu0 %v2378
    %2380 = vmatprep.subr.mxu0 0.0
    %v2381 = vand.u32 %v228, 4294901760
    %2382 = vmatpush1.msra.mxu0 %v2381
    %2383 = vmatprep.subr.mxu0 0.0
    %v2384 = vand.u32 %v229, 4294901760
    %2385 = vmatpush1.msra.mxu0 %v2384
    %2386 = vmatprep.subr.mxu0 0.0
    %v2387 = vand.u32 %v230, 4294901760
    %2388 = vmatpush1.msra.mxu0 %v2387
    %2389 = vmatprep.subr.mxu0 0.0
    %v2390 = vand.u32 %v231, 4294901760
    %2391 = vmatpush1.msra.mxu0 %v2390
    %2392 = vmatprep.subr.mxu0 0.0
    %v2393 = vand.u32 %v232, 4294901760
    %2394 = vmatpush1.msra.mxu0 %v2393
    %2395 = vmatprep.subr.mxu0 0.0
    %v2396 = vand.u32 %v233, 4294901760
    %2397 = vmatpush1.msra.mxu0 %v2396
    %2398 = vmatprep.subr.mxu0 0.0
    %v2399 = vand.u32 %v234, 4294901760
    %2400 = vmatpush1.msra.mxu0 %v2399
    %2401 = vmatprep.subr.mxu0 0.0
    %v2402 = vand.u32 %v235, 4294901760
    %2403 = vmatpush1.msra.mxu0 %v2402
    %2404 = vmatprep.subr.mxu0 0.0
    %v2405 = vand.u32 %v236, 4294901760
    %2406 = vmatpush1.msra.mxu0 %v2405
    %2407 = vmatprep.subr.mxu0 0.0
    %v2408 = vand.u32 %v237, 4294901760
    %2409 = vmatpush1.msra.mxu0 %v2408
    %2410 = vmatprep.subr.mxu0 0.0
    %v2411 = vand.u32 %v238, 4294901760
    %2412 = vmatpush1.msra.mxu0 %v2411
    %2413 = vmatprep.subr.mxu0 0.0
    %v2414 = vand.u32 %v239, 4294901760
    %2415 = vmatpush1.msra.mxu0 %v2414
    %2416 = vmatprep.subr.mxu0 0.0
    %v2417 = vand.u32 %v240, 4294901760
    %2418 = vmatpush1.msra.mxu0 %v2417
    %2419 = vmatprep.subr.mxu0 0.0
    %2420 = vmatpush1.msra.mxu0 0.0
    %2421 = vmatprep.subr.mxu0 0.0
    %2422 = vmatpush1.msra.mxu0 0.0
    %2423 = vmatprep.subr.mxu0 0.0
    %2424 = vmatpush1.msra.mxu0 0.0
    %2425 = vmatprep.subr.mxu0 0.0
    %2426 = vmatpush1.msra.mxu0 0.0
    %2427 = vmatprep.subr.mxu0 0.0
    %2428 = vmatpush1.msra.mxu0 0.0
    %2429 = vmatprep.subr.mxu0 0.0
    %2430 = vmatpush1.msra.mxu0 0.0
    %2431 = vmatprep.subr.mxu0 0.0
    %2432 = vmatpush1.msra.mxu0 0.0
    %2433 = vmatprep.subr.mxu0 0.0
    %2434 = vmatpush1.msra.mxu0 0.0
    %2435 = vmatprep.subr.mxu0 0.0
    %2436 = vmatpush1.msra.mxu0 0.0
    %2437 = vmatprep.subr.mxu0 0.0
    %2438 = vmatpush1.msra.mxu0 0.0
    %2439 = vmatprep.subr.mxu0 0.0
    %2440 = vmatpush1.msra.mxu0 0.0
    %2441 = vmatprep.subr.mxu0 0.0
    %2442 = vmatpush1.msra.mxu0 0.0
    %2443 = vmatprep.subr.mxu0 0.0
    %2444 = vmatpush1.msra.mxu0 0.0
    %2445 = vmatprep.subr.mxu0 0.0
    %2446 = vmatpush1.msra.mxu0 0.0
    %2447 = vmatprep.subr.mxu0 0.0
    %2448 = vmatpush1.msra.mxu0 0.0
    %2449 = vmatprep.subr.mxu0 0.0
    %2450 = vmatpush1.msra.mxu0 0.0
    %2451 = vmatprep.mubr.f32.mxu0 0.0
    %v2452 = vand.u32 %v1993, 4294901760
    %v2453 = vsub.f32 %v1993, %v2452
    %v2454 = vand.u32 %v2453, 4294901760
    %2455 = vmatmul.mubr.f32.gmra.mrb[0].mxu0 %v2454
    %v2456 = vpop.f32.mrb[0].mxu0
    %v2457 = vadd.f32 %v2361, %v2456
    %v2458 = vpop.f32.mrb[0].mxu0
    %2459 = vmatprep.mubr.f32.mxu0 0.0
    %v2460 = vand.u32 %v1999, 4294901760
    %v2461 = vsub.f32 %v1999, %v2460
    %v2462 = vand.u32 %v2461, 4294901760
    %2463 = vmatmul.mubr.f32.gmra.mrb[0].mxu0 %v2462
    %v2464 = vpop.f32.mrb[0].mxu0
    %v2465 = vadd.f32 %v2368, %v2464
    %v2466 = vpop.f32.mrb[0].mxu0
    %2467 = vdwg.mxu0
    %2468 = vmatprep.subr.mxu0 0.0
    %v2469 = vand.u32 %v225, 4294901760
    %v2470 = vsub.f32 %v225, %v2469
    %v2471 = vand.u32 %v2470, 4294901760
    %2472 = vmatpush1.msra.mxu0 %v2471
    %2473 = vmatprep.subr.mxu0 0.0
    %v2474 = vand.u32 %v226, 4294901760
    %v2475 = vsub.f32 %v226, %v2474
    %v2476 = vand.u32 %v2475, 4294901760
    %2477 = vmatpush1.msra.mxu0 %v2476
    %2478 = vmatprep.subr.mxu0 0.0
    %v2479 = vand.u32 %v227, 4294901760
    %v2480 = vsub.f32 %v227, %v2479
    %v2481 = vand.u32 %v2480, 4294901760
    %2482 = vmatpush1.msra.mxu0 %v2481
    %2483 = vmatprep.subr.mxu0 0.0
    %v2484 = vand.u32 %v228, 4294901760
    %v2485 = vsub.f32 %v228, %v2484
    %v2486 = vand.u32 %v2485, 4294901760
    %2487 = vmatpush1.msra.mxu0 %v2486
    %2488 = vmatprep.subr.mxu0 0.0
    %v2489 = vand.u32 %v229, 4294901760
    %v2490 = vsub.f32 %v229, %v2489
    %v2491 = vand.u32 %v2490, 4294901760
    %2492 = vmatpush1.msra.mxu0 %v2491
    %2493 = vmatprep.subr.mxu0 0.0
    %v2494 = vand.u32 %v230, 4294901760
    %v2495 = vsub.f32 %v230, %v2494
    %v2496 = vand.u32 %v2495, 4294901760
    %2497 = vmatpush1.msra.mxu0 %v2496
    %2498 = vmatprep.subr.mxu0 0.0
    %v2499 = vand.u32 %v231, 4294901760
    %v2500 = vsub.f32 %v231, %v2499
    %v2501 = vand.u32 %v2500, 4294901760
    %2502 = vmatpush1.msra.mxu0 %v2501
    %2503 = vmatprep.subr.mxu0 0.0
    %v2504 = vand.u32 %v232, 4294901760
    %v2505 = vsub.f32 %v232, %v2504
    %v2506 = vand.u32 %v2505, 4294901760
    %2507 = vmatpush1.msra.mxu0 %v2506
    %2508 = vmatprep.subr.mxu0 0.0
    %v2509 = vand.u32 %v233, 4294901760
    %v2510 = vsub.f32 %v233, %v2509
    %v2511 = vand.u32 %v2510, 4294901760
    %2512 = vmatpush1.msra.mxu0 %v2511
    %2513 = vmatprep.subr.mxu0 0.0
    %v2514 = vand.u32 %v234, 4294901760
    %v2515 = vsub.f32 %v234, %v2514
    %v2516 = vand.u32 %v2515, 4294901760
    %2517 = vmatpush1.msra.mxu0 %v2516
    %2518 = vmatprep.subr.mxu0 0.0
    %v2519 = vand.u32 %v235, 4294901760
    %v2520 = vsub.f32 %v235, %v2519
    %v2521 = vand.u32 %v2520, 4294901760
    %2522 = vmatpush1.msra.mxu0 %v2521
    %2523 = vmatprep.subr.mxu0 0.0
    %v2524 = vand.u32 %v236, 4294901760
    %v2525 = vsub.f32 %v236, %v2524
    %v2526 = vand.u32 %v2525, 4294901760
    %2527 = vmatpush1.msra.mxu0 %v2526
    %2528 = vmatprep.subr.mxu0 0.0
    %v2529 = vand.u32 %v237, 4294901760
    %v2530 = vsub.f32 %v237, %v2529
    %v2531 = vand.u32 %v2530, 4294901760
    %2532 = vmatpush1.msra.mxu0 %v2531
    %2533 = vmatprep.subr.mxu0 0.0
    %v2534 = vand.u32 %v238, 4294901760
    %v2535 = vsub.f32 %v238, %v2534
    %v2536 = vand.u32 %v2535, 4294901760
    %2537 = vmatpush1.msra.mxu0 %v2536
    %2538 = vmatprep.subr.mxu0 0.0
    %v2539 = vand.u32 %v239, 4294901760
    %v2540 = vsub.f32 %v239, %v2539
    %v2541 = vand.u32 %v2540, 4294901760
    %2542 = vmatpush1.msra.mxu0 %v2541
    %2543 = vmatprep.subr.mxu0 0.0
    %v2544 = vand.u32 %v240, 4294901760
    %v2545 = vsub.f32 %v240, %v2544
    %v2546 = vand.u32 %v2545, 4294901760
    %2547 = vmatpush1.msra.mxu0 %v2546
    %2548 = vmatprep.subr.mxu0 0.0
    %2549 = vmatpush1.msra.mxu0 0.0
    %2550 = vmatprep.subr.mxu0 0.0
    %2551 = vmatpush1.msra.mxu0 0.0
    %2552 = vmatprep.subr.mxu0 0.0
    %2553 = vmatpush1.msra.mxu0 0.0
    %2554 = vmatprep.subr.mxu0 0.0
    %2555 = vmatpush1.msra.mxu0 0.0
    %2556 = vmatprep.subr.mxu0 0.0
    %2557 = vmatpush1.msra.mxu0 0.0
    %2558 = vmatprep.subr.mxu0 0.0
    %2559 = vmatpush1.msra.mxu0 0.0
    %2560 = vmatprep.subr.mxu0 0.0
    %2561 = vmatpush1.msra.mxu0 0.0
    %2562 = vmatprep.subr.mxu0 0.0
    %2563 = vmatpush1.msra.mxu0 0.0
    %2564 = vmatprep.subr.mxu0 0.0
    %2565 = vmatpush1.msra.mxu0 0.0
    %2566 = vmatprep.subr.mxu0 0.0
    %2567 = vmatpush1.msra.mxu0 0.0
    %2568 = vmatprep.subr.mxu0 0.0
    %2569 = vmatpush1.msra.mxu0 0.0
    %2570 = vmatprep.subr.mxu0 0.0
    %2571 = vmatpush1.msra.mxu0 0.0
    %2572 = vmatprep.subr.mxu0 0.0
    %2573 = vmatpush1.msra.mxu0 0.0
    %2574 = vmatprep.subr.mxu0 0.0
    %2575 = vmatpush1.msra.mxu0 0.0
    %2576 = vmatprep.subr.mxu0 0.0
    %2577 = vmatpush1.msra.mxu0 0.0
    %2578 = vmatprep.subr.mxu0 0.0
    %2579 = vmatpush1.msra.mxu0 0.0
    %2580 = vmatprep.mubr.f32.mxu0 0.0
    %v2581 = vand.u32 %v1993, 4294901760
    %2582 = vmatmul.mubr.f32.gmra.mrb[0].mxu0 %v2581
    %v2583 = vpop.f32.mrb[0].mxu0
    %v2584 = vadd.f32 %v2457, %v2583
    %v2585 = vpop.f32.mrb[0].mxu0
    %2586 = vmatprep.mubr.f32.mxu0 0.0
    %v2587 = vand.u32 %v1999, 4294901760
    %2588 = vmatmul.mubr.f32.gmra.mrb[0].mxu0 %v2587
    %v2589 = vpop.f32.mrb[0].mxu0
    %v2590 = vadd.f32 %v2465, %v2589
    %v2591 = vpop.f32.mrb[0].mxu0
    %2592 = vdwg.mxu0
    %2593 = vmatprep.subr.mxu0 0.0
    %v2594 = vand.u32 %v225, 4294901760
    %2595 = vmatpush1.msra.mxu0 %v2594
    %2596 = vmatprep.subr.mxu0 0.0
    %v2597 = vand.u32 %v226, 4294901760
    %2598 = vmatpush1.msra.mxu0 %v2597
    %2599 = vmatprep.subr.mxu0 0.0
    %v2600 = vand.u32 %v227, 4294901760
    %2601 = vmatpush1.msra.mxu0 %v2600
    %2602 = vmatprep.subr.mxu0 0.0
    %v2603 = vand.u32 %v228, 4294901760
    %2604 = vmatpush1.msra.mxu0 %v2603
    %2605 = vmatprep.subr.mxu0 0.0
    %v2606 = vand.u32 %v229, 4294901760
    %2607 = vmatpush1.msra.mxu0 %v2606
    %2608 = vmatprep.subr.mxu0 0.0
    %v2609 = vand.u32 %v230, 4294901760
    %2610 = vmatpush1.msra.mxu0 %v2609
    %2611 = vmatprep.subr.mxu0 0.0
    %v2612 = vand.u32 %v231, 4294901760
    %2613 = vmatpush1.msra.mxu0 %v2612
    %2614 = vmatprep.subr.mxu0 0.0
    %v2615 = vand.u32 %v232, 4294901760
    %2616 = vmatpush1.msra.mxu0 %v2615
    %2617 = vmatprep.subr.mxu0 0.0
    %v2618 = vand.u32 %v233, 4294901760
    %2619 = vmatpush1.msra.mxu0 %v2618
    %2620 = vmatprep.subr.mxu0 0.0
    %v2621 = vand.u32 %v234, 4294901760
    %2622 = vmatpush1.msra.mxu0 %v2621
    %2623 = vmatprep.subr.mxu0 0.0
    %v2624 = vand.u32 %v235, 4294901760
    %2625 = vmatpush1.msra.mxu0 %v2624
    %2626 = vmatprep.subr.mxu0 0.0
    %v2627 = vand.u32 %v236, 4294901760
    %2628 = vmatpush1.msra.mxu0 %v2627
    %2629 = vmatprep.subr.mxu0 0.0
    %v2630 = vand.u32 %v237, 4294901760
    %2631 = vmatpush1.msra.mxu0 %v2630
    %2632 = vmatprep.subr.mxu0 0.0
    %v2633 = vand.u32 %v238, 4294901760
    %2634 = vmatpush1.msra.mxu0 %v2633
    %2635 = vmatprep.subr.mxu0 0.0
    %v2636 = vand.u32 %v239, 4294901760
    %2637 = vmatpush1.msra.mxu0 %v2636
    %2638 = vmatprep.subr.mxu0 0.0
    %v2639 = vand.u32 %v240, 4294901760
    %2640 = vmatpush1.msra.mxu0 %v2639
    %2641 = vmatprep.subr.mxu0 0.0
    %2642 = vmatpush1.msra.mxu0 0.0
    %2643 = vmatprep.subr.mxu0 0.0
    %2644 = vmatpush1.msra.mxu0 0.0
    %2645 = vmatprep.subr.mxu0 0.0
    %2646 = vmatpush1.msra.mxu0 0.0
    %2647 = vmatprep.subr.mxu0 0.0
    %2648 = vmatpush1.msra.mxu0 0.0
    %2649 = vmatprep.subr.mxu0 0.0
    %2650 = vmatpush1.msra.mxu0 0.0
    %2651 = vmatprep.subr.mxu0 0.0
    %2652 = vmatpush1.msra.mxu0 0.0
    %2653 = vmatprep.subr.mxu0 0.0
    %2654 = vmatpush1.msra.mxu0 0.0
    %2655 = vmatprep.subr.mxu0 0.0
    %2656 = vmatpush1.msra.mxu0 0.0
    %2657 = vmatprep.subr.mxu0 0.0
    %2658 = vmatpush1.msra.mxu0 0.0
    %2659 = vmatprep.subr.mxu0 0.0
    %2660 = vmatpush1.msra.mxu0 0.0
    %2661 = vmatprep.subr.mxu0 0.0
    %2662 = vmatpush1.msra.mxu0 0.0
    %2663 = vmatprep.subr.mxu0 0.0
    %2664 = vmatpush1.msra.mxu0 0.0
    %2665 = vmatprep.subr.mxu0 0.0
    %2666 = vmatpush1.msra.mxu0 0.0
    %2667 = vmatprep.subr.mxu0 0.0
    %2668 = vmatpush1.msra.mxu0 0.0
    %2669 = vmatprep.subr.mxu0 0.0
    %2670 = vmatpush1.msra.mxu0 0.0
    %2671 = vmatprep.subr.mxu0 0.0
    %2672 = vmatpush1.msra.mxu0 0.0
    %2673 = vmatprep.mubr.f32.mxu0 0.0
    %v2674 = vand.u32 %v1993, 4294901760
    %2675 = vmatmul.mubr.f32.gmra.mrb[0].mxu0 %v2674
    %v2676 = vpop.f32.mrb[0].mxu0
    %v2677 = vadd.f32 %v2584, %v2676
    %v2678 = vpop.f32.mrb[0].mxu0
    %2679 = vmatprep.mubr.f32.mxu0 0.0
    %v2680 = vand.u32 %v1999, 4294901760
    %2681 = vmatmul.mubr.f32.gmra.mrb[0].mxu0 %v2680
    %v2682 = vpop.f32.mrb[0].mxu0
    %v2683 = vadd.f32 %v2590, %v2682
    %v2684 = vpop.f32.mrb[0].mxu0
    %2685 = vdwg.mxu0
    %v2686 = vxor.u32 %v2677, 2147483648
    %v2687 = vxor.u32 %v2683, 2147483648
    %v2688 = vmul.f32 %v2686, 1.442695
    %v2689 = vpow.pop %v2688
    %v2690 = vmul.f32 %v2687, 1.442695
    %v2691 = vpow.pop %v2690
    %v2692 = vadd.f32 %v2689, 1.0
    %v2693 = vadd.f32 %v2691, 1.0
    %v2694 = vrcp.pop %v2692
    %v2695 = vmul.f32 1.0, %v2694
    %v2696 = vrcp.pop %v2693
    %v2697 = vmul.f32 1.0, %v2696
    %v2698 = vmul.f32 %v2695, %v1993
    %v2699 = vmul.f32 %v2697, %v1999
    %v2700 = vld [vmem:[#allocation10] sm:$0xff]
    %v2701 = vld [vmem:[#allocation10 + $0x8] sm:$0xff]
    %v2702 = vld [vmem:[#allocation10 + $0x10] sm:$0xff]
    %v2703 = vld [vmem:[#allocation10 + $0x18] sm:$0xff]
    %v2704 = vld [vmem:[#allocation10 + $0x20] sm:$0xff]
    %v2705 = vld [vmem:[#allocation10 + $0x28] sm:$0xff]
    %v2706 = vld [vmem:[#allocation10 + $0x30] sm:$0xff]
    %v2707 = vld [vmem:[#allocation10 + $0x38] sm:$0xff]
    %v2708 = vld [vmem:[#allocation10 + $0x40] sm:$0xff]
    %v2709 = vld [vmem:[#allocation10 + $0x48] sm:$0xff]
    %v2710 = vld [vmem:[#allocation10 + $0x50] sm:$0xff]
    %v2711 = vld [vmem:[#allocation10 + $0x58] sm:$0xff]
    %v2712 = vld [vmem:[#allocation10 + $0x60] sm:$0xff]
    %v2713 = vld [vmem:[#allocation10 + $0x68] sm:$0xff]
    %v2714 = vld [vmem:[#allocation10 + $0x70] sm:$0xff]
    %v2715 = vld [vmem:[#allocation10 + $0x78] sm:$0xff]
    %v2716 = vld [vmem:[#allocation10 + $0x80] sm:$0xff]
    %v2717 = vld [vmem:[#allocation10 + $0x88] sm:$0xff]
    %v2718 = vld [vmem:[#allocation10 + $0x90] sm:$0xff]
    %v2719 = vld [vmem:[#allocation10 + $0x98] sm:$0xff]
    %v2720 = vld [vmem:[#allocation10 + $0xa0] sm:$0xff]
    %v2721 = vld [vmem:[#allocation10 + $0xa8] sm:$0xff]
    %v2722 = vld [vmem:[#allocation10 + $0xb0] sm:$0xff]
    %v2723 = vld [vmem:[#allocation10 + $0xb8] sm:$0xff]
    %v2724 = vld [vmem:[#allocation10 + $0xc0] sm:$0xff]
    %v2725 = vld [vmem:[#allocation10 + $0xc8] sm:$0xff]
    %v2726 = vld [vmem:[#allocation10 + $0xd0] sm:$0xff]
    %v2727 = vld [vmem:[#allocation10 + $0xd8] sm:$0xff]
    %v2728 = vld [vmem:[#allocation10 + $0xe0] sm:$0xff]
    %v2729 = vld [vmem:[#allocation10 + $0xe8] sm:$0xff]
    %v2730 = vld [vmem:[#allocation10 + $0xf0] sm:$0xff]
    %v2731 = vld [vmem:[#allocation10 + $0xf8] sm:$0xff]
    %v2732 = vld [vmem:[#allocation10 + $0x100] sm:$0xff]
    %v2733 = vld [vmem:[#allocation10 + $0x108] sm:$0xff]
    %v2734 = vld [vmem:[#allocation10 + $0x110] sm:$0xff]
    %v2735 = vld [vmem:[#allocation10 + $0x118] sm:$0xff]
    %v2736 = vld [vmem:[#allocation10 + $0x120] sm:$0xff]
    %v2737 = vld [vmem:[#allocation10 + $0x128] sm:$0xff]
    %v2738 = vld [vmem:[#allocation10 + $0x130] sm:$0xff]
    %v2739 = vld [vmem:[#allocation10 + $0x138] sm:$0xff]
    %v2740 = vld [vmem:[#allocation10 + $0x140] sm:$0xff]
    %v2741 = vld [vmem:[#allocation10 + $0x148] sm:$0xff]
    %v2742 = vld [vmem:[#allocation10 + $0x150] sm:$0xff]
    %v2743 = vld [vmem:[#allocation10 + $0x158] sm:$0xff]
    %v2744 = vld [vmem:[#allocation10 + $0x160] sm:$0xff]
    %v2745 = vld [vmem:[#allocation10 + $0x168] sm:$0xff]
    %v2746 = vld [vmem:[#allocation10 + $0x170] sm:$0xff]
    %v2747 = vld [vmem:[#allocation10 + $0x178] sm:$0xff]
    %v2748 = vld [vmem:[%s6] sm:$0x7]
    %v2749 = vld [vmem:[#allocation11] sm:$0xff]
    %v2750 = vld [vmem:[#allocation11 + $0x8] sm:$0xff]
    %v2751 = vld [vmem:[#allocation11 + $0x10] sm:$0xff]
    %v2752 = vld [vmem:[#allocation11 + $0x18] sm:$0xff]
    %v2753 = vld [vmem:[#allocation11 + $0x20] sm:$0xff]
    %v2754 = vld [vmem:[#allocation11 + $0x28] sm:$0xff]
    %v2755 = vld [vmem:[#allocation11 + $0x30] sm:$0xff]
    %v2756 = vld [vmem:[#allocation11 + $0x38] sm:$0xff]
    %v2757 = vld [vmem:[#allocation11 + $0x40] sm:$0xff]
    %v2758 = vld [vmem:[#allocation11 + $0x48] sm:$0xff]
    %v2759 = vld [vmem:[#allocation11 + $0x50] sm:$0xff]
    %v2760 = vld [vmem:[#allocation11 + $0x58] sm:$0xff]
    %v2761 = vld [vmem:[#allocation11 + $0x60] sm:$0xff]
    %v2762 = vld [vmem:[#allocation11 + $0x68] sm:$0xff]
    %v2763 = vld [vmem:[#allocation11 + $0x70] sm:$0xff]
    %v2764 = vld [vmem:[#allocation11 + $0x78] sm:$0xff]
    %v2765 = vld [vmem:[#allocation13] sm:$0xff]
    %v2766 = vld [vmem:[#allocation13 + $0x8] sm:$0xff]
    %v2767 = vld [vmem:[#allocation13 + $0x10] sm:$0xff]
    %v2768 = vld [vmem:[#allocation13 + $0x18] sm:$0xff]
    %v2769 = vld [vmem:[#allocation13 + $0x20] sm:$0xff]
    %v2770 = vld [vmem:[#allocation13 + $0x28] sm:$0xff]
    %v2771 = vld [vmem:[#allocation13 + $0x30] sm:$0xff]
    %v2772 = vld [vmem:[#allocation13 + $0x38] sm:$0xff]
    %v2773 = vld [vmem:[#allocation13 + $0x40] sm:$0xff]
    %v2774 = vld [vmem:[#allocation13 + $0x48] sm:$0xff]
    %v2775 = vld [vmem:[#allocation13 + $0x50] sm:$0xff]
    %v2776 = vld [vmem:[#allocation13 + $0x58] sm:$0xff]
    %v2777 = vld [vmem:[#allocation13 + $0x60] sm:$0xff]
    %v2778 = vld [vmem:[#allocation13 + $0x68] sm:$0xff]
    %v2779 = vld [vmem:[#allocation13 + $0x70] sm:$0xff]
    %v2780 = vld [vmem:[#allocation13 + $0x78] sm:$0xff]
    %v2782 = vlaneseq
    %v2783 = vshrl.u32 %v2782, 7
    %v2784 = vsub.s32 0, %v2783
    %v2785 = vrot.slane %v2748, %v2784
    %v2786 = vlaneseq
    %v2787 = vshrl.u32 %v2786, 7
    %v2788 = vsub.s32 1, %v2787
    %v2789 = vrot.slane %v2748, %v2788
    %v2790 = vlaneseq
    %v2791 = vshrl.u32 %v2790, 7
    %v2792 = vsub.s32 2, %v2791
    %v2793 = vrot.slane %v2748, %v2792
    %v2797 = vand.u32 %v2701, 4294901760
    %2798 = vmatprep.subr.mxu0 %v2797
    %v2799 = vand.u32 %v2700, 4294901760
    %2800 = vmatpush1.msra.mxu0 %v2799
    %v2801 = vand.u32 %v2704, 4294901760
    %2802 = vmatprep.subr.mxu0 %v2801
    %v2803 = vand.u32 %v2703, 4294901760
    %2804 = vmatpush1.msra.mxu0 %v2803
    %v2805 = vand.u32 %v2707, 4294901760
    %2806 = vmatprep.subr.mxu0 %v2805
    %v2807 = vand.u32 %v2706, 4294901760
    %2808 = vmatpush1.msra.mxu0 %v2807
    %v2809 = vand.u32 %v2710, 4294901760
    %2810 = vmatprep.subr.mxu0 %v2809
    %v2811 = vand.u32 %v2709, 4294901760
    %2812 = vmatpush1.msra.mxu0 %v2811
    %v2813 = vand.u32 %v2713, 4294901760
    %2814 = vmatprep.subr.mxu0 %v2813
    %v2815 = vand.u32 %v2712, 4294901760
    %2816 = vmatpush1.msra.mxu0 %v2815
    %v2817 = vand.u32 %v2716, 4294901760
    %2818 = vmatprep.subr.mxu0 %v2817
    %v2819 = vand.u32 %v2715, 4294901760
    %2820 = vmatpush1.msra.mxu0 %v2819
    %v2821 = vand.u32 %v2719, 4294901760
    %2822 = vmatprep.subr.mxu0 %v2821
    %v2823 = vand.u32 %v2718, 4294901760
    %2824 = vmatpush1.msra.mxu0 %v2823
    %v2825 = vand.u32 %v2722, 4294901760
    %2826 = vmatprep.subr.mxu0 %v2825
    %v2827 = vand.u32 %v2721, 4294901760
    %2828 = vmatpush1.msra.mxu0 %v2827
    %v2829 = vand.u32 %v2725, 4294901760
    %2830 = vmatprep.subr.mxu0 %v2829
    %v2831 = vand.u32 %v2724, 4294901760
    %2832 = vmatpush1.msra.mxu0 %v2831
    %v2833 = vand.u32 %v2728, 4294901760
    %2834 = vmatprep.subr.mxu0 %v2833
    %v2835 = vand.u32 %v2727, 4294901760
    %2836 = vmatpush1.msra.mxu0 %v2835
    %v2837 = vand.u32 %v2731, 4294901760
    %2838 = vmatprep.subr.mxu0 %v2837
    %v2839 = vand.u32 %v2730, 4294901760
    %2840 = vmatpush1.msra.mxu0 %v2839
    %v2841 = vand.u32 %v2734, 4294901760
    %2842 = vmatprep.subr.mxu0 %v2841
    %v2843 = vand.u32 %v2733, 4294901760
    %2844 = vmatpush1.msra.mxu0 %v2843
    %v2845 = vand.u32 %v2737, 4294901760
    %2846 = vmatprep.subr.mxu0 %v2845
    %v2847 = vand.u32 %v2736, 4294901760
    %2848 = vmatpush1.msra.mxu0 %v2847
    %v2849 = vand.u32 %v2740, 4294901760
    %2850 = vmatprep.subr.mxu0 %v2849
    %v2851 = vand.u32 %v2739, 4294901760
    %2852 = vmatpush1.msra.mxu0 %v2851
    %v2853 = vand.u32 %v2743, 4294901760
    %2854 = vmatprep.subr.mxu0 %v2853
    %v2855 = vand.u32 %v2742, 4294901760
    %2856 = vmatpush1.msra.mxu0 %v2855
    %v2857 = vand.u32 %v2746, 4294901760
    %2858 = vmatprep.subr.mxu0 %v2857
    %v2859 = vand.u32 %v2745, 4294901760
    %2860 = vmatpush1.msra.mxu0 %v2859
    %2861 = vmatprep.subr.mxu0 0.0
    %2862 = vmatpush1.msra.mxu0 0.0
    %2863 = vmatprep.subr.mxu0 0.0
    %2864 = vmatpush1.msra.mxu0 0.0
    %2865 = vmatprep.subr.mxu0 0.0
    %2866 = vmatpush1.msra.mxu0 0.0
    %2867 = vmatprep.subr.mxu0 0.0
    %2868 = vmatpush1.msra.mxu0 0.0
    %2869 = vmatprep.subr.mxu0 0.0
    %2870 = vmatpush1.msra.mxu0 0.0
    %2871 = vmatprep.subr.mxu0 0.0
    %2872 = vmatpush1.msra.mxu0 0.0
    %2873 = vmatprep.subr.mxu0 0.0
    %2874 = vmatpush1.msra.mxu0 0.0
    %2875 = vmatprep.subr.mxu0 0.0
    %2876 = vmatpush1.msra.mxu0 0.0
    %2877 = vmatprep.subr.mxu0 0.0
    %2878 = vmatpush1.msra.mxu0 0.0
    %2879 = vmatprep.subr.mxu0 0.0
    %2880 = vmatpush1.msra.mxu0 0.0
    %2881 = vmatprep.subr.mxu0 0.0
    %2882 = vmatpush1.msra.mxu0 0.0
    %2883 = vmatprep.subr.mxu0 0.0
    %2884 = vmatpush1.msra.mxu0 0.0
    %2885 = vmatprep.subr.mxu0 0.0
    %2886 = vmatpush1.msra.mxu0 0.0
    %2887 = vmatprep.subr.mxu0 0.0
    %2888 = vmatpush1.msra.mxu0 0.0
    %2889 = vmatprep.subr.mxu0 0.0
    %2890 = vmatpush1.msra.mxu0 0.0
    %2891 = vmatprep.subr.mxu0 0.0
    %2892 = vmatpush1.msra.mxu0 0.0
    %2893 = vmatprep.mubr.f32.mxu0 0.0
    %v2894 = vand.u32 %v2698, 4294901760
    %v2895 = vsub.f32 %v2698, %v2894
    %v2896 = vand.u32 %v2895, 4294901760
    %v2897 = vsub.f32 %v2895, %v2896
    %v2898 = vand.u32 %v2897, 4294901760
    %2899 = vmatmul.mubr.f32.gmra.mrb[0].mxu0 %v2898
    %v2900 = vpop.f32.mrb[0].mxu0
    %v2901 = vadd.f32 %v2785, %v2900
    %v2902 = vpop.f32.mrb[0].mxu0
    %v2903 = vadd.f32 %v2789, %v2902
    %2904 = vmatprep.mubr.f32.mxu0 0.0
    %v2905 = vand.u32 %v2699, 4294901760
    %v2906 = vsub.f32 %v2699, %v2905
    %v2907 = vand.u32 %v2906, 4294901760
    %v2908 = vsub.f32 %v2906, %v2907
    %v2909 = vand.u32 %v2908, 4294901760
    %2910 = vmatmul.mubr.f32.gmra.mrb[0].mxu0 %v2909
    %v2911 = vpop.f32.mrb[0].mxu0
    %v2912 = vadd.f32 %v2785, %v2911
    %v2913 = vpop.f32.mrb[0].mxu0
    %v2914 = vadd.f32 %v2789, %v2913
    %2915 = vdwg.mxu0
    %v2916 = vand.u32 %v2701, 4294901760
    %v2917 = vsub.f32 %v2701, %v2916
    %v2918 = vand.u32 %v2917, 4294901760
    %v2919 = vsub.f32 %v2917, %v2918
    %v2920 = vand.u32 %v2919, 4294901760
    %2921 = vmatprep.subr.mxu0 %v2920
    %v2922 = vand.u32 %v2700, 4294901760
    %v2923 = vsub.f32 %v2700, %v2922
    %v2924 = vand.u32 %v2923, 4294901760
    %v2925 = vsub.f32 %v2923, %v2924
    %v2926 = vand.u32 %v2925, 4294901760
    %2927 = vmatpush1.msra.mxu0 %v2926
    %v2928 = vand.u32 %v2704, 4294901760
    %v2929 = vsub.f32 %v2704, %v2928
    %v2930 = vand.u32 %v2929, 4294901760
    %v2931 = vsub.f32 %v2929, %v2930
    %v2932 = vand.u32 %v2931, 4294901760
    %2933 = vmatprep.subr.mxu0 %v2932
    %v2934 = vand.u32 %v2703, 4294901760
    %v2935 = vsub.f32 %v2703, %v2934
    %v2936 = vand.u32 %v2935, 4294901760
    %v2937 = vsub.f32 %v2935, %v2936
    %v2938 = vand.u32 %v2937, 4294901760
    %2939 = vmatpush1.msra.mxu0 %v2938
    %v2940 = vand.u32 %v2707, 4294901760
    %v2941 = vsub.f32 %v2707, %v2940
    %v2942 = vand.u32 %v2941, 4294901760
    %v2943 = vsub.f32 %v2941, %v2942
    %v2944 = vand.u32 %v2943, 4294901760
    %2945 = vmatprep.subr.mxu0 %v2944
    %v2946 = vand.u32 %v2706, 4294901760
    %v2947 = vsub.f32 %v2706, %v2946
    %v2948 = vand.u32 %v2947, 4294901760
    %v2949 = vsub.f32 %v2947, %v2948
    %v2950 = vand.u32 %v2949, 4294901760
    %2951 = vmatpush1.msra.mxu0 %v2950
    %v2952 = vand.u32 %v2710, 4294901760
    %v2953 = vsub.f32 %v2710, %v2952
    %v2954 = vand.u32 %v2953, 4294901760
    %v2955 = vsub.f32 %v2953, %v2954
    %v2956 = vand.u32 %v2955, 4294901760
    %2957 = vmatprep.subr.mxu0 %v2956
    %v2958 = vand.u32 %v2709, 4294901760
    %v2959 = vsub.f32 %v2709, %v2958
    %v2960 = vand.u32 %v2959, 4294901760
    %v2961 = vsub.f32 %v2959, %v2960
    %v2962 = vand.u32 %v2961, 4294901760
    %2963 = vmatpush1.msra.mxu0 %v2962
    %v2964 = vand.u32 %v2713, 4294901760
    %v2965 = vsub.f32 %v2713, %v2964
    %v2966 = vand.u32 %v2965, 4294901760
    %v2967 = vsub.f32 %v2965, %v2966
    %v2968 = vand.u32 %v2967, 4294901760
    %2969 = vmatprep.subr.mxu0 %v2968
    %v2970 = vand.u32 %v2712, 4294901760
    %v2971 = vsub.f32 %v2712, %v2970
    %v2972 = vand.u32 %v2971, 4294901760
    %v2973 = vsub.f32 %v2971, %v2972
    %v2974 = vand.u32 %v2973, 4294901760
    %2975 = vmatpush1.msra.mxu0 %v2974
    %v2976 = vand.u32 %v2716, 4294901760
    %v2977 = vsub.f32 %v2716, %v2976
    %v2978 = vand.u32 %v2977, 4294901760
    %v2979 = vsub.f32 %v2977, %v2978
    %v2980 = vand.u32 %v2979, 4294901760
    %2981 = vmatprep.subr.mxu0 %v2980
    %v2982 = vand.u32 %v2715, 4294901760
    %v2983 = vsub.f32 %v2715, %v2982
    %v2984 = vand.u32 %v2983, 4294901760
    %v2985 = vsub.f32 %v2983, %v2984
    %v2986 = vand.u32 %v2985, 4294901760
    %2987 = vmatpush1.msra.mxu0 %v2986
    %v2988 = vand.u32 %v2719, 4294901760
    %v2989 = vsub.f32 %v2719, %v2988
    %v2990 = vand.u32 %v2989, 4294901760
    %v2991 = vsub.f32 %v2989, %v2990
    %v2992 = vand.u32 %v2991, 4294901760
    %2993 = vmatprep.subr.mxu0 %v2992
    %v2994 = vand.u32 %v2718, 4294901760
    %v2995 = vsub.f32 %v2718, %v2994
    %v2996 = vand.u32 %v2995, 4294901760
    %v2997 = vsub.f32 %v2995, %v2996
    %v2998 = vand.u32 %v2997, 4294901760
    %2999 = vmatpush1.msra.mxu0 %v2998
    %v3000 = vand.u32 %v2722, 4294901760
    %v3001 = vsub.f32 %v2722, %v3000
    %v3002 = vand.u32 %v3001, 4294901760
    %v3003 = vsub.f32 %v3001, %v3002
    %v3004 = vand.u32 %v3003, 4294901760
    %3005 = vmatprep.subr.mxu0 %v3004
    %v3006 = vand.u32 %v2721, 4294901760
    %v3007 = vsub.f32 %v2721, %v3006
    %v3008 = vand.u32 %v3007, 4294901760
    %v3009 = vsub.f32 %v3007, %v3008
    %v3010 = vand.u32 %v3009, 4294901760
    %3011 = vmatpush1.msra.mxu0 %v3010
    %v3012 = vand.u32 %v2725, 4294901760
    %v3013 = vsub.f32 %v2725, %v3012
    %v3014 = vand.u32 %v3013, 4294901760
    %v3015 = vsub.f32 %v3013, %v3014
    %v3016 = vand.u32 %v3015, 4294901760
    %3017 = vmatprep.subr.mxu0 %v3016
    %v3018 = vand.u32 %v2724, 4294901760
    %v3019 = vsub.f32 %v2724, %v3018
    %v3020 = vand.u32 %v3019, 4294901760
    %v3021 = vsub.f32 %v3019, %v3020
    %v3022 = vand.u32 %v3021, 4294901760
    %3023 = vmatpush1.msra.mxu0 %v3022
    %v3024 = vand.u32 %v2728, 4294901760
    %v3025 = vsub.f32 %v2728, %v3024
    %v3026 = vand.u32 %v3025, 4294901760
    %v3027 = vsub.f32 %v3025, %v3026
    %v3028 = vand.u32 %v3027, 4294901760
    %3029 = vmatprep.subr.mxu0 %v3028
    %v3030 = vand.u32 %v2727, 4294901760
    %v3031 = vsub.f32 %v2727, %v3030
    %v3032 = vand.u32 %v3031, 4294901760
    %v3033 = vsub.f32 %v3031, %v3032
    %v3034 = vand.u32 %v3033, 4294901760
    %3035 = vmatpush1.msra.mxu0 %v3034
    %v3036 = vand.u32 %v2731, 4294901760
    %v3037 = vsub.f32 %v2731, %v3036
    %v3038 = vand.u32 %v3037, 4294901760
    %v3039 = vsub.f32 %v3037, %v3038
    %v3040 = vand.u32 %v3039, 4294901760
    %3041 = vmatprep.subr.mxu0 %v3040
    %v3042 = vand.u32 %v2730, 4294901760
    %v3043 = vsub.f32 %v2730, %v3042
    %v3044 = vand.u32 %v3043, 4294901760
    %v3045 = vsub.f32 %v3043, %v3044
    %v3046 = vand.u32 %v3045, 4294901760
    %3047 = vmatpush1.msra.mxu0 %v3046
    %v3048 = vand.u32 %v2734, 4294901760
    %v3049 = vsub.f32 %v2734, %v3048
    %v3050 = vand.u32 %v3049, 4294901760
    %v3051 = vsub.f32 %v3049, %v3050
    %v3052 = vand.u32 %v3051, 4294901760
    %3053 = vmatprep.subr.mxu0 %v3052
    %v3054 = vand.u32 %v2733, 4294901760
    %v3055 = vsub.f32 %v2733, %v3054
    %v3056 = vand.u32 %v3055, 4294901760
    %v3057 = vsub.f32 %v3055, %v3056
    %v3058 = vand.u32 %v3057, 4294901760
    %3059 = vmatpush1.msra.mxu0 %v3058
    %v3060 = vand.u32 %v2737, 4294901760
    %v3061 = vsub.f32 %v2737, %v3060
    %v3062 = vand.u32 %v3061, 4294901760
    %v3063 = vsub.f32 %v3061, %v3062
    %v3064 = vand.u32 %v3063, 4294901760
    %3065 = vmatprep.subr.mxu0 %v3064
    %v3066 = vand.u32 %v2736, 4294901760
    %v3067 = vsub.f32 %v2736, %v3066
    %v3068 = vand.u32 %v3067, 4294901760
    %v3069 = vsub.f32 %v3067, %v3068
    %v3070 = vand.u32 %v3069, 4294901760
    %3071 = vmatpush1.msra.mxu0 %v3070
    %v3072 = vand.u32 %v2740, 4294901760
    %v3073 = vsub.f32 %v2740, %v3072
    %v3074 = vand.u32 %v3073, 4294901760
    %v3075 = vsub.f32 %v3073, %v3074
    %v3076 = vand.u32 %v3075, 4294901760
    %3077 = vmatprep.subr.mxu0 %v3076
    %v3078 = vand.u32 %v2739, 4294901760
    %v3079 = vsub.f32 %v2739, %v3078
    %v3080 = vand.u32 %v3079, 4294901760
    %v3081 = vsub.f32 %v3079, %v3080
    %v3082 = vand.u32 %v3081, 4294901760
    %3083 = vmatpush1.msra.mxu0 %v3082
    %v3084 = vand.u32 %v2743, 4294901760
    %v3085 = vsub.f32 %v2743, %v3084
    %v3086 = vand.u32 %v3085, 4294901760
    %v3087 = vsub.f32 %v3085, %v3086
    %v3088 = vand.u32 %v3087, 4294901760
    %3089 = vmatprep.subr.mxu0 %v3088
    %v3090 = vand.u32 %v2742, 4294901760
    %v3091 = vsub.f32 %v2742, %v3090
    %v3092 = vand.u32 %v3091, 4294901760
    %v3093 = vsub.f32 %v3091, %v3092
    %v3094 = vand.u32 %v3093, 4294901760
    %3095 = vmatpush1.msra.mxu0 %v3094
    %v3096 = vand.u32 %v2746, 4294901760
    %v3097 = vsub.f32 %v2746, %v3096
    %v3098 = vand.u32 %v3097, 4294901760
    %v3099 = vsub.f32 %v3097, %v3098
    %v3100 = vand.u32 %v3099, 4294901760
    %3101 = vmatprep.subr.mxu0 %v3100
    %v3102 = vand.u32 %v2745, 4294901760
    %v3103 = vsub.f32 %v2745, %v3102
    %v3104 = vand.u32 %v3103, 4294901760
    %v3105 = vsub.f32 %v3103, %v3104
    %v3106 = vand.u32 %v3105, 4294901760
    %3107 = vmatpush1.msra.mxu0 %v3106
    %3108 = vmatprep.subr.mxu0 0.0
    %3109 = vmatpush1.msra.mxu0 0.0
    %3110 = vmatprep.subr.mxu0 0.0
    %3111 = vmatpush1.msra.mxu0 0.0
    %3112 = vmatprep.subr.mxu0 0.0
    %3113 = vmatpush1.msra.mxu0 0.0
    %3114 = vmatprep.subr.mxu0 0.0
    %3115 = vmatpush1.msra.mxu0 0.0
    %3116 = vmatprep.subr.mxu0 0.0
    %3117 = vmatpush1.msra.mxu0 0.0
    %3118 = vmatprep.subr.mxu0 0.0
    %3119 = vmatpush1.msra.mxu0 0.0
    %3120 = vmatprep.subr.mxu0 0.0
    %3121 = vmatpush1.msra.mxu0 0.0
    %3122 = vmatprep.subr.mxu0 0.0
    %3123 = vmatpush1.msra.mxu0 0.0
    %3124 = vmatprep.subr.mxu0 0.0
    %3125 = vmatpush1.msra.mxu0 0.0
    %3126 = vmatprep.subr.mxu0 0.0
    %3127 = vmatpush1.msra.mxu0 0.0
    %3128 = vmatprep.subr.mxu0 0.0
    %3129 = vmatpush1.msra.mxu0 0.0
    %3130 = vmatprep.subr.mxu0 0.0
    %3131 = vmatpush1.msra.mxu0 0.0
    %3132 = vmatprep.subr.mxu0 0.0
    %3133 = vmatpush1.msra.mxu0 0.0
    %3134 = vmatprep.subr.mxu0 0.0
    %3135 = vmatpush1.msra.mxu0 0.0
    %3136 = vmatprep.subr.mxu0 0.0
    %3137 = vmatpush1.msra.mxu0 0.0
    %3138 = vmatprep.subr.mxu0 0.0
    %3139 = vmatpush1.msra.mxu0 0.0
    %3140 = vmatprep.mubr.f32.mxu0 0.0
    %v3141 = vand.u32 %v2698, 4294901760
    %3142 = vmatmul.mubr.f32.gmra.mrb[0].mxu0 %v3141
    %v3143 = vpop.f32.mrb[0].mxu0
    %v3144 = vadd.f32 %v2901, %v3143
    %v3145 = vpop.f32.mrb[0].mxu0
    %v3146 = vadd.f32 %v2903, %v3145
    %3147 = vmatprep.mubr.f32.mxu0 0.0
    %v3148 = vand.u32 %v2699, 4294901760
    %3149 = vmatmul.mubr.f32.gmra.mrb[0].mxu0 %v3148
    %v3150 = vpop.f32.mrb[0].mxu0
    %v3151 = vadd.f32 %v2912, %v3150
    %v3152 = vpop.f32.mrb[0].mxu0
    %v3153 = vadd.f32 %v2914, %v3152
    %3154 = vdwg.mxu0
    %v3155 = vand.u32 %v2701, 4294901760
    %v3156 = vsub.f32 %v2701, %v3155
    %3157 = vmatprep.subr.mxu0 %v3156
    %v3158 = vand.u32 %v2700, 4294901760
    %v3159 = vsub.f32 %v2700, %v3158
    %3160 = vmatpush1.msra.mxu0 %v3159
    %v3161 = vand.u32 %v2704, 4294901760
    %v3162 = vsub.f32 %v2704, %v3161
    %3163 = vmatprep.subr.mxu0 %v3162
    %v3164 = vand.u32 %v2703, 4294901760
    %v3165 = vsub.f32 %v2703, %v3164
    %3166 = vmatpush1.msra.mxu0 %v3165
    %v3167 = vand.u32 %v2707, 4294901760
    %v3168 = vsub.f32 %v2707, %v3167
    %3169 = vmatprep.subr.mxu0 %v3168
    %v3170 = vand.u32 %v2706, 4294901760
    %v3171 = vsub.f32 %v2706, %v3170
    %3172 = vmatpush1.msra.mxu0 %v3171
    %v3173 = vand.u32 %v2710, 4294901760
    %v3174 = vsub.f32 %v2710, %v3173
    %3175 = vmatprep.subr.mxu0 %v3174
    %v3176 = vand.u32 %v2709, 4294901760
    %v3177 = vsub.f32 %v2709, %v3176
    %3178 = vmatpush1.msra.mxu0 %v3177
    %v3179 = vand.u32 %v2713, 4294901760
    %v3180 = vsub.f32 %v2713, %v3179
    %3181 = vmatprep.subr.mxu0 %v3180
    %v3182 = vand.u32 %v2712, 4294901760
    %v3183 = vsub.f32 %v2712, %v3182
    %3184 = vmatpush1.msra.mxu0 %v3183
    %v3185 = vand.u32 %v2716, 4294901760
    %v3186 = vsub.f32 %v2716, %v3185
    %3187 = vmatprep.subr.mxu0 %v3186
    %v3188 = vand.u32 %v2715, 4294901760
    %v3189 = vsub.f32 %v2715, %v3188
    %3190 = vmatpush1.msra.mxu0 %v3189
    %v3191 = vand.u32 %v2719, 4294901760
    %v3192 = vsub.f32 %v2719, %v3191
    %3193 = vmatprep.subr.mxu0 %v3192
    %v3194 = vand.u32 %v2718, 4294901760
    %v3195 = vsub.f32 %v2718, %v3194
    %3196 = vmatpush1.msra.mxu0 %v3195
    %v3197 = vand.u32 %v2722, 4294901760
    %v3198 = vsub.f32 %v2722, %v3197
    %3199 = vmatprep.subr.mxu0 %v3198
    %v3200 = vand.u32 %v2721, 4294901760
    %v3201 = vsub.f32 %v2721, %v3200
    %3202 = vmatpush1.msra.mxu0 %v3201
    %v3203 = vand.u32 %v2725, 4294901760
    %v3204 = vsub.f32 %v2725, %v3203
    %3205 = vmatprep.subr.mxu0 %v3204
    %v3206 = vand.u32 %v2724, 4294901760
    %v3207 = vsub.f32 %v2724, %v3206
    %3208 = vmatpush1.msra.mxu0 %v3207
    %v3209 = vand.u32 %v2728, 4294901760
    %v3210 = vsub.f32 %v2728, %v3209
    %3211 = vmatprep.subr.mxu0 %v3210
    %v3212 = vand.u32 %v2727, 4294901760
    %v3213 = vsub.f32 %v2727, %v3212
    %3214 = vmatpush1.msra.mxu0 %v3213
    %v3215 = vand.u32 %v2731, 4294901760
    %v3216 = vsub.f32 %v2731, %v3215
    %3217 = vmatprep.subr.mxu0 %v3216
    %v3218 = vand.u32 %v2730, 4294901760
    %v3219 = vsub.f32 %v2730, %v3218
    %3220 = vmatpush1.msra.mxu0 %v3219
    %v3221 = vand.u32 %v2734, 4294901760
    %v3222 = vsub.f32 %v2734, %v3221
    %3223 = vmatprep.subr.mxu0 %v3222
    %v3224 = vand.u32 %v2733, 4294901760
    %v3225 = vsub.f32 %v2733, %v3224
    %3226 = vmatpush1.msra.mxu0 %v3225
    %v3227 = vand.u32 %v2737, 4294901760
    %v3228 = vsub.f32 %v2737, %v3227
    %3229 = vmatprep.subr.mxu0 %v3228
    %v3230 = vand.u32 %v2736, 4294901760
    %v3231 = vsub.f32 %v2736, %v3230
    %3232 = vmatpush1.msra.mxu0 %v3231
    %v3233 = vand.u32 %v2740, 4294901760
    %v3234 = vsub.f32 %v2740, %v3233
    %3235 = vmatprep.subr.mxu0 %v3234
    %v3236 = vand.u32 %v2739, 4294901760
    %v3237 = vsub.f32 %v2739, %v3236
    %3238 = vmatpush1.msra.mxu0 %v3237
    %v3239 = vand.u32 %v2743, 4294901760
    %v3240 = vsub.f32 %v2743, %v3239
    %3241 = vmatprep.subr.mxu0 %v3240
    %v3242 = vand.u32 %v2742, 4294901760
    %v3243 = vsub.f32 %v2742, %v3242
    %3244 = vmatpush1.msra.mxu0 %v3243
    %v3245 = vand.u32 %v2746, 4294901760
    %v3246 = vsub.f32 %v2746, %v3245
    %3247 = vmatprep.subr.mxu0 %v3246
    %v3248 = vand.u32 %v2745, 4294901760
    %v3249 = vsub.f32 %v2745, %v3248
    %3250 = vmatpush1.msra.mxu0 %v3249
    %3251 = vmatprep.subr.mxu0 0.0
    %3252 = vmatpush1.msra.mxu0 0.0
    %3253 = vmatprep.subr.mxu0 0.0
    %3254 = vmatpush1.msra.mxu0 0.0
    %3255 = vmatprep.subr.mxu0 0.0
    %3256 = vmatpush1.msra.mxu0 0.0
    %3257 = vmatprep.subr.mxu0 0.0
    %3258 = vmatpush1.msra.mxu0 0.0
    %3259 = vmatprep.subr.mxu0 0.0
    %3260 = vmatpush1.msra.mxu0 0.0
    %3261 = vmatprep.subr.mxu0 0.0
    %3262 = vmatpush1.msra.mxu0 0.0
    %3263 = vmatprep.subr.mxu0 0.0
    %3264 = vmatpush1.msra.mxu0 0.0
    %3265 = vmatprep.subr.mxu0 0.0
    %3266 = vmatpush1.msra.mxu0 0.0
    %3267 = vmatprep.subr.mxu0 0.0
    %3268 = vmatpush1.msra.mxu0 0.0
    %3269 = vmatprep.subr.mxu0 0.0
    %3270 = vmatpush1.msra.mxu0 0.0
    %3271 = vmatprep.subr.mxu0 0.0
    %3272 = vmatpush1.msra.mxu0 0.0
    %3273 = vmatprep.subr.mxu0 0.0
    %3274 = vmatpush1.msra.mxu0 0.0
    %3275 = vmatprep.subr.mxu0 0.0
    %3276 = vmatpush1.msra.mxu0 0.0
    %3277 = vmatprep.subr.mxu0 0.0
    %3278 = vmatpush1.msra.mxu0 0.0
    %3279 = vmatprep.subr.mxu0 0.0
    %3280 = vmatpush1.msra.mxu0 0.0
    %3281 = vmatprep.subr.mxu0 0.0
    %3282 = vmatpush1.msra.mxu0 0.0
    %3283 = vmatprep.mubr.f32.mxu0 0.0
    %v3284 = vand.u32 %v2698, 4294901760
    %v3285 = vsub.f32 %v2698, %v3284
    %3286 = vmatmul.mubr.f32.gmra.mrb[0].mxu0 %v3285
    %v3287 = vpop.f32.mrb[0].mxu0
    %v3288 = vadd.f32 %v3144, %v3287
    %v3289 = vpop.f32.mrb[0].mxu0
    %v3290 = vadd.f32 %v3146, %v3289
    %3291 = vmatprep.mubr.f32.mxu0 0.0
    %v3292 = vand.u32 %v2699, 4294901760
    %v3293 = vsub.f32 %v2699, %v3292
    %3294 = vmatmul.mubr.f32.gmra.mrb[0].mxu0 %v3293
    %v3295 = vpop.f32.mrb[0].mxu0
    %v3296 = vadd.f32 %v3151, %v3295
    %v3297 = vpop.f32.mrb[0].mxu0
    %v3298 = vadd.f32 %v3153, %v3297
    %3299 = vdwg.mxu0
    %v3300 = vand.u32 %v2701, 4294901760
    %3301 = vmatprep.subr.mxu0 %v3300
    %v3302 = vand.u32 %v2700, 4294901760
    %3303 = vmatpush1.msra.mxu0 %v3302
    %v3304 = vand.u32 %v2704, 4294901760
    %3305 = vmatprep.subr.mxu0 %v3304
    %v3306 = vand.u32 %v2703, 4294901760
    %3307 = vmatpush1.msra.mxu0 %v3306
    %v3308 = vand.u32 %v2707, 4294901760
    %3309 = vmatprep.subr.mxu0 %v3308
    %v3310 = vand.u32 %v2706, 4294901760
    %3311 = vmatpush1.msra.mxu0 %v3310
    %v3312 = vand.u32 %v2710, 4294901760
    %3313 = vmatprep.subr.mxu0 %v3312
    %v3314 = vand.u32 %v2709, 4294901760
    %3315 = vmatpush1.msra.mxu0 %v3314
    %v3316 = vand.u32 %v2713, 4294901760
    %3317 = vmatprep.subr.mxu0 %v3316
    %v3318 = vand.u32 %v2712, 4294901760
    %3319 = vmatpush1.msra.mxu0 %v3318
    %v3320 = vand.u32 %v2716, 4294901760
    %3321 = vmatprep.subr.mxu0 %v3320
    %v3322 = vand.u32 %v2715, 4294901760
    %3323 = vmatpush1.msra.mxu0 %v3322
    %v3324 = vand.u32 %v2719, 4294901760
    %3325 = vmatprep.subr.mxu0 %v3324
    %v3326 = vand.u32 %v2718, 4294901760
    %3327 = vmatpush1.msra.mxu0 %v3326
    %v3328 = vand.u32 %v2722, 4294901760
    %3329 = vmatprep.subr.mxu0 %v3328
    %v3330 = vand.u32 %v2721, 4294901760
    %3331 = vmatpush1.msra.mxu0 %v3330
    %v3332 = vand.u32 %v2725, 4294901760
    %3333 = vmatprep.subr.mxu0 %v3332
    %v3334 = vand.u32 %v2724, 4294901760
    %3335 = vmatpush1.msra.mxu0 %v3334
    %v3336 = vand.u32 %v2728, 4294901760
    %3337 = vmatprep.subr.mxu0 %v3336
    %v3338 = vand.u32 %v2727, 4294901760
    %3339 = vmatpush1.msra.mxu0 %v3338
    %v3340 = vand.u32 %v2731, 4294901760
    %3341 = vmatprep.subr.mxu0 %v3340
    %v3342 = vand.u32 %v2730, 4294901760
    %3343 = vmatpush1.msra.mxu0 %v3342
    %v3344 = vand.u32 %v2734, 4294901760
    %3345 = vmatprep.subr.mxu0 %v3344
    %v3346 = vand.u32 %v2733, 4294901760
    %3347 = vmatpush1.msra.mxu0 %v3346
    %v3348 = vand.u32 %v2737, 4294901760
    %3349 = vmatprep.subr.mxu0 %v3348
    %v3350 = vand.u32 %v2736, 4294901760
    %3351 = vmatpush1.msra.mxu0 %v3350
    %v3352 = vand.u32 %v2740, 4294901760
    %3353 = vmatprep.subr.mxu0 %v3352
    %v3354 = vand.u32 %v2739, 4294901760
    %3355 = vmatpush1.msra.mxu0 %v3354
    %v3356 = vand.u32 %v2743, 4294901760
    %3357 = vmatprep.subr.mxu0 %v3356
    %v3358 = vand.u32 %v2742, 4294901760
    %3359 = vmatpush1.msra.mxu0 %v3358
    %v3360 = vand.u32 %v2746, 4294901760
    %3361 = vmatprep.subr.mxu0 %v3360
    %v3362 = vand.u32 %v2745, 4294901760
    %3363 = vmatpush1.msra.mxu0 %v3362
    %3364 = vmatprep.subr.mxu0 0.0
    %3365 = vmatpush1.msra.mxu0 0.0
    %3366 = vmatprep.subr.mxu0 0.0
    %3367 = vmatpush1.msra.mxu0 0.0
    %3368 = vmatprep.subr.mxu0 0.0
    %3369 = vmatpush1.msra.mxu0 0.0
    %3370 = vmatprep.subr.mxu0 0.0
    %3371 = vmatpush1.msra.mxu0 0.0
    %3372 = vmatprep.subr.mxu0 0.0
    %3373 = vmatpush1.msra.mxu0 0.0
    %3374 = vmatprep.subr.mxu0 0.0
    %3375 = vmatpush1.msra.mxu0 0.0
    %3376 = vmatprep.subr.mxu0 0.0
    %3377 = vmatpush1.msra.mxu0 0.0
    %3378 = vmatprep.subr.mxu0 0.0
    %3379 = vmatpush1.msra.mxu0 0.0
    %3380 = vmatprep.subr.mxu0 0.0
    %3381 = vmatpush1.msra.mxu0 0.0
    %3382 = vmatprep.subr.mxu0 0.0
    %3383 = vmatpush1.msra.mxu0 0.0
    %3384 = vmatprep.subr.mxu0 0.0
    %3385 = vmatpush1.msra.mxu0 0.0
    %3386 = vmatprep.subr.mxu0 0.0
    %3387 = vmatpush1.msra.mxu0 0.0
    %3388 = vmatprep.subr.mxu0 0.0
    %3389 = vmatpush1.msra.mxu0 0.0
    %3390 = vmatprep.subr.mxu0 0.0
    %3391 = vmatpush1.msra.mxu0 0.0
    %3392 = vmatprep.subr.mxu0 0.0
    %3393 = vmatpush1.msra.mxu0 0.0
    %3394 = vmatprep.subr.mxu0 0.0
    %3395 = vmatpush1.msra.mxu0 0.0
    %3396 = vmatprep.mubr.f32.mxu0 0.0
    %v3397 = vand.u32 %v2698, 4294901760
    %v3398 = vsub.f32 %v2698, %v3397
    %v3399 = vand.u32 %v3398, 4294901760
    %3400 = vmatmul.mubr.f32.gmra.mrb[0].mxu0 %v3399
    %v3401 = vpop.f32.mrb[0].mxu0
    %v3402 = vadd.f32 %v3288, %v3401
    %v3403 = vpop.f32.mrb[0].mxu0
    %v3404 = vadd.f32 %v3290, %v3403
    %3405 = vmatprep.mubr.f32.mxu0 0.0
    %v3406 = vand.u32 %v2699, 4294901760
    %v3407 = vsub.f32 %v2699, %v3406
    %v3408 = vand.u32 %v3407, 4294901760
    %3409 = vmatmul.mubr.f32.gmra.mrb[0].mxu0 %v3408
    %v3410 = vpop.f32.mrb[0].mxu0
    %v3411 = vadd.f32 %v3296, %v3410
    %v3412 = vpop.f32.mrb[0].mxu0
    %v3413 = vadd.f32 %v3298, %v3412
    %3414 = vdwg.mxu0
    %v3415 = vand.u32 %v2701, 4294901760
    %v3416 = vsub.f32 %v2701, %v3415
    %v3417 = vand.u32 %v3416, 4294901760
    %3418 = vmatprep.subr.mxu0 %v3417
    %v3419 = vand.u32 %v2700, 4294901760
    %v3420 = vsub.f32 %v2700, %v3419
    %v3421 = vand.u32 %v3420, 4294901760
    %3422 = vmatpush1.msra.mxu0 %v3421
    %v3423 = vand.u32 %v2704, 4294901760
    %v3424 = vsub.f32 %v2704, %v3423
    %v3425 = vand.u32 %v3424, 4294901760
    %3426 = vmatprep.subr.mxu0 %v3425
    %v3427 = vand.u32 %v2703, 4294901760
    %v3428 = vsub.f32 %v2703, %v3427
    %v3429 = vand.u32 %v3428, 4294901760
    %3430 = vmatpush1.msra.mxu0 %v3429
    %v3431 = vand.u32 %v2707, 4294901760
    %v3432 = vsub.f32 %v2707, %v3431
    %v3433 = vand.u32 %v3432, 4294901760
    %3434 = vmatprep.subr.mxu0 %v3433
    %v3435 = vand.u32 %v2706, 4294901760
    %v3436 = vsub.f32 %v2706, %v3435
    %v3437 = vand.u32 %v3436, 4294901760
    %3438 = vmatpush1.msra.mxu0 %v3437
    %v3439 = vand.u32 %v2710, 4294901760
    %v3440 = vsub.f32 %v2710, %v3439
    %v3441 = vand.u32 %v3440, 4294901760
    %3442 = vmatprep.subr.mxu0 %v3441
    %v3443 = vand.u32 %v2709, 4294901760
    %v3444 = vsub.f32 %v2709, %v3443
    %v3445 = vand.u32 %v3444, 4294901760
    %3446 = vmatpush1.msra.mxu0 %v3445
    %v3447 = vand.u32 %v2713, 4294901760
    %v3448 = vsub.f32 %v2713, %v3447
    %v3449 = vand.u32 %v3448, 4294901760
    %3450 = vmatprep.subr.mxu0 %v3449
    %v3451 = vand.u32 %v2712, 4294901760
    %v3452 = vsub.f32 %v2712, %v3451
    %v3453 = vand.u32 %v3452, 4294901760
    %3454 = vmatpush1.msra.mxu0 %v3453
    %v3455 = vand.u32 %v2716, 4294901760
    %v3456 = vsub.f32 %v2716, %v3455
    %v3457 = vand.u32 %v3456, 4294901760
    %3458 = vmatprep.subr.mxu0 %v3457
    %v3459 = vand.u32 %v2715, 4294901760
    %v3460 = vsub.f32 %v2715, %v3459
    %v3461 = vand.u32 %v3460, 4294901760
    %3462 = vmatpush1.msra.mxu0 %v3461
    %v3463 = vand.u32 %v2719, 4294901760
    %v3464 = vsub.f32 %v2719, %v3463
    %v3465 = vand.u32 %v3464, 4294901760
    %3466 = vmatprep.subr.mxu0 %v3465
    %v3467 = vand.u32 %v2718, 4294901760
    %v3468 = vsub.f32 %v2718, %v3467
    %v3469 = vand.u32 %v3468, 4294901760
    %3470 = vmatpush1.msra.mxu0 %v3469
    %v3471 = vand.u32 %v2722, 4294901760
    %v3472 = vsub.f32 %v2722, %v3471
    %v3473 = vand.u32 %v3472, 4294901760
    %3474 = vmatprep.subr.mxu0 %v3473
    %v3475 = vand.u32 %v2721, 4294901760
    %v3476 = vsub.f32 %v2721, %v3475
    %v3477 = vand.u32 %v3476, 4294901760
    %3478 = vmatpush1.msra.mxu0 %v3477
    %v3479 = vand.u32 %v2725, 4294901760
    %v3480 = vsub.f32 %v2725, %v3479
    %v3481 = vand.u32 %v3480, 4294901760
    %3482 = vmatprep.subr.mxu0 %v3481
    %v3483 = vand.u32 %v2724, 4294901760
    %v3484 = vsub.f32 %v2724, %v3483
    %v3485 = vand.u32 %v3484, 4294901760
    %3486 = vmatpush1.msra.mxu0 %v3485
    %v3487 = vand.u32 %v2728, 4294901760
    %v3488 = vsub.f32 %v2728, %v3487
    %v3489 = vand.u32 %v3488, 4294901760
    %3490 = vmatprep.subr.mxu0 %v3489
    %v3491 = vand.u32 %v2727, 4294901760
    %v3492 = vsub.f32 %v2727, %v3491
    %v3493 = vand.u32 %v3492, 4294901760
    %3494 = vmatpush1.msra.mxu0 %v3493
    %v3495 = vand.u32 %v2731, 4294901760
    %v3496 = vsub.f32 %v2731, %v3495
    %v3497 = vand.u32 %v3496, 4294901760
    %3498 = vmatprep.subr.mxu0 %v3497
    %v3499 = vand.u32 %v2730, 4294901760
    %v3500 = vsub.f32 %v2730, %v3499
    %v3501 = vand.u32 %v3500, 4294901760
    %3502 = vmatpush1.msra.mxu0 %v3501
    %v3503 = vand.u32 %v2734, 4294901760
    %v3504 = vsub.f32 %v2734, %v3503
    %v3505 = vand.u32 %v3504, 4294901760
    %3506 = vmatprep.subr.mxu0 %v3505
    %v3507 = vand.u32 %v2733, 4294901760
    %v3508 = vsub.f32 %v2733, %v3507
    %v3509 = vand.u32 %v3508, 4294901760
    %3510 = vmatpush1.msra.mxu0 %v3509
    %v3511 = vand.u32 %v2737, 4294901760
    %v3512 = vsub.f32 %v2737, %v3511
    %v3513 = vand.u32 %v3512, 4294901760
    %3514 = vmatprep.subr.mxu0 %v3513
    %v3515 = vand.u32 %v2736, 4294901760
    %v3516 = vsub.f32 %v2736, %v3515
    %v3517 = vand.u32 %v3516, 4294901760
    %3518 = vmatpush1.msra.mxu0 %v3517
    %v3519 = vand.u32 %v2740, 4294901760
    %v3520 = vsub.f32 %v2740, %v3519
    %v3521 = vand.u32 %v3520, 4294901760
    %3522 = vmatprep.subr.mxu0 %v3521
    %v3523 = vand.u32 %v2739, 4294901760
    %v3524 = vsub.f32 %v2739, %v3523
    %v3525 = vand.u32 %v3524, 4294901760
    %3526 = vmatpush1.msra.mxu0 %v3525
    %v3527 = vand.u32 %v2743, 4294901760
    %v3528 = vsub.f32 %v2743, %v3527
    %v3529 = vand.u32 %v3528, 4294901760
    %3530 = vmatprep.subr.mxu0 %v3529
    %v3531 = vand.u32 %v2742, 4294901760
    %v3532 = vsub.f32 %v2742, %v3531
    %v3533 = vand.u32 %v3532, 4294901760
    %3534 = vmatpush1.msra.mxu0 %v3533
    %v3535 = vand.u32 %v2746, 4294901760
    %v3536 = vsub.f32 %v2746, %v3535
    %v3537 = vand.u32 %v3536, 4294901760
    %3538 = vmatprep.subr.mxu0 %v3537
    %v3539 = vand.u32 %v2745, 4294901760
    %v3540 = vsub.f32 %v2745, %v3539
    %v3541 = vand.u32 %v3540, 4294901760
    %3542 = vmatpush1.msra.mxu0 %v3541
    %3543 = vmatprep.subr.mxu0 0.0
    %3544 = vmatpush1.msra.mxu0 0.0
    %3545 = vmatprep.subr.mxu0 0.0
    %3546 = vmatpush1.msra.mxu0 0.0
    %3547 = vmatprep.subr.mxu0 0.0
    %3548 = vmatpush1.msra.mxu0 0.0
    %3549 = vmatprep.subr.mxu0 0.0
    %3550 = vmatpush1.msra.mxu0 0.0
    %3551 = vmatprep.subr.mxu0 0.0
    %3552 = vmatpush1.msra.mxu0 0.0
    %3553 = vmatprep.subr.mxu0 0.0
    %3554 = vmatpush1.msra.mxu0 0.0
    %3555 = vmatprep.subr.mxu0 0.0
    %3556 = vmatpush1.msra.mxu0 0.0
    %3557 = vmatprep.subr.mxu0 0.0
    %3558 = vmatpush1.msra.mxu0 0.0
    %3559 = vmatprep.subr.mxu0 0.0
    %3560 = vmatpush1.msra.mxu0 0.0
    %3561 = vmatprep.subr.mxu0 0.0
    %3562 = vmatpush1.msra.mxu0 0.0
    %3563 = vmatprep.subr.mxu0 0.0
    %3564 = vmatpush1.msra.mxu0 0.0
    %3565 = vmatprep.subr.mxu0 0.0
    %3566 = vmatpush1.msra.mxu0 0.0
    %3567 = vmatprep.subr.mxu0 0.0
    %3568 = vmatpush1.msra.mxu0 0.0
    %3569 = vmatprep.subr.mxu0 0.0
    %3570 = vmatpush1.msra.mxu0 0.0
    %3571 = vmatprep.subr.mxu0 0.0
    %3572 = vmatpush1.msra.mxu0 0.0
    %3573 = vmatprep.subr.mxu0 0.0
    %3574 = vmatpush1.msra.mxu0 0.0
    %3575 = vmatprep.mubr.f32.mxu0 0.0
    %v3576 = vand.u32 %v2698, 4294901760
    %3577 = vmatmul.mubr.f32.gmra.mrb[0].mxu0 %v3576
    %v3578 = vpop.f32.mrb[0].mxu0
    %v3579 = vadd.f32 %v3402, %v3578
    %v3580 = vpop.f32.mrb[0].mxu0
    %v3581 = vadd.f32 %v3404, %v3580
    %3582 = vmatprep.mubr.f32.mxu0 0.0
    %v3583 = vand.u32 %v2699, 4294901760
    %3584 = vmatmul.mubr.f32.gmra.mrb[0].mxu0 %v3583
    %v3585 = vpop.f32.mrb[0].mxu0
    %v3586 = vadd.f32 %v3411, %v3585
    %v3587 = vpop.f32.mrb[0].mxu0
    %v3588 = vadd.f32 %v3413, %v3587
    %3589 = vdwg.mxu0
    %v3590 = vand.u32 %v2701, 4294901760
    %3591 = vmatprep.subr.mxu0 %v3590
    %v3592 = vand.u32 %v2700, 4294901760
    %3593 = vmatpush1.msra.mxu0 %v3592
    %v3594 = vand.u32 %v2704, 4294901760
    %3595 = vmatprep.subr.mxu0 %v3594
    %v3596 = vand.u32 %v2703, 4294901760
    %3597 = vmatpush1.msra.mxu0 %v3596
    %v3598 = vand.u32 %v2707, 4294901760
    %3599 = vmatprep.subr.mxu0 %v3598
    %v3600 = vand.u32 %v2706, 4294901760
    %3601 = vmatpush1.msra.mxu0 %v3600
    %v3602 = vand.u32 %v2710, 4294901760
    %3603 = vmatprep.subr.mxu0 %v3602
    %v3604 = vand.u32 %v2709, 4294901760
    %3605 = vmatpush1.msra.mxu0 %v3604
    %v3606 = vand.u32 %v2713, 4294901760
    %3607 = vmatprep.subr.mxu0 %v3606
    %v3608 = vand.u32 %v2712, 4294901760
    %3609 = vmatpush1.msra.mxu0 %v3608
    %v3610 = vand.u32 %v2716, 4294901760
    %3611 = vmatprep.subr.mxu0 %v3610
    %v3612 = vand.u32 %v2715, 4294901760
    %3613 = vmatpush1.msra.mxu0 %v3612
    %v3614 = vand.u32 %v2719, 4294901760
    %3615 = vmatprep.subr.mxu0 %v3614
    %v3616 = vand.u32 %v2718, 4294901760
    %3617 = vmatpush1.msra.mxu0 %v3616
    %v3618 = vand.u32 %v2722, 4294901760
    %3619 = vmatprep.subr.mxu0 %v3618
    %v3620 = vand.u32 %v2721, 4294901760
    %3621 = vmatpush1.msra.mxu0 %v3620
    %v3622 = vand.u32 %v2725, 4294901760
    %3623 = vmatprep.subr.mxu0 %v3622
    %v3624 = vand.u32 %v2724, 4294901760
    %3625 = vmatpush1.msra.mxu0 %v3624
    %v3626 = vand.u32 %v2728, 4294901760
    %3627 = vmatprep.subr.mxu0 %v3626
    %v3628 = vand.u32 %v2727, 4294901760
    %3629 = vmatpush1.msra.mxu0 %v3628
    %v3630 = vand.u32 %v2731, 4294901760
    %3631 = vmatprep.subr.mxu0 %v3630
    %v3632 = vand.u32 %v2730, 4294901760
    %3633 = vmatpush1.msra.mxu0 %v3632
    %v3634 = vand.u32 %v2734, 4294901760
    %3635 = vmatprep.subr.mxu0 %v3634
    %v3636 = vand.u32 %v2733, 4294901760
    %3637 = vmatpush1.msra.mxu0 %v3636
    %v3638 = vand.u32 %v2737, 4294901760
    %3639 = vmatprep.subr.mxu0 %v3638
    %v3640 = vand.u32 %v2736, 4294901760
    %3641 = vmatpush1.msra.mxu0 %v3640
    %v3642 = vand.u32 %v2740, 4294901760
    %3643 = vmatprep.subr.mxu0 %v3642
    %v3644 = vand.u32 %v2739, 4294901760
    %3645 = vmatpush1.msra.mxu0 %v3644
    %v3646 = vand.u32 %v2743, 4294901760
    %3647 = vmatprep.subr.mxu0 %v3646
    %v3648 = vand.u32 %v2742, 4294901760
    %3649 = vmatpush1.msra.mxu0 %v3648
    %v3650 = vand.u32 %v2746, 4294901760
    %3651 = vmatprep.subr.mxu0 %v3650
    %v3652 = vand.u32 %v2745, 4294901760
    %3653 = vmatpush1.msra.mxu0 %v3652
    %3654 = vmatprep.subr.mxu0 0.0
    %3655 = vmatpush1.msra.mxu0 0.0
    %3656 = vmatprep.subr.mxu0 0.0
    %3657 = vmatpush1.msra.mxu0 0.0
    %3658 = vmatprep.subr.mxu0 0.0
    %3659 = vmatpush1.msra.mxu0 0.0
    %3660 = vmatprep.subr.mxu0 0.0
    %3661 = vmatpush1.msra.mxu0 0.0
    %3662 = vmatprep.subr.mxu0 0.0
    %3663 = vmatpush1.msra.mxu0 0.0
    %3664 = vmatprep.subr.mxu0 0.0
    %3665 = vmatpush1.msra.mxu0 0.0
    %3666 = vmatprep.subr.mxu0 0.0
    %3667 = vmatpush1.msra.mxu0 0.0
    %3668 = vmatprep.subr.mxu0 0.0
    %3669 = vmatpush1.msra.mxu0 0.0
    %3670 = vmatprep.subr.mxu0 0.0
    %3671 = vmatpush1.msra.mxu0 0.0
    %3672 = vmatprep.subr.mxu0 0.0
    %3673 = vmatpush1.msra.mxu0 0.0
    %3674 = vmatprep.subr.mxu0 0.0
    %3675 = vmatpush1.msra.mxu0 0.0
    %3676 = vmatprep.subr.mxu0 0.0
    %3677 = vmatpush1.msra.mxu0 0.0
    %3678 = vmatprep.subr.mxu0 0.0
    %3679 = vmatpush1.msra.mxu0 0.0
    %3680 = vmatprep.subr.mxu0 0.0
    %3681 = vmatpush1.msra.mxu0 0.0
    %3682 = vmatprep.subr.mxu0 0.0
    %3683 = vmatpush1.msra.mxu0 0.0
    %3684 = vmatprep.subr.mxu0 0.0
    %3685 = vmatpush1.msra.mxu0 0.0
    %3686 = vmatprep.mubr.f32.mxu0 0.0
    %v3687 = vand.u32 %v2698, 4294901760
    %3688 = vmatmul.mubr.f32.gmra.mrb[0].mxu0 %v3687
    %v3689 = vpop.f32.mrb[0].mxu0
    %v3690 = vadd.f32 %v3579, %v3689
    %v3691 = vpop.f32.mrb[0].mxu0
    %v3692 = vadd.f32 %v3581, %v3691
    %3693 = vmatprep.mubr.f32.mxu0 0.0
    %v3694 = vand.u32 %v2699, 4294901760
    %3695 = vmatmul.mubr.f32.gmra.mrb[0].mxu0 %v3694
    %v3696 = vpop.f32.mrb[0].mxu0
    %v3697 = vadd.f32 %v3586, %v3696
    %v3698 = vpop.f32.mrb[0].mxu0
    %v3699 = vadd.f32 %v3588, %v3698
    %3700 = vdwg.mxu0
    %3701 = vmatprep.subr.mxu0 0.0
    %v3702 = vand.u32 %v2702, 4294901760
    %3703 = vmatpush1.msra.mxu0 %v3702
    %3704 = vmatprep.subr.mxu0 0.0
    %v3705 = vand.u32 %v2705, 4294901760
    %3706 = vmatpush1.msra.mxu0 %v3705
    %3707 = vmatprep.subr.mxu0 0.0
    %v3708 = vand.u32 %v2708, 4294901760
    %3709 = vmatpush1.msra.mxu0 %v3708
    %3710 = vmatprep.subr.mxu0 0.0
    %v3711 = vand.u32 %v2711, 4294901760
    %3712 = vmatpush1.msra.mxu0 %v3711
    %3713 = vmatprep.subr.mxu0 0.0
    %v3714 = vand.u32 %v2714, 4294901760
    %3715 = vmatpush1.msra.mxu0 %v3714
    %3716 = vmatprep.subr.mxu0 0.0
    %v3717 = vand.u32 %v2717, 4294901760
    %3718 = vmatpush1.msra.mxu0 %v3717
    %3719 = vmatprep.subr.mxu0 0.0
    %v3720 = vand.u32 %v2720, 4294901760
    %3721 = vmatpush1.msra.mxu0 %v3720
    %3722 = vmatprep.subr.mxu0 0.0
    %v3723 = vand.u32 %v2723, 4294901760
    %3724 = vmatpush1.msra.mxu0 %v3723
    %3725 = vmatprep.subr.mxu0 0.0
    %v3726 = vand.u32 %v2726, 4294901760
    %3727 = vmatpush1.msra.mxu0 %v3726
    %3728 = vmatprep.subr.mxu0 0.0
    %v3729 = vand.u32 %v2729, 4294901760
    %3730 = vmatpush1.msra.mxu0 %v3729
    %3731 = vmatprep.subr.mxu0 0.0
    %v3732 = vand.u32 %v2732, 4294901760
    %3733 = vmatpush1.msra.mxu0 %v3732
    %3734 = vmatprep.subr.mxu0 0.0
    %v3735 = vand.u32 %v2735, 4294901760
    %3736 = vmatpush1.msra.mxu0 %v3735
    %3737 = vmatprep.subr.mxu0 0.0
    %v3738 = vand.u32 %v2738, 4294901760
    %3739 = vmatpush1.msra.mxu0 %v3738
    %3740 = vmatprep.subr.mxu0 0.0
    %v3741 = vand.u32 %v2741, 4294901760
    %3742 = vmatpush1.msra.mxu0 %v3741
    %3743 = vmatprep.subr.mxu0 0.0
    %v3744 = vand.u32 %v2744, 4294901760
    %3745 = vmatpush1.msra.mxu0 %v3744
    %3746 = vmatprep.subr.mxu0 0.0
    %v3747 = vand.u32 %v2747, 4294901760
    %3748 = vmatpush1.msra.mxu0 %v3747
    %3749 = vmatprep.subr.mxu0 0.0
    %3750 = vmatpush1.msra.mxu0 0.0
    %3751 = vmatprep.subr.mxu0 0.0
    %3752 = vmatpush1.msra.mxu0 0.0
    %3753 = vmatprep.subr.mxu0 0.0
    %3754 = vmatpush1.msra.mxu0 0.0
    %3755 = vmatprep.subr.mxu0 0.0
    %3756 = vmatpush1.msra.mxu0 0.0
    %3757 = vmatprep.subr.mxu0 0.0
    %3758 = vmatpush1.msra.mxu0 0.0
    %3759 = vmatprep.subr.mxu0 0.0
    %3760 = vmatpush1.msra.mxu0 0.0
    %3761 = vmatprep.subr.mxu0 0.0
    %3762 = vmatpush1.msra.mxu0 0.0
    %3763 = vmatprep.subr.mxu0 0.0
    %3764 = vmatpush1.msra.mxu0 0.0
    %3765 = vmatprep.subr.mxu0 0.0
    %3766 = vmatpush1.msra.mxu0 0.0
    %3767 = vmatprep.subr.mxu0 0.0
    %3768 = vmatpush1.msra.mxu0 0.0
    %3769 = vmatprep.subr.mxu0 0.0
    %3770 = vmatpush1.msra.mxu0 0.0
    %3771 = vmatprep.subr.mxu0 0.0
    %3772 = vmatpush1.msra.mxu0 0.0
    %3773 = vmatprep.subr.mxu0 0.0
    %3774 = vmatpush1.msra.mxu0 0.0
    %3775 = vmatprep.subr.mxu0 0.0
    %3776 = vmatpush1.msra.mxu0 0.0
    %3777 = vmatprep.subr.mxu0 0.0
    %3778 = vmatpush1.msra.mxu0 0.0
    %3779 = vmatprep.subr.mxu0 0.0
    %3780 = vmatpush1.msra.mxu0 0.0
    %3781 = vmatprep.mubr.f32.mxu0 0.0
    %v3782 = vand.u32 %v2698, 4294901760
    %v3783 = vsub.f32 %v2698, %v3782
    %v3784 = vand.u32 %v3783, 4294901760
    %v3785 = vsub.f32 %v3783, %v3784
    %v3786 = vand.u32 %v3785, 4294901760
    %3787 = vmatmul.mubr.f32.gmra.mrb[0].mxu0 %v3786
    %v3788 = vpop.f32.mrb[0].mxu0
    %v3789 = vadd.f32 %v2793, %v3788
    %v3790 = vpop.f32.mrb[0].mxu0
    %3791 = vmatprep.mubr.f32.mxu0 0.0
    %v3792 = vand.u32 %v2699, 4294901760
    %v3793 = vsub.f32 %v2699, %v3792
    %v3794 = vand.u32 %v3793, 4294901760
    %v3795 = vsub.f32 %v3793, %v3794
    %v3796 = vand.u32 %v3795, 4294901760
    %3797 = vmatmul.mubr.f32.gmra.mrb[0].mxu0 %v3796
    %v3798 = vpop.f32.mrb[0].mxu0
    %v3799 = vadd.f32 %v2793, %v3798
    %v3800 = vpop.f32.mrb[0].mxu0
    %3801 = vdwg.mxu0
    %3802 = vmatprep.subr.mxu0 0.0
    %v3803 = vand.u32 %v2702, 4294901760
    %v3804 = vsub.f32 %v2702, %v3803
    %v3805 = vand.u32 %v3804, 4294901760
    %v3806 = vsub.f32 %v3804, %v3805
    %v3807 = vand.u32 %v3806, 4294901760
    %3808 = vmatpush1.msra.mxu0 %v3807
    %3809 = vmatprep.subr.mxu0 0.0
    %v3810 = vand.u32 %v2705, 4294901760
    %v3811 = vsub.f32 %v2705, %v3810
    %v3812 = vand.u32 %v3811, 4294901760
    %v3813 = vsub.f32 %v3811, %v3812
    %v3814 = vand.u32 %v3813, 4294901760
    %3815 = vmatpush1.msra.mxu0 %v3814
    %3816 = vmatprep.subr.mxu0 0.0
    %v3817 = vand.u32 %v2708, 4294901760
    %v3818 = vsub.f32 %v2708, %v3817
    %v3819 = vand.u32 %v3818, 4294901760
    %v3820 = vsub.f32 %v3818, %v3819
    %v3821 = vand.u32 %v3820, 4294901760
    %3822 = vmatpush1.msra.mxu0 %v3821
    %3823 = vmatprep.subr.mxu0 0.0
    %v3824 = vand.u32 %v2711, 4294901760
    %v3825 = vsub.f32 %v2711, %v3824
    %v3826 = vand.u32 %v3825, 4294901760
    %v3827 = vsub.f32 %v3825, %v3826
    %v3828 = vand.u32 %v3827, 4294901760
    %3829 = vmatpush1.msra.mxu0 %v3828
    %3830 = vmatprep.subr.mxu0 0.0
    %v3831 = vand.u32 %v2714, 4294901760
    %v3832 = vsub.f32 %v2714, %v3831
    %v3833 = vand.u32 %v3832, 4294901760
    %v3834 = vsub.f32 %v3832, %v3833
    %v3835 = vand.u32 %v3834, 4294901760
    %3836 = vmatpush1.msra.mxu0 %v3835
    %3837 = vmatprep.subr.mxu0 0.0
    %v3838 = vand.u32 %v2717, 4294901760
    %v3839 = vsub.f32 %v2717, %v3838
    %v3840 = vand.u32 %v3839, 4294901760
    %v3841 = vsub.f32 %v3839, %v3840
    %v3842 = vand.u32 %v3841, 4294901760
    %3843 = vmatpush1.msra.mxu0 %v3842
    %3844 = vmatprep.subr.mxu0 0.0
    %v3845 = vand.u32 %v2720, 4294901760
    %v3846 = vsub.f32 %v2720, %v3845
    %v3847 = vand.u32 %v3846, 4294901760
    %v3848 = vsub.f32 %v3846, %v3847
    %v3849 = vand.u32 %v3848, 4294901760
    %3850 = vmatpush1.msra.mxu0 %v3849
    %3851 = vmatprep.subr.mxu0 0.0
    %v3852 = vand.u32 %v2723, 4294901760
    %v3853 = vsub.f32 %v2723, %v3852
    %v3854 = vand.u32 %v3853, 4294901760
    %v3855 = vsub.f32 %v3853, %v3854
    %v3856 = vand.u32 %v3855, 4294901760
    %3857 = vmatpush1.msra.mxu0 %v3856
    %3858 = vmatprep.subr.mxu0 0.0
    %v3859 = vand.u32 %v2726, 4294901760
    %v3860 = vsub.f32 %v2726, %v3859
    %v3861 = vand.u32 %v3860, 4294901760
    %v3862 = vsub.f32 %v3860, %v3861
    %v3863 = vand.u32 %v3862, 4294901760
    %3864 = vmatpush1.msra.mxu0 %v3863
    %3865 = vmatprep.subr.mxu0 0.0
    %v3866 = vand.u32 %v2729, 4294901760
    %v3867 = vsub.f32 %v2729, %v3866
    %v3868 = vand.u32 %v3867, 4294901760
    %v3869 = vsub.f32 %v3867, %v3868
    %v3870 = vand.u32 %v3869, 4294901760
    %3871 = vmatpush1.msra.mxu0 %v3870
    %3872 = vmatprep.subr.mxu0 0.0
    %v3873 = vand.u32 %v2732, 4294901760
    %v3874 = vsub.f32 %v2732, %v3873
    %v3875 = vand.u32 %v3874, 4294901760
    %v3876 = vsub.f32 %v3874, %v3875
    %v3877 = vand.u32 %v3876, 4294901760
    %3878 = vmatpush1.msra.mxu0 %v3877
    %3879 = vmatprep.subr.mxu0 0.0
    %v3880 = vand.u32 %v2735, 4294901760
    %v3881 = vsub.f32 %v2735, %v3880
    %v3882 = vand.u32 %v3881, 4294901760
    %v3883 = vsub.f32 %v3881, %v3882
    %v3884 = vand.u32 %v3883, 4294901760
    %3885 = vmatpush1.msra.mxu0 %v3884
    %3886 = vmatprep.subr.mxu0 0.0
    %v3887 = vand.u32 %v2738, 4294901760
    %v3888 = vsub.f32 %v2738, %v3887
    %v3889 = vand.u32 %v3888, 4294901760
    %v3890 = vsub.f32 %v3888, %v3889
    %v3891 = vand.u32 %v3890, 4294901760
    %3892 = vmatpush1.msra.mxu0 %v3891
    %3893 = vmatprep.subr.mxu0 0.0
    %v3894 = vand.u32 %v2741, 4294901760
    %v3895 = vsub.f32 %v2741, %v3894
    %v3896 = vand.u32 %v3895, 4294901760
    %v3897 = vsub.f32 %v3895, %v3896
    %v3898 = vand.u32 %v3897, 4294901760
    %3899 = vmatpush1.msra.mxu0 %v3898
    %3900 = vmatprep.subr.mxu0 0.0
    %v3901 = vand.u32 %v2744, 4294901760
    %v3902 = vsub.f32 %v2744, %v3901
    %v3903 = vand.u32 %v3902, 4294901760
    %v3904 = vsub.f32 %v3902, %v3903
    %v3905 = vand.u32 %v3904, 4294901760
    %3906 = vmatpush1.msra.mxu0 %v3905
    %3907 = vmatprep.subr.mxu0 0.0
    %v3908 = vand.u32 %v2747, 4294901760
    %v3909 = vsub.f32 %v2747, %v3908
    %v3910 = vand.u32 %v3909, 4294901760
    %v3911 = vsub.f32 %v3909, %v3910
    %v3912 = vand.u32 %v3911, 4294901760
    %3913 = vmatpush1.msra.mxu0 %v3912
    %3914 = vmatprep.subr.mxu0 0.0
    %3915 = vmatpush1.msra.mxu0 0.0
    %3916 = vmatprep.subr.mxu0 0.0
    %3917 = vmatpush1.msra.mxu0 0.0
    %3918 = vmatprep.subr.mxu0 0.0
    %3919 = vmatpush1.msra.mxu0 0.0
    %3920 = vmatprep.subr.mxu0 0.0
    %3921 = vmatpush1.msra.mxu0 0.0
    %3922 = vmatprep.subr.mxu0 0.0
    %3923 = vmatpush1.msra.mxu0 0.0
    %3924 = vmatprep.subr.mxu0 0.0
    %3925 = vmatpush1.msra.mxu0 0.0
    %3926 = vmatprep.subr.mxu0 0.0
    %3927 = vmatpush1.msra.mxu0 0.0
    %3928 = vmatprep.subr.mxu0 0.0
    %3929 = vmatpush1.msra.mxu0 0.0
    %3930 = vmatprep.subr.mxu0 0.0
    %3931 = vmatpush1.msra.mxu0 0.0
    %3932 = vmatprep.subr.mxu0 0.0
    %3933 = vmatpush1.msra.mxu0 0.0
    %3934 = vmatprep.subr.mxu0 0.0
    %3935 = vmatpush1.msra.mxu0 0.0
    %3936 = vmatprep.subr.mxu0 0.0
    %3937 = vmatpush1.msra.mxu0 0.0
    %3938 = vmatprep.subr.mxu0 0.0
    %3939 = vmatpush1.msra.mxu0 0.0
    %3940 = vmatprep.subr.mxu0 0.0
    %3941 = vmatpush1.msra.mxu0 0.0
    %3942 = vmatprep.subr.mxu0 0.0
    %3943 = vmatpush1.msra.mxu0 0.0
    %3944 = vmatprep.subr.mxu0 0.0
    %3945 = vmatpush1.msra.mxu0 0.0
    %3946 = vmatprep.mubr.f32.mxu0 0.0
    %v3947 = vand.u32 %v2698, 4294901760
    %3948 = vmatmul.mubr.f32.gmra.mrb[0].mxu0 %v3947
    %v3949 = vpop.f32.mrb[0].mxu0
    %v3950 = vadd.f32 %v3789, %v3949
    %v3951 = vpop.f32.mrb[0].mxu0
    %3952 = vmatprep.mubr.f32.mxu0 0.0
    %v3953 = vand.u32 %v2699, 4294901760
    %3954 = vmatmul.mubr.f32.gmra.mrb[0].mxu0 %v3953
    %v3955 = vpop.f32.mrb[0].mxu0
    %v3956 = vadd.f32 %v3799, %v3955
    %v3957 = vpop.f32.mrb[0].mxu0
    %3958 = vdwg.mxu0
    %3959 = vmatprep.subr.mxu0 0.0
    %v3960 = vand.u32 %v2702, 4294901760
    %v3961 = vsub.f32 %v2702, %v3960
    %3962 = vmatpush1.msra.mxu0 %v3961
    %3963 = vmatprep.subr.mxu0 0.0
    %v3964 = vand.u32 %v2705, 4294901760
    %v3965 = vsub.f32 %v2705, %v3964
    %3966 = vmatpush1.msra.mxu0 %v3965
    %3967 = vmatprep.subr.mxu0 0.0
    %v3968 = vand.u32 %v2708, 4294901760
    %v3969 = vsub.f32 %v2708, %v3968
    %3970 = vmatpush1.msra.mxu0 %v3969
    %3971 = vmatprep.subr.mxu0 0.0
    %v3972 = vand.u32 %v2711, 4294901760
    %v3973 = vsub.f32 %v2711, %v3972
    %3974 = vmatpush1.msra.mxu0 %v3973
    %3975 = vmatprep.subr.mxu0 0.0
    %v3976 = vand.u32 %v2714, 4294901760
    %v3977 = vsub.f32 %v2714, %v3976
    %3978 = vmatpush1.msra.mxu0 %v3977
    %3979 = vmatprep.subr.mxu0 0.0
    %v3980 = vand.u32 %v2717, 4294901760
    %v3981 = vsub.f32 %v2717, %v3980
    %3982 = vmatpush1.msra.mxu0 %v3981
    %3983 = vmatprep.subr.mxu0 0.0
    %v3984 = vand.u32 %v2720, 4294901760
    %v3985 = vsub.f32 %v2720, %v3984
    %3986 = vmatpush1.msra.mxu0 %v3985
    %3987 = vmatprep.subr.mxu0 0.0
    %v3988 = vand.u32 %v2723, 4294901760
    %v3989 = vsub.f32 %v2723, %v3988
    %3990 = vmatpush1.msra.mxu0 %v3989
    %3991 = vmatprep.subr.mxu0 0.0
    %v3992 = vand.u32 %v2726, 4294901760
    %v3993 = vsub.f32 %v2726, %v3992
    %3994 = vmatpush1.msra.mxu0 %v3993
    %3995 = vmatprep.subr.mxu0 0.0
    %v3996 = vand.u32 %v2729, 4294901760
    %v3997 = vsub.f32 %v2729, %v3996
    %3998 = vmatpush1.msra.mxu0 %v3997
    %3999 = vmatprep.subr.mxu0 0.0
    %v4000 = vand.u32 %v2732, 4294901760
    %v4001 = vsub.f32 %v2732, %v4000
    %4002 = vmatpush1.msra.mxu0 %v4001
    %4003 = vmatprep.subr.mxu0 0.0
    %v4004 = vand.u32 %v2735, 4294901760
    %v4005 = vsub.f32 %v2735, %v4004
    %4006 = vmatpush1.msra.mxu0 %v4005
    %4007 = vmatprep.subr.mxu0 0.0
    %v4008 = vand.u32 %v2738, 4294901760
    %v4009 = vsub.f32 %v2738, %v4008
    %4010 = vmatpush1.msra.mxu0 %v4009
    %4011 = vmatprep.subr.mxu0 0.0
    %v4012 = vand.u32 %v2741, 4294901760
    %v4013 = vsub.f32 %v2741, %v4012
    %4014 = vmatpush1.msra.mxu0 %v4013
    %4015 = vmatprep.subr.mxu0 0.0
    %v4016 = vand.u32 %v2744, 4294901760
    %v4017 = vsub.f32 %v2744, %v4016
    %4018 = vmatpush1.msra.mxu0 %v4017
    %4019 = vmatprep.subr.mxu0 0.0
    %v4020 = vand.u32 %v2747, 4294901760
    %v4021 = vsub.f32 %v2747, %v4020
    %4022 = vmatpush1.msra.mxu0 %v4021
    %4023 = vmatprep.subr.mxu0 0.0
    %4024 = vmatpush1.msra.mxu0 0.0
    %4025 = vmatprep.subr.mxu0 0.0
    %4026 = vmatpush1.msra.mxu0 0.0
    %4027 = vmatprep.subr.mxu0 0.0
    %4028 = vmatpush1.msra.mxu0 0.0
    %4029 = vmatprep.subr.mxu0 0.0
    %4030 = vmatpush1.msra.mxu0 0.0
    %4031 = vmatprep.subr.mxu0 0.0
    %4032 = vmatpush1.msra.mxu0 0.0
    %4033 = vmatprep.subr.mxu0 0.0
    %4034 = vmatpush1.msra.mxu0 0.0
    %4035 = vmatprep.subr.mxu0 0.0
    %4036 = vmatpush1.msra.mxu0 0.0
    %4037 = vmatprep.subr.mxu0 0.0
    %4038 = vmatpush1.msra.mxu0 0.0
    %4039 = vmatprep.subr.mxu0 0.0
    %4040 = vmatpush1.msra.mxu0 0.0
    %4041 = vmatprep.subr.mxu0 0.0
    %4042 = vmatpush1.msra.mxu0 0.0
    %4043 = vmatprep.subr.mxu0 0.0
    %4044 = vmatpush1.msra.mxu0 0.0
    %4045 = vmatprep.subr.mxu0 0.0
    %4046 = vmatpush1.msra.mxu0 0.0
    %4047 = vmatprep.subr.mxu0 0.0
    %4048 = vmatpush1.msra.mxu0 0.0
    %4049 = vmatprep.subr.mxu0 0.0
    %4050 = vmatpush1.msra.mxu0 0.0
    %4051 = vmatprep.subr.mxu0 0.0
    %4052 = vmatpush1.msra.mxu0 0.0
    %4053 = vmatprep.subr.mxu0 0.0
    %4054 = vmatpush1.msra.mxu0 0.0
    %4055 = vmatprep.mubr.f32.mxu0 0.0
    %v4056 = vand.u32 %v2698, 4294901760
    %v4057 = vsub.f32 %v2698, %v4056
    %4058 = vmatmul.mubr.f32.gmra.mrb[0].mxu0 %v4057
    %v4059 = vpop.f32.mrb[0].mxu0
    %v4060 = vadd.f32 %v3950, %v4059
    %v4061 = vpop.f32.mrb[0].mxu0
    %4062 = vmatprep.mubr.f32.mxu0 0.0
    %v4063 = vand.u32 %v2699, 4294901760
    %v4064 = vsub.f32 %v2699, %v4063
    %4065 = vmatmul.mubr.f32.gmra.mrb[0].mxu0 %v4064
    %v4066 = vpop.f32.mrb[0].mxu0
    %v4067 = vadd.f32 %v3956, %v4066
    %v4068 = vpop.f32.mrb[0].mxu0
    %4069 = vdwg.mxu0
    %4070 = vmatprep.subr.mxu0 0.0
    %v4071 = vand.u32 %v2702, 4294901760
    %4072 = vmatpush1.msra.mxu0 %v4071
    %4073 = vmatprep.subr.mxu0 0.0
    %v4074 = vand.u32 %v2705, 4294901760
    %4075 = vmatpush1.msra.mxu0 %v4074
    %4076 = vmatprep.subr.mxu0 0.0
    %v4077 = vand.u32 %v2708, 4294901760
    %4078 = vmatpush1.msra.mxu0 %v4077
    %4079 = vmatprep.subr.mxu0 0.0
    %v4080 = vand.u32 %v2711, 4294901760
    %4081 = vmatpush1.msra.mxu0 %v4080
    %4082 = vmatprep.subr.mxu0 0.0
    %v4083 = vand.u32 %v2714, 4294901760
    %4084 = vmatpush1.msra.mxu0 %v4083
    %4085 = vmatprep.subr.mxu0 0.0
    %v4086 = vand.u32 %v2717, 4294901760
    %4087 = vmatpush1.msra.mxu0 %v4086
    %4088 = vmatprep.subr.mxu0 0.0
    %v4089 = vand.u32 %v2720, 4294901760
    %4090 = vmatpush1.msra.mxu0 %v4089
    %4091 = vmatprep.subr.mxu0 0.0
    %v4092 = vand.u32 %v2723, 4294901760
    %4093 = vmatpush1.msra.mxu0 %v4092
    %4094 = vmatprep.subr.mxu0 0.0
    %v4095 = vand.u32 %v2726, 4294901760
    %4096 = vmatpush1.msra.mxu0 %v4095
    %4097 = vmatprep.subr.mxu0 0.0
    %v4098 = vand.u32 %v2729, 4294901760
    %4099 = vmatpush1.msra.mxu0 %v4098
    %4100 = vmatprep.subr.mxu0 0.0
    %v4101 = vand.u32 %v2732, 4294901760
    %4102 = vmatpush1.msra.mxu0 %v4101
    %4103 = vmatprep.subr.mxu0 0.0
    %v4104 = vand.u32 %v2735, 4294901760
    %4105 = vmatpush1.msra.mxu0 %v4104
    %4106 = vmatprep.subr.mxu0 0.0
    %v4107 = vand.u32 %v2738, 4294901760
    %4108 = vmatpush1.msra.mxu0 %v4107
    %4109 = vmatprep.subr.mxu0 0.0
    %v4110 = vand.u32 %v2741, 4294901760
    %4111 = vmatpush1.msra.mxu0 %v4110
    %4112 = vmatprep.subr.mxu0 0.0
    %v4113 = vand.u32 %v2744, 4294901760
    %4114 = vmatpush1.msra.mxu0 %v4113
    %4115 = vmatprep.subr.mxu0 0.0
    %v4116 = vand.u32 %v2747, 4294901760
    %4117 = vmatpush1.msra.mxu0 %v4116
    %4118 = vmatprep.subr.mxu0 0.0
    %4119 = vmatpush1.msra.mxu0 0.0
    %4120 = vmatprep.subr.mxu0 0.0
    %4121 = vmatpush1.msra.mxu0 0.0
    %4122 = vmatprep.subr.mxu0 0.0
    %4123 = vmatpush1.msra.mxu0 0.0
    %4124 = vmatprep.subr.mxu0 0.0
    %4125 = vmatpush1.msra.mxu0 0.0
    %4126 = vmatprep.subr.mxu0 0.0
    %4127 = vmatpush1.msra.mxu0 0.0
    %4128 = vmatprep.subr.mxu0 0.0
    %4129 = vmatpush1.msra.mxu0 0.0
    %4130 = vmatprep.subr.mxu0 0.0
    %4131 = vmatpush1.msra.mxu0 0.0
    %4132 = vmatprep.subr.mxu0 0.0
    %4133 = vmatpush1.msra.mxu0 0.0
    %4134 = vmatprep.subr.mxu0 0.0
    %4135 = vmatpush1.msra.mxu0 0.0
    %4136 = vmatprep.subr.mxu0 0.0
    %4137 = vmatpush1.msra.mxu0 0.0
    %4138 = vmatprep.subr.mxu0 0.0
    %4139 = vmatpush1.msra.mxu0 0.0
    %4140 = vmatprep.subr.mxu0 0.0
    %4141 = vmatpush1.msra.mxu0 0.0
    %4142 = vmatprep.subr.mxu0 0.0
    %4143 = vmatpush1.msra.mxu0 0.0
    %4144 = vmatprep.subr.mxu0 0.0
    %4145 = vmatpush1.msra.mxu0 0.0
    %4146 = vmatprep.subr.mxu0 0.0
    %4147 = vmatpush1.msra.mxu0 0.0
    %4148 = vmatprep.subr.mxu0 0.0
    %4149 = vmatpush1.msra.mxu0 0.0
    %4150 = vmatprep.mubr.f32.mxu0 0.0
    %v4151 = vand.u32 %v2698, 4294901760
    %v4152 = vsub.f32 %v2698, %v4151
    %v4153 = vand.u32 %v4152, 4294901760
    %4154 = vmatmul.mubr.f32.gmra.mrb[0].mxu0 %v4153
    %v4155 = vpop.f32.mrb[0].mxu0
    %v4156 = vadd.f32 %v4060, %v4155
    %v4157 = vpop.f32.mrb[0].mxu0
    %4158 = vmatprep.mubr.f32.mxu0 0.0
    %v4159 = vand.u32 %v2699, 4294901760
    %v4160 = vsub.f32 %v2699, %v4159
    %v4161 = vand.u32 %v4160, 4294901760
    %4162 = vmatmul.mubr.f32.gmra.mrb[0].mxu0 %v4161
    %v4163 = vpop.f32.mrb[0].mxu0
    %v4164 = vadd.f32 %v4067, %v4163
    %v4165 = vpop.f32.mrb[0].mxu0
    %4166 = vdwg.mxu0
    %4167 = vmatprep.subr.mxu0 0.0
    %v4168 = vand.u32 %v2702, 4294901760
    %v4169 = vsub.f32 %v2702, %v4168
    %v4170 = vand.u32 %v4169, 4294901760
    %4171 = vmatpush1.msra.mxu0 %v4170
    %4172 = vmatprep.subr.mxu0 0.0
    %v4173 = vand.u32 %v2705, 4294901760
    %v4174 = vsub.f32 %v2705, %v4173
    %v4175 = vand.u32 %v4174, 4294901760
    %4176 = vmatpush1.msra.mxu0 %v4175
    %4177 = vmatprep.subr.mxu0 0.0
    %v4178 = vand.u32 %v2708, 4294901760
    %v4179 = vsub.f32 %v2708, %v4178
    %v4180 = vand.u32 %v4179, 4294901760
    %4181 = vmatpush1.msra.mxu0 %v4180
    %4182 = vmatprep.subr.mxu0 0.0
    %v4183 = vand.u32 %v2711, 4294901760
    %v4184 = vsub.f32 %v2711, %v4183
    %v4185 = vand.u32 %v4184, 4294901760
    %4186 = vmatpush1.msra.mxu0 %v4185
    %4187 = vmatprep.subr.mxu0 0.0
    %v4188 = vand.u32 %v2714, 4294901760
    %v4189 = vsub.f32 %v2714, %v4188
    %v4190 = vand.u32 %v4189, 4294901760
    %4191 = vmatpush1.msra.mxu0 %v4190
    %4192 = vmatprep.subr.mxu0 0.0
    %v4193 = vand.u32 %v2717, 4294901760
    %v4194 = vsub.f32 %v2717, %v4193
    %v4195 = vand.u32 %v4194, 4294901760
    %4196 = vmatpush1.msra.mxu0 %v4195
    %4197 = vmatprep.subr.mxu0 0.0
    %v4198 = vand.u32 %v2720, 4294901760
    %v4199 = vsub.f32 %v2720, %v4198
    %v4200 = vand.u32 %v4199, 4294901760
    %4201 = vmatpush1.msra.mxu0 %v4200
    %4202 = vmatprep.subr.mxu0 0.0
    %v4203 = vand.u32 %v2723, 4294901760
    %v4204 = vsub.f32 %v2723, %v4203
    %v4205 = vand.u32 %v4204, 4294901760
    %4206 = vmatpush1.msra.mxu0 %v4205
    %4207 = vmatprep.subr.mxu0 0.0
    %v4208 = vand.u32 %v2726, 4294901760
    %v4209 = vsub.f32 %v2726, %v4208
    %v4210 = vand.u32 %v4209, 4294901760
    %4211 = vmatpush1.msra.mxu0 %v4210
    %4212 = vmatprep.subr.mxu0 0.0
    %v4213 = vand.u32 %v2729, 4294901760
    %v4214 = vsub.f32 %v2729, %v4213
    %v4215 = vand.u32 %v4214, 4294901760
    %4216 = vmatpush1.msra.mxu0 %v4215
    %4217 = vmatprep.subr.mxu0 0.0
    %v4218 = vand.u32 %v2732, 4294901760
    %v4219 = vsub.f32 %v2732, %v4218
    %v4220 = vand.u32 %v4219, 4294901760
    %4221 = vmatpush1.msra.mxu0 %v4220
    %4222 = vmatprep.subr.mxu0 0.0
    %v4223 = vand.u32 %v2735, 4294901760
    %v4224 = vsub.f32 %v2735, %v4223
    %v4225 = vand.u32 %v4224, 4294901760
    %4226 = vmatpush1.msra.mxu0 %v4225
    %4227 = vmatprep.subr.mxu0 0.0
    %v4228 = vand.u32 %v2738, 4294901760
    %v4229 = vsub.f32 %v2738, %v4228
    %v4230 = vand.u32 %v4229, 4294901760
    %4231 = vmatpush1.msra.mxu0 %v4230
    %4232 = vmatprep.subr.mxu0 0.0
    %v4233 = vand.u32 %v2741, 4294901760
    %v4234 = vsub.f32 %v2741, %v4233
    %v4235 = vand.u32 %v4234, 4294901760
    %4236 = vmatpush1.msra.mxu0 %v4235
    %4237 = vmatprep.subr.mxu0 0.0
    %v4238 = vand.u32 %v2744, 4294901760
    %v4239 = vsub.f32 %v2744, %v4238
    %v4240 = vand.u32 %v4239, 4294901760
    %4241 = vmatpush1.msra.mxu0 %v4240
    %4242 = vmatprep.subr.mxu0 0.0
    %v4243 = vand.u32 %v2747, 4294901760
    %v4244 = vsub.f32 %v2747, %v4243
    %v4245 = vand.u32 %v4244, 4294901760
    %4246 = vmatpush1.msra.mxu0 %v4245
    %4247 = vmatprep.subr.mxu0 0.0
    %4248 = vmatpush1.msra.mxu0 0.0
    %4249 = vmatprep.subr.mxu0 0.0
    %4250 = vmatpush1.msra.mxu0 0.0
    %4251 = vmatprep.subr.mxu0 0.0
    %4252 = vmatpush1.msra.mxu0 0.0
    %4253 = vmatprep.subr.mxu0 0.0
    %4254 = vmatpush1.msra.mxu0 0.0
    %4255 = vmatprep.subr.mxu0 0.0
    %4256 = vmatpush1.msra.mxu0 0.0
    %4257 = vmatprep.subr.mxu0 0.0
    %4258 = vmatpush1.msra.mxu0 0.0
    %4259 = vmatprep.subr.mxu0 0.0
    %4260 = vmatpush1.msra.mxu0 0.0
    %4261 = vmatprep.subr.mxu0 0.0
    %4262 = vmatpush1.msra.mxu0 0.0
    %4263 = vmatprep.subr.mxu0 0.0
    %4264 = vmatpush1.msra.mxu0 0.0
    %4265 = vmatprep.subr.mxu0 0.0
    %4266 = vmatpush1.msra.mxu0 0.0
    %4267 = vmatprep.subr.mxu0 0.0
    %4268 = vmatpush1.msra.mxu0 0.0
    %4269 = vmatprep.subr.mxu0 0.0
    %4270 = vmatpush1.msra.mxu0 0.0
    %4271 = vmatprep.subr.mxu0 0.0
    %4272 = vmatpush1.msra.mxu0 0.0
    %4273 = vmatprep.subr.mxu0 0.0
    %4274 = vmatpush1.msra.mxu0 0.0
    %4275 = vmatprep.subr.mxu0 0.0
    %4276 = vmatpush1.msra.mxu0 0.0
    %4277 = vmatprep.subr.mxu0 0.0
    %4278 = vmatpush1.msra.mxu0 0.0
    %4279 = vmatprep.mubr.f32.mxu0 0.0
    %v4280 = vand.u32 %v2698, 4294901760
    %4281 = vmatmul.mubr.f32.gmra.mrb[0].mxu0 %v4280
    %v4282 = vpop.f32.mrb[0].mxu0
    %v4283 = vadd.f32 %v4156, %v4282
    %v4284 = vpop.f32.mrb[0].mxu0
    %4285 = vmatprep.mubr.f32.mxu0 0.0
    %v4286 = vand.u32 %v2699, 4294901760
    %4287 = vmatmul.mubr.f32.gmra.mrb[0].mxu0 %v4286
    %v4288 = vpop.f32.mrb[0].mxu0
    %v4289 = vadd.f32 %v4164, %v4288
    %v4290 = vpop.f32.mrb[0].mxu0
    %4291 = vdwg.mxu0
    %4292 = vmatprep.subr.mxu0 0.0
    %v4293 = vand.u32 %v2702, 4294901760
    %4294 = vmatpush1.msra.mxu0 %v4293
    %4295 = vmatprep.subr.mxu0 0.0
    %v4296 = vand.u32 %v2705, 4294901760
    %4297 = vmatpush1.msra.mxu0 %v4296
    %4298 = vmatprep.subr.mxu0 0.0
    %v4299 = vand.u32 %v2708, 4294901760
    %4300 = vmatpush1.msra.mxu0 %v4299
    %4301 = vmatprep.subr.mxu0 0.0
    %v4302 = vand.u32 %v2711, 4294901760
    %4303 = vmatpush1.msra.mxu0 %v4302
    %4304 = vmatprep.subr.mxu0 0.0
    %v4305 = vand.u32 %v2714, 4294901760
    %4306 = vmatpush1.msra.mxu0 %v4305
    %4307 = vmatprep.subr.mxu0 0.0
    %v4308 = vand.u32 %v2717, 4294901760
    %4309 = vmatpush1.msra.mxu0 %v4308
    %4310 = vmatprep.subr.mxu0 0.0
    %v4311 = vand.u32 %v2720, 4294901760
    %4312 = vmatpush1.msra.mxu0 %v4311
    %4313 = vmatprep.subr.mxu0 0.0
    %v4314 = vand.u32 %v2723, 4294901760
    %4315 = vmatpush1.msra.mxu0 %v4314
    %4316 = vmatprep.subr.mxu0 0.0
    %v4317 = vand.u32 %v2726, 4294901760
    %4318 = vmatpush1.msra.mxu0 %v4317
    %4319 = vmatprep.subr.mxu0 0.0
    %v4320 = vand.u32 %v2729, 4294901760
    %4321 = vmatpush1.msra.mxu0 %v4320
    %4322 = vmatprep.subr.mxu0 0.0
    %v4323 = vand.u32 %v2732, 4294901760
    %4324 = vmatpush1.msra.mxu0 %v4323
    %4325 = vmatprep.subr.mxu0 0.0
    %v4326 = vand.u32 %v2735, 4294901760
    %4327 = vmatpush1.msra.mxu0 %v4326
    %4328 = vmatprep.subr.mxu0 0.0
    %v4329 = vand.u32 %v2738, 4294901760
    %4330 = vmatpush1.msra.mxu0 %v4329
    %4331 = vmatprep.subr.mxu0 0.0
    %v4332 = vand.u32 %v2741, 4294901760
    %4333 = vmatpush1.msra.mxu0 %v4332
    %4334 = vmatprep.subr.mxu0 0.0
    %v4335 = vand.u32 %v2744, 4294901760
    %4336 = vmatpush1.msra.mxu0 %v4335
    %4337 = vmatprep.subr.mxu0 0.0
    %v4338 = vand.u32 %v2747, 4294901760
    %4339 = vmatpush1.msra.mxu0 %v4338
    %4340 = vmatprep.subr.mxu0 0.0
    %4341 = vmatpush1.msra.mxu0 0.0
    %4342 = vmatprep.subr.mxu0 0.0
    %4343 = vmatpush1.msra.mxu0 0.0
    %4344 = vmatprep.subr.mxu0 0.0
    %4345 = vmatpush1.msra.mxu0 0.0
    %4346 = vmatprep.subr.mxu0 0.0
    %4347 = vmatpush1.msra.mxu0 0.0
    %4348 = vmatprep.subr.mxu0 0.0
    %4349 = vmatpush1.msra.mxu0 0.0
    %4350 = vmatprep.subr.mxu0 0.0
    %4351 = vmatpush1.msra.mxu0 0.0
    %4352 = vmatprep.subr.mxu0 0.0
    %4353 = vmatpush1.msra.mxu0 0.0
    %4354 = vmatprep.subr.mxu0 0.0
    %4355 = vmatpush1.msra.mxu0 0.0
    %4356 = vmatprep.subr.mxu0 0.0
    %4357 = vmatpush1.msra.mxu0 0.0
    %4358 = vmatprep.subr.mxu0 0.0
    %4359 = vmatpush1.msra.mxu0 0.0
    %4360 = vmatprep.subr.mxu0 0.0
    %4361 = vmatpush1.msra.mxu0 0.0
    %4362 = vmatprep.subr.mxu0 0.0
    %4363 = vmatpush1.msra.mxu0 0.0
    %4364 = vmatprep.subr.mxu0 0.0
    %4365 = vmatpush1.msra.mxu0 0.0
    %4366 = vmatprep.subr.mxu0 0.0
    %4367 = vmatpush1.msra.mxu0 0.0
    %4368 = vmatprep.subr.mxu0 0.0
    %4369 = vmatpush1.msra.mxu0 0.0
    %4370 = vmatprep.subr.mxu0 0.0
    %4371 = vmatpush1.msra.mxu0 0.0
    %4372 = vmatprep.mubr.f32.mxu0 0.0
    %v4373 = vand.u32 %v2698, 4294901760
    %4374 = vmatmul.mubr.f32.gmra.mrb[0].mxu0 %v4373
    %v4375 = vpop.f32.mrb[0].mxu0
    %v4376 = vadd.f32 %v4283, %v4375
    %v4377 = vpop.f32.mrb[0].mxu0
    %4378 = vmatprep.mubr.f32.mxu0 0.0
    %v4379 = vand.u32 %v2699, 4294901760
    %4380 = vmatmul.mubr.f32.gmra.mrb[0].mxu0 %v4379
    %v4381 = vpop.f32.mrb[0].mxu0
    %v4382 = vadd.f32 %v4289, %v4381
    %v4383 = vpop.f32.mrb[0].mxu0
    %4384 = vdwg.mxu0
    %v4385 = vmul.f32 %v3692, %v4376
    %v4386 = vmul.f32 %v3699, %v4382
    %4387 = vmatprep.subr.mxu0 0.0
    %v4388 = vand.u32 %v2749, 4294901760
    %4389 = vmatpush1.msra.mxu0 %v4388
    %4390 = vmatprep.subr.mxu0 0.0
    %v4391 = vand.u32 %v2750, 4294901760
    %4392 = vmatpush1.msra.mxu0 %v4391
    %4393 = vmatprep.subr.mxu0 0.0
    %v4394 = vand.u32 %v2751, 4294901760
    %4395 = vmatpush1.msra.mxu0 %v4394
    %4396 = vmatprep.subr.mxu0 0.0
    %v4397 = vand.u32 %v2752, 4294901760
    %4398 = vmatpush1.msra.mxu0 %v4397
    %4399 = vmatprep.subr.mxu0 0.0
    %v4400 = vand.u32 %v2753, 4294901760
    %4401 = vmatpush1.msra.mxu0 %v4400
    %4402 = vmatprep.subr.mxu0 0.0
    %v4403 = vand.u32 %v2754, 4294901760
    %4404 = vmatpush1.msra.mxu0 %v4403
    %4405 = vmatprep.subr.mxu0 0.0
    %v4406 = vand.u32 %v2755, 4294901760
    %4407 = vmatpush1.msra.mxu0 %v4406
    %4408 = vmatprep.subr.mxu0 0.0
    %v4409 = vand.u32 %v2756, 4294901760
    %4410 = vmatpush1.msra.mxu0 %v4409
    %4411 = vmatprep.subr.mxu0 0.0
    %v4412 = vand.u32 %v2757, 4294901760
    %4413 = vmatpush1.msra.mxu0 %v4412
    %4414 = vmatprep.subr.mxu0 0.0
    %v4415 = vand.u32 %v2758, 4294901760
    %4416 = vmatpush1.msra.mxu0 %v4415
    %4417 = vmatprep.subr.mxu0 0.0
    %v4418 = vand.u32 %v2759, 4294901760
    %4419 = vmatpush1.msra.mxu0 %v4418
    %4420 = vmatprep.subr.mxu0 0.0
    %v4421 = vand.u32 %v2760, 4294901760
    %4422 = vmatpush1.msra.mxu0 %v4421
    %4423 = vmatprep.subr.mxu0 0.0
    %v4424 = vand.u32 %v2761, 4294901760
    %4425 = vmatpush1.msra.mxu0 %v4424
    %4426 = vmatprep.subr.mxu0 0.0
    %v4427 = vand.u32 %v2762, 4294901760
    %4428 = vmatpush1.msra.mxu0 %v4427
    %4429 = vmatprep.subr.mxu0 0.0
    %v4430 = vand.u32 %v2763, 4294901760
    %4431 = vmatpush1.msra.mxu0 %v4430
    %4432 = vmatprep.subr.mxu0 0.0
    %v4433 = vand.u32 %v2764, 4294901760
    %4434 = vmatpush1.msra.mxu0 %v4433
    %4435 = vmatprep.subr.mxu0 0.0
    %4436 = vmatpush1.msra.mxu0 0.0
    %4437 = vmatprep.subr.mxu0 0.0
    %4438 = vmatpush1.msra.mxu0 0.0
    %4439 = vmatprep.subr.mxu0 0.0
    %4440 = vmatpush1.msra.mxu0 0.0
    %4441 = vmatprep.subr.mxu0 0.0
    %4442 = vmatpush1.msra.mxu0 0.0
    %4443 = vmatprep.subr.mxu0 0.0
    %4444 = vmatpush1.msra.mxu0 0.0
    %4445 = vmatprep.subr.mxu0 0.0
    %4446 = vmatpush1.msra.mxu0 0.0
    %4447 = vmatprep.subr.mxu0 0.0
    %4448 = vmatpush1.msra.mxu0 0.0
    %4449 = vmatprep.subr.mxu0 0.0
    %4450 = vmatpush1.msra.mxu0 0.0
    %4451 = vmatprep.subr.mxu0 0.0
    %4452 = vmatpush1.msra.mxu0 0.0
    %4453 = vmatprep.subr.mxu0 0.0
    %4454 = vmatpush1.msra.mxu0 0.0
    %4455 = vmatprep.subr.mxu0 0.0
    %4456 = vmatpush1.msra.mxu0 0.0
    %4457 = vmatprep.subr.mxu0 0.0
    %4458 = vmatpush1.msra.mxu0 0.0
    %4459 = vmatprep.subr.mxu0 0.0
    %4460 = vmatpush1.msra.mxu0 0.0
    %4461 = vmatprep.subr.mxu0 0.0
    %4462 = vmatpush1.msra.mxu0 0.0
    %4463 = vmatprep.subr.mxu0 0.0
    %4464 = vmatpush1.msra.mxu0 0.0
    %4465 = vmatprep.subr.mxu0 0.0
    %4466 = vmatpush1.msra.mxu0 0.0
    %4467 = vmatprep.mubr.f32.mxu0 0.0
    %v4468 = vand.u32 %v4385, 4294901760
    %v4469 = vsub.f32 %v4385, %v4468
    %v4470 = vand.u32 %v4469, 4294901760
    %v4471 = vsub.f32 %v4469, %v4470
    %v4472 = vand.u32 %v4471, 4294901760
    %4473 = vmatmul.mubr.f32.gmra.mrb[0].mxu0 %v4472
    %v4474 = vpop.f32.mrb[0].mxu0
    %v4475 = vadd.f32 %v3690, %v4474
    %v4476 = vpop.f32.mrb[0].mxu0
    %4477 = vmatprep.mubr.f32.mxu0 0.0
    %v4478 = vand.u32 %v4386, 4294901760
    %v4479 = vsub.f32 %v4386, %v4478
    %v4480 = vand.u32 %v4479, 4294901760
    %v4481 = vsub.f32 %v4479, %v4480
    %v4482 = vand.u32 %v4481, 4294901760
    %4483 = vmatmul.mubr.f32.gmra.mrb[0].mxu0 %v4482
    %v4484 = vpop.f32.mrb[0].mxu0
    %v4485 = vadd.f32 %v3697, %v4484
    %v4486 = vpop.f32.mrb[0].mxu0
    %4487 = vdwg.mxu0
    %4488 = vmatprep.subr.mxu0 0.0
    %v4489 = vand.u32 %v2749, 4294901760
    %v4490 = vsub.f32 %v2749, %v4489
    %v4491 = vand.u32 %v4490, 4294901760
    %v4492 = vsub.f32 %v4490, %v4491
    %v4493 = vand.u32 %v4492, 4294901760
    %4494 = vmatpush1.msra.mxu0 %v4493
    %4495 = vmatprep.subr.mxu0 0.0
    %v4496 = vand.u32 %v2750, 4294901760
    %v4497 = vsub.f32 %v2750, %v4496
    %v4498 = vand.u32 %v4497, 4294901760
    %v4499 = vsub.f32 %v4497, %v4498
    %v4500 = vand.u32 %v4499, 4294901760
    %4501 = vmatpush1.msra.mxu0 %v4500
    %4502 = vmatprep.subr.mxu0 0.0
    %v4503 = vand.u32 %v2751, 4294901760
    %v4504 = vsub.f32 %v2751, %v4503
    %v4505 = vand.u32 %v4504, 4294901760
    %v4506 = vsub.f32 %v4504, %v4505
    %v4507 = vand.u32 %v4506, 4294901760
    %4508 = vmatpush1.msra.mxu0 %v4507
    %4509 = vmatprep.subr.mxu0 0.0
    %v4510 = vand.u32 %v2752, 4294901760
    %v4511 = vsub.f32 %v2752, %v4510
    %v4512 = vand.u32 %v4511, 4294901760
    %v4513 = vsub.f32 %v4511, %v4512
    %v4514 = vand.u32 %v4513, 4294901760
    %4515 = vmatpush1.msra.mxu0 %v4514
    %4516 = vmatprep.subr.mxu0 0.0
    %v4517 = vand.u32 %v2753, 4294901760
    %v4518 = vsub.f32 %v2753, %v4517
    %v4519 = vand.u32 %v4518, 4294901760
    %v4520 = vsub.f32 %v4518, %v4519
    %v4521 = vand.u32 %v4520, 4294901760
    %4522 = vmatpush1.msra.mxu0 %v4521
    %4523 = vmatprep.subr.mxu0 0.0
    %v4524 = vand.u32 %v2754, 4294901760
    %v4525 = vsub.f32 %v2754, %v4524
    %v4526 = vand.u32 %v4525, 4294901760
    %v4527 = vsub.f32 %v4525, %v4526
    %v4528 = vand.u32 %v4527, 4294901760
    %4529 = vmatpush1.msra.mxu0 %v4528
    %4530 = vmatprep.subr.mxu0 0.0
    %v4531 = vand.u32 %v2755, 4294901760
    %v4532 = vsub.f32 %v2755, %v4531
    %v4533 = vand.u32 %v4532, 4294901760
    %v4534 = vsub.f32 %v4532, %v4533
    %v4535 = vand.u32 %v4534, 4294901760
    %4536 = vmatpush1.msra.mxu0 %v4535
    %4537 = vmatprep.subr.mxu0 0.0
    %v4538 = vand.u32 %v2756, 4294901760
    %v4539 = vsub.f32 %v2756, %v4538
    %v4540 = vand.u32 %v4539, 4294901760
    %v4541 = vsub.f32 %v4539, %v4540
    %v4542 = vand.u32 %v4541, 4294901760
    %4543 = vmatpush1.msra.mxu0 %v4542
    %4544 = vmatprep.subr.mxu0 0.0
    %v4545 = vand.u32 %v2757, 4294901760
    %v4546 = vsub.f32 %v2757, %v4545
    %v4547 = vand.u32 %v4546, 4294901760
    %v4548 = vsub.f32 %v4546, %v4547
    %v4549 = vand.u32 %v4548, 4294901760
    %4550 = vmatpush1.msra.mxu0 %v4549
    %4551 = vmatprep.subr.mxu0 0.0
    %v4552 = vand.u32 %v2758, 4294901760
    %v4553 = vsub.f32 %v2758, %v4552
    %v4554 = vand.u32 %v4553, 4294901760
    %v4555 = vsub.f32 %v4553, %v4554
    %v4556 = vand.u32 %v4555, 4294901760
    %4557 = vmatpush1.msra.mxu0 %v4556
    %4558 = vmatprep.subr.mxu0 0.0
    %v4559 = vand.u32 %v2759, 4294901760
    %v4560 = vsub.f32 %v2759, %v4559
    %v4561 = vand.u32 %v4560, 4294901760
    %v4562 = vsub.f32 %v4560, %v4561
    %v4563 = vand.u32 %v4562, 4294901760
    %4564 = vmatpush1.msra.mxu0 %v4563
    %4565 = vmatprep.subr.mxu0 0.0
    %v4566 = vand.u32 %v2760, 4294901760
    %v4567 = vsub.f32 %v2760, %v4566
    %v4568 = vand.u32 %v4567, 4294901760
    %v4569 = vsub.f32 %v4567, %v4568
    %v4570 = vand.u32 %v4569, 4294901760
    %4571 = vmatpush1.msra.mxu0 %v4570
    %4572 = vmatprep.subr.mxu0 0.0
    %v4573 = vand.u32 %v2761, 4294901760
    %v4574 = vsub.f32 %v2761, %v4573
    %v4575 = vand.u32 %v4574, 4294901760
    %v4576 = vsub.f32 %v4574, %v4575
    %v4577 = vand.u32 %v4576, 4294901760
    %4578 = vmatpush1.msra.mxu0 %v4577
    %4579 = vmatprep.subr.mxu0 0.0
    %v4580 = vand.u32 %v2762, 4294901760
    %v4581 = vsub.f32 %v2762, %v4580
    %v4582 = vand.u32 %v4581, 4294901760
    %v4583 = vsub.f32 %v4581, %v4582
    %v4584 = vand.u32 %v4583, 4294901760
    %4585 = vmatpush1.msra.mxu0 %v4584
    %4586 = vmatprep.subr.mxu0 0.0
    %v4587 = vand.u32 %v2763, 4294901760
    %v4588 = vsub.f32 %v2763, %v4587
    %v4589 = vand.u32 %v4588, 4294901760
    %v4590 = vsub.f32 %v4588, %v4589
    %v4591 = vand.u32 %v4590, 4294901760
    %4592 = vmatpush1.msra.mxu0 %v4591
    %4593 = vmatprep.subr.mxu0 0.0
    %v4594 = vand.u32 %v2764, 4294901760
    %v4595 = vsub.f32 %v2764, %v4594
    %v4596 = vand.u32 %v4595, 4294901760
    %v4597 = vsub.f32 %v4595, %v4596
    %v4598 = vand.u32 %v4597, 4294901760
    %4599 = vmatpush1.msra.mxu0 %v4598
    %4600 = vmatprep.subr.mxu0 0.0
    %4601 = vmatpush1.msra.mxu0 0.0
    %4602 = vmatprep.subr.mxu0 0.0
    %4603 = vmatpush1.msra.mxu0 0.0
    %4604 = vmatprep.subr.mxu0 0.0
    %4605 = vmatpush1.msra.mxu0 0.0
    %4606 = vmatprep.subr.mxu0 0.0
    %4607 = vmatpush1.msra.mxu0 0.0
    %4608 = vmatprep.subr.mxu0 0.0
    %4609 = vmatpush1.msra.mxu0 0.0
    %4610 = vmatprep.subr.mxu0 0.0
    %4611 = vmatpush1.msra.mxu0 0.0
    %4612 = vmatprep.subr.mxu0 0.0
    %4613 = vmatpush1.msra.mxu0 0.0
    %4614 = vmatprep.subr.mxu0 0.0
    %4615 = vmatpush1.msra.mxu0 0.0
    %4616 = vmatprep.subr.mxu0 0.0
    %4617 = vmatpush1.msra.mxu0 0.0
    %4618 = vmatprep.subr.mxu0 0.0
    %4619 = vmatpush1.msra.mxu0 0.0
    %4620 = vmatprep.subr.mxu0 0.0
    %4621 = vmatpush1.msra.mxu0 0.0
    %4622 = vmatprep.subr.mxu0 0.0
    %4623 = vmatpush1.msra.mxu0 0.0
    %4624 = vmatprep.subr.mxu0 0.0
    %4625 = vmatpush1.msra.mxu0 0.0
    %4626 = vmatprep.subr.mxu0 0.0
    %4627 = vmatpush1.msra.mxu0 0.0
    %4628 = vmatprep.subr.mxu0 0.0
    %4629 = vmatpush1.msra.mxu0 0.0
    %4630 = vmatprep.subr.mxu0 0.0
    %4631 = vmatpush1.msra.mxu0 0.0
    %4632 = vmatprep.mubr.f32.mxu0 0.0
    %v4633 = vand.u32 %v4385, 4294901760
    %4634 = vmatmul.mubr.f32.gmra.mrb[0].mxu0 %v4633
    %v4635 = vpop.f32.mrb[0].mxu0
    %v4636 = vadd.f32 %v4475, %v4635
    %v4637 = vpop.f32.mrb[0].mxu0
    %4638 = vmatprep.mubr.f32.mxu0 0.0
    %v4639 = vand.u32 %v4386, 4294901760
    %4640 = vmatmul.mubr.f32.gmra.mrb[0].mxu0 %v4639
    %v4641 = vpop.f32.mrb[0].mxu0
    %v4642 = vadd.f32 %v4485, %v4641
    %v4643 = vpop.f32.mrb[0].mxu0
    %4644 = vdwg.mxu0
    %4645 = vmatprep.subr.mxu0 0.0
    %v4646 = vand.u32 %v2749, 4294901760
    %v4647 = vsub.f32 %v2749, %v4646
    %4648 = vmatpush1.msra.mxu0 %v4647
    %4649 = vmatprep.subr.mxu0 0.0
    %v4650 = vand.u32 %v2750, 4294901760
    %v4651 = vsub.f32 %v2750, %v4650
    %4652 = vmatpush1.msra.mxu0 %v4651
    %4653 = vmatprep.subr.mxu0 0.0
    %v4654 = vand.u32 %v2751, 4294901760
    %v4655 = vsub.f32 %v2751, %v4654
    %4656 = vmatpush1.msra.mxu0 %v4655
    %4657 = vmatprep.subr.mxu0 0.0
    %v4658 = vand.u32 %v2752, 4294901760
    %v4659 = vsub.f32 %v2752, %v4658
    %4660 = vmatpush1.msra.mxu0 %v4659
    %4661 = vmatprep.subr.mxu0 0.0
    %v4662 = vand.u32 %v2753, 4294901760
    %v4663 = vsub.f32 %v2753, %v4662
    %4664 = vmatpush1.msra.mxu0 %v4663
    %4665 = vmatprep.subr.mxu0 0.0
    %v4666 = vand.u32 %v2754, 4294901760
    %v4667 = vsub.f32 %v2754, %v4666
    %4668 = vmatpush1.msra.mxu0 %v4667
    %4669 = vmatprep.subr.mxu0 0.0
    %v4670 = vand.u32 %v2755, 4294901760
    %v4671 = vsub.f32 %v2755, %v4670
    %4672 = vmatpush1.msra.mxu0 %v4671
    %4673 = vmatprep.subr.mxu0 0.0
    %v4674 = vand.u32 %v2756, 4294901760
    %v4675 = vsub.f32 %v2756, %v4674
    %4676 = vmatpush1.msra.mxu0 %v4675
    %4677 = vmatprep.subr.mxu0 0.0
    %v4678 = vand.u32 %v2757, 4294901760
    %v4679 = vsub.f32 %v2757, %v4678
    %4680 = vmatpush1.msra.mxu0 %v4679
    %4681 = vmatprep.subr.mxu0 0.0
    %v4682 = vand.u32 %v2758, 4294901760
    %v4683 = vsub.f32 %v2758, %v4682
    %4684 = vmatpush1.msra.mxu0 %v4683
    %4685 = vmatprep.subr.mxu0 0.0
    %v4686 = vand.u32 %v2759, 4294901760
    %v4687 = vsub.f32 %v2759, %v4686
    %4688 = vmatpush1.msra.mxu0 %v4687
    %4689 = vmatprep.subr.mxu0 0.0
    %v4690 = vand.u32 %v2760, 4294901760
    %v4691 = vsub.f32 %v2760, %v4690
    %4692 = vmatpush1.msra.mxu0 %v4691
    %4693 = vmatprep.subr.mxu0 0.0
    %v4694 = vand.u32 %v2761, 4294901760
    %v4695 = vsub.f32 %v2761, %v4694
    %4696 = vmatpush1.msra.mxu0 %v4695
    %4697 = vmatprep.subr.mxu0 0.0
    %v4698 = vand.u32 %v2762, 4294901760
    %v4699 = vsub.f32 %v2762, %v4698
    %4700 = vmatpush1.msra.mxu0 %v4699
    %4701 = vmatprep.subr.mxu0 0.0
    %v4702 = vand.u32 %v2763, 4294901760
    %v4703 = vsub.f32 %v2763, %v4702
    %4704 = vmatpush1.msra.mxu0 %v4703
    %4705 = vmatprep.subr.mxu0 0.0
    %v4706 = vand.u32 %v2764, 4294901760
    %v4707 = vsub.f32 %v2764, %v4706
    %4708 = vmatpush1.msra.mxu0 %v4707
    %4709 = vmatprep.subr.mxu0 0.0
    %4710 = vmatpush1.msra.mxu0 0.0
    %4711 = vmatprep.subr.mxu0 0.0
    %4712 = vmatpush1.msra.mxu0 0.0
    %4713 = vmatprep.subr.mxu0 0.0
    %4714 = vmatpush1.msra.mxu0 0.0
    %4715 = vmatprep.subr.mxu0 0.0
    %4716 = vmatpush1.msra.mxu0 0.0
    %4717 = vmatprep.subr.mxu0 0.0
    %4718 = vmatpush1.msra.mxu0 0.0
    %4719 = vmatprep.subr.mxu0 0.0
    %4720 = vmatpush1.msra.mxu0 0.0
    %4721 = vmatprep.subr.mxu0 0.0
    %4722 = vmatpush1.msra.mxu0 0.0
    %4723 = vmatprep.subr.mxu0 0.0
    %4724 = vmatpush1.msra.mxu0 0.0
    %4725 = vmatprep.subr.mxu0 0.0
    %4726 = vmatpush1.msra.mxu0 0.0
    %4727 = vmatprep.subr.mxu0 0.0
    %4728 = vmatpush1.msra.mxu0 0.0
    %4729 = vmatprep.subr.mxu0 0.0
    %4730 = vmatpush1.msra.mxu0 0.0
    %4731 = vmatprep.subr.mxu0 0.0
    %4732 = vmatpush1.msra.mxu0 0.0
    %4733 = vmatprep.subr.mxu0 0.0
    %4734 = vmatpush1.msra.mxu0 0.0
    %4735 = vmatprep.subr.mxu0 0.0
    %4736 = vmatpush1.msra.mxu0 0.0
    %4737 = vmatprep.subr.mxu0 0.0
    %4738 = vmatpush1.msra.mxu0 0.0
    %4739 = vmatprep.subr.mxu0 0.0
    %4740 = vmatpush1.msra.mxu0 0.0
    %4741 = vmatprep.mubr.f32.mxu0 0.0
    %v4742 = vand.u32 %v4385, 4294901760
    %v4743 = vsub.f32 %v4385, %v4742
    %4744 = vmatmul.mubr.f32.gmra.mrb[0].mxu0 %v4743
    %v4745 = vpop.f32.mrb[0].mxu0
    %v4746 = vadd.f32 %v4636, %v4745
    %v4747 = vpop.f32.mrb[0].mxu0
    %4748 = vmatprep.mubr.f32.mxu0 0.0
    %v4749 = vand.u32 %v4386, 4294901760
    %v4750 = vsub.f32 %v4386, %v4749
    %4751 = vmatmul.mubr.f32.gmra.mrb[0].mxu0 %v4750
    %v4752 = vpop.f32.mrb[0].mxu0
    %v4753 = vadd.f32 %v4642, %v4752
    %v4754 = vpop.f32.mrb[0].mxu0
    %4755 = vdwg.mxu0
    %4756 = vmatprep.subr.mxu0 0.0
    %v4757 = vand.u32 %v2749, 4294901760
    %4758 = vmatpush1.msra.mxu0 %v4757
    %4759 = vmatprep.subr.mxu0 0.0
    %v4760 = vand.u32 %v2750, 4294901760
    %4761 = vmatpush1.msra.mxu0 %v4760
    %4762 = vmatprep.subr.mxu0 0.0
    %v4763 = vand.u32 %v2751, 4294901760
    %4764 = vmatpush1.msra.mxu0 %v4763
    %4765 = vmatprep.subr.mxu0 0.0
    %v4766 = vand.u32 %v2752, 4294901760
    %4767 = vmatpush1.msra.mxu0 %v4766
    %4768 = vmatprep.subr.mxu0 0.0
    %v4769 = vand.u32 %v2753, 4294901760
    %4770 = vmatpush1.msra.mxu0 %v4769
    %4771 = vmatprep.subr.mxu0 0.0
    %v4772 = vand.u32 %v2754, 4294901760
    %4773 = vmatpush1.msra.mxu0 %v4772
    %4774 = vmatprep.subr.mxu0 0.0
    %v4775 = vand.u32 %v2755, 4294901760
    %4776 = vmatpush1.msra.mxu0 %v4775
    %4777 = vmatprep.subr.mxu0 0.0
    %v4778 = vand.u32 %v2756, 4294901760
    %4779 = vmatpush1.msra.mxu0 %v4778
    %4780 = vmatprep.subr.mxu0 0.0
    %v4781 = vand.u32 %v2757, 4294901760
    %4782 = vmatpush1.msra.mxu0 %v4781
    %4783 = vmatprep.subr.mxu0 0.0
    %v4784 = vand.u32 %v2758, 4294901760
    %4785 = vmatpush1.msra.mxu0 %v4784
    %4786 = vmatprep.subr.mxu0 0.0
    %v4787 = vand.u32 %v2759, 4294901760
    %4788 = vmatpush1.msra.mxu0 %v4787
    %4789 = vmatprep.subr.mxu0 0.0
    %v4790 = vand.u32 %v2760, 4294901760
    %4791 = vmatpush1.msra.mxu0 %v4790
    %4792 = vmatprep.subr.mxu0 0.0
    %v4793 = vand.u32 %v2761, 4294901760
    %4794 = vmatpush1.msra.mxu0 %v4793
    %4795 = vmatprep.subr.mxu0 0.0
    %v4796 = vand.u32 %v2762, 4294901760
    %4797 = vmatpush1.msra.mxu0 %v4796
    %4798 = vmatprep.subr.mxu0 0.0
    %v4799 = vand.u32 %v2763, 4294901760
    %4800 = vmatpush1.msra.mxu0 %v4799
    %4801 = vmatprep.subr.mxu0 0.0
    %v4802 = vand.u32 %v2764, 4294901760
    %4803 = vmatpush1.msra.mxu0 %v4802
    %4804 = vmatprep.subr.mxu0 0.0
    %4805 = vmatpush1.msra.mxu0 0.0
    %4806 = vmatprep.subr.mxu0 0.0
    %4807 = vmatpush1.msra.mxu0 0.0
    %4808 = vmatprep.subr.mxu0 0.0
    %4809 = vmatpush1.msra.mxu0 0.0
    %4810 = vmatprep.subr.mxu0 0.0
    %4811 = vmatpush1.msra.mxu0 0.0
    %4812 = vmatprep.subr.mxu0 0.0
    %4813 = vmatpush1.msra.mxu0 0.0
    %4814 = vmatprep.subr.mxu0 0.0
    %4815 = vmatpush1.msra.mxu0 0.0
    %4816 = vmatprep.subr.mxu0 0.0
    %4817 = vmatpush1.msra.mxu0 0.0
    %4818 = vmatprep.subr.mxu0 0.0
    %4819 = vmatpush1.msra.mxu0 0.0
    %4820 = vmatprep.subr.mxu0 0.0
    %4821 = vmatpush1.msra.mxu0 0.0
    %4822 = vmatprep.subr.mxu0 0.0
    %4823 = vmatpush1.msra.mxu0 0.0
    %4824 = vmatprep.subr.mxu0 0.0
    %4825 = vmatpush1.msra.mxu0 0.0
    %4826 = vmatprep.subr.mxu0 0.0
    %4827 = vmatpush1.msra.mxu0 0.0
    %4828 = vmatprep.subr.mxu0 0.0
    %4829 = vmatpush1.msra.mxu0 0.0
    %4830 = vmatprep.subr.mxu0 0.0
    %4831 = vmatpush1.msra.mxu0 0.0
    %4832 = vmatprep.subr.mxu0 0.0
    %4833 = vmatpush1.msra.mxu0 0.0
    %4834 = vmatprep.subr.mxu0 0.0
    %4835 = vmatpush1.msra.mxu0 0.0
    %4836 = vmatprep.mubr.f32.mxu0 0.0
    %v4837 = vand.u32 %v4385, 4294901760
    %v4838 = vsub.f32 %v4385, %v4837
    %v4839 = vand.u32 %v4838, 4294901760
    %4840 = vmatmul.mubr.f32.gmra.mrb[0].mxu0 %v4839
    %v4841 = vpop.f32.mrb[0].mxu0
    %v4842 = vadd.f32 %v4746, %v4841
    %v4843 = vpop.f32.mrb[0].mxu0
    %4844 = vmatprep.mubr.f32.mxu0 0.0
    %v4845 = vand.u32 %v4386, 4294901760
    %v4846 = vsub.f32 %v4386, %v4845
    %v4847 = vand.u32 %v4846, 4294901760
    %4848 = vmatmul.mubr.f32.gmra.mrb[0].mxu0 %v4847
    %v4849 = vpop.f32.mrb[0].mxu0
    %v4850 = vadd.f32 %v4753, %v4849
    %v4851 = vpop.f32.mrb[0].mxu0
    %4852 = vdwg.mxu0
    %4853 = vmatprep.subr.mxu0 0.0
    %v4854 = vand.u32 %v2749, 4294901760
    %v4855 = vsub.f32 %v2749, %v4854
    %v4856 = vand.u32 %v4855, 4294901760
    %4857 = vmatpush1.msra.mxu0 %v4856
    %4858 = vmatprep.subr.mxu0 0.0
    %v4859 = vand.u32 %v2750, 4294901760
    %v4860 = vsub.f32 %v2750, %v4859
    %v4861 = vand.u32 %v4860, 4294901760
    %4862 = vmatpush1.msra.mxu0 %v4861
    %4863 = vmatprep.subr.mxu0 0.0
    %v4864 = vand.u32 %v2751, 4294901760
    %v4865 = vsub.f32 %v2751, %v4864
    %v4866 = vand.u32 %v4865, 4294901760
    %4867 = vmatpush1.msra.mxu0 %v4866
    %4868 = vmatprep.subr.mxu0 0.0
    %v4869 = vand.u32 %v2752, 4294901760
    %v4870 = vsub.f32 %v2752, %v4869
    %v4871 = vand.u32 %v4870, 4294901760
    %4872 = vmatpush1.msra.mxu0 %v4871
    %4873 = vmatprep.subr.mxu0 0.0
    %v4874 = vand.u32 %v2753, 4294901760
    %v4875 = vsub.f32 %v2753, %v4874
    %v4876 = vand.u32 %v4875, 4294901760
    %4877 = vmatpush1.msra.mxu0 %v4876
    %4878 = vmatprep.subr.mxu0 0.0
    %v4879 = vand.u32 %v2754, 4294901760
    %v4880 = vsub.f32 %v2754, %v4879
    %v4881 = vand.u32 %v4880, 4294901760
    %4882 = vmatpush1.msra.mxu0 %v4881
    %4883 = vmatprep.subr.mxu0 0.0
    %v4884 = vand.u32 %v2755, 4294901760
    %v4885 = vsub.f32 %v2755, %v4884
    %v4886 = vand.u32 %v4885, 4294901760
    %4887 = vmatpush1.msra.mxu0 %v4886
    %4888 = vmatprep.subr.mxu0 0.0
    %v4889 = vand.u32 %v2756, 4294901760
    %v4890 = vsub.f32 %v2756, %v4889
    %v4891 = vand.u32 %v4890, 4294901760
    %4892 = vmatpush1.msra.mxu0 %v4891
    %4893 = vmatprep.subr.mxu0 0.0
    %v4894 = vand.u32 %v2757, 4294901760
    %v4895 = vsub.f32 %v2757, %v4894
    %v4896 = vand.u32 %v4895, 4294901760
    %4897 = vmatpush1.msra.mxu0 %v4896
    %4898 = vmatprep.subr.mxu0 0.0
    %v4899 = vand.u32 %v2758, 4294901760
    %v4900 = vsub.f32 %v2758, %v4899
    %v4901 = vand.u32 %v4900, 4294901760
    %4902 = vmatpush1.msra.mxu0 %v4901
    %4903 = vmatprep.subr.mxu0 0.0
    %v4904 = vand.u32 %v2759, 4294901760
    %v4905 = vsub.f32 %v2759, %v4904
    %v4906 = vand.u32 %v4905, 4294901760
    %4907 = vmatpush1.msra.mxu0 %v4906
    %4908 = vmatprep.subr.mxu0 0.0
    %v4909 = vand.u32 %v2760, 4294901760
    %v4910 = vsub.f32 %v2760, %v4909
    %v4911 = vand.u32 %v4910, 4294901760
    %4912 = vmatpush1.msra.mxu0 %v4911
    %4913 = vmatprep.subr.mxu0 0.0
    %v4914 = vand.u32 %v2761, 4294901760
    %v4915 = vsub.f32 %v2761, %v4914
    %v4916 = vand.u32 %v4915, 4294901760
    %4917 = vmatpush1.msra.mxu0 %v4916
    %4918 = vmatprep.subr.mxu0 0.0
    %v4919 = vand.u32 %v2762, 4294901760
    %v4920 = vsub.f32 %v2762, %v4919
    %v4921 = vand.u32 %v4920, 4294901760
    %4922 = vmatpush1.msra.mxu0 %v4921
    %4923 = vmatprep.subr.mxu0 0.0
    %v4924 = vand.u32 %v2763, 4294901760
    %v4925 = vsub.f32 %v2763, %v4924
    %v4926 = vand.u32 %v4925, 4294901760
    %4927 = vmatpush1.msra.mxu0 %v4926
    %4928 = vmatprep.subr.mxu0 0.0
    %v4929 = vand.u32 %v2764, 4294901760
    %v4930 = vsub.f32 %v2764, %v4929
    %v4931 = vand.u32 %v4930, 4294901760
    %4932 = vmatpush1.msra.mxu0 %v4931
    %4933 = vmatprep.subr.mxu0 0.0
    %4934 = vmatpush1.msra.mxu0 0.0
    %4935 = vmatprep.subr.mxu0 0.0
    %4936 = vmatpush1.msra.mxu0 0.0
    %4937 = vmatprep.subr.mxu0 0.0
    %4938 = vmatpush1.msra.mxu0 0.0
    %4939 = vmatprep.subr.mxu0 0.0
    %4940 = vmatpush1.msra.mxu0 0.0
    %4941 = vmatprep.subr.mxu0 0.0
    %4942 = vmatpush1.msra.mxu0 0.0
    %4943 = vmatprep.subr.mxu0 0.0
    %4944 = vmatpush1.msra.mxu0 0.0
    %4945 = vmatprep.subr.mxu0 0.0
    %4946 = vmatpush1.msra.mxu0 0.0
    %4947 = vmatprep.subr.mxu0 0.0
    %4948 = vmatpush1.msra.mxu0 0.0
    %4949 = vmatprep.subr.mxu0 0.0
    %4950 = vmatpush1.msra.mxu0 0.0
    %4951 = vmatprep.subr.mxu0 0.0
    %4952 = vmatpush1.msra.mxu0 0.0
    %4953 = vmatprep.subr.mxu0 0.0
    %4954 = vmatpush1.msra.mxu0 0.0
    %4955 = vmatprep.subr.mxu0 0.0
    %4956 = vmatpush1.msra.mxu0 0.0
    %4957 = vmatprep.subr.mxu0 0.0
    %4958 = vmatpush1.msra.mxu0 0.0
    %4959 = vmatprep.subr.mxu0 0.0
    %4960 = vmatpush1.msra.mxu0 0.0
    %4961 = vmatprep.subr.mxu0 0.0
    %4962 = vmatpush1.msra.mxu0 0.0
    %4963 = vmatprep.subr.mxu0 0.0
    %4964 = vmatpush1.msra.mxu0 0.0
    %4965 = vmatprep.mubr.f32.mxu0 0.0
    %v4966 = vand.u32 %v4385, 4294901760
    %4967 = vmatmul.mubr.f32.gmra.mrb[0].mxu0 %v4966
    %v4968 = vpop.f32.mrb[0].mxu0
    %v4969 = vadd.f32 %v4842, %v4968
    %v4970 = vpop.f32.mrb[0].mxu0
    %4971 = vmatprep.mubr.f32.mxu0 0.0
    %v4972 = vand.u32 %v4386, 4294901760
    %4973 = vmatmul.mubr.f32.gmra.mrb[0].mxu0 %v4972
    %v4974 = vpop.f32.mrb[0].mxu0
    %v4975 = vadd.f32 %v4850, %v4974
    %v4976 = vpop.f32.mrb[0].mxu0
    %4977 = vdwg.mxu0
    %4978 = vmatprep.subr.mxu0 0.0
    %v4979 = vand.u32 %v2749, 4294901760
    %4980 = vmatpush1.msra.mxu0 %v4979
    %4981 = vmatprep.subr.mxu0 0.0
    %v4982 = vand.u32 %v2750, 4294901760
    %4983 = vmatpush1.msra.mxu0 %v4982
    %4984 = vmatprep.subr.mxu0 0.0
    %v4985 = vand.u32 %v2751, 4294901760
    %4986 = vmatpush1.msra.mxu0 %v4985
    %4987 = vmatprep.subr.mxu0 0.0
    %v4988 = vand.u32 %v2752, 4294901760
    %4989 = vmatpush1.msra.mxu0 %v4988
    %4990 = vmatprep.subr.mxu0 0.0
    %v4991 = vand.u32 %v2753, 4294901760
    %4992 = vmatpush1.msra.mxu0 %v4991
    %4993 = vmatprep.subr.mxu0 0.0
    %v4994 = vand.u32 %v2754, 4294901760
    %4995 = vmatpush1.msra.mxu0 %v4994
    %4996 = vmatprep.subr.mxu0 0.0
    %v4997 = vand.u32 %v2755, 4294901760
    %4998 = vmatpush1.msra.mxu0 %v4997
    %4999 = vmatprep.subr.mxu0 0.0
    %v5000 = vand.u32 %v2756, 4294901760
    %5001 = vmatpush1.msra.mxu0 %v5000
    %5002 = vmatprep.subr.mxu0 0.0
    %v5003 = vand.u32 %v2757, 4294901760
    %5004 = vmatpush1.msra.mxu0 %v5003
    %5005 = vmatprep.subr.mxu0 0.0
    %v5006 = vand.u32 %v2758, 4294901760
    %5007 = vmatpush1.msra.mxu0 %v5006
    %5008 = vmatprep.subr.mxu0 0.0
    %v5009 = vand.u32 %v2759, 4294901760
    %5010 = vmatpush1.msra.mxu0 %v5009
    %5011 = vmatprep.subr.mxu0 0.0
    %v5012 = vand.u32 %v2760, 4294901760
    %5013 = vmatpush1.msra.mxu0 %v5012
    %5014 = vmatprep.subr.mxu0 0.0
    %v5015 = vand.u32 %v2761, 4294901760
    %5016 = vmatpush1.msra.mxu0 %v5015
    %5017 = vmatprep.subr.mxu0 0.0
    %v5018 = vand.u32 %v2762, 4294901760
    %5019 = vmatpush1.msra.mxu0 %v5018
    %5020 = vmatprep.subr.mxu0 0.0
    %v5021 = vand.u32 %v2763, 4294901760
    %5022 = vmatpush1.msra.mxu0 %v5021
    %5023 = vmatprep.subr.mxu0 0.0
    %v5024 = vand.u32 %v2764, 4294901760
    %5025 = vmatpush1.msra.mxu0 %v5024
    %5026 = vmatprep.subr.mxu0 0.0
    %5027 = vmatpush1.msra.mxu0 0.0
    %5028 = vmatprep.subr.mxu0 0.0
    %5029 = vmatpush1.msra.mxu0 0.0
    %5030 = vmatprep.subr.mxu0 0.0
    %5031 = vmatpush1.msra.mxu0 0.0
    %5032 = vmatprep.subr.mxu0 0.0
    %5033 = vmatpush1.msra.mxu0 0.0
    %5034 = vmatprep.subr.mxu0 0.0
    %5035 = vmatpush1.msra.mxu0 0.0
    %5036 = vmatprep.subr.mxu0 0.0
    %5037 = vmatpush1.msra.mxu0 0.0
    %5038 = vmatprep.subr.mxu0 0.0
    %5039 = vmatpush1.msra.mxu0 0.0
    %5040 = vmatprep.subr.mxu0 0.0
    %5041 = vmatpush1.msra.mxu0 0.0
    %5042 = vmatprep.subr.mxu0 0.0
    %5043 = vmatpush1.msra.mxu0 0.0
    %5044 = vmatprep.subr.mxu0 0.0
    %5045 = vmatpush1.msra.mxu0 0.0
    %5046 = vmatprep.subr.mxu0 0.0
    %5047 = vmatpush1.msra.mxu0 0.0
    %5048 = vmatprep.subr.mxu0 0.0
    %5049 = vmatpush1.msra.mxu0 0.0
    %5050 = vmatprep.subr.mxu0 0.0
    %5051 = vmatpush1.msra.mxu0 0.0
    %5052 = vmatprep.subr.mxu0 0.0
    %5053 = vmatpush1.msra.mxu0 0.0
    %5054 = vmatprep.subr.mxu0 0.0
    %5055 = vmatpush1.msra.mxu0 0.0
    %5056 = vmatprep.subr.mxu0 0.0
    %5057 = vmatpush1.msra.mxu0 0.0
    %5058 = vmatprep.mubr.f32.mxu0 0.0
    %v5059 = vand.u32 %v4385, 4294901760
    %5060 = vmatmul.mubr.f32.gmra.mrb[0].mxu0 %v5059
    %v5061 = vpop.f32.mrb[0].mxu0
    %v5062 = vadd.f32 %v4969, %v5061
    %v5063 = vpop.f32.mrb[0].mxu0
    %5064 = vmatprep.mubr.f32.mxu0 0.0
    %v5065 = vand.u32 %v4386, 4294901760
    %5066 = vmatmul.mubr.f32.gmra.mrb[0].mxu0 %v5065
    %v5067 = vpop.f32.mrb[0].mxu0
    %v5068 = vadd.f32 %v4975, %v5067
    %v5069 = vpop.f32.mrb[0].mxu0
    %5070 = vdwg.mxu0
    %5071 = vmatprep.subr.mxu0 0.0
    %v5072 = vand.u32 %v2765, 4294901760
    %5073 = vmatpush1.msra.mxu0 %v5072
    %5074 = vmatprep.subr.mxu0 0.0
    %v5075 = vand.u32 %v2766, 4294901760
    %5076 = vmatpush1.msra.mxu0 %v5075
    %5077 = vmatprep.subr.mxu0 0.0
    %v5078 = vand.u32 %v2767, 4294901760
    %5079 = vmatpush1.msra.mxu0 %v5078
    %5080 = vmatprep.subr.mxu0 0.0
    %v5081 = vand.u32 %v2768, 4294901760
    %5082 = vmatpush1.msra.mxu0 %v5081
    %5083 = vmatprep.subr.mxu0 0.0
    %v5084 = vand.u32 %v2769, 4294901760
    %5085 = vmatpush1.msra.mxu0 %v5084
    %5086 = vmatprep.subr.mxu0 0.0
    %v5087 = vand.u32 %v2770, 4294901760
    %5088 = vmatpush1.msra.mxu0 %v5087
    %5089 = vmatprep.subr.mxu0 0.0
    %v5090 = vand.u32 %v2771, 4294901760
    %5091 = vmatpush1.msra.mxu0 %v5090
    %5092 = vmatprep.subr.mxu0 0.0
    %v5093 = vand.u32 %v2772, 4294901760
    %5094 = vmatpush1.msra.mxu0 %v5093
    %5095 = vmatprep.subr.mxu0 0.0
    %v5096 = vand.u32 %v2773, 4294901760
    %5097 = vmatpush1.msra.mxu0 %v5096
    %5098 = vmatprep.subr.mxu0 0.0
    %v5099 = vand.u32 %v2774, 4294901760
    %5100 = vmatpush1.msra.mxu0 %v5099
    %5101 = vmatprep.subr.mxu0 0.0
    %v5102 = vand.u32 %v2775, 4294901760
    %5103 = vmatpush1.msra.mxu0 %v5102
    %5104 = vmatprep.subr.mxu0 0.0
    %v5105 = vand.u32 %v2776, 4294901760
    %5106 = vmatpush1.msra.mxu0 %v5105
    %5107 = vmatprep.subr.mxu0 0.0
    %v5108 = vand.u32 %v2777, 4294901760
    %5109 = vmatpush1.msra.mxu0 %v5108
    %5110 = vmatprep.subr.mxu0 0.0
    %v5111 = vand.u32 %v2778, 4294901760
    %5112 = vmatpush1.msra.mxu0 %v5111
    %5113 = vmatprep.subr.mxu0 0.0
    %v5114 = vand.u32 %v2779, 4294901760
    %5115 = vmatpush1.msra.mxu0 %v5114
    %5116 = vmatprep.subr.mxu0 0.0
    %v5117 = vand.u32 %v2780, 4294901760
    %5118 = vmatpush1.msra.mxu0 %v5117
    %5119 = vmatprep.subr.mxu0 0.0
    %5120 = vmatpush1.msra.mxu0 0.0
    %5121 = vmatprep.subr.mxu0 0.0
    %5122 = vmatpush1.msra.mxu0 0.0
    %5123 = vmatprep.subr.mxu0 0.0
    %5124 = vmatpush1.msra.mxu0 0.0
    %5125 = vmatprep.subr.mxu0 0.0
    %5126 = vmatpush1.msra.mxu0 0.0
    %5127 = vmatprep.subr.mxu0 0.0
    %5128 = vmatpush1.msra.mxu0 0.0
    %5129 = vmatprep.subr.mxu0 0.0
    %5130 = vmatpush1.msra.mxu0 0.0
    %5131 = vmatprep.subr.mxu0 0.0
    %5132 = vmatpush1.msra.mxu0 0.0
    %5133 = vmatprep.subr.mxu0 0.0
    %5134 = vmatpush1.msra.mxu0 0.0
    %5135 = vmatprep.subr.mxu0 0.0
    %5136 = vmatpush1.msra.mxu0 0.0
    %5137 = vmatprep.subr.mxu0 0.0
    %5138 = vmatpush1.msra.mxu0 0.0
    %5139 = vmatprep.subr.mxu0 0.0
    %5140 = vmatpush1.msra.mxu0 0.0
    %5141 = vmatprep.subr.mxu0 0.0
    %5142 = vmatpush1.msra.mxu0 0.0
    %5143 = vmatprep.subr.mxu0 0.0
    %5144 = vmatpush1.msra.mxu0 0.0
    %5145 = vmatprep.subr.mxu0 0.0
    %5146 = vmatpush1.msra.mxu0 0.0
    %5147 = vmatprep.subr.mxu0 0.0
    %5148 = vmatpush1.msra.mxu0 0.0
    %5149 = vmatprep.subr.mxu0 0.0
    %5150 = vmatpush1.msra.mxu0 0.0
    %5151 = vmatprep.mubr.f32.mxu0 0.0
    %v5152 = vand.u32 %v5062, 4294901760
    %v5153 = vsub.f32 %v5062, %v5152
    %v5154 = vand.u32 %v5153, 4294901760
    %v5155 = vsub.f32 %v5153, %v5154
    %v5156 = vand.u32 %v5155, 4294901760
    %5157 = vmatmul.mubr.f32.gmra.mrb[0].mxu0 %v5156
    %v5158 = vpop.f32.mrb[0].mxu0
    %v5159 = vadd.f32 0.0, %v5158
    %v5160 = vpop.f32.mrb[0].mxu0
    %5161 = vmatprep.mubr.f32.mxu0 0.0
    %v5162 = vand.u32 %v5068, 4294901760
    %v5163 = vsub.f32 %v5068, %v5162
    %v5164 = vand.u32 %v5163, 4294901760
    %v5165 = vsub.f32 %v5163, %v5164
    %v5166 = vand.u32 %v5165, 4294901760
    %5167 = vmatmul.mubr.f32.gmra.mrb[0].mxu0 %v5166
    %v5168 = vpop.f32.mrb[0].mxu0
    %v5169 = vadd.f32 0.0, %v5168
    %v5170 = vpop.f32.mrb[0].mxu0
    %5171 = vdwg.mxu0
    %5172 = vmatprep.subr.mxu0 0.0
    %v5173 = vand.u32 %v2765, 4294901760
    %v5174 = vsub.f32 %v2765, %v5173
    %v5175 = vand.u32 %v5174, 4294901760
    %v5176 = vsub.f32 %v5174, %v5175
    %v5177 = vand.u32 %v5176, 4294901760
    %5178 = vmatpush1.msra.mxu0 %v5177
    %5179 = vmatprep.subr.mxu0 0.0
    %v5180 = vand.u32 %v2766, 4294901760
    %v5181 = vsub.f32 %v2766, %v5180
    %v5182 = vand.u32 %v5181, 4294901760
    %v5183 = vsub.f32 %v5181, %v5182
    %v5184 = vand.u32 %v5183, 4294901760
    %5185 = vmatpush1.msra.mxu0 %v5184
    %5186 = vmatprep.subr.mxu0 0.0
    %v5187 = vand.u32 %v2767, 4294901760
    %v5188 = vsub.f32 %v2767, %v5187
    %v5189 = vand.u32 %v5188, 4294901760
    %v5190 = vsub.f32 %v5188, %v5189
    %v5191 = vand.u32 %v5190, 4294901760
    %5192 = vmatpush1.msra.mxu0 %v5191
    %5193 = vmatprep.subr.mxu0 0.0
    %v5194 = vand.u32 %v2768, 4294901760
    %v5195 = vsub.f32 %v2768, %v5194
    %v5196 = vand.u32 %v5195, 4294901760
    %v5197 = vsub.f32 %v5195, %v5196
    %v5198 = vand.u32 %v5197, 4294901760
    %5199 = vmatpush1.msra.mxu0 %v5198
    %5200 = vmatprep.subr.mxu0 0.0
    %v5201 = vand.u32 %v2769, 4294901760
    %v5202 = vsub.f32 %v2769, %v5201
    %v5203 = vand.u32 %v5202, 4294901760
    %v5204 = vsub.f32 %v5202, %v5203
    %v5205 = vand.u32 %v5204, 4294901760
    %5206 = vmatpush1.msra.mxu0 %v5205
    %5207 = vmatprep.subr.mxu0 0.0
    %v5208 = vand.u32 %v2770, 4294901760
    %v5209 = vsub.f32 %v2770, %v5208
    %v5210 = vand.u32 %v5209, 4294901760
    %v5211 = vsub.f32 %v5209, %v5210
    %v5212 = vand.u32 %v5211, 4294901760
    %5213 = vmatpush1.msra.mxu0 %v5212
    %5214 = vmatprep.subr.mxu0 0.0
    %v5215 = vand.u32 %v2771, 4294901760
    %v5216 = vsub.f32 %v2771, %v5215
    %v5217 = vand.u32 %v5216, 4294901760
    %v5218 = vsub.f32 %v5216, %v5217
    %v5219 = vand.u32 %v5218, 4294901760
    %5220 = vmatpush1.msra.mxu0 %v5219
    %5221 = vmatprep.subr.mxu0 0.0
    %v5222 = vand.u32 %v2772, 4294901760
    %v5223 = vsub.f32 %v2772, %v5222
    %v5224 = vand.u32 %v5223, 4294901760
    %v5225 = vsub.f32 %v5223, %v5224
    %v5226 = vand.u32 %v5225, 4294901760
    %5227 = vmatpush1.msra.mxu0 %v5226
    %5228 = vmatprep.subr.mxu0 0.0
    %v5229 = vand.u32 %v2773, 4294901760
    %v5230 = vsub.f32 %v2773, %v5229
    %v5231 = vand.u32 %v5230, 4294901760
    %v5232 = vsub.f32 %v5230, %v5231
    %v5233 = vand.u32 %v5232, 4294901760
    %5234 = vmatpush1.msra.mxu0 %v5233
    %5235 = vmatprep.subr.mxu0 0.0
    %v5236 = vand.u32 %v2774, 4294901760
    %v5237 = vsub.f32 %v2774, %v5236
    %v5238 = vand.u32 %v5237, 4294901760
    %v5239 = vsub.f32 %v5237, %v5238
    %v5240 = vand.u32 %v5239, 4294901760
    %5241 = vmatpush1.msra.mxu0 %v5240
    %5242 = vmatprep.subr.mxu0 0.0
    %v5243 = vand.u32 %v2775, 4294901760
    %v5244 = vsub.f32 %v2775, %v5243
    %v5245 = vand.u32 %v5244, 4294901760
    %v5246 = vsub.f32 %v5244, %v5245
    %v5247 = vand.u32 %v5246, 4294901760
    %5248 = vmatpush1.msra.mxu0 %v5247
    %5249 = vmatprep.subr.mxu0 0.0
    %v5250 = vand.u32 %v2776, 4294901760
    %v5251 = vsub.f32 %v2776, %v5250
    %v5252 = vand.u32 %v5251, 4294901760
    %v5253 = vsub.f32 %v5251, %v5252
    %v5254 = vand.u32 %v5253, 4294901760
    %5255 = vmatpush1.msra.mxu0 %v5254
    %5256 = vmatprep.subr.mxu0 0.0
    %v5257 = vand.u32 %v2777, 4294901760
    %v5258 = vsub.f32 %v2777, %v5257
    %v5259 = vand.u32 %v5258, 4294901760
    %v5260 = vsub.f32 %v5258, %v5259
    %v5261 = vand.u32 %v5260, 4294901760
    %5262 = vmatpush1.msra.mxu0 %v5261
    %5263 = vmatprep.subr.mxu0 0.0
    %v5264 = vand.u32 %v2778, 4294901760
    %v5265 = vsub.f32 %v2778, %v5264
    %v5266 = vand.u32 %v5265, 4294901760
    %v5267 = vsub.f32 %v5265, %v5266
    %v5268 = vand.u32 %v5267, 4294901760
    %5269 = vmatpush1.msra.mxu0 %v5268
    %5270 = vmatprep.subr.mxu0 0.0
    %v5271 = vand.u32 %v2779, 4294901760
    %v5272 = vsub.f32 %v2779, %v5271
    %v5273 = vand.u32 %v5272, 4294901760
    %v5274 = vsub.f32 %v5272, %v5273
    %v5275 = vand.u32 %v5274, 4294901760
    %5276 = vmatpush1.msra.mxu0 %v5275
    %5277 = vmatprep.subr.mxu0 0.0
    %v5278 = vand.u32 %v2780, 4294901760
    %v5279 = vsub.f32 %v2780, %v5278
    %v5280 = vand.u32 %v5279, 4294901760
    %v5281 = vsub.f32 %v5279, %v5280
    %v5282 = vand.u32 %v5281, 4294901760
    %5283 = vmatpush1.msra.mxu0 %v5282
    %5284 = vmatprep.subr.mxu0 0.0
    %5285 = vmatpush1.msra.mxu0 0.0
    %5286 = vmatprep.subr.mxu0 0.0
    %5287 = vmatpush1.msra.mxu0 0.0
    %5288 = vmatprep.subr.mxu0 0.0
    %5289 = vmatpush1.msra.mxu0 0.0
    %5290 = vmatprep.subr.mxu0 0.0
    %5291 = vmatpush1.msra.mxu0 0.0
    %5292 = vmatprep.subr.mxu0 0.0
    %5293 = vmatpush1.msra.mxu0 0.0
    %5294 = vmatprep.subr.mxu0 0.0
    %5295 = vmatpush1.msra.mxu0 0.0
    %5296 = vmatprep.subr.mxu0 0.0
    %5297 = vmatpush1.msra.mxu0 0.0
    %5298 = vmatprep.subr.mxu0 0.0
    %5299 = vmatpush1.msra.mxu0 0.0
    %5300 = vmatprep.subr.mxu0 0.0
    %5301 = vmatpush1.msra.mxu0 0.0
    %5302 = vmatprep.subr.mxu0 0.0
    %5303 = vmatpush1.msra.mxu0 0.0
    %5304 = vmatprep.subr.mxu0 0.0
    %5305 = vmatpush1.msra.mxu0 0.0
    %5306 = vmatprep.subr.mxu0 0.0
    %5307 = vmatpush1.msra.mxu0 0.0
    %5308 = vmatprep.subr.mxu0 0.0
    %5309 = vmatpush1.msra.mxu0 0.0
    %5310 = vmatprep.subr.mxu0 0.0
    %5311 = vmatpush1.msra.mxu0 0.0
    %5312 = vmatprep.subr.mxu0 0.0
    %5313 = vmatpush1.msra.mxu0 0.0
    %5314 = vmatprep.subr.mxu0 0.0
    %5315 = vmatpush1.msra.mxu0 0.0
    %5316 = vmatprep.mubr.f32.mxu0 0.0
    %v5317 = vand.u32 %v5062, 4294901760
    %5318 = vmatmul.mubr.f32.gmra.mrb[0].mxu0 %v5317
    %v5319 = vpop.f32.mrb[0].mxu0
    %v5320 = vadd.f32 %v5159, %v5319
    %v5321 = vpop.f32.mrb[0].mxu0
    %5322 = vmatprep.mubr.f32.mxu0 0.0
    %v5323 = vand.u32 %v5068, 4294901760
    %5324 = vmatmul.mubr.f32.gmra.mrb[0].mxu0 %v5323
    %v5325 = vpop.f32.mrb[0].mxu0
    %v5326 = vadd.f32 %v5169, %v5325
    %v5327 = vpop.f32.mrb[0].mxu0
    %5328 = vdwg.mxu0
    %5329 = vmatprep.subr.mxu0 0.0
    %v5330 = vand.u32 %v2765, 4294901760
    %v5331 = vsub.f32 %v2765, %v5330
    %5332 = vmatpush1.msra.mxu0 %v5331
    %5333 = vmatprep.subr.mxu0 0.0
    %v5334 = vand.u32 %v2766, 4294901760
    %v5335 = vsub.f32 %v2766, %v5334
    %5336 = vmatpush1.msra.mxu0 %v5335
    %5337 = vmatprep.subr.mxu0 0.0
    %v5338 = vand.u32 %v2767, 4294901760
    %v5339 = vsub.f32 %v2767, %v5338
    %5340 = vmatpush1.msra.mxu0 %v5339
    %5341 = vmatprep.subr.mxu0 0.0
    %v5342 = vand.u32 %v2768, 4294901760
    %v5343 = vsub.f32 %v2768, %v5342
    %5344 = vmatpush1.msra.mxu0 %v5343
    %5345 = vmatprep.subr.mxu0 0.0
    %v5346 = vand.u32 %v2769, 4294901760
    %v5347 = vsub.f32 %v2769, %v5346
    %5348 = vmatpush1.msra.mxu0 %v5347
    %5349 = vmatprep.subr.mxu0 0.0
    %v5350 = vand.u32 %v2770, 4294901760
    %v5351 = vsub.f32 %v2770, %v5350
    %5352 = vmatpush1.msra.mxu0 %v5351
    %5353 = vmatprep.subr.mxu0 0.0
    %v5354 = vand.u32 %v2771, 4294901760
    %v5355 = vsub.f32 %v2771, %v5354
    %5356 = vmatpush1.msra.mxu0 %v5355
    %5357 = vmatprep.subr.mxu0 0.0
    %v5358 = vand.u32 %v2772, 4294901760
    %v5359 = vsub.f32 %v2772, %v5358
    %5360 = vmatpush1.msra.mxu0 %v5359
    %5361 = vmatprep.subr.mxu0 0.0
    %v5362 = vand.u32 %v2773, 4294901760
    %v5363 = vsub.f32 %v2773, %v5362
    %5364 = vmatpush1.msra.mxu0 %v5363
    %5365 = vmatprep.subr.mxu0 0.0
    %v5366 = vand.u32 %v2774, 4294901760
    %v5367 = vsub.f32 %v2774, %v5366
    %5368 = vmatpush1.msra.mxu0 %v5367
    %5369 = vmatprep.subr.mxu0 0.0
    %v5370 = vand.u32 %v2775, 4294901760
    %v5371 = vsub.f32 %v2775, %v5370
    %5372 = vmatpush1.msra.mxu0 %v5371
    %5373 = vmatprep.subr.mxu0 0.0
    %v5374 = vand.u32 %v2776, 4294901760
    %v5375 = vsub.f32 %v2776, %v5374
    %5376 = vmatpush1.msra.mxu0 %v5375
    %5377 = vmatprep.subr.mxu0 0.0
    %v5378 = vand.u32 %v2777, 4294901760
    %v5379 = vsub.f32 %v2777, %v5378
    %5380 = vmatpush1.msra.mxu0 %v5379
    %5381 = vmatprep.subr.mxu0 0.0
    %v5382 = vand.u32 %v2778, 4294901760
    %v5383 = vsub.f32 %v2778, %v5382
    %5384 = vmatpush1.msra.mxu0 %v5383
    %5385 = vmatprep.subr.mxu0 0.0
    %v5386 = vand.u32 %v2779, 4294901760
    %v5387 = vsub.f32 %v2779, %v5386
    %5388 = vmatpush1.msra.mxu0 %v5387
    %5389 = vmatprep.subr.mxu0 0.0
    %v5390 = vand.u32 %v2780, 4294901760
    %v5391 = vsub.f32 %v2780, %v5390
    %5392 = vmatpush1.msra.mxu0 %v5391
    %5393 = vmatprep.subr.mxu0 0.0
    %5394 = vmatpush1.msra.mxu0 0.0
    %5395 = vmatprep.subr.mxu0 0.0
    %5396 = vmatpush1.msra.mxu0 0.0
    %5397 = vmatprep.subr.mxu0 0.0
    %5398 = vmatpush1.msra.mxu0 0.0
    %5399 = vmatprep.subr.mxu0 0.0
    %5400 = vmatpush1.msra.mxu0 0.0
    %5401 = vmatprep.subr.mxu0 0.0
    %5402 = vmatpush1.msra.mxu0 0.0
    %5403 = vmatprep.subr.mxu0 0.0
    %5404 = vmatpush1.msra.mxu0 0.0
    %5405 = vmatprep.subr.mxu0 0.0
    %5406 = vmatpush1.msra.mxu0 0.0
    %5407 = vmatprep.subr.mxu0 0.0
    %5408 = vmatpush1.msra.mxu0 0.0
    %5409 = vmatprep.subr.mxu0 0.0
    %5410 = vmatpush1.msra.mxu0 0.0
    %5411 = vmatprep.subr.mxu0 0.0
    %5412 = vmatpush1.msra.mxu0 0.0
    %5413 = vmatprep.subr.mxu0 0.0
    %5414 = vmatpush1.msra.mxu0 0.0
    %5415 = vmatprep.subr.mxu0 0.0
    %5416 = vmatpush1.msra.mxu0 0.0
    %5417 = vmatprep.subr.mxu0 0.0
    %5418 = vmatpush1.msra.mxu0 0.0
    %5419 = vmatprep.subr.mxu0 0.0
    %5420 = vmatpush1.msra.mxu0 0.0
    %5421 = vmatprep.subr.mxu0 0.0
    %5422 = vmatpush1.msra.mxu0 0.0
    %5423 = vmatprep.subr.mxu0 0.0
    %5424 = vmatpush1.msra.mxu0 0.0
    %5425 = vmatprep.mubr.f32.mxu0 0.0
    %v5426 = vand.u32 %v5062, 4294901760
    %v5427 = vsub.f32 %v5062, %v5426
    %5428 = vmatmul.mubr.f32.gmra.mrb[0].mxu0 %v5427
    %v5429 = vpop.f32.mrb[0].mxu0
    %v5430 = vadd.f32 %v5320, %v5429
    %v5431 = vpop.f32.mrb[0].mxu0
    %5432 = vmatprep.mubr.f32.mxu0 0.0
    %v5433 = vand.u32 %v5068, 4294901760
    %v5434 = vsub.f32 %v5068, %v5433
    %5435 = vmatmul.mubr.f32.gmra.mrb[0].mxu0 %v5434
    %v5436 = vpop.f32.mrb[0].mxu0
    %v5437 = vadd.f32 %v5326, %v5436
    %v5438 = vpop.f32.mrb[0].mxu0
    %5439 = vdwg.mxu0
    %5440 = vmatprep.subr.mxu0 0.0
    %v5441 = vand.u32 %v2765, 4294901760
    %5442 = vmatpush1.msra.mxu0 %v5441
    %5443 = vmatprep.subr.mxu0 0.0
    %v5444 = vand.u32 %v2766, 4294901760
    %5445 = vmatpush1.msra.mxu0 %v5444
    %5446 = vmatprep.subr.mxu0 0.0
    %v5447 = vand.u32 %v2767, 4294901760
    %5448 = vmatpush1.msra.mxu0 %v5447
    %5449 = vmatprep.subr.mxu0 0.0
    %v5450 = vand.u32 %v2768, 4294901760
    %5451 = vmatpush1.msra.mxu0 %v5450
    %5452 = vmatprep.subr.mxu0 0.0
    %v5453 = vand.u32 %v2769, 4294901760
    %5454 = vmatpush1.msra.mxu0 %v5453
    %5455 = vmatprep.subr.mxu0 0.0
    %v5456 = vand.u32 %v2770, 4294901760
    %5457 = vmatpush1.msra.mxu0 %v5456
    %5458 = vmatprep.subr.mxu0 0.0
    %v5459 = vand.u32 %v2771, 4294901760
    %5460 = vmatpush1.msra.mxu0 %v5459
    %5461 = vmatprep.subr.mxu0 0.0
    %v5462 = vand.u32 %v2772, 4294901760
    %5463 = vmatpush1.msra.mxu0 %v5462
    %5464 = vmatprep.subr.mxu0 0.0
    %v5465 = vand.u32 %v2773, 4294901760
    %5466 = vmatpush1.msra.mxu0 %v5465
    %5467 = vmatprep.subr.mxu0 0.0
    %v5468 = vand.u32 %v2774, 4294901760
    %5469 = vmatpush1.msra.mxu0 %v5468
    %5470 = vmatprep.subr.mxu0 0.0
    %v5471 = vand.u32 %v2775, 4294901760
    %5472 = vmatpush1.msra.mxu0 %v5471
    %5473 = vmatprep.subr.mxu0 0.0
    %v5474 = vand.u32 %v2776, 4294901760
    %5475 = vmatpush1.msra.mxu0 %v5474
    %5476 = vmatprep.subr.mxu0 0.0
    %v5477 = vand.u32 %v2777, 4294901760
    %5478 = vmatpush1.msra.mxu0 %v5477
    %5479 = vmatprep.subr.mxu0 0.0
    %v5480 = vand.u32 %v2778, 4294901760
    %5481 = vmatpush1.msra.mxu0 %v5480
    %5482 = vmatprep.subr.mxu0 0.0
    %v5483 = vand.u32 %v2779, 4294901760
    %5484 = vmatpush1.msra.mxu0 %v5483
    %5485 = vmatprep.subr.mxu0 0.0
    %v5486 = vand.u32 %v2780, 4294901760
    %5487 = vmatpush1.msra.mxu0 %v5486
    %5488 = vmatprep.subr.mxu0 0.0
    %5489 = vmatpush1.msra.mxu0 0.0
    %5490 = vmatprep.subr.mxu0 0.0
    %5491 = vmatpush1.msra.mxu0 0.0
    %5492 = vmatprep.subr.mxu0 0.0
    %5493 = vmatpush1.msra.mxu0 0.0
    %5494 = vmatprep.subr.mxu0 0.0
    %5495 = vmatpush1.msra.mxu0 0.0
    %5496 = vmatprep.subr.mxu0 0.0
    %5497 = vmatpush1.msra.mxu0 0.0
    %5498 = vmatprep.subr.mxu0 0.0
    %5499 = vmatpush1.msra.mxu0 0.0
    %5500 = vmatprep.subr.mxu0 0.0
    %5501 = vmatpush1.msra.mxu0 0.0
    %5502 = vmatprep.subr.mxu0 0.0
    %5503 = vmatpush1.msra.mxu0 0.0
    %5504 = vmatprep.subr.mxu0 0.0
    %5505 = vmatpush1.msra.mxu0 0.0
    %5506 = vmatprep.subr.mxu0 0.0
    %5507 = vmatpush1.msra.mxu0 0.0
    %5508 = vmatprep.subr.mxu0 0.0
    %5509 = vmatpush1.msra.mxu0 0.0
    %5510 = vmatprep.subr.mxu0 0.0
    %5511 = vmatpush1.msra.mxu0 0.0
    %5512 = vmatprep.subr.mxu0 0.0
    %5513 = vmatpush1.msra.mxu0 0.0
    %5514 = vmatprep.subr.mxu0 0.0
    %5515 = vmatpush1.msra.mxu0 0.0
    %5516 = vmatprep.subr.mxu0 0.0
    %5517 = vmatpush1.msra.mxu0 0.0
    %5518 = vmatprep.subr.mxu0 0.0
    %5519 = vmatpush1.msra.mxu0 0.0
    %5520 = vmatprep.mubr.f32.mxu0 0.0
    %v5521 = vand.u32 %v5062, 4294901760
    %v5522 = vsub.f32 %v5062, %v5521
    %v5523 = vand.u32 %v5522, 4294901760
    %5524 = vmatmul.mubr.f32.gmra.mrb[0].mxu0 %v5523
    %v5525 = vpop.f32.mrb[0].mxu0
    %v5526 = vadd.f32 %v5430, %v5525
    %v5527 = vpop.f32.mrb[0].mxu0
    %5528 = vmatprep.mubr.f32.mxu0 0.0
    %v5529 = vand.u32 %v5068, 4294901760
    %v5530 = vsub.f32 %v5068, %v5529
    %v5531 = vand.u32 %v5530, 4294901760
    %5532 = vmatmul.mubr.f32.gmra.mrb[0].mxu0 %v5531
    %v5533 = vpop.f32.mrb[0].mxu0
    %v5534 = vadd.f32 %v5437, %v5533
    %v5535 = vpop.f32.mrb[0].mxu0
    %5536 = vdwg.mxu0
    %5537 = vmatprep.subr.mxu0 0.0
    %v5538 = vand.u32 %v2765, 4294901760
    %v5539 = vsub.f32 %v2765, %v5538
    %v5540 = vand.u32 %v5539, 4294901760
    %5541 = vmatpush1.msra.mxu0 %v5540
    %5542 = vmatprep.subr.mxu0 0.0
    %v5543 = vand.u32 %v2766, 4294901760
    %v5544 = vsub.f32 %v2766, %v5543
    %v5545 = vand.u32 %v5544, 4294901760
    %5546 = vmatpush1.msra.mxu0 %v5545
    %5547 = vmatprep.subr.mxu0 0.0
    %v5548 = vand.u32 %v2767, 4294901760
    %v5549 = vsub.f32 %v2767, %v5548
    %v5550 = vand.u32 %v5549, 4294901760
    %5551 = vmatpush1.msra.mxu0 %v5550
    %5552 = vmatprep.subr.mxu0 0.0
    %v5553 = vand.u32 %v2768, 4294901760
    %v5554 = vsub.f32 %v2768, %v5553
    %v5555 = vand.u32 %v5554, 4294901760
    %5556 = vmatpush1.msra.mxu0 %v5555
    %5557 = vmatprep.subr.mxu0 0.0
    %v5558 = vand.u32 %v2769, 4294901760
    %v5559 = vsub.f32 %v2769, %v5558
    %v5560 = vand.u32 %v5559, 4294901760
    %5561 = vmatpush1.msra.mxu0 %v5560
    %5562 = vmatprep.subr.mxu0 0.0
    %v5563 = vand.u32 %v2770, 4294901760
    %v5564 = vsub.f32 %v2770, %v5563
    %v5565 = vand.u32 %v5564, 4294901760
    %5566 = vmatpush1.msra.mxu0 %v5565
    %5567 = vmatprep.subr.mxu0 0.0
    %v5568 = vand.u32 %v2771, 4294901760
    %v5569 = vsub.f32 %v2771, %v5568
    %v5570 = vand.u32 %v5569, 4294901760
    %5571 = vmatpush1.msra.mxu0 %v5570
    %5572 = vmatprep.subr.mxu0 0.0
    %v5573 = vand.u32 %v2772, 4294901760
    %v5574 = vsub.f32 %v2772, %v5573
    %v5575 = vand.u32 %v5574, 4294901760
    %5576 = vmatpush1.msra.mxu0 %v5575
    %5577 = vmatprep.subr.mxu0 0.0
    %v5578 = vand.u32 %v2773, 4294901760
    %v5579 = vsub.f32 %v2773, %v5578
    %v5580 = vand.u32 %v5579, 4294901760
    %5581 = vmatpush1.msra.mxu0 %v5580
    %5582 = vmatprep.subr.mxu0 0.0
    %v5583 = vand.u32 %v2774, 4294901760
    %v5584 = vsub.f32 %v2774, %v5583
    %v5585 = vand.u32 %v5584, 4294901760
    %5586 = vmatpush1.msra.mxu0 %v5585
    %5587 = vmatprep.subr.mxu0 0.0
    %v5588 = vand.u32 %v2775, 4294901760
    %v5589 = vsub.f32 %v2775, %v5588
    %v5590 = vand.u32 %v5589, 4294901760
    %5591 = vmatpush1.msra.mxu0 %v5590
    %5592 = vmatprep.subr.mxu0 0.0
    %v5593 = vand.u32 %v2776, 4294901760
    %v5594 = vsub.f32 %v2776, %v5593
    %v5595 = vand.u32 %v5594, 4294901760
    %5596 = vmatpush1.msra.mxu0 %v5595
    %5597 = vmatprep.subr.mxu0 0.0
    %v5598 = vand.u32 %v2777, 4294901760
    %v5599 = vsub.f32 %v2777, %v5598
    %v5600 = vand.u32 %v5599, 4294901760
    %5601 = vmatpush1.msra.mxu0 %v5600
    %5602 = vmatprep.subr.mxu0 0.0
    %v5603 = vand.u32 %v2778, 4294901760
    %v5604 = vsub.f32 %v2778, %v5603
    %v5605 = vand.u32 %v5604, 4294901760
    %5606 = vmatpush1.msra.mxu0 %v5605
    %5607 = vmatprep.subr.mxu0 0.0
    %v5608 = vand.u32 %v2779, 4294901760
    %v5609 = vsub.f32 %v2779, %v5608
    %v5610 = vand.u32 %v5609, 4294901760
    %5611 = vmatpush1.msra.mxu0 %v5610
    %5612 = vmatprep.subr.mxu0 0.0
    %v5613 = vand.u32 %v2780, 4294901760
    %v5614 = vsub.f32 %v2780, %v5613
    %v5615 = vand.u32 %v5614, 4294901760
    %5616 = vmatpush1.msra.mxu0 %v5615
    %5617 = vmatprep.subr.mxu0 0.0
    %5618 = vmatpush1.msra.mxu0 0.0
    %5619 = vmatprep.subr.mxu0 0.0
    %5620 = vmatpush1.msra.mxu0 0.0
    %5621 = vmatprep.subr.mxu0 0.0
    %5622 = vmatpush1.msra.mxu0 0.0
    %5623 = vmatprep.subr.mxu0 0.0
    %5624 = vmatpush1.msra.mxu0 0.0
    %5625 = vmatprep.subr.mxu0 0.0
    %5626 = vmatpush1.msra.mxu0 0.0
    %5627 = vmatprep.subr.mxu0 0.0
    %5628 = vmatpush1.msra.mxu0 0.0
    %5629 = vmatprep.subr.mxu0 0.0
    %5630 = vmatpush1.msra.mxu0 0.0
    %5631 = vmatprep.subr.mxu0 0.0
    %5632 = vmatpush1.msra.mxu0 0.0
    %5633 = vmatprep.subr.mxu0 0.0
    %5634 = vmatpush1.msra.mxu0 0.0
    %5635 = vmatprep.subr.mxu0 0.0
    %5636 = vmatpush1.msra.mxu0 0.0
    %5637 = vmatprep.subr.mxu0 0.0
    %5638 = vmatpush1.msra.mxu0 0.0
    %5639 = vmatprep.subr.mxu0 0.0
    %5640 = vmatpush1.msra.mxu0 0.0
    %5641 = vmatprep.subr.mxu0 0.0
    %5642 = vmatpush1.msra.mxu0 0.0
    %5643 = vmatprep.subr.mxu0 0.0
    %5644 = vmatpush1.msra.mxu0 0.0
    %5645 = vmatprep.subr.mxu0 0.0
    %5646 = vmatpush1.msra.mxu0 0.0
    %5647 = vmatprep.subr.mxu0 0.0
    %5648 = vmatpush1.msra.mxu0 0.0
    %5649 = vmatprep.mubr.f32.mxu0 0.0
    %v5650 = vand.u32 %v5062, 4294901760
    %5651 = vmatmul.mubr.f32.gmra.mrb[0].mxu0 %v5650
    %v5652 = vpop.f32.mrb[0].mxu0
    %v5653 = vadd.f32 %v5526, %v5652
    %v5654 = vpop.f32.mrb[0].mxu0
    %5655 = vmatprep.mubr.f32.mxu0 0.0
    %v5656 = vand.u32 %v5068, 4294901760
    %5657 = vmatmul.mubr.f32.gmra.mrb[0].mxu0 %v5656
    %v5658 = vpop.f32.mrb[0].mxu0
    %v5659 = vadd.f32 %v5534, %v5658
    %v5660 = vpop.f32.mrb[0].mxu0
    %5661 = vdwg.mxu0
    %5662 = vmatprep.subr.mxu0 0.0
    %v5663 = vand.u32 %v2765, 4294901760
    %5664 = vmatpush1.msra.mxu0 %v5663
    %5665 = vmatprep.subr.mxu0 0.0
    %v5666 = vand.u32 %v2766, 4294901760
    %5667 = vmatpush1.msra.mxu0 %v5666
    %5668 = vmatprep.subr.mxu0 0.0
    %v5669 = vand.u32 %v2767, 4294901760
    %5670 = vmatpush1.msra.mxu0 %v5669
    %5671 = vmatprep.subr.mxu0 0.0
    %v5672 = vand.u32 %v2768, 4294901760
    %5673 = vmatpush1.msra.mxu0 %v5672
    %5674 = vmatprep.subr.mxu0 0.0
    %v5675 = vand.u32 %v2769, 4294901760
    %5676 = vmatpush1.msra.mxu0 %v5675
    %5677 = vmatprep.subr.mxu0 0.0
    %v5678 = vand.u32 %v2770, 4294901760
    %5679 = vmatpush1.msra.mxu0 %v5678
    %5680 = vmatprep.subr.mxu0 0.0
    %v5681 = vand.u32 %v2771, 4294901760
    %5682 = vmatpush1.msra.mxu0 %v5681
    %5683 = vmatprep.subr.mxu0 0.0
    %v5684 = vand.u32 %v2772, 4294901760
    %5685 = vmatpush1.msra.mxu0 %v5684
    %5686 = vmatprep.subr.mxu0 0.0
    %v5687 = vand.u32 %v2773, 4294901760
    %5688 = vmatpush1.msra.mxu0 %v5687
    %5689 = vmatprep.subr.mxu0 0.0
    %v5690 = vand.u32 %v2774, 4294901760
    %5691 = vmatpush1.msra.mxu0 %v5690
    %5692 = vmatprep.subr.mxu0 0.0
    %v5693 = vand.u32 %v2775, 4294901760
    %5694 = vmatpush1.msra.mxu0 %v5693
    %5695 = vmatprep.subr.mxu0 0.0
    %v5696 = vand.u32 %v2776, 4294901760
    %5697 = vmatpush1.msra.mxu0 %v5696
    %5698 = vmatprep.subr.mxu0 0.0
    %v5699 = vand.u32 %v2777, 4294901760
    %5700 = vmatpush1.msra.mxu0 %v5699
    %5701 = vmatprep.subr.mxu0 0.0
    %v5702 = vand.u32 %v2778, 4294901760
    %5703 = vmatpush1.msra.mxu0 %v5702
    %5704 = vmatprep.subr.mxu0 0.0
    %v5705 = vand.u32 %v2779, 4294901760
    %5706 = vmatpush1.msra.mxu0 %v5705
    %5707 = vmatprep.subr.mxu0 0.0
    %v5708 = vand.u32 %v2780, 4294901760
    %5709 = vmatpush1.msra.mxu0 %v5708
    %5710 = vmatprep.subr.mxu0 0.0
    %5711 = vmatpush1.msra.mxu0 0.0
    %5712 = vmatprep.subr.mxu0 0.0
    %5713 = vmatpush1.msra.mxu0 0.0
    %5714 = vmatprep.subr.mxu0 0.0
    %5715 = vmatpush1.msra.mxu0 0.0
    %5716 = vmatprep.subr.mxu0 0.0
    %5717 = vmatpush1.msra.mxu0 0.0
    %5718 = vmatprep.subr.mxu0 0.0
    %5719 = vmatpush1.msra.mxu0 0.0
    %5720 = vmatprep.subr.mxu0 0.0
    %5721 = vmatpush1.msra.mxu0 0.0
    %5722 = vmatprep.subr.mxu0 0.0
    %5723 = vmatpush1.msra.mxu0 0.0
    %5724 = vmatprep.subr.mxu0 0.0
    %5725 = vmatpush1.msra.mxu0 0.0
    %5726 = vmatprep.subr.mxu0 0.0
    %5727 = vmatpush1.msra.mxu0 0.0
    %5728 = vmatprep.subr.mxu0 0.0
    %5729 = vmatpush1.msra.mxu0 0.0
    %5730 = vmatprep.subr.mxu0 0.0
    %5731 = vmatpush1.msra.mxu0 0.0
    %5732 = vmatprep.subr.mxu0 0.0
    %5733 = vmatpush1.msra.mxu0 0.0
    %5734 = vmatprep.subr.mxu0 0.0
    %5735 = vmatpush1.msra.mxu0 0.0
    %5736 = vmatprep.subr.mxu0 0.0
    %5737 = vmatpush1.msra.mxu0 0.0
    %5738 = vmatprep.subr.mxu0 0.0
    %5739 = vmatpush1.msra.mxu0 0.0
    %5740 = vmatprep.subr.mxu0 0.0
    %5741 = vmatpush1.msra.mxu0 0.0
    %5742 = vmatprep.mubr.f32.mxu0 0.0
    %v5743 = vand.u32 %v5062, 4294901760
    %5744 = vmatmul.mubr.f32.gmra.mrb[0].mxu0 %v5743
    %v5745 = vpop.f32.mrb[0].mxu0
    %v5746 = vadd.f32 %v5653, %v5745
    %v5747 = vpop.f32.mrb[0].mxu0
    %5748 = vmatprep.mubr.f32.mxu0 0.0
    %v5749 = vand.u32 %v5068, 4294901760
    %5750 = vmatmul.mubr.f32.gmra.mrb[0].mxu0 %v5749
    %v5751 = vpop.f32.mrb[0].mxu0
    %v5752 = vadd.f32 %v5659, %v5751
    %v5753 = vpop.f32.mrb[0].mxu0
    %5754 = vdwg.mxu0
    %v5755 = vxor.u32 %v5746, 2147483648
    %v5756 = vxor.u32 %v5752, 2147483648
    %v5757 = vmul.f32 %v5755, 1.442695
    %v5758 = vpow.pop %v5757
    %v5759 = vmul.f32 %v5756, 1.442695
    %v5760 = vpow.pop %v5759
    %v5761 = vadd.f32 %v5758, 1.0
    %v5762 = vadd.f32 %v5760, 1.0
    %v5763 = vrcp.pop %v5761
    %v5764 = vmul.f32 1.0, %v5763
    %v5765 = vrcp.pop %v5762
    %v5766 = vmul.f32 1.0, %v5765
    %v5767 = vmul.f32 %v5764, %v5062
    %v5768 = vmul.f32 %v5766, %v5068
    %v5769 = vld [vmem:[#allocation14] sm:$0xff]
    %v5770 = vld [vmem:[#allocation14 + $0x8] sm:$0xff]
    %v5771 = vld [vmem:[#allocation14 + $0x10] sm:$0xff]
    %v5772 = vld [vmem:[#allocation14 + $0x18] sm:$0xff]
    %v5773 = vld [vmem:[#allocation14 + $0x20] sm:$0xff]
    %v5774 = vld [vmem:[#allocation14 + $0x28] sm:$0xff]
    %v5775 = vld [vmem:[#allocation14 + $0x30] sm:$0xff]
    %v5776 = vld [vmem:[#allocation14 + $0x38] sm:$0xff]
    %v5777 = vld [vmem:[#allocation14 + $0x40] sm:$0xff]
    %v5778 = vld [vmem:[#allocation14 + $0x48] sm:$0xff]
    %v5779 = vld [vmem:[#allocation14 + $0x50] sm:$0xff]
    %v5780 = vld [vmem:[#allocation14 + $0x58] sm:$0xff]
    %v5781 = vld [vmem:[#allocation14 + $0x60] sm:$0xff]
    %v5782 = vld [vmem:[#allocation14 + $0x68] sm:$0xff]
    %v5783 = vld [vmem:[#allocation14 + $0x70] sm:$0xff]
    %v5784 = vld [vmem:[#allocation14 + $0x78] sm:$0xff]
    %v5785 = vld [vmem:[#allocation14 + $0x80] sm:$0xff]
    %v5786 = vld [vmem:[#allocation14 + $0x88] sm:$0xff]
    %v5787 = vld [vmem:[#allocation14 + $0x90] sm:$0xff]
    %v5788 = vld [vmem:[#allocation14 + $0x98] sm:$0xff]
    %v5789 = vld [vmem:[#allocation14 + $0xa0] sm:$0xff]
    %v5790 = vld [vmem:[#allocation14 + $0xa8] sm:$0xff]
    %v5791 = vld [vmem:[#allocation14 + $0xb0] sm:$0xff]
    %v5792 = vld [vmem:[#allocation14 + $0xb8] sm:$0xff]
    %v5793 = vld [vmem:[#allocation14 + $0xc0] sm:$0xff]
    %v5794 = vld [vmem:[#allocation14 + $0xc8] sm:$0xff]
    %v5795 = vld [vmem:[#allocation14 + $0xd0] sm:$0xff]
    %v5796 = vld [vmem:[#allocation14 + $0xd8] sm:$0xff]
    %v5797 = vld [vmem:[#allocation14 + $0xe0] sm:$0xff]
    %v5798 = vld [vmem:[#allocation14 + $0xe8] sm:$0xff]
    %v5799 = vld [vmem:[#allocation14 + $0xf0] sm:$0xff]
    %v5800 = vld [vmem:[#allocation14 + $0xf8] sm:$0xff]
    %v5801 = vld [vmem:[#allocation14 + $0x100] sm:$0xff]
    %v5802 = vld [vmem:[#allocation14 + $0x108] sm:$0xff]
    %v5803 = vld [vmem:[#allocation14 + $0x110] sm:$0xff]
    %v5804 = vld [vmem:[#allocation14 + $0x118] sm:$0xff]
    %v5805 = vld [vmem:[#allocation14 + $0x120] sm:$0xff]
    %v5806 = vld [vmem:[#allocation14 + $0x128] sm:$0xff]
    %v5807 = vld [vmem:[#allocation14 + $0x130] sm:$0xff]
    %v5808 = vld [vmem:[#allocation14 + $0x138] sm:$0xff]
    %v5809 = vld [vmem:[#allocation14 + $0x140] sm:$0xff]
    %v5810 = vld [vmem:[#allocation14 + $0x148] sm:$0xff]
    %v5811 = vld [vmem:[#allocation14 + $0x150] sm:$0xff]
    %v5812 = vld [vmem:[#allocation14 + $0x158] sm:$0xff]
    %v5813 = vld [vmem:[#allocation14 + $0x160] sm:$0xff]
    %v5814 = vld [vmem:[#allocation14 + $0x168] sm:$0xff]
    %v5815 = vld [vmem:[#allocation14 + $0x170] sm:$0xff]
    %v5816 = vld [vmem:[#allocation14 + $0x178] sm:$0xff]
    %v5817 = vld [vmem:[%s10] sm:$0x7]
    %v5818 = vld [vmem:[#allocation16] sm:$0xff]
    %v5819 = vld [vmem:[#allocation16 + $0x8] sm:$0xff]
    %v5820 = vld [vmem:[#allocation16 + $0x10] sm:$0xff]
    %v5821 = vld [vmem:[#allocation16 + $0x18] sm:$0xff]
    %v5822 = vld [vmem:[#allocation16 + $0x20] sm:$0xff]
    %v5823 = vld [vmem:[#allocation16 + $0x28] sm:$0xff]
    %v5824 = vld [vmem:[#allocation16 + $0x30] sm:$0xff]
    %v5825 = vld [vmem:[#allocation16 + $0x38] sm:$0xff]
    %v5826 = vld [vmem:[#allocation16 + $0x40] sm:$0xff]
    %v5827 = vld [vmem:[#allocation16 + $0x48] sm:$0xff]
    %v5828 = vld [vmem:[#allocation16 + $0x50] sm:$0xff]
    %v5829 = vld [vmem:[#allocation16 + $0x58] sm:$0xff]
    %v5830 = vld [vmem:[#allocation16 + $0x60] sm:$0xff]
    %v5831 = vld [vmem:[#allocation16 + $0x68] sm:$0xff]
    %v5832 = vld [vmem:[#allocation16 + $0x70] sm:$0xff]
    %v5833 = vld [vmem:[#allocation16 + $0x78] sm:$0xff]
    %v5834 = vld [vmem:[#allocation17] sm:$0xff]
    %v5835 = vld [vmem:[#allocation17 + $0x8] sm:$0xff]
    %v5836 = vld [vmem:[#allocation17 + $0x10] sm:$0xff]
    %v5837 = vld [vmem:[#allocation17 + $0x18] sm:$0xff]
    %v5838 = vld [vmem:[#allocation17 + $0x20] sm:$0xff]
    %v5839 = vld [vmem:[#allocation17 + $0x28] sm:$0xff]
    %v5840 = vld [vmem:[#allocation17 + $0x30] sm:$0xff]
    %v5841 = vld [vmem:[#allocation17 + $0x38] sm:$0xff]
    %v5842 = vld [vmem:[#allocation17 + $0x40] sm:$0xff]
    %v5843 = vld [vmem:[#allocation17 + $0x48] sm:$0xff]
    %v5844 = vld [vmem:[#allocation17 + $0x50] sm:$0xff]
    %v5845 = vld [vmem:[#allocation17 + $0x58] sm:$0xff]
    %v5846 = vld [vmem:[#allocation17 + $0x60] sm:$0xff]
    %v5847 = vld [vmem:[#allocation17 + $0x68] sm:$0xff]
    %v5848 = vld [vmem:[#allocation17 + $0x70] sm:$0xff]
    %v5849 = vld [vmem:[#allocation17 + $0x78] sm:$0xff]
    %v5851 = vlaneseq
    %v5852 = vshrl.u32 %v5851, 7
    %v5853 = vsub.s32 0, %v5852
    %v5854 = vrot.slane %v5817, %v5853
    %v5855 = vlaneseq
    %v5856 = vshrl.u32 %v5855, 7
    %v5857 = vsub.s32 1, %v5856
    %v5858 = vrot.slane %v5817, %v5857
    %v5859 = vlaneseq
    %v5860 = vshrl.u32 %v5859, 7
    %v5861 = vsub.s32 2, %v5860
    %v5862 = vrot.slane %v5817, %v5861
    %v5866 = vand.u32 %v5770, 4294901760
    %5867 = vmatprep.subr.mxu0 %v5866
    %v5868 = vand.u32 %v5769, 4294901760
    %5869 = vmatpush1.msra.mxu0 %v5868
    %v5870 = vand.u32 %v5773, 4294901760
    %5871 = vmatprep.subr.mxu0 %v5870
    %v5872 = vand.u32 %v5772, 4294901760
    %5873 = vmatpush1.msra.mxu0 %v5872
    %v5874 = vand.u32 %v5776, 4294901760
    %5875 = vmatprep.subr.mxu0 %v5874
    %v5876 = vand.u32 %v5775, 4294901760
    %5877 = vmatpush1.msra.mxu0 %v5876
    %v5878 = vand.u32 %v5779, 4294901760
    %5879 = vmatprep.subr.mxu0 %v5878
    %v5880 = vand.u32 %v5778, 4294901760
    %5881 = vmatpush1.msra.mxu0 %v5880
    %v5882 = vand.u32 %v5782, 4294901760
    %5883 = vmatprep.subr.mxu0 %v5882
    %v5884 = vand.u32 %v5781, 4294901760
    %5885 = vmatpush1.msra.mxu0 %v5884
    %v5886 = vand.u32 %v5785, 4294901760
    %5887 = vmatprep.subr.mxu0 %v5886
    %v5888 = vand.u32 %v5784, 4294901760
    %5889 = vmatpush1.msra.mxu0 %v5888
    %v5890 = vand.u32 %v5788, 4294901760
    %5891 = vmatprep.subr.mxu0 %v5890
    %v5892 = vand.u32 %v5787, 4294901760
    %5893 = vmatpush1.msra.mxu0 %v5892
    %v5894 = vand.u32 %v5791, 4294901760
    %5895 = vmatprep.subr.mxu0 %v5894
    %v5896 = vand.u32 %v5790, 4294901760
    %5897 = vmatpush1.msra.mxu0 %v5896
    %v5898 = vand.u32 %v5794, 4294901760
    %5899 = vmatprep.subr.mxu0 %v5898
    %v5900 = vand.u32 %v5793, 4294901760
    %5901 = vmatpush1.msra.mxu0 %v5900
    %v5902 = vand.u32 %v5797, 4294901760
    %5903 = vmatprep.subr.mxu0 %v5902
    %v5904 = vand.u32 %v5796, 4294901760
    %5905 = vmatpush1.msra.mxu0 %v5904
    %v5906 = vand.u32 %v5800, 4294901760
    %5907 = vmatprep.subr.mxu0 %v5906
    %v5908 = vand.u32 %v5799, 4294901760
    %5909 = vmatpush1.msra.mxu0 %v5908
    %v5910 = vand.u32 %v5803, 4294901760
    %5911 = vmatprep.subr.mxu0 %v5910
    %v5912 = vand.u32 %v5802, 4294901760
    %5913 = vmatpush1.msra.mxu0 %v5912
    %v5914 = vand.u32 %v5806, 4294901760
    %5915 = vmatprep.subr.mxu0 %v5914
    %v5916 = vand.u32 %v5805, 4294901760
    %5917 = vmatpush1.msra.mxu0 %v5916
    %v5918 = vand.u32 %v5809, 4294901760
    %5919 = vmatprep.subr.mxu0 %v5918
    %v5920 = vand.u32 %v5808, 4294901760
    %5921 = vmatpush1.msra.mxu0 %v5920
    %v5922 = vand.u32 %v5812, 4294901760
    %5923 = vmatprep.subr.mxu0 %v5922
    %v5924 = vand.u32 %v5811, 4294901760
    %5925 = vmatpush1.msra.mxu0 %v5924
    %v5926 = vand.u32 %v5815, 4294901760
    %5927 = vmatprep.subr.mxu0 %v5926
    %v5928 = vand.u32 %v5814, 4294901760
    %5929 = vmatpush1.msra.mxu0 %v5928
    %5930 = vmatprep.subr.mxu0 0.0
    %5931 = vmatpush1.msra.mxu0 0.0
    %5932 = vmatprep.subr.mxu0 0.0
    %5933 = vmatpush1.msra.mxu0 0.0
    %5934 = vmatprep.subr.mxu0 0.0
    %5935 = vmatpush1.msra.mxu0 0.0
    %5936 = vmatprep.subr.mxu0 0.0
    %5937 = vmatpush1.msra.mxu0 0.0
    %5938 = vmatprep.subr.mxu0 0.0
    %5939 = vmatpush1.msra.mxu0 0.0
    %5940 = vmatprep.subr.mxu0 0.0
    %5941 = vmatpush1.msra.mxu0 0.0
    %5942 = vmatprep.subr.mxu0 0.0
    %5943 = vmatpush1.msra.mxu0 0.0
    %5944 = vmatprep.subr.mxu0 0.0
    %5945 = vmatpush1.msra.mxu0 0.0
    %5946 = vmatprep.subr.mxu0 0.0
    %5947 = vmatpush1.msra.mxu0 0.0
    %5948 = vmatprep.subr.mxu0 0.0
    %5949 = vmatpush1.msra.mxu0 0.0
    %5950 = vmatprep.subr.mxu0 0.0
    %5951 = vmatpush1.msra.mxu0 0.0
    %5952 = vmatprep.subr.mxu0 0.0
    %5953 = vmatpush1.msra.mxu0 0.0
    %5954 = vmatprep.subr.mxu0 0.0
    %5955 = vmatpush1.msra.mxu0 0.0
    %5956 = vmatprep.subr.mxu0 0.0
    %5957 = vmatpush1.msra.mxu0 0.0
    %5958 = vmatprep.subr.mxu0 0.0
    %5959 = vmatpush1.msra.mxu0 0.0
    %5960 = vmatprep.subr.mxu0 0.0
    %5961 = vmatpush1.msra.mxu0 0.0
    %5962 = vmatprep.mubr.f32.mxu0 0.0
    %v5963 = vand.u32 %v5767, 4294901760
    %v5964 = vsub.f32 %v5767, %v5963
    %v5965 = vand.u32 %v5964, 4294901760
    %v5966 = vsub.f32 %v5964, %v5965
    %v5967 = vand.u32 %v5966, 4294901760
    %5968 = vmatmul.mubr.f32.gmra.mrb[0].mxu0 %v5967
    %v5969 = vpop.f32.mrb[0].mxu0
    %v5970 = vadd.f32 %v5854, %v5969
    %v5971 = vpop.f32.mrb[0].mxu0
    %v5972 = vadd.f32 %v5858, %v5971
    %5973 = vmatprep.mubr.f32.mxu0 0.0
    %v5974 = vand.u32 %v5768, 4294901760
    %v5975 = vsub.f32 %v5768, %v5974
    %v5976 = vand.u32 %v5975, 4294901760
    %v5977 = vsub.f32 %v5975, %v5976
    %v5978 = vand.u32 %v5977, 4294901760
    %5979 = vmatmul.mubr.f32.gmra.mrb[0].mxu0 %v5978
    %v5980 = vpop.f32.mrb[0].mxu0
    %v5981 = vadd.f32 %v5854, %v5980
    %v5982 = vpop.f32.mrb[0].mxu0
    %v5983 = vadd.f32 %v5858, %v5982
    %5984 = vdwg.mxu0
    %v5985 = vand.u32 %v5770, 4294901760
    %v5986 = vsub.f32 %v5770, %v5985
    %v5987 = vand.u32 %v5986, 4294901760
    %v5988 = vsub.f32 %v5986, %v5987
    %v5989 = vand.u32 %v5988, 4294901760
    %5990 = vmatprep.subr.mxu0 %v5989
    %v5991 = vand.u32 %v5769, 4294901760
    %v5992 = vsub.f32 %v5769, %v5991
    %v5993 = vand.u32 %v5992, 4294901760
    %v5994 = vsub.f32 %v5992, %v5993
    %v5995 = vand.u32 %v5994, 4294901760
    %5996 = vmatpush1.msra.mxu0 %v5995
    %v5997 = vand.u32 %v5773, 4294901760
    %v5998 = vsub.f32 %v5773, %v5997
    %v5999 = vand.u32 %v5998, 4294901760
    %v6000 = vsub.f32 %v5998, %v5999
    %v6001 = vand.u32 %v6000, 4294901760
    %6002 = vmatprep.subr.mxu0 %v6001
    %v6003 = vand.u32 %v5772, 4294901760
    %v6004 = vsub.f32 %v5772, %v6003
    %v6005 = vand.u32 %v6004, 4294901760
    %v6006 = vsub.f32 %v6004, %v6005
    %v6007 = vand.u32 %v6006, 4294901760
    %6008 = vmatpush1.msra.mxu0 %v6007
    %v6009 = vand.u32 %v5776, 4294901760
    %v6010 = vsub.f32 %v5776, %v6009
    %v6011 = vand.u32 %v6010, 4294901760
    %v6012 = vsub.f32 %v6010, %v6011
    %v6013 = vand.u32 %v6012, 4294901760
    %6014 = vmatprep.subr.mxu0 %v6013
    %v6015 = vand.u32 %v5775, 4294901760
    %v6016 = vsub.f32 %v5775, %v6015
    %v6017 = vand.u32 %v6016, 4294901760
    %v6018 = vsub.f32 %v6016, %v6017
    %v6019 = vand.u32 %v6018, 4294901760
    %6020 = vmatpush1.msra.mxu0 %v6019
    %v6021 = vand.u32 %v5779, 4294901760
    %v6022 = vsub.f32 %v5779, %v6021
    %v6023 = vand.u32 %v6022, 4294901760
    %v6024 = vsub.f32 %v6022, %v6023
    %v6025 = vand.u32 %v6024, 4294901760
    %6026 = vmatprep.subr.mxu0 %v6025
    %v6027 = vand.u32 %v5778, 4294901760
    %v6028 = vsub.f32 %v5778, %v6027
    %v6029 = vand.u32 %v6028, 4294901760
    %v6030 = vsub.f32 %v6028, %v6029
    %v6031 = vand.u32 %v6030, 4294901760
    %6032 = vmatpush1.msra.mxu0 %v6031
    %v6033 = vand.u32 %v5782, 4294901760
    %v6034 = vsub.f32 %v5782, %v6033
    %v6035 = vand.u32 %v6034, 4294901760
    %v6036 = vsub.f32 %v6034, %v6035
    %v6037 = vand.u32 %v6036, 4294901760
    %6038 = vmatprep.subr.mxu0 %v6037
    %v6039 = vand.u32 %v5781, 4294901760
    %v6040 = vsub.f32 %v5781, %v6039
    %v6041 = vand.u32 %v6040, 4294901760
    %v6042 = vsub.f32 %v6040, %v6041
    %v6043 = vand.u32 %v6042, 4294901760
    %6044 = vmatpush1.msra.mxu0 %v6043
    %v6045 = vand.u32 %v5785, 4294901760
    %v6046 = vsub.f32 %v5785, %v6045
    %v6047 = vand.u32 %v6046, 4294901760
    %v6048 = vsub.f32 %v6046, %v6047
    %v6049 = vand.u32 %v6048, 4294901760
    %6050 = vmatprep.subr.mxu0 %v6049
    %v6051 = vand.u32 %v5784, 4294901760
    %v6052 = vsub.f32 %v5784, %v6051
    %v6053 = vand.u32 %v6052, 4294901760
    %v6054 = vsub.f32 %v6052, %v6053
    %v6055 = vand.u32 %v6054, 4294901760
    %6056 = vmatpush1.msra.mxu0 %v6055
    %v6057 = vand.u32 %v5788, 4294901760
    %v6058 = vsub.f32 %v5788, %v6057
    %v6059 = vand.u32 %v6058, 4294901760
    %v6060 = vsub.f32 %v6058, %v6059
    %v6061 = vand.u32 %v6060, 4294901760
    %6062 = vmatprep.subr.mxu0 %v6061
    %v6063 = vand.u32 %v5787, 4294901760
    %v6064 = vsub.f32 %v5787, %v6063
    %v6065 = vand.u32 %v6064, 4294901760
    %v6066 = vsub.f32 %v6064, %v6065
    %v6067 = vand.u32 %v6066, 4294901760
    %6068 = vmatpush1.msra.mxu0 %v6067
    %v6069 = vand.u32 %v5791, 4294901760
    %v6070 = vsub.f32 %v5791, %v6069
    %v6071 = vand.u32 %v6070, 4294901760
    %v6072 = vsub.f32 %v6070, %v6071
    %v6073 = vand.u32 %v6072, 4294901760
    %6074 = vmatprep.subr.mxu0 %v6073
    %v6075 = vand.u32 %v5790, 4294901760
    %v6076 = vsub.f32 %v5790, %v6075
    %v6077 = vand.u32 %v6076, 4294901760
    %v6078 = vsub.f32 %v6076, %v6077
    %v6079 = vand.u32 %v6078, 4294901760
    %6080 = vmatpush1.msra.mxu0 %v6079
    %v6081 = vand.u32 %v5794, 4294901760
    %v6082 = vsub.f32 %v5794, %v6081
    %v6083 = vand.u32 %v6082, 4294901760
    %v6084 = vsub.f32 %v6082, %v6083
    %v6085 = vand.u32 %v6084, 4294901760
    %6086 = vmatprep.subr.mxu0 %v6085
    %v6087 = vand.u32 %v5793, 4294901760
    %v6088 = vsub.f32 %v5793, %v6087
    %v6089 = vand.u32 %v6088, 4294901760
    %v6090 = vsub.f32 %v6088, %v6089
    %v6091 = vand.u32 %v6090, 4294901760
    %6092 = vmatpush1.msra.mxu0 %v6091
    %v6093 = vand.u32 %v5797, 4294901760
    %v6094 = vsub.f32 %v5797, %v6093
    %v6095 = vand.u32 %v6094, 4294901760
    %v6096 = vsub.f32 %v6094, %v6095
    %v6097 = vand.u32 %v6096, 4294901760
    %6098 = vmatprep.subr.mxu0 %v6097
    %v6099 = vand.u32 %v5796, 4294901760
    %v6100 = vsub.f32 %v5796, %v6099
    %v6101 = vand.u32 %v6100, 4294901760
    %v6102 = vsub.f32 %v6100, %v6101
    %v6103 = vand.u32 %v6102, 4294901760
    %6104 = vmatpush1.msra.mxu0 %v6103
    %v6105 = vand.u32 %v5800, 4294901760
    %v6106 = vsub.f32 %v5800, %v6105
    %v6107 = vand.u32 %v6106, 4294901760
    %v6108 = vsub.f32 %v6106, %v6107
    %v6109 = vand.u32 %v6108, 4294901760
    %6110 = vmatprep.subr.mxu0 %v6109
    %v6111 = vand.u32 %v5799, 4294901760
    %v6112 = vsub.f32 %v5799, %v6111
    %v6113 = vand.u32 %v6112, 4294901760
    %v6114 = vsub.f32 %v6112, %v6113
    %v6115 = vand.u32 %v6114, 4294901760
    %6116 = vmatpush1.msra.mxu0 %v6115
    %v6117 = vand.u32 %v5803, 4294901760
    %v6118 = vsub.f32 %v5803, %v6117
    %v6119 = vand.u32 %v6118, 4294901760
    %v6120 = vsub.f32 %v6118, %v6119
    %v6121 = vand.u32 %v6120, 4294901760
    %6122 = vmatprep.subr.mxu0 %v6121
    %v6123 = vand.u32 %v5802, 4294901760
    %v6124 = vsub.f32 %v5802, %v6123
    %v6125 = vand.u32 %v6124, 4294901760
    %v6126 = vsub.f32 %v6124, %v6125
    %v6127 = vand.u32 %v6126, 4294901760
    %6128 = vmatpush1.msra.mxu0 %v6127
    %v6129 = vand.u32 %v5806, 4294901760
    %v6130 = vsub.f32 %v5806, %v6129
    %v6131 = vand.u32 %v6130, 4294901760
    %v6132 = vsub.f32 %v6130, %v6131
    %v6133 = vand.u32 %v6132, 4294901760
    %6134 = vmatprep.subr.mxu0 %v6133
    %v6135 = vand.u32 %v5805, 4294901760
    %v6136 = vsub.f32 %v5805, %v6135
    %v6137 = vand.u32 %v6136, 4294901760
    %v6138 = vsub.f32 %v6136, %v6137
    %v6139 = vand.u32 %v6138, 4294901760
    %6140 = vmatpush1.msra.mxu0 %v6139
    %v6141 = vand.u32 %v5809, 4294901760
    %v6142 = vsub.f32 %v5809, %v6141
    %v6143 = vand.u32 %v6142, 4294901760
    %v6144 = vsub.f32 %v6142, %v6143
    %v6145 = vand.u32 %v6144, 4294901760
    %6146 = vmatprep.subr.mxu0 %v6145
    %v6147 = vand.u32 %v5808, 4294901760
    %v6148 = vsub.f32 %v5808, %v6147
    %v6149 = vand.u32 %v6148, 4294901760
    %v6150 = vsub.f32 %v6148, %v6149
    %v6151 = vand.u32 %v6150, 4294901760
    %6152 = vmatpush1.msra.mxu0 %v6151
    %v6153 = vand.u32 %v5812, 4294901760
    %v6154 = vsub.f32 %v5812, %v6153
    %v6155 = vand.u32 %v6154, 4294901760
    %v6156 = vsub.f32 %v6154, %v6155
    %v6157 = vand.u32 %v6156, 4294901760
    %6158 = vmatprep.subr.mxu0 %v6157
    %v6159 = vand.u32 %v5811, 4294901760
    %v6160 = vsub.f32 %v5811, %v6159
    %v6161 = vand.u32 %v6160, 4294901760
    %v6162 = vsub.f32 %v6160, %v6161
    %v6163 = vand.u32 %v6162, 4294901760
    %6164 = vmatpush1.msra.mxu0 %v6163
    %v6165 = vand.u32 %v5815, 4294901760
    %v6166 = vsub.f32 %v5815, %v6165
    %v6167 = vand.u32 %v6166, 4294901760
    %v6168 = vsub.f32 %v6166, %v6167
    %v6169 = vand.u32 %v6168, 4294901760
    %6170 = vmatprep.subr.mxu0 %v6169
    %v6171 = vand.u32 %v5814, 4294901760
    %v6172 = vsub.f32 %v5814, %v6171
    %v6173 = vand.u32 %v6172, 4294901760
    %v6174 = vsub.f32 %v6172, %v6173
    %v6175 = vand.u32 %v6174, 4294901760
    %6176 = vmatpush1.msra.mxu0 %v6175
    %6177 = vmatprep.subr.mxu0 0.0
    %6178 = vmatpush1.msra.mxu0 0.0
    %6179 = vmatprep.subr.mxu0 0.0
    %6180 = vmatpush1.msra.mxu0 0.0
    %6181 = vmatprep.subr.mxu0 0.0
    %6182 = vmatpush1.msra.mxu0 0.0
    %6183 = vmatprep.subr.mxu0 0.0
    %6184 = vmatpush1.msra.mxu0 0.0
    %6185 = vmatprep.subr.mxu0 0.0
    %6186 = vmatpush1.msra.mxu0 0.0
    %6187 = vmatprep.subr.mxu0 0.0
    %6188 = vmatpush1.msra.mxu0 0.0
    %6189 = vmatprep.subr.mxu0 0.0
    %6190 = vmatpush1.msra.mxu0 0.0
    %6191 = vmatprep.subr.mxu0 0.0
    %6192 = vmatpush1.msra.mxu0 0.0
    %6193 = vmatprep.subr.mxu0 0.0
    %6194 = vmatpush1.msra.mxu0 0.0
    %6195 = vmatprep.subr.mxu0 0.0
    %6196 = vmatpush1.msra.mxu0 0.0
    %6197 = vmatprep.subr.mxu0 0.0
    %6198 = vmatpush1.msra.mxu0 0.0
    %6199 = vmatprep.subr.mxu0 0.0
    %6200 = vmatpush1.msra.mxu0 0.0
    %6201 = vmatprep.subr.mxu0 0.0
    %6202 = vmatpush1.msra.mxu0 0.0
    %6203 = vmatprep.subr.mxu0 0.0
    %6204 = vmatpush1.msra.mxu0 0.0
    %6205 = vmatprep.subr.mxu0 0.0
    %6206 = vmatpush1.msra.mxu0 0.0
    %6207 = vmatprep.subr.mxu0 0.0
    %6208 = vmatpush1.msra.mxu0 0.0
    %6209 = vmatprep.mubr.f32.mxu0 0.0
    %v6210 = vand.u32 %v5767, 4294901760
    %6211 = vmatmul.mubr.f32.gmra.mrb[0].mxu0 %v6210
    %v6212 = vpop.f32.mrb[0].mxu0
    %v6213 = vadd.f32 %v5970, %v6212
    %v6214 = vpop.f32.mrb[0].mxu0
    %v6215 = vadd.f32 %v5972, %v6214
    %6216 = vmatprep.mubr.f32.mxu0 0.0
    %v6217 = vand.u32 %v5768, 4294901760
    %6218 = vmatmul.mubr.f32.gmra.mrb[0].mxu0 %v6217
    %v6219 = vpop.f32.mrb[0].mxu0
    %v6220 = vadd.f32 %v5981, %v6219
    %v6221 = vpop.f32.mrb[0].mxu0
    %v6222 = vadd.f32 %v5983, %v6221
    %6223 = vdwg.mxu0
    %v6224 = vand.u32 %v5770, 4294901760
    %v6225 = vsub.f32 %v5770, %v6224
    %6226 = vmatprep.subr.mxu0 %v6225
    %v6227 = vand.u32 %v5769, 4294901760
    %v6228 = vsub.f32 %v5769, %v6227
    %6229 = vmatpush1.msra.mxu0 %v6228
    %v6230 = vand.u32 %v5773, 4294901760
    %v6231 = vsub.f32 %v5773, %v6230
    %6232 = vmatprep.subr.mxu0 %v6231
    %v6233 = vand.u32 %v5772, 4294901760
    %v6234 = vsub.f32 %v5772, %v6233
    %6235 = vmatpush1.msra.mxu0 %v6234
    %v6236 = vand.u32 %v5776, 4294901760
    %v6237 = vsub.f32 %v5776, %v6236
    %6238 = vmatprep.subr.mxu0 %v6237
    %v6239 = vand.u32 %v5775, 4294901760
    %v6240 = vsub.f32 %v5775, %v6239
    %6241 = vmatpush1.msra.mxu0 %v6240
    %v6242 = vand.u32 %v5779, 4294901760
    %v6243 = vsub.f32 %v5779, %v6242
    %6244 = vmatprep.subr.mxu0 %v6243
    %v6245 = vand.u32 %v5778, 4294901760
    %v6246 = vsub.f32 %v5778, %v6245
    %6247 = vmatpush1.msra.mxu0 %v6246
    %v6248 = vand.u32 %v5782, 4294901760
    %v6249 = vsub.f32 %v5782, %v6248
    %6250 = vmatprep.subr.mxu0 %v6249
    %v6251 = vand.u32 %v5781, 4294901760
    %v6252 = vsub.f32 %v5781, %v6251
    %6253 = vmatpush1.msra.mxu0 %v6252
    %v6254 = vand.u32 %v5785, 4294901760
    %v6255 = vsub.f32 %v5785, %v6254
    %6256 = vmatprep.subr.mxu0 %v6255
    %v6257 = vand.u32 %v5784, 4294901760
    %v6258 = vsub.f32 %v5784, %v6257
    %6259 = vmatpush1.msra.mxu0 %v6258
    %v6260 = vand.u32 %v5788, 4294901760
    %v6261 = vsub.f32 %v5788, %v6260
    %6262 = vmatprep.subr.mxu0 %v6261
    %v6263 = vand.u32 %v5787, 4294901760
    %v6264 = vsub.f32 %v5787, %v6263
    %6265 = vmatpush1.msra.mxu0 %v6264
    %v6266 = vand.u32 %v5791, 4294901760
    %v6267 = vsub.f32 %v5791, %v6266
    %6268 = vmatprep.subr.mxu0 %v6267
    %v6269 = vand.u32 %v5790, 4294901760
    %v6270 = vsub.f32 %v5790, %v6269
    %6271 = vmatpush1.msra.mxu0 %v6270
    %v6272 = vand.u32 %v5794, 4294901760
    %v6273 = vsub.f32 %v5794, %v6272
    %6274 = vmatprep.subr.mxu0 %v6273
    %v6275 = vand.u32 %v5793, 4294901760
    %v6276 = vsub.f32 %v5793, %v6275
    %6277 = vmatpush1.msra.mxu0 %v6276
    %v6278 = vand.u32 %v5797, 4294901760
    %v6279 = vsub.f32 %v5797, %v6278
    %6280 = vmatprep.subr.mxu0 %v6279
    %v6281 = vand.u32 %v5796, 4294901760
    %v6282 = vsub.f32 %v5796, %v6281
    %6283 = vmatpush1.msra.mxu0 %v6282
    %v6284 = vand.u32 %v5800, 4294901760
    %v6285 = vsub.f32 %v5800, %v6284
    %6286 = vmatprep.subr.mxu0 %v6285
    %v6287 = vand.u32 %v5799, 4294901760
    %v6288 = vsub.f32 %v5799, %v6287
    %6289 = vmatpush1.msra.mxu0 %v6288
    %v6290 = vand.u32 %v5803, 4294901760
    %v6291 = vsub.f32 %v5803, %v6290
    %6292 = vmatprep.subr.mxu0 %v6291
    %v6293 = vand.u32 %v5802, 4294901760
    %v6294 = vsub.f32 %v5802, %v6293
    %6295 = vmatpush1.msra.mxu0 %v6294
    %v6296 = vand.u32 %v5806, 4294901760
    %v6297 = vsub.f32 %v5806, %v6296
    %6298 = vmatprep.subr.mxu0 %v6297
    %v6299 = vand.u32 %v5805, 4294901760
    %v6300 = vsub.f32 %v5805, %v6299
    %6301 = vmatpush1.msra.mxu0 %v6300
    %v6302 = vand.u32 %v5809, 4294901760
    %v6303 = vsub.f32 %v5809, %v6302
    %6304 = vmatprep.subr.mxu0 %v6303
    %v6305 = vand.u32 %v5808, 4294901760
    %v6306 = vsub.f32 %v5808, %v6305
    %6307 = vmatpush1.msra.mxu0 %v6306
    %v6308 = vand.u32 %v5812, 4294901760
    %v6309 = vsub.f32 %v5812, %v6308
    %6310 = vmatprep.subr.mxu0 %v6309
    %v6311 = vand.u32 %v5811, 4294901760
    %v6312 = vsub.f32 %v5811, %v6311
    %6313 = vmatpush1.msra.mxu0 %v6312
    %v6314 = vand.u32 %v5815, 4294901760
    %v6315 = vsub.f32 %v5815, %v6314
    %6316 = vmatprep.subr.mxu0 %v6315
    %v6317 = vand.u32 %v5814, 4294901760
    %v6318 = vsub.f32 %v5814, %v6317
    %6319 = vmatpush1.msra.mxu0 %v6318
    %6320 = vmatprep.subr.mxu0 0.0
    %6321 = vmatpush1.msra.mxu0 0.0
    %6322 = vmatprep.subr.mxu0 0.0
    %6323 = vmatpush1.msra.mxu0 0.0
    %6324 = vmatprep.subr.mxu0 0.0
    %6325 = vmatpush1.msra.mxu0 0.0
    %6326 = vmatprep.subr.mxu0 0.0
    %6327 = vmatpush1.msra.mxu0 0.0
    %6328 = vmatprep.subr.mxu0 0.0
    %6329 = vmatpush1.msra.mxu0 0.0
    %6330 = vmatprep.subr.mxu0 0.0
    %6331 = vmatpush1.msra.mxu0 0.0
    %6332 = vmatprep.subr.mxu0 0.0
    %6333 = vmatpush1.msra.mxu0 0.0
    %6334 = vmatprep.subr.mxu0 0.0
    %6335 = vmatpush1.msra.mxu0 0.0
    %6336 = vmatprep.subr.mxu0 0.0
    %6337 = vmatpush1.msra.mxu0 0.0
    %6338 = vmatprep.subr.mxu0 0.0
    %6339 = vmatpush1.msra.mxu0 0.0
    %6340 = vmatprep.subr.mxu0 0.0
    %6341 = vmatpush1.msra.mxu0 0.0
    %6342 = vmatprep.subr.mxu0 0.0
    %6343 = vmatpush1.msra.mxu0 0.0
    %6344 = vmatprep.subr.mxu0 0.0
    %6345 = vmatpush1.msra.mxu0 0.0
    %6346 = vmatprep.subr.mxu0 0.0
    %6347 = vmatpush1.msra.mxu0 0.0
    %6348 = vmatprep.subr.mxu0 0.0
    %6349 = vmatpush1.msra.mxu0 0.0
    %6350 = vmatprep.subr.mxu0 0.0
    %6351 = vmatpush1.msra.mxu0 0.0
    %6352 = vmatprep.mubr.f32.mxu0 0.0
    %v6353 = vand.u32 %v5767, 4294901760
    %v6354 = vsub.f32 %v5767, %v6353
    %6355 = vmatmul.mubr.f32.gmra.mrb[0].mxu0 %v6354
    %v6356 = vpop.f32.mrb[0].mxu0
    %v6357 = vadd.f32 %v6213, %v6356
    %v6358 = vpop.f32.mrb[0].mxu0
    %v6359 = vadd.f32 %v6215, %v6358
    %6360 = vmatprep.mubr.f32.mxu0 0.0
    %v6361 = vand.u32 %v5768, 4294901760
    %v6362 = vsub.f32 %v5768, %v6361
    %6363 = vmatmul.mubr.f32.gmra.mrb[0].mxu0 %v6362
    %v6364 = vpop.f32.mrb[0].mxu0
    %v6365 = vadd.f32 %v6220, %v6364
    %v6366 = vpop.f32.mrb[0].mxu0
    %v6367 = vadd.f32 %v6222, %v6366
    %6368 = vdwg.mxu0
    %v6369 = vand.u32 %v5770, 4294901760
    %6370 = vmatprep.subr.mxu0 %v6369
    %v6371 = vand.u32 %v5769, 4294901760
    %6372 = vmatpush1.msra.mxu0 %v6371
    %v6373 = vand.u32 %v5773, 4294901760
    %6374 = vmatprep.subr.mxu0 %v6373
    %v6375 = vand.u32 %v5772, 4294901760
    %6376 = vmatpush1.msra.mxu0 %v6375
    %v6377 = vand.u32 %v5776, 4294901760
    %6378 = vmatprep.subr.mxu0 %v6377
    %v6379 = vand.u32 %v5775, 4294901760
    %6380 = vmatpush1.msra.mxu0 %v6379
    %v6381 = vand.u32 %v5779, 4294901760
    %6382 = vmatprep.subr.mxu0 %v6381
    %v6383 = vand.u32 %v5778, 4294901760
    %6384 = vmatpush1.msra.mxu0 %v6383
    %v6385 = vand.u32 %v5782, 4294901760
    %6386 = vmatprep.subr.mxu0 %v6385
    %v6387 = vand.u32 %v5781, 4294901760
    %6388 = vmatpush1.msra.mxu0 %v6387
    %v6389 = vand.u32 %v5785, 4294901760
    %6390 = vmatprep.subr.mxu0 %v6389
    %v6391 = vand.u32 %v5784, 4294901760
    %6392 = vmatpush1.msra.mxu0 %v6391
    %v6393 = vand.u32 %v5788, 4294901760
    %6394 = vmatprep.subr.mxu0 %v6393
    %v6395 = vand.u32 %v5787, 4294901760
    %6396 = vmatpush1.msra.mxu0 %v6395
    %v6397 = vand.u32 %v5791, 4294901760
    %6398 = vmatprep.subr.mxu0 %v6397
    %v6399 = vand.u32 %v5790, 4294901760
    %6400 = vmatpush1.msra.mxu0 %v6399
    %v6401 = vand.u32 %v5794, 4294901760
    %6402 = vmatprep.subr.mxu0 %v6401
    %v6403 = vand.u32 %v5793, 4294901760
    %6404 = vmatpush1.msra.mxu0 %v6403
    %v6405 = vand.u32 %v5797, 4294901760
    %6406 = vmatprep.subr.mxu0 %v6405
    %v6407 = vand.u32 %v5796, 4294901760
    %6408 = vmatpush1.msra.mxu0 %v6407
    %v6409 = vand.u32 %v5800, 4294901760
    %6410 = vmatprep.subr.mxu0 %v6409
    %v6411 = vand.u32 %v5799, 4294901760
    %6412 = vmatpush1.msra.mxu0 %v6411
    %v6413 = vand.u32 %v5803, 4294901760
    %6414 = vmatprep.subr.mxu0 %v6413
    %v6415 = vand.u32 %v5802, 4294901760
    %6416 = vmatpush1.msra.mxu0 %v6415
    %v6417 = vand.u32 %v5806, 4294901760
    %6418 = vmatprep.subr.mxu0 %v6417
    %v6419 = vand.u32 %v5805, 4294901760
    %6420 = vmatpush1.msra.mxu0 %v6419
    %v6421 = vand.u32 %v5809, 4294901760
    %6422 = vmatprep.subr.mxu0 %v6421
    %v6423 = vand.u32 %v5808, 4294901760
    %6424 = vmatpush1.msra.mxu0 %v6423
    %v6425 = vand.u32 %v5812, 4294901760
    %6426 = vmatprep.subr.mxu0 %v6425
    %v6427 = vand.u32 %v5811, 4294901760
    %6428 = vmatpush1.msra.mxu0 %v6427
    %v6429 = vand.u32 %v5815, 4294901760
    %6430 = vmatprep.subr.mxu0 %v6429
    %v6431 = vand.u32 %v5814, 4294901760
    %6432 = vmatpush1.msra.mxu0 %v6431
    %6433 = vmatprep.subr.mxu0 0.0
    %6434 = vmatpush1.msra.mxu0 0.0
    %6435 = vmatprep.subr.mxu0 0.0
    %6436 = vmatpush1.msra.mxu0 0.0
    %6437 = vmatprep.subr.mxu0 0.0
    %6438 = vmatpush1.msra.mxu0 0.0
    %6439 = vmatprep.subr.mxu0 0.0
    %6440 = vmatpush1.msra.mxu0 0.0
    %6441 = vmatprep.subr.mxu0 0.0
    %6442 = vmatpush1.msra.mxu0 0.0
    %6443 = vmatprep.subr.mxu0 0.0
    %6444 = vmatpush1.msra.mxu0 0.0
    %6445 = vmatprep.subr.mxu0 0.0
    %6446 = vmatpush1.msra.mxu0 0.0
    %6447 = vmatprep.subr.mxu0 0.0
    %6448 = vmatpush1.msra.mxu0 0.0
    %6449 = vmatprep.subr.mxu0 0.0
    %6450 = vmatpush1.msra.mxu0 0.0
    %6451 = vmatprep.subr.mxu0 0.0
    %6452 = vmatpush1.msra.mxu0 0.0
    %6453 = vmatprep.subr.mxu0 0.0
    %6454 = vmatpush1.msra.mxu0 0.0
    %6455 = vmatprep.subr.mxu0 0.0
    %6456 = vmatpush1.msra.mxu0 0.0
    %6457 = vmatprep.subr.mxu0 0.0
    %6458 = vmatpush1.msra.mxu0 0.0
    %6459 = vmatprep.subr.mxu0 0.0
    %6460 = vmatpush1.msra.mxu0 0.0
    %6461 = vmatprep.subr.mxu0 0.0
    %6462 = vmatpush1.msra.mxu0 0.0
    %6463 = vmatprep.subr.mxu0 0.0
    %6464 = vmatpush1.msra.mxu0 0.0
    %6465 = vmatprep.mubr.f32.mxu0 0.0
    %v6466 = vand.u32 %v5767, 4294901760
    %v6467 = vsub.f32 %v5767, %v6466
    %v6468 = vand.u32 %v6467, 4294901760
    %6469 = vmatmul.mubr.f32.gmra.mrb[0].mxu0 %v6468
    %v6470 = vpop.f32.mrb[0].mxu0
    %v6471 = vadd.f32 %v6357, %v6470
    %v6472 = vpop.f32.mrb[0].mxu0
    %v6473 = vadd.f32 %v6359, %v6472
    %6474 = vmatprep.mubr.f32.mxu0 0.0
    %v6475 = vand.u32 %v5768, 4294901760
    %v6476 = vsub.f32 %v5768, %v6475
    %v6477 = vand.u32 %v6476, 4294901760
    %6478 = vmatmul.mubr.f32.gmra.mrb[0].mxu0 %v6477
    %v6479 = vpop.f32.mrb[0].mxu0
    %v6480 = vadd.f32 %v6365, %v6479
    %v6481 = vpop.f32.mrb[0].mxu0
    %v6482 = vadd.f32 %v6367, %v6481
    %6483 = vdwg.mxu0
    %v6484 = vand.u32 %v5770, 4294901760
    %v6485 = vsub.f32 %v5770, %v6484
    %v6486 = vand.u32 %v6485, 4294901760
    %6487 = vmatprep.subr.mxu0 %v6486
    %v6488 = vand.u32 %v5769, 4294901760
    %v6489 = vsub.f32 %v5769, %v6488
    %v6490 = vand.u32 %v6489, 4294901760
    %6491 = vmatpush1.msra.mxu0 %v6490
    %v6492 = vand.u32 %v5773, 4294901760
    %v6493 = vsub.f32 %v5773, %v6492
    %v6494 = vand.u32 %v6493, 4294901760
    %6495 = vmatprep.subr.mxu0 %v6494
    %v6496 = vand.u32 %v5772, 4294901760
    %v6497 = vsub.f32 %v5772, %v6496
    %v6498 = vand.u32 %v6497, 4294901760
    %6499 = vmatpush1.msra.mxu0 %v6498
    %v6500 = vand.u32 %v5776, 4294901760
    %v6501 = vsub.f32 %v5776, %v6500
    %v6502 = vand.u32 %v6501, 4294901760
    %6503 = vmatprep.subr.mxu0 %v6502
    %v6504 = vand.u32 %v5775, 4294901760
    %v6505 = vsub.f32 %v5775, %v6504
    %v6506 = vand.u32 %v6505, 4294901760
    %6507 = vmatpush1.msra.mxu0 %v6506
    %v6508 = vand.u32 %v5779, 4294901760
    %v6509 = vsub.f32 %v5779, %v6508
    %v6510 = vand.u32 %v6509, 4294901760
    %6511 = vmatprep.subr.mxu0 %v6510
    %v6512 = vand.u32 %v5778, 4294901760
    %v6513 = vsub.f32 %v5778, %v6512
    %v6514 = vand.u32 %v6513, 4294901760
    %6515 = vmatpush1.msra.mxu0 %v6514
    %v6516 = vand.u32 %v5782, 4294901760
    %v6517 = vsub.f32 %v5782, %v6516
    %v6518 = vand.u32 %v6517, 4294901760
    %6519 = vmatprep.subr.mxu0 %v6518
    %v6520 = vand.u32 %v5781, 4294901760
    %v6521 = vsub.f32 %v5781, %v6520
    %v6522 = vand.u32 %v6521, 4294901760
    %6523 = vmatpush1.msra.mxu0 %v6522
    %v6524 = vand.u32 %v5785, 4294901760
    %v6525 = vsub.f32 %v5785, %v6524
    %v6526 = vand.u32 %v6525, 4294901760
    %6527 = vmatprep.subr.mxu0 %v6526
    %v6528 = vand.u32 %v5784, 4294901760
    %v6529 = vsub.f32 %v5784, %v6528
    %v6530 = vand.u32 %v6529, 4294901760
    %6531 = vmatpush1.msra.mxu0 %v6530
    %v6532 = vand.u32 %v5788, 4294901760
    %v6533 = vsub.f32 %v5788, %v6532
    %v6534 = vand.u32 %v6533, 4294901760
    %6535 = vmatprep.subr.mxu0 %v6534
    %v6536 = vand.u32 %v5787, 4294901760
    %v6537 = vsub.f32 %v5787, %v6536
    %v6538 = vand.u32 %v6537, 4294901760
    %6539 = vmatpush1.msra.mxu0 %v6538
    %v6540 = vand.u32 %v5791, 4294901760
    %v6541 = vsub.f32 %v5791, %v6540
    %v6542 = vand.u32 %v6541, 4294901760
    %6543 = vmatprep.subr.mxu0 %v6542
    %v6544 = vand.u32 %v5790, 4294901760
    %v6545 = vsub.f32 %v5790, %v6544
    %v6546 = vand.u32 %v6545, 4294901760
    %6547 = vmatpush1.msra.mxu0 %v6546
    %v6548 = vand.u32 %v5794, 4294901760
    %v6549 = vsub.f32 %v5794, %v6548
    %v6550 = vand.u32 %v6549, 4294901760
    %6551 = vmatprep.subr.mxu0 %v6550
    %v6552 = vand.u32 %v5793, 4294901760
    %v6553 = vsub.f32 %v5793, %v6552
    %v6554 = vand.u32 %v6553, 4294901760
    %6555 = vmatpush1.msra.mxu0 %v6554
    %v6556 = vand.u32 %v5797, 4294901760
    %v6557 = vsub.f32 %v5797, %v6556
    %v6558 = vand.u32 %v6557, 4294901760
    %6559 = vmatprep.subr.mxu0 %v6558
    %v6560 = vand.u32 %v5796, 4294901760
    %v6561 = vsub.f32 %v5796, %v6560
    %v6562 = vand.u32 %v6561, 4294901760
    %6563 = vmatpush1.msra.mxu0 %v6562
    %v6564 = vand.u32 %v5800, 4294901760
    %v6565 = vsub.f32 %v5800, %v6564
    %v6566 = vand.u32 %v6565, 4294901760
    %6567 = vmatprep.subr.mxu0 %v6566
    %v6568 = vand.u32 %v5799, 4294901760
    %v6569 = vsub.f32 %v5799, %v6568
    %v6570 = vand.u32 %v6569, 4294901760
    %6571 = vmatpush1.msra.mxu0 %v6570
    %v6572 = vand.u32 %v5803, 4294901760
    %v6573 = vsub.f32 %v5803, %v6572
    %v6574 = vand.u32 %v6573, 4294901760
    %6575 = vmatprep.subr.mxu0 %v6574
    %v6576 = vand.u32 %v5802, 4294901760
    %v6577 = vsub.f32 %v5802, %v6576
    %v6578 = vand.u32 %v6577, 4294901760
    %6579 = vmatpush1.msra.mxu0 %v6578
    %v6580 = vand.u32 %v5806, 4294901760
    %v6581 = vsub.f32 %v5806, %v6580
    %v6582 = vand.u32 %v6581, 4294901760
    %6583 = vmatprep.subr.mxu0 %v6582
    %v6584 = vand.u32 %v5805, 4294901760
    %v6585 = vsub.f32 %v5805, %v6584
    %v6586 = vand.u32 %v6585, 4294901760
    %6587 = vmatpush1.msra.mxu0 %v6586
    %v6588 = vand.u32 %v5809, 4294901760
    %v6589 = vsub.f32 %v5809, %v6588
    %v6590 = vand.u32 %v6589, 4294901760
    %6591 = vmatprep.subr.mxu0 %v6590
    %v6592 = vand.u32 %v5808, 4294901760
    %v6593 = vsub.f32 %v5808, %v6592
    %v6594 = vand.u32 %v6593, 4294901760
    %6595 = vmatpush1.msra.mxu0 %v6594
    %v6596 = vand.u32 %v5812, 4294901760
    %v6597 = vsub.f32 %v5812, %v6596
    %v6598 = vand.u32 %v6597, 4294901760
    %6599 = vmatprep.subr.mxu0 %v6598
    %v6600 = vand.u32 %v5811, 4294901760
    %v6601 = vsub.f32 %v5811, %v6600
    %v6602 = vand.u32 %v6601, 4294901760
    %6603 = vmatpush1.msra.mxu0 %v6602
    %v6604 = vand.u32 %v5815, 4294901760
    %v6605 = vsub.f32 %v5815, %v6604
    %v6606 = vand.u32 %v6605, 4294901760
    %6607 = vmatprep.subr.mxu0 %v6606
    %v6608 = vand.u32 %v5814, 4294901760
    %v6609 = vsub.f32 %v5814, %v6608
    %v6610 = vand.u32 %v6609, 4294901760
    %6611 = vmatpush1.msra.mxu0 %v6610
    %6612 = vmatprep.subr.mxu0 0.0
    %6613 = vmatpush1.msra.mxu0 0.0
    %6614 = vmatprep.subr.mxu0 0.0
    %6615 = vmatpush1.msra.mxu0 0.0
    %6616 = vmatprep.subr.mxu0 0.0
    %6617 = vmatpush1.msra.mxu0 0.0
    %6618 = vmatprep.subr.mxu0 0.0
    %6619 = vmatpush1.msra.mxu0 0.0
    %6620 = vmatprep.subr.mxu0 0.0
    %6621 = vmatpush1.msra.mxu0 0.0
    %6622 = vmatprep.subr.mxu0 0.0
    %6623 = vmatpush1.msra.mxu0 0.0
    %6624 = vmatprep.subr.mxu0 0.0
    %6625 = vmatpush1.msra.mxu0 0.0
    %6626 = vmatprep.subr.mxu0 0.0
    %6627 = vmatpush1.msra.mxu0 0.0
    %6628 = vmatprep.subr.mxu0 0.0
    %6629 = vmatpush1.msra.mxu0 0.0
    %6630 = vmatprep.subr.mxu0 0.0
    %6631 = vmatpush1.msra.mxu0 0.0
    %6632 = vmatprep.subr.mxu0 0.0
    %6633 = vmatpush1.msra.mxu0 0.0
    %6634 = vmatprep.subr.mxu0 0.0
    %6635 = vmatpush1.msra.mxu0 0.0
    %6636 = vmatprep.subr.mxu0 0.0
    %6637 = vmatpush1.msra.mxu0 0.0
    %6638 = vmatprep.subr.mxu0 0.0
    %6639 = vmatpush1.msra.mxu0 0.0
    %6640 = vmatprep.subr.mxu0 0.0
    %6641 = vmatpush1.msra.mxu0 0.0
    %6642 = vmatprep.subr.mxu0 0.0
    %6643 = vmatpush1.msra.mxu0 0.0
    %6644 = vmatprep.mubr.f32.mxu0 0.0
    %v6645 = vand.u32 %v5767, 4294901760
    %6646 = vmatmul.mubr.f32.gmra.mrb[0].mxu0 %v6645
    %v6647 = vpop.f32.mrb[0].mxu0
    %v6648 = vadd.f32 %v6471, %v6647
    %v6649 = vpop.f32.mrb[0].mxu0
    %v6650 = vadd.f32 %v6473, %v6649
    %6651 = vmatprep.mubr.f32.mxu0 0.0
    %v6652 = vand.u32 %v5768, 4294901760
    %6653 = vmatmul.mubr.f32.gmra.mrb[0].mxu0 %v6652
    %v6654 = vpop.f32.mrb[0].mxu0
    %v6655 = vadd.f32 %v6480, %v6654
    %v6656 = vpop.f32.mrb[0].mxu0
    %v6657 = vadd.f32 %v6482, %v6656
    %6658 = vdwg.mxu0
    %v6659 = vand.u32 %v5770, 4294901760
    %6660 = vmatprep.subr.mxu0 %v6659
    %v6661 = vand.u32 %v5769, 4294901760
    %6662 = vmatpush1.msra.mxu0 %v6661
    %v6663 = vand.u32 %v5773, 4294901760
    %6664 = vmatprep.subr.mxu0 %v6663
    %v6665 = vand.u32 %v5772, 4294901760
    %6666 = vmatpush1.msra.mxu0 %v6665
    %v6667 = vand.u32 %v5776, 4294901760
    %6668 = vmatprep.subr.mxu0 %v6667
    %v6669 = vand.u32 %v5775, 4294901760
    %6670 = vmatpush1.msra.mxu0 %v6669
    %v6671 = vand.u32 %v5779, 4294901760
    %6672 = vmatprep.subr.mxu0 %v6671
    %v6673 = vand.u32 %v5778, 4294901760
    %6674 = vmatpush1.msra.mxu0 %v6673
    %v6675 = vand.u32 %v5782, 4294901760
    %6676 = vmatprep.subr.mxu0 %v6675
    %v6677 = vand.u32 %v5781, 4294901760
    %6678 = vmatpush1.msra.mxu0 %v6677
    %v6679 = vand.u32 %v5785, 4294901760
    %6680 = vmatprep.subr.mxu0 %v6679
    %v6681 = vand.u32 %v5784, 4294901760
    %6682 = vmatpush1.msra.mxu0 %v6681
    %v6683 = vand.u32 %v5788, 4294901760
    %6684 = vmatprep.subr.mxu0 %v6683
    %v6685 = vand.u32 %v5787, 4294901760
    %6686 = vmatpush1.msra.mxu0 %v6685
    %v6687 = vand.u32 %v5791, 4294901760
    %6688 = vmatprep.subr.mxu0 %v6687
    %v6689 = vand.u32 %v5790, 4294901760
    %6690 = vmatpush1.msra.mxu0 %v6689
    %v6691 = vand.u32 %v5794, 4294901760
    %6692 = vmatprep.subr.mxu0 %v6691
    %v6693 = vand.u32 %v5793, 4294901760
    %6694 = vmatpush1.msra.mxu0 %v6693
    %v6695 = vand.u32 %v5797, 4294901760
    %6696 = vmatprep.subr.mxu0 %v6695
    %v6697 = vand.u32 %v5796, 4294901760
    %6698 = vmatpush1.msra.mxu0 %v6697
    %v6699 = vand.u32 %v5800, 4294901760
    %6700 = vmatprep.subr.mxu0 %v6699
    %v6701 = vand.u32 %v5799, 4294901760
    %6702 = vmatpush1.msra.mxu0 %v6701
    %v6703 = vand.u32 %v5803, 4294901760
    %6704 = vmatprep.subr.mxu0 %v6703
    %v6705 = vand.u32 %v5802, 4294901760
    %6706 = vmatpush1.msra.mxu0 %v6705
    %v6707 = vand.u32 %v5806, 4294901760
    %6708 = vmatprep.subr.mxu0 %v6707
    %v6709 = vand.u32 %v5805, 4294901760
    %6710 = vmatpush1.msra.mxu0 %v6709
    %v6711 = vand.u32 %v5809, 4294901760
    %6712 = vmatprep.subr.mxu0 %v6711
    %v6713 = vand.u32 %v5808, 4294901760
    %6714 = vmatpush1.msra.mxu0 %v6713
    %v6715 = vand.u32 %v5812, 4294901760
    %6716 = vmatprep.subr.mxu0 %v6715
    %v6717 = vand.u32 %v5811, 4294901760
    %6718 = vmatpush1.msra.mxu0 %v6717
    %v6719 = vand.u32 %v5815, 4294901760
    %6720 = vmatprep.subr.mxu0 %v6719
    %v6721 = vand.u32 %v5814, 4294901760
    %6722 = vmatpush1.msra.mxu0 %v6721
    %6723 = vmatprep.subr.mxu0 0.0
    %6724 = vmatpush1.msra.mxu0 0.0
    %6725 = vmatprep.subr.mxu0 0.0
    %6726 = vmatpush1.msra.mxu0 0.0
    %6727 = vmatprep.subr.mxu0 0.0
    %6728 = vmatpush1.msra.mxu0 0.0
    %6729 = vmatprep.subr.mxu0 0.0
    %6730 = vmatpush1.msra.mxu0 0.0
    %6731 = vmatprep.subr.mxu0 0.0
    %6732 = vmatpush1.msra.mxu0 0.0
    %6733 = vmatprep.subr.mxu0 0.0
    %6734 = vmatpush1.msra.mxu0 0.0
    %6735 = vmatprep.subr.mxu0 0.0
    %6736 = vmatpush1.msra.mxu0 0.0
    %6737 = vmatprep.subr.mxu0 0.0
    %6738 = vmatpush1.msra.mxu0 0.0
    %6739 = vmatprep.subr.mxu0 0.0
    %6740 = vmatpush1.msra.mxu0 0.0
    %6741 = vmatprep.subr.mxu0 0.0
    %6742 = vmatpush1.msra.mxu0 0.0
    %6743 = vmatprep.subr.mxu0 0.0
    %6744 = vmatpush1.msra.mxu0 0.0
    %6745 = vmatprep.subr.mxu0 0.0
    %6746 = vmatpush1.msra.mxu0 0.0
    %6747 = vmatprep.subr.mxu0 0.0
    %6748 = vmatpush1.msra.mxu0 0.0
    %6749 = vmatprep.subr.mxu0 0.0
    %6750 = vmatpush1.msra.mxu0 0.0
    %6751 = vmatprep.subr.mxu0 0.0
    %6752 = vmatpush1.msra.mxu0 0.0
    %6753 = vmatprep.subr.mxu0 0.0
    %6754 = vmatpush1.msra.mxu0 0.0
    %6755 = vmatprep.mubr.f32.mxu0 0.0
    %v6756 = vand.u32 %v5767, 4294901760
    %6757 = vmatmul.mubr.f32.gmra.mrb[0].mxu0 %v6756
    %v6758 = vpop.f32.mrb[0].mxu0
    %v6759 = vadd.f32 %v6648, %v6758
    %v6760 = vpop.f32.mrb[0].mxu0
    %v6761 = vadd.f32 %v6650, %v6760
    %6762 = vmatprep.mubr.f32.mxu0 0.0
    %v6763 = vand.u32 %v5768, 4294901760
    %6764 = vmatmul.mubr.f32.gmra.mrb[0].mxu0 %v6763
    %v6765 = vpop.f32.mrb[0].mxu0
    %v6766 = vadd.f32 %v6655, %v6765
    %v6767 = vpop.f32.mrb[0].mxu0
    %v6768 = vadd.f32 %v6657, %v6767
    %6769 = vdwg.mxu0
    %6770 = vmatprep.subr.mxu0 0.0
    %v6771 = vand.u32 %v5771, 4294901760
    %6772 = vmatpush1.msra.mxu0 %v6771
    %6773 = vmatprep.subr.mxu0 0.0
    %v6774 = vand.u32 %v5774, 4294901760
    %6775 = vmatpush1.msra.mxu0 %v6774
    %6776 = vmatprep.subr.mxu0 0.0
    %v6777 = vand.u32 %v5777, 4294901760
    %6778 = vmatpush1.msra.mxu0 %v6777
    %6779 = vmatprep.subr.mxu0 0.0
    %v6780 = vand.u32 %v5780, 4294901760
    %6781 = vmatpush1.msra.mxu0 %v6780
    %6782 = vmatprep.subr.mxu0 0.0
    %v6783 = vand.u32 %v5783, 4294901760
    %6784 = vmatpush1.msra.mxu0 %v6783
    %6785 = vmatprep.subr.mxu0 0.0
    %v6786 = vand.u32 %v5786, 4294901760
    %6787 = vmatpush1.msra.mxu0 %v6786
    %6788 = vmatprep.subr.mxu0 0.0
    %v6789 = vand.u32 %v5789, 4294901760
    %6790 = vmatpush1.msra.mxu0 %v6789
    %6791 = vmatprep.subr.mxu0 0.0
    %v6792 = vand.u32 %v5792, 4294901760
    %6793 = vmatpush1.msra.mxu0 %v6792
    %6794 = vmatprep.subr.mxu0 0.0
    %v6795 = vand.u32 %v5795, 4294901760
    %6796 = vmatpush1.msra.mxu0 %v6795
    %6797 = vmatprep.subr.mxu0 0.0
    %v6798 = vand.u32 %v5798, 4294901760
    %6799 = vmatpush1.msra.mxu0 %v6798
    %6800 = vmatprep.subr.mxu0 0.0
    %v6801 = vand.u32 %v5801, 4294901760
    %6802 = vmatpush1.msra.mxu0 %v6801
    %6803 = vmatprep.subr.mxu0 0.0
    %v6804 = vand.u32 %v5804, 4294901760
    %6805 = vmatpush1.msra.mxu0 %v6804
    %6806 = vmatprep.subr.mxu0 0.0
    %v6807 = vand.u32 %v5807, 4294901760
    %6808 = vmatpush1.msra.mxu0 %v6807
    %6809 = vmatprep.subr.mxu0 0.0
    %v6810 = vand.u32 %v5810, 4294901760
    %6811 = vmatpush1.msra.mxu0 %v6810
    %6812 = vmatprep.subr.mxu0 0.0
    %v6813 = vand.u32 %v5813, 4294901760
    %6814 = vmatpush1.msra.mxu0 %v6813
    %6815 = vmatprep.subr.mxu0 0.0
    %v6816 = vand.u32 %v5816, 4294901760
    %6817 = vmatpush1.msra.mxu0 %v6816
    %6818 = vmatprep.subr.mxu0 0.0
    %6819 = vmatpush1.msra.mxu0 0.0
    %6820 = vmatprep.subr.mxu0 0.0
    %6821 = vmatpush1.msra.mxu0 0.0
    %6822 = vmatprep.subr.mxu0 0.0
    %6823 = vmatpush1.msra.mxu0 0.0
    %6824 = vmatprep.subr.mxu0 0.0
    %6825 = vmatpush1.msra.mxu0 0.0
    %6826 = vmatprep.subr.mxu0 0.0
    %6827 = vmatpush1.msra.mxu0 0.0
    %6828 = vmatprep.subr.mxu0 0.0
    %6829 = vmatpush1.msra.mxu0 0.0
    %6830 = vmatprep.subr.mxu0 0.0
    %6831 = vmatpush1.msra.mxu0 0.0
    %6832 = vmatprep.subr.mxu0 0.0
    %6833 = vmatpush1.msra.mxu0 0.0
    %6834 = vmatprep.subr.mxu0 0.0
    %6835 = vmatpush1.msra.mxu0 0.0
    %6836 = vmatprep.subr.mxu0 0.0
    %6837 = vmatpush1.msra.mxu0 0.0
    %6838 = vmatprep.subr.mxu0 0.0
    %6839 = vmatpush1.msra.mxu0 0.0
    %6840 = vmatprep.subr.mxu0 0.0
    %6841 = vmatpush1.msra.mxu0 0.0
    %6842 = vmatprep.subr.mxu0 0.0
    %6843 = vmatpush1.msra.mxu0 0.0
    %6844 = vmatprep.subr.mxu0 0.0
    %6845 = vmatpush1.msra.mxu0 0.0
    %6846 = vmatprep.subr.mxu0 0.0
    %6847 = vmatpush1.msra.mxu0 0.0
    %6848 = vmatprep.subr.mxu0 0.0
    %6849 = vmatpush1.msra.mxu0 0.0
    %6850 = vmatprep.mubr.f32.mxu0 0.0
    %v6851 = vand.u32 %v5767, 4294901760
    %v6852 = vsub.f32 %v5767, %v6851
    %v6853 = vand.u32 %v6852, 4294901760
    %v6854 = vsub.f32 %v6852, %v6853
    %v6855 = vand.u32 %v6854, 4294901760
    %6856 = vmatmul.mubr.f32.gmra.mrb[0].mxu0 %v6855
    %v6857 = vpop.f32.mrb[0].mxu0
    %v6858 = vadd.f32 %v5862, %v6857
    %v6859 = vpop.f32.mrb[0].mxu0
    %6860 = vmatprep.mubr.f32.mxu0 0.0
    %v6861 = vand.u32 %v5768, 4294901760
    %v6862 = vsub.f32 %v5768, %v6861
    %v6863 = vand.u32 %v6862, 4294901760
    %v6864 = vsub.f32 %v6862, %v6863
    %v6865 = vand.u32 %v6864, 4294901760
    %6866 = vmatmul.mubr.f32.gmra.mrb[0].mxu0 %v6865
    %v6867 = vpop.f32.mrb[0].mxu0
    %v6868 = vadd.f32 %v5862, %v6867
    %v6869 = vpop.f32.mrb[0].mxu0
    %6870 = vdwg.mxu0
    %6871 = vmatprep.subr.mxu0 0.0
    %v6872 = vand.u32 %v5771, 4294901760
    %v6873 = vsub.f32 %v5771, %v6872
    %v6874 = vand.u32 %v6873, 4294901760
    %v6875 = vsub.f32 %v6873, %v6874
    %v6876 = vand.u32 %v6875, 4294901760
    %6877 = vmatpush1.msra.mxu0 %v6876
    %6878 = vmatprep.subr.mxu0 0.0
    %v6879 = vand.u32 %v5774, 4294901760
    %v6880 = vsub.f32 %v5774, %v6879
    %v6881 = vand.u32 %v6880, 4294901760
    %v6882 = vsub.f32 %v6880, %v6881
    %v6883 = vand.u32 %v6882, 4294901760
    %6884 = vmatpush1.msra.mxu0 %v6883
    %6885 = vmatprep.subr.mxu0 0.0
    %v6886 = vand.u32 %v5777, 4294901760
    %v6887 = vsub.f32 %v5777, %v6886
    %v6888 = vand.u32 %v6887, 4294901760
    %v6889 = vsub.f32 %v6887, %v6888
    %v6890 = vand.u32 %v6889, 4294901760
    %6891 = vmatpush1.msra.mxu0 %v6890
    %6892 = vmatprep.subr.mxu0 0.0
    %v6893 = vand.u32 %v5780, 4294901760
    %v6894 = vsub.f32 %v5780, %v6893
    %v6895 = vand.u32 %v6894, 4294901760
    %v6896 = vsub.f32 %v6894, %v6895
    %v6897 = vand.u32 %v6896, 4294901760
    %6898 = vmatpush1.msra.mxu0 %v6897
    %6899 = vmatprep.subr.mxu0 0.0
    %v6900 = vand.u32 %v5783, 4294901760
    %v6901 = vsub.f32 %v5783, %v6900
    %v6902 = vand.u32 %v6901, 4294901760
    %v6903 = vsub.f32 %v6901, %v6902
    %v6904 = vand.u32 %v6903, 4294901760
    %6905 = vmatpush1.msra.mxu0 %v6904
    %6906 = vmatprep.subr.mxu0 0.0
    %v6907 = vand.u32 %v5786, 4294901760
    %v6908 = vsub.f32 %v5786, %v6907
    %v6909 = vand.u32 %v6908, 4294901760
    %v6910 = vsub.f32 %v6908, %v6909
    %v6911 = vand.u32 %v6910, 4294901760
    %6912 = vmatpush1.msra.mxu0 %v6911
    %6913 = vmatprep.subr.mxu0 0.0
    %v6914 = vand.u32 %v5789, 4294901760
    %v6915 = vsub.f32 %v5789, %v6914
    %v6916 = vand.u32 %v6915, 4294901760
    %v6917 = vsub.f32 %v6915, %v6916
    %v6918 = vand.u32 %v6917, 4294901760
    %6919 = vmatpush1.msra.mxu0 %v6918
    %6920 = vmatprep.subr.mxu0 0.0
    %v6921 = vand.u32 %v5792, 4294901760
    %v6922 = vsub.f32 %v5792, %v6921
    %v6923 = vand.u32 %v6922, 4294901760
    %v6924 = vsub.f32 %v6922, %v6923
    %v6925 = vand.u32 %v6924, 4294901760
    %6926 = vmatpush1.msra.mxu0 %v6925
    %6927 = vmatprep.subr.mxu0 0.0
    %v6928 = vand.u32 %v5795, 4294901760
    %v6929 = vsub.f32 %v5795, %v6928
    %v6930 = vand.u32 %v6929, 4294901760
    %v6931 = vsub.f32 %v6929, %v6930
    %v6932 = vand.u32 %v6931, 4294901760
    %6933 = vmatpush1.msra.mxu0 %v6932
    %6934 = vmatprep.subr.mxu0 0.0
    %v6935 = vand.u32 %v5798, 4294901760
    %v6936 = vsub.f32 %v5798, %v6935
    %v6937 = vand.u32 %v6936, 4294901760
    %v6938 = vsub.f32 %v6936, %v6937
    %v6939 = vand.u32 %v6938, 4294901760
    %6940 = vmatpush1.msra.mxu0 %v6939
    %6941 = vmatprep.subr.mxu0 0.0
    %v6942 = vand.u32 %v5801, 4294901760
    %v6943 = vsub.f32 %v5801, %v6942
    %v6944 = vand.u32 %v6943, 4294901760
    %v6945 = vsub.f32 %v6943, %v6944
    %v6946 = vand.u32 %v6945, 4294901760
    %6947 = vmatpush1.msra.mxu0 %v6946
    %6948 = vmatprep.subr.mxu0 0.0
    %v6949 = vand.u32 %v5804, 4294901760
    %v6950 = vsub.f32 %v5804, %v6949
    %v6951 = vand.u32 %v6950, 4294901760
    %v6952 = vsub.f32 %v6950, %v6951
    %v6953 = vand.u32 %v6952, 4294901760
    %6954 = vmatpush1.msra.mxu0 %v6953
    %6955 = vmatprep.subr.mxu0 0.0
    %v6956 = vand.u32 %v5807, 4294901760
    %v6957 = vsub.f32 %v5807, %v6956
    %v6958 = vand.u32 %v6957, 4294901760
    %v6959 = vsub.f32 %v6957, %v6958
    %v6960 = vand.u32 %v6959, 4294901760
    %6961 = vmatpush1.msra.mxu0 %v6960
    %6962 = vmatprep.subr.mxu0 0.0
    %v6963 = vand.u32 %v5810, 4294901760
    %v6964 = vsub.f32 %v5810, %v6963
    %v6965 = vand.u32 %v6964, 4294901760
    %v6966 = vsub.f32 %v6964, %v6965
    %v6967 = vand.u32 %v6966, 4294901760
    %6968 = vmatpush1.msra.mxu0 %v6967
    %6969 = vmatprep.subr.mxu0 0.0
    %v6970 = vand.u32 %v5813, 4294901760
    %v6971 = vsub.f32 %v5813, %v6970
    %v6972 = vand.u32 %v6971, 4294901760
    %v6973 = vsub.f32 %v6971, %v6972
    %v6974 = vand.u32 %v6973, 4294901760
    %6975 = vmatpush1.msra.mxu0 %v6974
    %6976 = vmatprep.subr.mxu0 0.0
    %v6977 = vand.u32 %v5816, 4294901760
    %v6978 = vsub.f32 %v5816, %v6977
    %v6979 = vand.u32 %v6978, 4294901760
    %v6980 = vsub.f32 %v6978, %v6979
    %v6981 = vand.u32 %v6980, 4294901760
    %6982 = vmatpush1.msra.mxu0 %v6981
    %6983 = vmatprep.subr.mxu0 0.0
    %6984 = vmatpush1.msra.mxu0 0.0
    %6985 = vmatprep.subr.mxu0 0.0
    %6986 = vmatpush1.msra.mxu0 0.0
    %6987 = vmatprep.subr.mxu0 0.0
    %6988 = vmatpush1.msra.mxu0 0.0
    %6989 = vmatprep.subr.mxu0 0.0
    %6990 = vmatpush1.msra.mxu0 0.0
    %6991 = vmatprep.subr.mxu0 0.0
    %6992 = vmatpush1.msra.mxu0 0.0
    %6993 = vmatprep.subr.mxu0 0.0
    %6994 = vmatpush1.msra.mxu0 0.0
    %6995 = vmatprep.subr.mxu0 0.0
    %6996 = vmatpush1.msra.mxu0 0.0
    %6997 = vmatprep.subr.mxu0 0.0
    %6998 = vmatpush1.msra.mxu0 0.0
    %6999 = vmatprep.subr.mxu0 0.0
    %7000 = vmatpush1.msra.mxu0 0.0
    %7001 = vmatprep.subr.mxu0 0.0
    %7002 = vmatpush1.msra.mxu0 0.0
    %7003 = vmatprep.subr.mxu0 0.0
    %7004 = vmatpush1.msra.mxu0 0.0
    %7005 = vmatprep.subr.mxu0 0.0
    %7006 = vmatpush1.msra.mxu0 0.0
    %7007 = vmatprep.subr.mxu0 0.0
    %7008 = vmatpush1.msra.mxu0 0.0
    %7009 = vmatprep.subr.mxu0 0.0
    %7010 = vmatpush1.msra.mxu0 0.0
    %7011 = vmatprep.subr.mxu0 0.0
    %7012 = vmatpush1.msra.mxu0 0.0
    %7013 = vmatprep.subr.mxu0 0.0
    %7014 = vmatpush1.msra.mxu0 0.0
    %7015 = vmatprep.mubr.f32.mxu0 0.0
    %v7016 = vand.u32 %v5767, 4294901760
    %7017 = vmatmul.mubr.f32.gmra.mrb[0].mxu0 %v7016
    %v7018 = vpop.f32.mrb[0].mxu0
    %v7019 = vadd.f32 %v6858, %v7018
    %v7020 = vpop.f32.mrb[0].mxu0
    %7021 = vmatprep.mubr.f32.mxu0 0.0
    %v7022 = vand.u32 %v5768, 4294901760
    %7023 = vmatmul.mubr.f32.gmra.mrb[0].mxu0 %v7022
    %v7024 = vpop.f32.mrb[0].mxu0
    %v7025 = vadd.f32 %v6868, %v7024
    %v7026 = vpop.f32.mrb[0].mxu0
    %7027 = vdwg.mxu0
    %7028 = vmatprep.subr.mxu0 0.0
    %v7029 = vand.u32 %v5771, 4294901760
    %v7030 = vsub.f32 %v5771, %v7029
    %7031 = vmatpush1.msra.mxu0 %v7030
    %7032 = vmatprep.subr.mxu0 0.0
    %v7033 = vand.u32 %v5774, 4294901760
    %v7034 = vsub.f32 %v5774, %v7033
    %7035 = vmatpush1.msra.mxu0 %v7034
    %7036 = vmatprep.subr.mxu0 0.0
    %v7037 = vand.u32 %v5777, 4294901760
    %v7038 = vsub.f32 %v5777, %v7037
    %7039 = vmatpush1.msra.mxu0 %v7038
    %7040 = vmatprep.subr.mxu0 0.0
    %v7041 = vand.u32 %v5780, 4294901760
    %v7042 = vsub.f32 %v5780, %v7041
    %7043 = vmatpush1.msra.mxu0 %v7042
    %7044 = vmatprep.subr.mxu0 0.0
    %v7045 = vand.u32 %v5783, 4294901760
    %v7046 = vsub.f32 %v5783, %v7045
    %7047 = vmatpush1.msra.mxu0 %v7046
    %7048 = vmatprep.subr.mxu0 0.0
    %v7049 = vand.u32 %v5786, 4294901760
    %v7050 = vsub.f32 %v5786, %v7049
    %7051 = vmatpush1.msra.mxu0 %v7050
    %7052 = vmatprep.subr.mxu0 0.0
    %v7053 = vand.u32 %v5789, 4294901760
    %v7054 = vsub.f32 %v5789, %v7053
    %7055 = vmatpush1.msra.mxu0 %v7054
    %7056 = vmatprep.subr.mxu0 0.0
    %v7057 = vand.u32 %v5792, 4294901760
    %v7058 = vsub.f32 %v5792, %v7057
    %7059 = vmatpush1.msra.mxu0 %v7058
    %7060 = vmatprep.subr.mxu0 0.0
    %v7061 = vand.u32 %v5795, 4294901760
    %v7062 = vsub.f32 %v5795, %v7061
    %7063 = vmatpush1.msra.mxu0 %v7062
    %7064 = vmatprep.subr.mxu0 0.0
    %v7065 = vand.u32 %v5798, 4294901760
    %v7066 = vsub.f32 %v5798, %v7065
    %7067 = vmatpush1.msra.mxu0 %v7066
    %7068 = vmatprep.subr.mxu0 0.0
    %v7069 = vand.u32 %v5801, 4294901760
    %v7070 = vsub.f32 %v5801, %v7069
    %7071 = vmatpush1.msra.mxu0 %v7070
    %7072 = vmatprep.subr.mxu0 0.0
    %v7073 = vand.u32 %v5804, 4294901760
    %v7074 = vsub.f32 %v5804, %v7073
    %7075 = vmatpush1.msra.mxu0 %v7074
    %7076 = vmatprep.subr.mxu0 0.0
    %v7077 = vand.u32 %v5807, 4294901760
    %v7078 = vsub.f32 %v5807, %v7077
    %7079 = vmatpush1.msra.mxu0 %v7078
    %7080 = vmatprep.subr.mxu0 0.0
    %v7081 = vand.u32 %v5810, 4294901760
    %v7082 = vsub.f32 %v5810, %v7081
    %7083 = vmatpush1.msra.mxu0 %v7082
    %7084 = vmatprep.subr.mxu0 0.0
    %v7085 = vand.u32 %v5813, 4294901760
    %v7086 = vsub.f32 %v5813, %v7085
    %7087 = vmatpush1.msra.mxu0 %v7086
    %7088 = vmatprep.subr.mxu0 0.0
    %v7089 = vand.u32 %v5816, 4294901760
    %v7090 = vsub.f32 %v5816, %v7089
    %7091 = vmatpush1.msra.mxu0 %v7090
    %7092 = vmatprep.subr.mxu0 0.0
    %7093 = vmatpush1.msra.mxu0 0.0
    %7094 = vmatprep.subr.mxu0 0.0
    %7095 = vmatpush1.msra.mxu0 0.0
    %7096 = vmatprep.subr.mxu0 0.0
    %7097 = vmatpush1.msra.mxu0 0.0
    %7098 = vmatprep.subr.mxu0 0.0
    %7099 = vmatpush1.msra.mxu0 0.0
    %7100 = vmatprep.subr.mxu0 0.0
    %7101 = vmatpush1.msra.mxu0 0.0
    %7102 = vmatprep.subr.mxu0 0.0
    %7103 = vmatpush1.msra.mxu0 0.0
    %7104 = vmatprep.subr.mxu0 0.0
    %7105 = vmatpush1.msra.mxu0 0.0
    %7106 = vmatprep.subr.mxu0 0.0
    %7107 = vmatpush1.msra.mxu0 0.0
    %7108 = vmatprep.subr.mxu0 0.0
    %7109 = vmatpush1.msra.mxu0 0.0
    %7110 = vmatprep.subr.mxu0 0.0
    %7111 = vmatpush1.msra.mxu0 0.0
    %7112 = vmatprep.subr.mxu0 0.0
    %7113 = vmatpush1.msra.mxu0 0.0
    %7114 = vmatprep.subr.mxu0 0.0
    %7115 = vmatpush1.msra.mxu0 0.0
    %7116 = vmatprep.subr.mxu0 0.0
    %7117 = vmatpush1.msra.mxu0 0.0
    %7118 = vmatprep.subr.mxu0 0.0
    %7119 = vmatpush1.msra.mxu0 0.0
    %7120 = vmatprep.subr.mxu0 0.0
    %7121 = vmatpush1.msra.mxu0 0.0
    %7122 = vmatprep.subr.mxu0 0.0
    %7123 = vmatpush1.msra.mxu0 0.0
    %7124 = vmatprep.mubr.f32.mxu0 0.0
    %v7125 = vand.u32 %v5767, 4294901760
    %v7126 = vsub.f32 %v5767, %v7125
    %7127 = vmatmul.mubr.f32.gmra.mrb[0].mxu0 %v7126
    %v7128 = vpop.f32.mrb[0].mxu0
    %v7129 = vadd.f32 %v7019, %v7128
    %v7130 = vpop.f32.mrb[0].mxu0
    %7131 = vmatprep.mubr.f32.mxu0 0.0
    %v7132 = vand.u32 %v5768, 4294901760
    %v7133 = vsub.f32 %v5768, %v7132
    %7134 = vmatmul.mubr.f32.gmra.mrb[0].mxu0 %v7133
    %v7135 = vpop.f32.mrb[0].mxu0
    %v7136 = vadd.f32 %v7025, %v7135
    %v7137 = vpop.f32.mrb[0].mxu0
    %7138 = vdwg.mxu0
    %7139 = vmatprep.subr.mxu0 0.0
    %v7140 = vand.u32 %v5771, 4294901760
    %7141 = vmatpush1.msra.mxu0 %v7140
    %7142 = vmatprep.subr.mxu0 0.0
    %v7143 = vand.u32 %v5774, 4294901760
    %7144 = vmatpush1.msra.mxu0 %v7143
    %7145 = vmatprep.subr.mxu0 0.0
    %v7146 = vand.u32 %v5777, 4294901760
    %7147 = vmatpush1.msra.mxu0 %v7146
    %7148 = vmatprep.subr.mxu0 0.0
    %v7149 = vand.u32 %v5780, 4294901760
    %7150 = vmatpush1.msra.mxu0 %v7149
    %7151 = vmatprep.subr.mxu0 0.0
    %v7152 = vand.u32 %v5783, 4294901760
    %7153 = vmatpush1.msra.mxu0 %v7152
    %7154 = vmatprep.subr.mxu0 0.0
    %v7155 = vand.u32 %v5786, 4294901760
    %7156 = vmatpush1.msra.mxu0 %v7155
    %7157 = vmatprep.subr.mxu0 0.0
    %v7158 = vand.u32 %v5789, 4294901760
    %7159 = vmatpush1.msra.mxu0 %v7158
    %7160 = vmatprep.subr.mxu0 0.0
    %v7161 = vand.u32 %v5792, 4294901760
    %7162 = vmatpush1.msra.mxu0 %v7161
    %7163 = vmatprep.subr.mxu0 0.0
    %v7164 = vand.u32 %v5795, 4294901760
    %7165 = vmatpush1.msra.mxu0 %v7164
    %7166 = vmatprep.subr.mxu0 0.0
    %v7167 = vand.u32 %v5798, 4294901760
    %7168 = vmatpush1.msra.mxu0 %v7167
    %7169 = vmatprep.subr.mxu0 0.0
    %v7170 = vand.u32 %v5801, 4294901760
    %7171 = vmatpush1.msra.mxu0 %v7170
    %7172 = vmatprep.subr.mxu0 0.0
    %v7173 = vand.u32 %v5804, 4294901760
    %7174 = vmatpush1.msra.mxu0 %v7173
    %7175 = vmatprep.subr.mxu0 0.0
    %v7176 = vand.u32 %v5807, 4294901760
    %7177 = vmatpush1.msra.mxu0 %v7176
    %7178 = vmatprep.subr.mxu0 0.0
    %v7179 = vand.u32 %v5810, 4294901760
    %7180 = vmatpush1.msra.mxu0 %v7179
    %7181 = vmatprep.subr.mxu0 0.0
    %v7182 = vand.u32 %v5813, 4294901760
    %7183 = vmatpush1.msra.mxu0 %v7182
    %7184 = vmatprep.subr.mxu0 0.0
    %v7185 = vand.u32 %v5816, 4294901760
    %7186 = vmatpush1.msra.mxu0 %v7185
    %7187 = vmatprep.subr.mxu0 0.0
    %7188 = vmatpush1.msra.mxu0 0.0
    %7189 = vmatprep.subr.mxu0 0.0
    %7190 = vmatpush1.msra.mxu0 0.0
    %7191 = vmatprep.subr.mxu0 0.0
    %7192 = vmatpush1.msra.mxu0 0.0
    %7193 = vmatprep.subr.mxu0 0.0
    %7194 = vmatpush1.msra.mxu0 0.0
    %7195 = vmatprep.subr.mxu0 0.0
    %7196 = vmatpush1.msra.mxu0 0.0
    %7197 = vmatprep.subr.mxu0 0.0
    %7198 = vmatpush1.msra.mxu0 0.0
    %7199 = vmatprep.subr.mxu0 0.0
    %7200 = vmatpush1.msra.mxu0 0.0
    %7201 = vmatprep.subr.mxu0 0.0
    %7202 = vmatpush1.msra.mxu0 0.0
    %7203 = vmatprep.subr.mxu0 0.0
    %7204 = vmatpush1.msra.mxu0 0.0
    %7205 = vmatprep.subr.mxu0 0.0
    %7206 = vmatpush1.msra.mxu0 0.0
    %7207 = vmatprep.subr.mxu0 0.0
    %7208 = vmatpush1.msra.mxu0 0.0
    %7209 = vmatprep.subr.mxu0 0.0
    %7210 = vmatpush1.msra.mxu0 0.0
    %7211 = vmatprep.subr.mxu0 0.0
    %7212 = vmatpush1.msra.mxu0 0.0
    %7213 = vmatprep.subr.mxu0 0.0
    %7214 = vmatpush1.msra.mxu0 0.0
    %7215 = vmatprep.subr.mxu0 0.0
    %7216 = vmatpush1.msra.mxu0 0.0
    %7217 = vmatprep.subr.mxu0 0.0
    %7218 = vmatpush1.msra.mxu0 0.0
    %7219 = vmatprep.mubr.f32.mxu0 0.0
    %v7220 = vand.u32 %v5767, 4294901760
    %v7221 = vsub.f32 %v5767, %v7220
    %v7222 = vand.u32 %v7221, 4294901760
    %7223 = vmatmul.mubr.f32.gmra.mrb[0].mxu0 %v7222
    %v7224 = vpop.f32.mrb[0].mxu0
    %v7225 = vadd.f32 %v7129, %v7224
    %v7226 = vpop.f32.mrb[0].mxu0
    %7227 = vmatprep.mubr.f32.mxu0 0.0
    %v7228 = vand.u32 %v5768, 4294901760
    %v7229 = vsub.f32 %v5768, %v7228
    %v7230 = vand.u32 %v7229, 4294901760
    %7231 = vmatmul.mubr.f32.gmra.mrb[0].mxu0 %v7230
    %v7232 = vpop.f32.mrb[0].mxu0
    %v7233 = vadd.f32 %v7136, %v7232
    %v7234 = vpop.f32.mrb[0].mxu0
    %7235 = vdwg.mxu0
    %7236 = vmatprep.subr.mxu0 0.0
    %v7237 = vand.u32 %v5771, 4294901760
    %v7238 = vsub.f32 %v5771, %v7237
    %v7239 = vand.u32 %v7238, 4294901760
    %7240 = vmatpush1.msra.mxu0 %v7239
    %7241 = vmatprep.subr.mxu0 0.0
    %v7242 = vand.u32 %v5774, 4294901760
    %v7243 = vsub.f32 %v5774, %v7242
    %v7244 = vand.u32 %v7243, 4294901760
    %7245 = vmatpush1.msra.mxu0 %v7244
    %7246 = vmatprep.subr.mxu0 0.0
    %v7247 = vand.u32 %v5777, 4294901760
    %v7248 = vsub.f32 %v5777, %v7247
    %v7249 = vand.u32 %v7248, 4294901760
    %7250 = vmatpush1.msra.mxu0 %v7249
    %7251 = vmatprep.subr.mxu0 0.0
    %v7252 = vand.u32 %v5780, 4294901760
    %v7253 = vsub.f32 %v5780, %v7252
    %v7254 = vand.u32 %v7253, 4294901760
    %7255 = vmatpush1.msra.mxu0 %v7254
    %7256 = vmatprep.subr.mxu0 0.0
    %v7257 = vand.u32 %v5783, 4294901760
    %v7258 = vsub.f32 %v5783, %v7257
    %v7259 = vand.u32 %v7258, 4294901760
    %7260 = vmatpush1.msra.mxu0 %v7259
    %7261 = vmatprep.subr.mxu0 0.0
    %v7262 = vand.u32 %v5786, 4294901760
    %v7263 = vsub.f32 %v5786, %v7262
    %v7264 = vand.u32 %v7263, 4294901760
    %7265 = vmatpush1.msra.mxu0 %v7264
    %7266 = vmatprep.subr.mxu0 0.0
    %v7267 = vand.u32 %v5789, 4294901760
    %v7268 = vsub.f32 %v5789, %v7267
    %v7269 = vand.u32 %v7268, 4294901760
    %7270 = vmatpush1.msra.mxu0 %v7269
    %7271 = vmatprep.subr.mxu0 0.0
    %v7272 = vand.u32 %v5792, 4294901760
    %v7273 = vsub.f32 %v5792, %v7272
    %v7274 = vand.u32 %v7273, 4294901760
    %7275 = vmatpush1.msra.mxu0 %v7274
    %7276 = vmatprep.subr.mxu0 0.0
    %v7277 = vand.u32 %v5795, 4294901760
    %v7278 = vsub.f32 %v5795, %v7277
    %v7279 = vand.u32 %v7278, 4294901760
    %7280 = vmatpush1.msra.mxu0 %v7279
    %7281 = vmatprep.subr.mxu0 0.0
    %v7282 = vand.u32 %v5798, 4294901760
    %v7283 = vsub.f32 %v5798, %v7282
    %v7284 = vand.u32 %v7283, 4294901760
    %7285 = vmatpush1.msra.mxu0 %v7284
    %7286 = vmatprep.subr.mxu0 0.0
    %v7287 = vand.u32 %v5801, 4294901760
    %v7288 = vsub.f32 %v5801, %v7287
    %v7289 = vand.u32 %v7288, 4294901760
    %7290 = vmatpush1.msra.mxu0 %v7289
    %7291 = vmatprep.subr.mxu0 0.0
    %v7292 = vand.u32 %v5804, 4294901760
    %v7293 = vsub.f32 %v5804, %v7292
    %v7294 = vand.u32 %v7293, 4294901760
    %7295 = vmatpush1.msra.mxu0 %v7294
    %7296 = vmatprep.subr.mxu0 0.0
    %v7297 = vand.u32 %v5807, 4294901760
    %v7298 = vsub.f32 %v5807, %v7297
    %v7299 = vand.u32 %v7298, 4294901760
    %7300 = vmatpush1.msra.mxu0 %v7299
    %7301 = vmatprep.subr.mxu0 0.0
    %v7302 = vand.u32 %v5810, 4294901760
    %v7303 = vsub.f32 %v5810, %v7302
    %v7304 = vand.u32 %v7303, 4294901760
    %7305 = vmatpush1.msra.mxu0 %v7304
    %7306 = vmatprep.subr.mxu0 0.0
    %v7307 = vand.u32 %v5813, 4294901760
    %v7308 = vsub.f32 %v5813, %v7307
    %v7309 = vand.u32 %v7308, 4294901760
    %7310 = vmatpush1.msra.mxu0 %v7309
    %7311 = vmatprep.subr.mxu0 0.0
    %v7312 = vand.u32 %v5816, 4294901760
    %v7313 = vsub.f32 %v5816, %v7312
    %v7314 = vand.u32 %v7313, 4294901760
    %7315 = vmatpush1.msra.mxu0 %v7314
    %7316 = vmatprep.subr.mxu0 0.0
    %7317 = vmatpush1.msra.mxu0 0.0
    %7318 = vmatprep.subr.mxu0 0.0
    %7319 = vmatpush1.msra.mxu0 0.0
    %7320 = vmatprep.subr.mxu0 0.0
    %7321 = vmatpush1.msra.mxu0 0.0
    %7322 = vmatprep.subr.mxu0 0.0
    %7323 = vmatpush1.msra.mxu0 0.0
    %7324 = vmatprep.subr.mxu0 0.0
    %7325 = vmatpush1.msra.mxu0 0.0
    %7326 = vmatprep.subr.mxu0 0.0
    %7327 = vmatpush1.msra.mxu0 0.0
    %7328 = vmatprep.subr.mxu0 0.0
    %7329 = vmatpush1.msra.mxu0 0.0
    %7330 = vmatprep.subr.mxu0 0.0
    %7331 = vmatpush1.msra.mxu0 0.0
    %7332 = vmatprep.subr.mxu0 0.0
    %7333 = vmatpush1.msra.mxu0 0.0
    %7334 = vmatprep.subr.mxu0 0.0
    %7335 = vmatpush1.msra.mxu0 0.0
    %7336 = vmatprep.subr.mxu0 0.0
    %7337 = vmatpush1.msra.mxu0 0.0
    %7338 = vmatprep.subr.mxu0 0.0
    %7339 = vmatpush1.msra.mxu0 0.0
    %7340 = vmatprep.subr.mxu0 0.0
    %7341 = vmatpush1.msra.mxu0 0.0
    %7342 = vmatprep.subr.mxu0 0.0
    %7343 = vmatpush1.msra.mxu0 0.0
    %7344 = vmatprep.subr.mxu0 0.0
    %7345 = vmatpush1.msra.mxu0 0.0
    %7346 = vmatprep.subr.mxu0 0.0
    %7347 = vmatpush1.msra.mxu0 0.0
    %7348 = vmatprep.mubr.f32.mxu0 0.0
    %v7349 = vand.u32 %v5767, 4294901760
    %7350 = vmatmul.mubr.f32.gmra.mrb[0].mxu0 %v7349
    %v7351 = vpop.f32.mrb[0].mxu0
    %v7352 = vadd.f32 %v7225, %v7351
    %v7353 = vpop.f32.mrb[0].mxu0
    %7354 = vmatprep.mubr.f32.mxu0 0.0
    %v7355 = vand.u32 %v5768, 4294901760
    %7356 = vmatmul.mubr.f32.gmra.mrb[0].mxu0 %v7355
    %v7357 = vpop.f32.mrb[0].mxu0
    %v7358 = vadd.f32 %v7233, %v7357
    %v7359 = vpop.f32.mrb[0].mxu0
    %7360 = vdwg.mxu0
    %7361 = vmatprep.subr.mxu0 0.0
    %v7362 = vand.u32 %v5771, 4294901760
    %7363 = vmatpush1.msra.mxu0 %v7362
    %7364 = vmatprep.subr.mxu0 0.0
    %v7365 = vand.u32 %v5774, 4294901760
    %7366 = vmatpush1.msra.mxu0 %v7365
    %7367 = vmatprep.subr.mxu0 0.0
    %v7368 = vand.u32 %v5777, 4294901760
    %7369 = vmatpush1.msra.mxu0 %v7368
    %7370 = vmatprep.subr.mxu0 0.0
    %v7371 = vand.u32 %v5780, 4294901760
    %7372 = vmatpush1.msra.mxu0 %v7371
    %7373 = vmatprep.subr.mxu0 0.0
    %v7374 = vand.u32 %v5783, 4294901760
    %7375 = vmatpush1.msra.mxu0 %v7374
    %7376 = vmatprep.subr.mxu0 0.0
    %v7377 = vand.u32 %v5786, 4294901760
    %7378 = vmatpush1.msra.mxu0 %v7377
    %7379 = vmatprep.subr.mxu0 0.0
    %v7380 = vand.u32 %v5789, 4294901760
    %7381 = vmatpush1.msra.mxu0 %v7380
    %7382 = vmatprep.subr.mxu0 0.0
    %v7383 = vand.u32 %v5792, 4294901760
    %7384 = vmatpush1.msra.mxu0 %v7383
    %7385 = vmatprep.subr.mxu0 0.0
    %v7386 = vand.u32 %v5795, 4294901760
    %7387 = vmatpush1.msra.mxu0 %v7386
    %7388 = vmatprep.subr.mxu0 0.0
    %v7389 = vand.u32 %v5798, 4294901760
    %7390 = vmatpush1.msra.mxu0 %v7389
    %7391 = vmatprep.subr.mxu0 0.0
    %v7392 = vand.u32 %v5801, 4294901760
    %7393 = vmatpush1.msra.mxu0 %v7392
    %7394 = vmatprep.subr.mxu0 0.0
    %v7395 = vand.u32 %v5804, 4294901760
    %7396 = vmatpush1.msra.mxu0 %v7395
    %7397 = vmatprep.subr.mxu0 0.0
    %v7398 = vand.u32 %v5807, 4294901760
    %7399 = vmatpush1.msra.mxu0 %v7398
    %7400 = vmatprep.subr.mxu0 0.0
    %v7401 = vand.u32 %v5810, 4294901760
    %7402 = vmatpush1.msra.mxu0 %v7401
    %7403 = vmatprep.subr.mxu0 0.0
    %v7404 = vand.u32 %v5813, 4294901760
    %7405 = vmatpush1.msra.mxu0 %v7404
    %7406 = vmatprep.subr.mxu0 0.0
    %v7407 = vand.u32 %v5816, 4294901760
    %7408 = vmatpush1.msra.mxu0 %v7407
    %7409 = vmatprep.subr.mxu0 0.0
    %7410 = vmatpush1.msra.mxu0 0.0
    %7411 = vmatprep.subr.mxu0 0.0
    %7412 = vmatpush1.msra.mxu0 0.0
    %7413 = vmatprep.subr.mxu0 0.0
    %7414 = vmatpush1.msra.mxu0 0.0
    %7415 = vmatprep.subr.mxu0 0.0
    %7416 = vmatpush1.msra.mxu0 0.0
    %7417 = vmatprep.subr.mxu0 0.0
    %7418 = vmatpush1.msra.mxu0 0.0
    %7419 = vmatprep.subr.mxu0 0.0
    %7420 = vmatpush1.msra.mxu0 0.0
    %7421 = vmatprep.subr.mxu0 0.0
    %7422 = vmatpush1.msra.mxu0 0.0
    %7423 = vmatprep.subr.mxu0 0.0
    %7424 = vmatpush1.msra.mxu0 0.0
    %7425 = vmatprep.subr.mxu0 0.0
    %7426 = vmatpush1.msra.mxu0 0.0
    %7427 = vmatprep.subr.mxu0 0.0
    %7428 = vmatpush1.msra.mxu0 0.0
    %7429 = vmatprep.subr.mxu0 0.0
    %7430 = vmatpush1.msra.mxu0 0.0
    %7431 = vmatprep.subr.mxu0 0.0
    %7432 = vmatpush1.msra.mxu0 0.0
    %7433 = vmatprep.subr.mxu0 0.0
    %7434 = vmatpush1.msra.mxu0 0.0
    %7435 = vmatprep.subr.mxu0 0.0
    %7436 = vmatpush1.msra.mxu0 0.0
    %7437 = vmatprep.subr.mxu0 0.0
    %7438 = vmatpush1.msra.mxu0 0.0
    %7439 = vmatprep.subr.mxu0 0.0
    %7440 = vmatpush1.msra.mxu0 0.0
    %7441 = vmatprep.mubr.f32.mxu0 0.0
    %v7442 = vand.u32 %v5767, 4294901760
    %7443 = vmatmul.mubr.f32.gmra.mrb[0].mxu0 %v7442
    %v7444 = vpop.f32.mrb[0].mxu0
    %v7445 = vadd.f32 %v7352, %v7444
    %v7446 = vpop.f32.mrb[0].mxu0
    %7447 = vmatprep.mubr.f32.mxu0 0.0
    %v7448 = vand.u32 %v5768, 4294901760
    %7449 = vmatmul.mubr.f32.gmra.mrb[0].mxu0 %v7448
    %v7450 = vpop.f32.mrb[0].mxu0
    %v7451 = vadd.f32 %v7358, %v7450
    %v7452 = vpop.f32.mrb[0].mxu0
    %7453 = vdwg.mxu0
    %v7454 = vmul.f32 %v6761, %v7445
    %v7455 = vmul.f32 %v6768, %v7451
    %7456 = vmatprep.subr.mxu0 0.0
    %v7457 = vand.u32 %v5818, 4294901760
    %7458 = vmatpush1.msra.mxu0 %v7457
    %7459 = vmatprep.subr.mxu0 0.0
    %v7460 = vand.u32 %v5819, 4294901760
    %7461 = vmatpush1.msra.mxu0 %v7460
    %7462 = vmatprep.subr.mxu0 0.0
    %v7463 = vand.u32 %v5820, 4294901760
    %7464 = vmatpush1.msra.mxu0 %v7463
    %7465 = vmatprep.subr.mxu0 0.0
    %v7466 = vand.u32 %v5821, 4294901760
    %7467 = vmatpush1.msra.mxu0 %v7466
    %7468 = vmatprep.subr.mxu0 0.0
    %v7469 = vand.u32 %v5822, 4294901760
    %7470 = vmatpush1.msra.mxu0 %v7469
    %7471 = vmatprep.subr.mxu0 0.0
    %v7472 = vand.u32 %v5823, 4294901760
    %7473 = vmatpush1.msra.mxu0 %v7472
    %7474 = vmatprep.subr.mxu0 0.0
    %v7475 = vand.u32 %v5824, 4294901760
    %7476 = vmatpush1.msra.mxu0 %v7475
    %7477 = vmatprep.subr.mxu0 0.0
    %v7478 = vand.u32 %v5825, 4294901760
    %7479 = vmatpush1.msra.mxu0 %v7478
    %7480 = vmatprep.subr.mxu0 0.0
    %v7481 = vand.u32 %v5826, 4294901760
    %7482 = vmatpush1.msra.mxu0 %v7481
    %7483 = vmatprep.subr.mxu0 0.0
    %v7484 = vand.u32 %v5827, 4294901760
    %7485 = vmatpush1.msra.mxu0 %v7484
    %7486 = vmatprep.subr.mxu0 0.0
    %v7487 = vand.u32 %v5828, 4294901760
    %7488 = vmatpush1.msra.mxu0 %v7487
    %7489 = vmatprep.subr.mxu0 0.0
    %v7490 = vand.u32 %v5829, 4294901760
    %7491 = vmatpush1.msra.mxu0 %v7490
    %7492 = vmatprep.subr.mxu0 0.0
    %v7493 = vand.u32 %v5830, 4294901760
    %7494 = vmatpush1.msra.mxu0 %v7493
    %7495 = vmatprep.subr.mxu0 0.0
    %v7496 = vand.u32 %v5831, 4294901760
    %7497 = vmatpush1.msra.mxu0 %v7496
    %7498 = vmatprep.subr.mxu0 0.0
    %v7499 = vand.u32 %v5832, 4294901760
    %7500 = vmatpush1.msra.mxu0 %v7499
    %7501 = vmatprep.subr.mxu0 0.0
    %v7502 = vand.u32 %v5833, 4294901760
    %7503 = vmatpush1.msra.mxu0 %v7502
    %7504 = vmatprep.subr.mxu0 0.0
    %7505 = vmatpush1.msra.mxu0 0.0
    %7506 = vmatprep.subr.mxu0 0.0
    %7507 = vmatpush1.msra.mxu0 0.0
    %7508 = vmatprep.subr.mxu0 0.0
    %7509 = vmatpush1.msra.mxu0 0.0
    %7510 = vmatprep.subr.mxu0 0.0
    %7511 = vmatpush1.msra.mxu0 0.0
    %7512 = vmatprep.subr.mxu0 0.0
    %7513 = vmatpush1.msra.mxu0 0.0
    %7514 = vmatprep.subr.mxu0 0.0
    %7515 = vmatpush1.msra.mxu0 0.0
    %7516 = vmatprep.subr.mxu0 0.0
    %7517 = vmatpush1.msra.mxu0 0.0
    %7518 = vmatprep.subr.mxu0 0.0
    %7519 = vmatpush1.msra.mxu0 0.0
    %7520 = vmatprep.subr.mxu0 0.0
    %7521 = vmatpush1.msra.mxu0 0.0
    %7522 = vmatprep.subr.mxu0 0.0
    %7523 = vmatpush1.msra.mxu0 0.0
    %7524 = vmatprep.subr.mxu0 0.0
    %7525 = vmatpush1.msra.mxu0 0.0
    %7526 = vmatprep.subr.mxu0 0.0
    %7527 = vmatpush1.msra.mxu0 0.0
    %7528 = vmatprep.subr.mxu0 0.0
    %7529 = vmatpush1.msra.mxu0 0.0
    %7530 = vmatprep.subr.mxu0 0.0
    %7531 = vmatpush1.msra.mxu0 0.0
    %7532 = vmatprep.subr.mxu0 0.0
    %7533 = vmatpush1.msra.mxu0 0.0
    %7534 = vmatprep.subr.mxu0 0.0
    %7535 = vmatpush1.msra.mxu0 0.0
    %7536 = vmatprep.mubr.f32.mxu0 0.0
    %v7537 = vand.u32 %v7454, 4294901760
    %v7538 = vsub.f32 %v7454, %v7537
    %v7539 = vand.u32 %v7538, 4294901760
    %v7540 = vsub.f32 %v7538, %v7539
    %v7541 = vand.u32 %v7540, 4294901760
    %7542 = vmatmul.mubr.f32.gmra.mrb[0].mxu0 %v7541
    %v7543 = vpop.f32.mrb[0].mxu0
    %v7544 = vadd.f32 %v6759, %v7543
    %v7545 = vpop.f32.mrb[0].mxu0
    %7546 = vmatprep.mubr.f32.mxu0 0.0
    %v7547 = vand.u32 %v7455, 4294901760
    %v7548 = vsub.f32 %v7455, %v7547
    %v7549 = vand.u32 %v7548, 4294901760
    %v7550 = vsub.f32 %v7548, %v7549
    %v7551 = vand.u32 %v7550, 4294901760
    %7552 = vmatmul.mubr.f32.gmra.mrb[0].mxu0 %v7551
    %v7553 = vpop.f32.mrb[0].mxu0
    %v7554 = vadd.f32 %v6766, %v7553
    %v7555 = vpop.f32.mrb[0].mxu0
    %7556 = vdwg.mxu0
    %7557 = vmatprep.subr.mxu0 0.0
    %v7558 = vand.u32 %v5818, 4294901760
    %v7559 = vsub.f32 %v5818, %v7558
    %v7560 = vand.u32 %v7559, 4294901760
    %v7561 = vsub.f32 %v7559, %v7560
    %v7562 = vand.u32 %v7561, 4294901760
    %7563 = vmatpush1.msra.mxu0 %v7562
    %7564 = vmatprep.subr.mxu0 0.0
    %v7565 = vand.u32 %v5819, 4294901760
    %v7566 = vsub.f32 %v5819, %v7565
    %v7567 = vand.u32 %v7566, 4294901760
    %v7568 = vsub.f32 %v7566, %v7567
    %v7569 = vand.u32 %v7568, 4294901760
    %7570 = vmatpush1.msra.mxu0 %v7569
    %7571 = vmatprep.subr.mxu0 0.0
    %v7572 = vand.u32 %v5820, 4294901760
    %v7573 = vsub.f32 %v5820, %v7572
    %v7574 = vand.u32 %v7573, 4294901760
    %v7575 = vsub.f32 %v7573, %v7574
    %v7576 = vand.u32 %v7575, 4294901760
    %7577 = vmatpush1.msra.mxu0 %v7576
    %7578 = vmatprep.subr.mxu0 0.0
    %v7579 = vand.u32 %v5821, 4294901760
    %v7580 = vsub.f32 %v5821, %v7579
    %v7581 = vand.u32 %v7580, 4294901760
    %v7582 = vsub.f32 %v7580, %v7581
    %v7583 = vand.u32 %v7582, 4294901760
    %7584 = vmatpush1.msra.mxu0 %v7583
    %7585 = vmatprep.subr.mxu0 0.0
    %v7586 = vand.u32 %v5822, 4294901760
    %v7587 = vsub.f32 %v5822, %v7586
    %v7588 = vand.u32 %v7587, 4294901760
    %v7589 = vsub.f32 %v7587, %v7588
    %v7590 = vand.u32 %v7589, 4294901760
    %7591 = vmatpush1.msra.mxu0 %v7590
    %7592 = vmatprep.subr.mxu0 0.0
    %v7593 = vand.u32 %v5823, 4294901760
    %v7594 = vsub.f32 %v5823, %v7593
    %v7595 = vand.u32 %v7594, 4294901760
    %v7596 = vsub.f32 %v7594, %v7595
    %v7597 = vand.u32 %v7596, 4294901760
    %7598 = vmatpush1.msra.mxu0 %v7597
    %7599 = vmatprep.subr.mxu0 0.0
    %v7600 = vand.u32 %v5824, 4294901760
    %v7601 = vsub.f32 %v5824, %v7600
    %v7602 = vand.u32 %v7601, 4294901760
    %v7603 = vsub.f32 %v7601, %v7602
    %v7604 = vand.u32 %v7603, 4294901760
    %7605 = vmatpush1.msra.mxu0 %v7604
    %7606 = vmatprep.subr.mxu0 0.0
    %v7607 = vand.u32 %v5825, 4294901760
    %v7608 = vsub.f32 %v5825, %v7607
    %v7609 = vand.u32 %v7608, 4294901760
    %v7610 = vsub.f32 %v7608, %v7609
    %v7611 = vand.u32 %v7610, 4294901760
    %7612 = vmatpush1.msra.mxu0 %v7611
    %7613 = vmatprep.subr.mxu0 0.0
    %v7614 = vand.u32 %v5826, 4294901760
    %v7615 = vsub.f32 %v5826, %v7614
    %v7616 = vand.u32 %v7615, 4294901760
    %v7617 = vsub.f32 %v7615, %v7616
    %v7618 = vand.u32 %v7617, 4294901760
    %7619 = vmatpush1.msra.mxu0 %v7618
    %7620 = vmatprep.subr.mxu0 0.0
    %v7621 = vand.u32 %v5827, 4294901760
    %v7622 = vsub.f32 %v5827, %v7621
    %v7623 = vand.u32 %v7622, 4294901760
    %v7624 = vsub.f32 %v7622, %v7623
    %v7625 = vand.u32 %v7624, 4294901760
    %7626 = vmatpush1.msra.mxu0 %v7625
    %7627 = vmatprep.subr.mxu0 0.0
    %v7628 = vand.u32 %v5828, 4294901760
    %v7629 = vsub.f32 %v5828, %v7628
    %v7630 = vand.u32 %v7629, 4294901760
    %v7631 = vsub.f32 %v7629, %v7630
    %v7632 = vand.u32 %v7631, 4294901760
    %7633 = vmatpush1.msra.mxu0 %v7632
    %7634 = vmatprep.subr.mxu0 0.0
    %v7635 = vand.u32 %v5829, 4294901760
    %v7636 = vsub.f32 %v5829, %v7635
    %v7637 = vand.u32 %v7636, 4294901760
    %v7638 = vsub.f32 %v7636, %v7637
    %v7639 = vand.u32 %v7638, 4294901760
    %7640 = vmatpush1.msra.mxu0 %v7639
    %7641 = vmatprep.subr.mxu0 0.0
    %v7642 = vand.u32 %v5830, 4294901760
    %v7643 = vsub.f32 %v5830, %v7642
    %v7644 = vand.u32 %v7643, 4294901760
    %v7645 = vsub.f32 %v7643, %v7644
    %v7646 = vand.u32 %v7645, 4294901760
    %7647 = vmatpush1.msra.mxu0 %v7646
    %7648 = vmatprep.subr.mxu0 0.0
    %v7649 = vand.u32 %v5831, 4294901760
    %v7650 = vsub.f32 %v5831, %v7649
    %v7651 = vand.u32 %v7650, 4294901760
    %v7652 = vsub.f32 %v7650, %v7651
    %v7653 = vand.u32 %v7652, 4294901760
    %7654 = vmatpush1.msra.mxu0 %v7653
    %7655 = vmatprep.subr.mxu0 0.0
    %v7656 = vand.u32 %v5832, 4294901760
    %v7657 = vsub.f32 %v5832, %v7656
    %v7658 = vand.u32 %v7657, 4294901760
    %v7659 = vsub.f32 %v7657, %v7658
    %v7660 = vand.u32 %v7659, 4294901760
    %7661 = vmatpush1.msra.mxu0 %v7660
    %7662 = vmatprep.subr.mxu0 0.0
    %v7663 = vand.u32 %v5833, 4294901760
    %v7664 = vsub.f32 %v5833, %v7663
    %v7665 = vand.u32 %v7664, 4294901760
    %v7666 = vsub.f32 %v7664, %v7665
    %v7667 = vand.u32 %v7666, 4294901760
    %7668 = vmatpush1.msra.mxu0 %v7667
    %7669 = vmatprep.subr.mxu0 0.0
    %7670 = vmatpush1.msra.mxu0 0.0
    %7671 = vmatprep.subr.mxu0 0.0
    %7672 = vmatpush1.msra.mxu0 0.0
    %7673 = vmatprep.subr.mxu0 0.0
    %7674 = vmatpush1.msra.mxu0 0.0
    %7675 = vmatprep.subr.mxu0 0.0
    %7676 = vmatpush1.msra.mxu0 0.0
    %7677 = vmatprep.subr.mxu0 0.0
    %7678 = vmatpush1.msra.mxu0 0.0
    %7679 = vmatprep.subr.mxu0 0.0
    %7680 = vmatpush1.msra.mxu0 0.0
    %7681 = vmatprep.subr.mxu0 0.0
    %7682 = vmatpush1.msra.mxu0 0.0
    %7683 = vmatprep.subr.mxu0 0.0
    %7684 = vmatpush1.msra.mxu0 0.0
    %7685 = vmatprep.subr.mxu0 0.0
    %7686 = vmatpush1.msra.mxu0 0.0
    %7687 = vmatprep.subr.mxu0 0.0
    %7688 = vmatpush1.msra.mxu0 0.0
    %7689 = vmatprep.subr.mxu0 0.0
    %7690 = vmatpush1.msra.mxu0 0.0
    %7691 = vmatprep.subr.mxu0 0.0
    %7692 = vmatpush1.msra.mxu0 0.0
    %7693 = vmatprep.subr.mxu0 0.0
    %7694 = vmatpush1.msra.mxu0 0.0
    %7695 = vmatprep.subr.mxu0 0.0
    %7696 = vmatpush1.msra.mxu0 0.0
    %7697 = vmatprep.subr.mxu0 0.0
    %7698 = vmatpush1.msra.mxu0 0.0
    %7699 = vmatprep.subr.mxu0 0.0
    %7700 = vmatpush1.msra.mxu0 0.0
    %7701 = vmatprep.mubr.f32.mxu0 0.0
    %v7702 = vand.u32 %v7454, 4294901760
    %7703 = vmatmul.mubr.f32.gmra.mrb[0].mxu0 %v7702
    %v7704 = vpop.f32.mrb[0].mxu0
    %v7705 = vadd.f32 %v7544, %v7704
    %v7706 = vpop.f32.mrb[0].mxu0
    %7707 = vmatprep.mubr.f32.mxu0 0.0
    %v7708 = vand.u32 %v7455, 4294901760
    %7709 = vmatmul.mubr.f32.gmra.mrb[0].mxu0 %v7708
    %v7710 = vpop.f32.mrb[0].mxu0
    %v7711 = vadd.f32 %v7554, %v7710
    %v7712 = vpop.f32.mrb[0].mxu0
    %7713 = vdwg.mxu0
    %7714 = vmatprep.subr.mxu0 0.0
    %v7715 = vand.u32 %v5818, 4294901760
    %v7716 = vsub.f32 %v5818, %v7715
    %7717 = vmatpush1.msra.mxu0 %v7716
    %7718 = vmatprep.subr.mxu0 0.0
    %v7719 = vand.u32 %v5819, 4294901760
    %v7720 = vsub.f32 %v5819, %v7719
    %7721 = vmatpush1.msra.mxu0 %v7720
    %7722 = vmatprep.subr.mxu0 0.0
    %v7723 = vand.u32 %v5820, 4294901760
    %v7724 = vsub.f32 %v5820, %v7723
    %7725 = vmatpush1.msra.mxu0 %v7724
    %7726 = vmatprep.subr.mxu0 0.0
    %v7727 = vand.u32 %v5821, 4294901760
    %v7728 = vsub.f32 %v5821, %v7727
    %7729 = vmatpush1.msra.mxu0 %v7728
    %7730 = vmatprep.subr.mxu0 0.0
    %v7731 = vand.u32 %v5822, 4294901760
    %v7732 = vsub.f32 %v5822, %v7731
    %7733 = vmatpush1.msra.mxu0 %v7732
    %7734 = vmatprep.subr.mxu0 0.0
    %v7735 = vand.u32 %v5823, 4294901760
    %v7736 = vsub.f32 %v5823, %v7735
    %7737 = vmatpush1.msra.mxu0 %v7736
    %7738 = vmatprep.subr.mxu0 0.0
    %v7739 = vand.u32 %v5824, 4294901760
    %v7740 = vsub.f32 %v5824, %v7739
    %7741 = vmatpush1.msra.mxu0 %v7740
    %7742 = vmatprep.subr.mxu0 0.0
    %v7743 = vand.u32 %v5825, 4294901760
    %v7744 = vsub.f32 %v5825, %v7743
    %7745 = vmatpush1.msra.mxu0 %v7744
    %7746 = vmatprep.subr.mxu0 0.0
    %v7747 = vand.u32 %v5826, 4294901760
    %v7748 = vsub.f32 %v5826, %v7747
    %7749 = vmatpush1.msra.mxu0 %v7748
    %7750 = vmatprep.subr.mxu0 0.0
    %v7751 = vand.u32 %v5827, 4294901760
    %v7752 = vsub.f32 %v5827, %v7751
    %7753 = vmatpush1.msra.mxu0 %v7752
    %7754 = vmatprep.subr.mxu0 0.0
    %v7755 = vand.u32 %v5828, 4294901760
    %v7756 = vsub.f32 %v5828, %v7755
    %7757 = vmatpush1.msra.mxu0 %v7756
    %7758 = vmatprep.subr.mxu0 0.0
    %v7759 = vand.u32 %v5829, 4294901760
    %v7760 = vsub.f32 %v5829, %v7759
    %7761 = vmatpush1.msra.mxu0 %v7760
    %7762 = vmatprep.subr.mxu0 0.0
    %v7763 = vand.u32 %v5830, 4294901760
    %v7764 = vsub.f32 %v5830, %v7763
    %7765 = vmatpush1.msra.mxu0 %v7764
    %7766 = vmatprep.subr.mxu0 0.0
    %v7767 = vand.u32 %v5831, 4294901760
    %v7768 = vsub.f32 %v5831, %v7767
    %7769 = vmatpush1.msra.mxu0 %v7768
    %7770 = vmatprep.subr.mxu0 0.0
    %v7771 = vand.u32 %v5832, 4294901760
    %v7772 = vsub.f32 %v5832, %v7771
    %7773 = vmatpush1.msra.mxu0 %v7772
    %7774 = vmatprep.subr.mxu0 0.0
    %v7775 = vand.u32 %v5833, 4294901760
    %v7776 = vsub.f32 %v5833, %v7775
    %7777 = vmatpush1.msra.mxu0 %v7776
    %7778 = vmatprep.subr.mxu0 0.0
    %7779 = vmatpush1.msra.mxu0 0.0
    %7780 = vmatprep.subr.mxu0 0.0
    %7781 = vmatpush1.msra.mxu0 0.0
    %7782 = vmatprep.subr.mxu0 0.0
    %7783 = vmatpush1.msra.mxu0 0.0
    %7784 = vmatprep.subr.mxu0 0.0
    %7785 = vmatpush1.msra.mxu0 0.0
    %7786 = vmatprep.subr.mxu0 0.0
    %7787 = vmatpush1.msra.mxu0 0.0
    %7788 = vmatprep.subr.mxu0 0.0
    %7789 = vmatpush1.msra.mxu0 0.0
    %7790 = vmatprep.subr.mxu0 0.0
    %7791 = vmatpush1.msra.mxu0 0.0
    %7792 = vmatprep.subr.mxu0 0.0
    %7793 = vmatpush1.msra.mxu0 0.0
    %7794 = vmatprep.subr.mxu0 0.0
    %7795 = vmatpush1.msra.mxu0 0.0
    %7796 = vmatprep.subr.mxu0 0.0
    %7797 = vmatpush1.msra.mxu0 0.0
    %7798 = vmatprep.subr.mxu0 0.0
    %7799 = vmatpush1.msra.mxu0 0.0
    %7800 = vmatprep.subr.mxu0 0.0
    %7801 = vmatpush1.msra.mxu0 0.0
    %7802 = vmatprep.subr.mxu0 0.0
    %7803 = vmatpush1.msra.mxu0 0.0
    %7804 = vmatprep.subr.mxu0 0.0
    %7805 = vmatpush1.msra.mxu0 0.0
    %7806 = vmatprep.subr.mxu0 0.0
    %7807 = vmatpush1.msra.mxu0 0.0
    %7808 = vmatprep.subr.mxu0 0.0
    %7809 = vmatpush1.msra.mxu0 0.0
    %7810 = vmatprep.mubr.f32.mxu0 0.0
    %v7811 = vand.u32 %v7454, 4294901760
    %v7812 = vsub.f32 %v7454, %v7811
    %7813 = vmatmul.mubr.f32.gmra.mrb[0].mxu0 %v7812
    %v7814 = vpop.f32.mrb[0].mxu0
    %v7815 = vadd.f32 %v7705, %v7814
    %v7816 = vpop.f32.mrb[0].mxu0
    %7817 = vmatprep.mubr.f32.mxu0 0.0
    %v7818 = vand.u32 %v7455, 4294901760
    %v7819 = vsub.f32 %v7455, %v7818
    %7820 = vmatmul.mubr.f32.gmra.mrb[0].mxu0 %v7819
    %v7821 = vpop.f32.mrb[0].mxu0
    %v7822 = vadd.f32 %v7711, %v7821
    %v7823 = vpop.f32.mrb[0].mxu0
    %7824 = vdwg.mxu0
    %7825 = vmatprep.subr.mxu0 0.0
    %v7826 = vand.u32 %v5818, 4294901760
    %7827 = vmatpush1.msra.mxu0 %v7826
    %7828 = vmatprep.subr.mxu0 0.0
    %v7829 = vand.u32 %v5819, 4294901760
    %7830 = vmatpush1.msra.mxu0 %v7829
    %7831 = vmatprep.subr.mxu0 0.0
    %v7832 = vand.u32 %v5820, 4294901760
    %7833 = vmatpush1.msra.mxu0 %v7832
    %7834 = vmatprep.subr.mxu0 0.0
    %v7835 = vand.u32 %v5821, 4294901760
    %7836 = vmatpush1.msra.mxu0 %v7835
    %7837 = vmatprep.subr.mxu0 0.0
    %v7838 = vand.u32 %v5822, 4294901760
    %7839 = vmatpush1.msra.mxu0 %v7838
    %7840 = vmatprep.subr.mxu0 0.0
    %v7841 = vand.u32 %v5823, 4294901760
    %7842 = vmatpush1.msra.mxu0 %v7841
    %7843 = vmatprep.subr.mxu0 0.0
    %v7844 = vand.u32 %v5824, 4294901760
    %7845 = vmatpush1.msra.mxu0 %v7844
    %7846 = vmatprep.subr.mxu0 0.0
    %v7847 = vand.u32 %v5825, 4294901760
    %7848 = vmatpush1.msra.mxu0 %v7847
    %7849 = vmatprep.subr.mxu0 0.0
    %v7850 = vand.u32 %v5826, 4294901760
    %7851 = vmatpush1.msra.mxu0 %v7850
    %7852 = vmatprep.subr.mxu0 0.0
    %v7853 = vand.u32 %v5827, 4294901760
    %7854 = vmatpush1.msra.mxu0 %v7853
    %7855 = vmatprep.subr.mxu0 0.0
    %v7856 = vand.u32 %v5828, 4294901760
    %7857 = vmatpush1.msra.mxu0 %v7856
    %7858 = vmatprep.subr.mxu0 0.0
    %v7859 = vand.u32 %v5829, 4294901760
    %7860 = vmatpush1.msra.mxu0 %v7859
    %7861 = vmatprep.subr.mxu0 0.0
    %v7862 = vand.u32 %v5830, 4294901760
    %7863 = vmatpush1.msra.mxu0 %v7862
    %7864 = vmatprep.subr.mxu0 0.0
    %v7865 = vand.u32 %v5831, 4294901760
    %7866 = vmatpush1.msra.mxu0 %v7865
    %7867 = vmatprep.subr.mxu0 0.0
    %v7868 = vand.u32 %v5832, 4294901760
    %7869 = vmatpush1.msra.mxu0 %v7868
    %7870 = vmatprep.subr.mxu0 0.0
    %v7871 = vand.u32 %v5833, 4294901760
    %7872 = vmatpush1.msra.mxu0 %v7871
    %7873 = vmatprep.subr.mxu0 0.0
    %7874 = vmatpush1.msra.mxu0 0.0
    %7875 = vmatprep.subr.mxu0 0.0
    %7876 = vmatpush1.msra.mxu0 0.0
    %7877 = vmatprep.subr.mxu0 0.0
    %7878 = vmatpush1.msra.mxu0 0.0
    %7879 = vmatprep.subr.mxu0 0.0
    %7880 = vmatpush1.msra.mxu0 0.0
    %7881 = vmatprep.subr.mxu0 0.0
    %7882 = vmatpush1.msra.mxu0 0.0
    %7883 = vmatprep.subr.mxu0 0.0
    %7884 = vmatpush1.msra.mxu0 0.0
    %7885 = vmatprep.subr.mxu0 0.0
    %7886 = vmatpush1.msra.mxu0 0.0
    %7887 = vmatprep.subr.mxu0 0.0
    %7888 = vmatpush1.msra.mxu0 0.0
    %7889 = vmatprep.subr.mxu0 0.0
    %7890 = vmatpush1.msra.mxu0 0.0
    %7891 = vmatprep.subr.mxu0 0.0
    %7892 = vmatpush1.msra.mxu0 0.0
    %7893 = vmatprep.subr.mxu0 0.0
    %7894 = vmatpush1.msra.mxu0 0.0
    %7895 = vmatprep.subr.mxu0 0.0
    %7896 = vmatpush1.msra.mxu0 0.0
    %7897 = vmatprep.subr.mxu0 0.0
    %7898 = vmatpush1.msra.mxu0 0.0
    %7899 = vmatprep.subr.mxu0 0.0
    %7900 = vmatpush1.msra.mxu0 0.0
    %7901 = vmatprep.subr.mxu0 0.0
    %7902 = vmatpush1.msra.mxu0 0.0
    %7903 = vmatprep.subr.mxu0 0.0
    %7904 = vmatpush1.msra.mxu0 0.0
    %7905 = vmatprep.mubr.f32.mxu0 0.0
    %v7906 = vand.u32 %v7454, 4294901760
    %v7907 = vsub.f32 %v7454, %v7906
    %v7908 = vand.u32 %v7907, 4294901760
    %7909 = vmatmul.mubr.f32.gmra.mrb[0].mxu0 %v7908
    %v7910 = vpop.f32.mrb[0].mxu0
    %v7911 = vadd.f32 %v7815, %v7910
    %v7912 = vpop.f32.mrb[0].mxu0
    %7913 = vmatprep.mubr.f32.mxu0 0.0
    %v7914 = vand.u32 %v7455, 4294901760
    %v7915 = vsub.f32 %v7455, %v7914
    %v7916 = vand.u32 %v7915, 4294901760
    %7917 = vmatmul.mubr.f32.gmra.mrb[0].mxu0 %v7916
    %v7918 = vpop.f32.mrb[0].mxu0
    %v7919 = vadd.f32 %v7822, %v7918
    %v7920 = vpop.f32.mrb[0].mxu0
    %7921 = vdwg.mxu0
    %7922 = vmatprep.subr.mxu0 0.0
    %v7923 = vand.u32 %v5818, 4294901760
    %v7924 = vsub.f32 %v5818, %v7923
    %v7925 = vand.u32 %v7924, 4294901760
    %7926 = vmatpush1.msra.mxu0 %v7925
    %7927 = vmatprep.subr.mxu0 0.0
    %v7928 = vand.u32 %v5819, 4294901760
    %v7929 = vsub.f32 %v5819, %v7928
    %v7930 = vand.u32 %v7929, 4294901760
    %7931 = vmatpush1.msra.mxu0 %v7930
    %7932 = vmatprep.subr.mxu0 0.0
    %v7933 = vand.u32 %v5820, 4294901760
    %v7934 = vsub.f32 %v5820, %v7933
    %v7935 = vand.u32 %v7934, 4294901760
    %7936 = vmatpush1.msra.mxu0 %v7935
    %7937 = vmatprep.subr.mxu0 0.0
    %v7938 = vand.u32 %v5821, 4294901760
    %v7939 = vsub.f32 %v5821, %v7938
    %v7940 = vand.u32 %v7939, 4294901760
    %7941 = vmatpush1.msra.mxu0 %v7940
    %7942 = vmatprep.subr.mxu0 0.0
    %v7943 = vand.u32 %v5822, 4294901760
    %v7944 = vsub.f32 %v5822, %v7943
    %v7945 = vand.u32 %v7944, 4294901760
    %7946 = vmatpush1.msra.mxu0 %v7945
    %7947 = vmatprep.subr.mxu0 0.0
    %v7948 = vand.u32 %v5823, 4294901760
    %v7949 = vsub.f32 %v5823, %v7948
    %v7950 = vand.u32 %v7949, 4294901760
    %7951 = vmatpush1.msra.mxu0 %v7950
    %7952 = vmatprep.subr.mxu0 0.0
    %v7953 = vand.u32 %v5824, 4294901760
    %v7954 = vsub.f32 %v5824, %v7953
    %v7955 = vand.u32 %v7954, 4294901760
    %7956 = vmatpush1.msra.mxu0 %v7955
    %7957 = vmatprep.subr.mxu0 0.0
    %v7958 = vand.u32 %v5825, 4294901760
    %v7959 = vsub.f32 %v5825, %v7958
    %v7960 = vand.u32 %v7959, 4294901760
    %7961 = vmatpush1.msra.mxu0 %v7960
    %7962 = vmatprep.subr.mxu0 0.0
    %v7963 = vand.u32 %v5826, 4294901760
    %v7964 = vsub.f32 %v5826, %v7963
    %v7965 = vand.u32 %v7964, 4294901760
    %7966 = vmatpush1.msra.mxu0 %v7965
    %7967 = vmatprep.subr.mxu0 0.0
    %v7968 = vand.u32 %v5827, 4294901760
    %v7969 = vsub.f32 %v5827, %v7968
    %v7970 = vand.u32 %v7969, 4294901760
    %7971 = vmatpush1.msra.mxu0 %v7970
    %7972 = vmatprep.subr.mxu0 0.0
    %v7973 = vand.u32 %v5828, 4294901760
    %v7974 = vsub.f32 %v5828, %v7973
    %v7975 = vand.u32 %v7974, 4294901760
    %7976 = vmatpush1.msra.mxu0 %v7975
    %7977 = vmatprep.subr.mxu0 0.0
    %v7978 = vand.u32 %v5829, 4294901760
    %v7979 = vsub.f32 %v5829, %v7978
    %v7980 = vand.u32 %v7979, 4294901760
    %7981 = vmatpush1.msra.mxu0 %v7980
    %7982 = vmatprep.subr.mxu0 0.0
    %v7983 = vand.u32 %v5830, 4294901760
    %v7984 = vsub.f32 %v5830, %v7983
    %v7985 = vand.u32 %v7984, 4294901760
    %7986 = vmatpush1.msra.mxu0 %v7985
    %7987 = vmatprep.subr.mxu0 0.0
    %v7988 = vand.u32 %v5831, 4294901760
    %v7989 = vsub.f32 %v5831, %v7988
    %v7990 = vand.u32 %v7989, 4294901760
    %7991 = vmatpush1.msra.mxu0 %v7990
    %7992 = vmatprep.subr.mxu0 0.0
    %v7993 = vand.u32 %v5832, 4294901760
    %v7994 = vsub.f32 %v5832, %v7993
    %v7995 = vand.u32 %v7994, 4294901760
    %7996 = vmatpush1.msra.mxu0 %v7995
    %7997 = vmatprep.subr.mxu0 0.0
    %v7998 = vand.u32 %v5833, 4294901760
    %v7999 = vsub.f32 %v5833, %v7998
    %v8000 = vand.u32 %v7999, 4294901760
    %8001 = vmatpush1.msra.mxu0 %v8000
    %8002 = vmatprep.subr.mxu0 0.0
    %8003 = vmatpush1.msra.mxu0 0.0
    %8004 = vmatprep.subr.mxu0 0.0
    %8005 = vmatpush1.msra.mxu0 0.0
    %8006 = vmatprep.subr.mxu0 0.0
    %8007 = vmatpush1.msra.mxu0 0.0
    %8008 = vmatprep.subr.mxu0 0.0
    %8009 = vmatpush1.msra.mxu0 0.0
    %8010 = vmatprep.subr.mxu0 0.0
    %8011 = vmatpush1.msra.mxu0 0.0
    %8012 = vmatprep.subr.mxu0 0.0
    %8013 = vmatpush1.msra.mxu0 0.0
    %8014 = vmatprep.subr.mxu0 0.0
    %8015 = vmatpush1.msra.mxu0 0.0
    %8016 = vmatprep.subr.mxu0 0.0
    %8017 = vmatpush1.msra.mxu0 0.0
    %8018 = vmatprep.subr.mxu0 0.0
    %8019 = vmatpush1.msra.mxu0 0.0
    %8020 = vmatprep.subr.mxu0 0.0
    %8021 = vmatpush1.msra.mxu0 0.0
    %8022 = vmatprep.subr.mxu0 0.0
    %8023 = vmatpush1.msra.mxu0 0.0
    %8024 = vmatprep.subr.mxu0 0.0
    %8025 = vmatpush1.msra.mxu0 0.0
    %8026 = vmatprep.subr.mxu0 0.0
    %8027 = vmatpush1.msra.mxu0 0.0
    %8028 = vmatprep.subr.mxu0 0.0
    %8029 = vmatpush1.msra.mxu0 0.0
    %8030 = vmatprep.subr.mxu0 0.0
    %8031 = vmatpush1.msra.mxu0 0.0
    %8032 = vmatprep.subr.mxu0 0.0
    %8033 = vmatpush1.msra.mxu0 0.0
    %8034 = vmatprep.mubr.f32.mxu0 0.0
    %v8035 = vand.u32 %v7454, 4294901760
    %8036 = vmatmul.mubr.f32.gmra.mrb[0].mxu0 %v8035
    %v8037 = vpop.f32.mrb[0].mxu0
    %v8038 = vadd.f32 %v7911, %v8037
    %v8039 = vpop.f32.mrb[0].mxu0
    %8040 = vmatprep.mubr.f32.mxu0 0.0
    %v8041 = vand.u32 %v7455, 4294901760
    %8042 = vmatmul.mubr.f32.gmra.mrb[0].mxu0 %v8041
    %v8043 = vpop.f32.mrb[0].mxu0
    %v8044 = vadd.f32 %v7919, %v8043
    %v8045 = vpop.f32.mrb[0].mxu0
    %8046 = vdwg.mxu0
    %8047 = vmatprep.subr.mxu0 0.0
    %v8048 = vand.u32 %v5818, 4294901760
    %8049 = vmatpush1.msra.mxu0 %v8048
    %8050 = vmatprep.subr.mxu0 0.0
    %v8051 = vand.u32 %v5819, 4294901760
    %8052 = vmatpush1.msra.mxu0 %v8051
    %8053 = vmatprep.subr.mxu0 0.0
    %v8054 = vand.u32 %v5820, 4294901760
    %8055 = vmatpush1.msra.mxu0 %v8054
    %8056 = vmatprep.subr.mxu0 0.0
    %v8057 = vand.u32 %v5821, 4294901760
    %8058 = vmatpush1.msra.mxu0 %v8057
    %8059 = vmatprep.subr.mxu0 0.0
    %v8060 = vand.u32 %v5822, 4294901760
    %8061 = vmatpush1.msra.mxu0 %v8060
    %8062 = vmatprep.subr.mxu0 0.0
    %v8063 = vand.u32 %v5823, 4294901760
    %8064 = vmatpush1.msra.mxu0 %v8063
    %8065 = vmatprep.subr.mxu0 0.0
    %v8066 = vand.u32 %v5824, 4294901760
    %8067 = vmatpush1.msra.mxu0 %v8066
    %8068 = vmatprep.subr.mxu0 0.0
    %v8069 = vand.u32 %v5825, 4294901760
    %8070 = vmatpush1.msra.mxu0 %v8069
    %8071 = vmatprep.subr.mxu0 0.0
    %v8072 = vand.u32 %v5826, 4294901760
    %8073 = vmatpush1.msra.mxu0 %v8072
    %8074 = vmatprep.subr.mxu0 0.0
    %v8075 = vand.u32 %v5827, 4294901760
    %8076 = vmatpush1.msra.mxu0 %v8075
    %8077 = vmatprep.subr.mxu0 0.0
    %v8078 = vand.u32 %v5828, 4294901760
    %8079 = vmatpush1.msra.mxu0 %v8078
    %8080 = vmatprep.subr.mxu0 0.0
    %v8081 = vand.u32 %v5829, 4294901760
    %8082 = vmatpush1.msra.mxu0 %v8081
    %8083 = vmatprep.subr.mxu0 0.0
    %v8084 = vand.u32 %v5830, 4294901760
    %8085 = vmatpush1.msra.mxu0 %v8084
    %8086 = vmatprep.subr.mxu0 0.0
    %v8087 = vand.u32 %v5831, 4294901760
    %8088 = vmatpush1.msra.mxu0 %v8087
    %8089 = vmatprep.subr.mxu0 0.0
    %v8090 = vand.u32 %v5832, 4294901760
    %8091 = vmatpush1.msra.mxu0 %v8090
    %8092 = vmatprep.subr.mxu0 0.0
    %v8093 = vand.u32 %v5833, 4294901760
    %8094 = vmatpush1.msra.mxu0 %v8093
    %8095 = vmatprep.subr.mxu0 0.0
    %8096 = vmatpush1.msra.mxu0 0.0
    %8097 = vmatprep.subr.mxu0 0.0
    %8098 = vmatpush1.msra.mxu0 0.0
    %8099 = vmatprep.subr.mxu0 0.0
    %8100 = vmatpush1.msra.mxu0 0.0
    %8101 = vmatprep.subr.mxu0 0.0
    %8102 = vmatpush1.msra.mxu0 0.0
    %8103 = vmatprep.subr.mxu0 0.0
    %8104 = vmatpush1.msra.mxu0 0.0
    %8105 = vmatprep.subr.mxu0 0.0
    %8106 = vmatpush1.msra.mxu0 0.0
    %8107 = vmatprep.subr.mxu0 0.0
    %8108 = vmatpush1.msra.mxu0 0.0
    %8109 = vmatprep.subr.mxu0 0.0
    %8110 = vmatpush1.msra.mxu0 0.0
    %8111 = vmatprep.subr.mxu0 0.0
    %8112 = vmatpush1.msra.mxu0 0.0
    %8113 = vmatprep.subr.mxu0 0.0
    %8114 = vmatpush1.msra.mxu0 0.0
    %8115 = vmatprep.subr.mxu0 0.0
    %8116 = vmatpush1.msra.mxu0 0.0
    %8117 = vmatprep.subr.mxu0 0.0
    %8118 = vmatpush1.msra.mxu0 0.0
    %8119 = vmatprep.subr.mxu0 0.0
    %8120 = vmatpush1.msra.mxu0 0.0
    %8121 = vmatprep.subr.mxu0 0.0
    %8122 = vmatpush1.msra.mxu0 0.0
    %8123 = vmatprep.subr.mxu0 0.0
    %8124 = vmatpush1.msra.mxu0 0.0
    %8125 = vmatprep.subr.mxu0 0.0
    %8126 = vmatpush1.msra.mxu0 0.0
    %8127 = vmatprep.mubr.f32.mxu0 0.0
    %v8128 = vand.u32 %v7454, 4294901760
    %8129 = vmatmul.mubr.f32.gmra.mrb[0].mxu0 %v8128
    %v8130 = vpop.f32.mrb[0].mxu0
    %v8131 = vadd.f32 %v8038, %v8130
    %v8132 = vpop.f32.mrb[0].mxu0
    %8133 = vmatprep.mubr.f32.mxu0 0.0
    %v8134 = vand.u32 %v7455, 4294901760
    %8135 = vmatmul.mubr.f32.gmra.mrb[0].mxu0 %v8134
    %v8136 = vpop.f32.mrb[0].mxu0
    %v8137 = vadd.f32 %v8044, %v8136
    %v8138 = vpop.f32.mrb[0].mxu0
    %8139 = vdwg.mxu0
    %8140 = vmatprep.subr.mxu0 0.0
    %v8141 = vand.u32 %v5834, 4294901760
    %8142 = vmatpush1.msra.mxu0 %v8141
    %8143 = vmatprep.subr.mxu0 0.0
    %v8144 = vand.u32 %v5835, 4294901760
    %8145 = vmatpush1.msra.mxu0 %v8144
    %8146 = vmatprep.subr.mxu0 0.0
    %v8147 = vand.u32 %v5836, 4294901760
    %8148 = vmatpush1.msra.mxu0 %v8147
    %8149 = vmatprep.subr.mxu0 0.0
    %v8150 = vand.u32 %v5837, 4294901760
    %8151 = vmatpush1.msra.mxu0 %v8150
    %8152 = vmatprep.subr.mxu0 0.0
    %v8153 = vand.u32 %v5838, 4294901760
    %8154 = vmatpush1.msra.mxu0 %v8153
    %8155 = vmatprep.subr.mxu0 0.0
    %v8156 = vand.u32 %v5839, 4294901760
    %8157 = vmatpush1.msra.mxu0 %v8156
    %8158 = vmatprep.subr.mxu0 0.0
    %v8159 = vand.u32 %v5840, 4294901760
    %8160 = vmatpush1.msra.mxu0 %v8159
    %8161 = vmatprep.subr.mxu0 0.0
    %v8162 = vand.u32 %v5841, 4294901760
    %8163 = vmatpush1.msra.mxu0 %v8162
    %8164 = vmatprep.subr.mxu0 0.0
    %v8165 = vand.u32 %v5842, 4294901760
    %8166 = vmatpush1.msra.mxu0 %v8165
    %8167 = vmatprep.subr.mxu0 0.0
    %v8168 = vand.u32 %v5843, 4294901760
    %8169 = vmatpush1.msra.mxu0 %v8168
    %8170 = vmatprep.subr.mxu0 0.0
    %v8171 = vand.u32 %v5844, 4294901760
    %8172 = vmatpush1.msra.mxu0 %v8171
    %8173 = vmatprep.subr.mxu0 0.0
    %v8174 = vand.u32 %v5845, 4294901760
    %8175 = vmatpush1.msra.mxu0 %v8174
    %8176 = vmatprep.subr.mxu0 0.0
    %v8177 = vand.u32 %v5846, 4294901760
    %8178 = vmatpush1.msra.mxu0 %v8177
    %8179 = vmatprep.subr.mxu0 0.0
    %v8180 = vand.u32 %v5847, 4294901760
    %8181 = vmatpush1.msra.mxu0 %v8180
    %8182 = vmatprep.subr.mxu0 0.0
    %v8183 = vand.u32 %v5848, 4294901760
    %8184 = vmatpush1.msra.mxu0 %v8183
    %8185 = vmatprep.subr.mxu0 0.0
    %v8186 = vand.u32 %v5849, 4294901760
    %8187 = vmatpush1.msra.mxu0 %v8186
    %8188 = vmatprep.subr.mxu0 0.0
    %8189 = vmatpush1.msra.mxu0 0.0
    %8190 = vmatprep.subr.mxu0 0.0
    %8191 = vmatpush1.msra.mxu0 0.0
    %8192 = vmatprep.subr.mxu0 0.0
    %8193 = vmatpush1.msra.mxu0 0.0
    %8194 = vmatprep.subr.mxu0 0.0
    %8195 = vmatpush1.msra.mxu0 0.0
    %8196 = vmatprep.subr.mxu0 0.0
    %8197 = vmatpush1.msra.mxu0 0.0
    %8198 = vmatprep.subr.mxu0 0.0
    %8199 = vmatpush1.msra.mxu0 0.0
    %8200 = vmatprep.subr.mxu0 0.0
    %8201 = vmatpush1.msra.mxu0 0.0
    %8202 = vmatprep.subr.mxu0 0.0
    %8203 = vmatpush1.msra.mxu0 0.0
    %8204 = vmatprep.subr.mxu0 0.0
    %8205 = vmatpush1.msra.mxu0 0.0
    %8206 = vmatprep.subr.mxu0 0.0
    %8207 = vmatpush1.msra.mxu0 0.0
    %8208 = vmatprep.subr.mxu0 0.0
    %8209 = vmatpush1.msra.mxu0 0.0
    %8210 = vmatprep.subr.mxu0 0.0
    %8211 = vmatpush1.msra.mxu0 0.0
    %8212 = vmatprep.subr.mxu0 0.0
    %8213 = vmatpush1.msra.mxu0 0.0
    %8214 = vmatprep.subr.mxu0 0.0
    %8215 = vmatpush1.msra.mxu0 0.0
    %8216 = vmatprep.subr.mxu0 0.0
    %8217 = vmatpush1.msra.mxu0 0.0
    %8218 = vmatprep.subr.mxu0 0.0
    %8219 = vmatpush1.msra.mxu0 0.0
    %8220 = vmatprep.mubr.f32.mxu0 0.0
    %v8221 = vand.u32 %v8131, 4294901760
    %v8222 = vsub.f32 %v8131, %v8221
    %v8223 = vand.u32 %v8222, 4294901760
    %v8224 = vsub.f32 %v8222, %v8223
    %v8225 = vand.u32 %v8224, 4294901760
    %8226 = vmatmul.mubr.f32.gmra.mrb[0].mxu0 %v8225
    %v8227 = vpop.f32.mrb[0].mxu0
    %v8228 = vadd.f32 0.0, %v8227
    %v8229 = vpop.f32.mrb[0].mxu0
    %8230 = vmatprep.mubr.f32.mxu0 0.0
    %v8231 = vand.u32 %v8137, 4294901760
    %v8232 = vsub.f32 %v8137, %v8231
    %v8233 = vand.u32 %v8232, 4294901760
    %v8234 = vsub.f32 %v8232, %v8233
    %v8235 = vand.u32 %v8234, 4294901760
    %8236 = vmatmul.mubr.f32.gmra.mrb[0].mxu0 %v8235
    %v8237 = vpop.f32.mrb[0].mxu0
    %v8238 = vadd.f32 0.0, %v8237
    %v8239 = vpop.f32.mrb[0].mxu0
    %8240 = vdwg.mxu0
    %8241 = vmatprep.subr.mxu0 0.0
    %v8242 = vand.u32 %v5834, 4294901760
    %v8243 = vsub.f32 %v5834, %v8242
    %v8244 = vand.u32 %v8243, 4294901760
    %v8245 = vsub.f32 %v8243, %v8244
    %v8246 = vand.u32 %v8245, 4294901760
    %8247 = vmatpush1.msra.mxu0 %v8246
    %8248 = vmatprep.subr.mxu0 0.0
    %v8249 = vand.u32 %v5835, 4294901760
    %v8250 = vsub.f32 %v5835, %v8249
    %v8251 = vand.u32 %v8250, 4294901760
    %v8252 = vsub.f32 %v8250, %v8251
    %v8253 = vand.u32 %v8252, 4294901760
    %8254 = vmatpush1.msra.mxu0 %v8253
    %8255 = vmatprep.subr.mxu0 0.0
    %v8256 = vand.u32 %v5836, 4294901760
    %v8257 = vsub.f32 %v5836, %v8256
    %v8258 = vand.u32 %v8257, 4294901760
    %v8259 = vsub.f32 %v8257, %v8258
    %v8260 = vand.u32 %v8259, 4294901760
    %8261 = vmatpush1.msra.mxu0 %v8260
    %8262 = vmatprep.subr.mxu0 0.0
    %v8263 = vand.u32 %v5837, 4294901760
    %v8264 = vsub.f32 %v5837, %v8263
    %v8265 = vand.u32 %v8264, 4294901760
    %v8266 = vsub.f32 %v8264, %v8265
    %v8267 = vand.u32 %v8266, 4294901760
    %8268 = vmatpush1.msra.mxu0 %v8267
    %8269 = vmatprep.subr.mxu0 0.0
    %v8270 = vand.u32 %v5838, 4294901760
    %v8271 = vsub.f32 %v5838, %v8270
    %v8272 = vand.u32 %v8271, 4294901760
    %v8273 = vsub.f32 %v8271, %v8272
    %v8274 = vand.u32 %v8273, 4294901760
    %8275 = vmatpush1.msra.mxu0 %v8274
    %8276 = vmatprep.subr.mxu0 0.0
    %v8277 = vand.u32 %v5839, 4294901760
    %v8278 = vsub.f32 %v5839, %v8277
    %v8279 = vand.u32 %v8278, 4294901760
    %v8280 = vsub.f32 %v8278, %v8279
    %v8281 = vand.u32 %v8280, 4294901760
    %8282 = vmatpush1.msra.mxu0 %v8281
    %8283 = vmatprep.subr.mxu0 0.0
    %v8284 = vand.u32 %v5840, 4294901760
    %v8285 = vsub.f32 %v5840, %v8284
    %v8286 = vand.u32 %v8285, 4294901760
    %v8287 = vsub.f32 %v8285, %v8286
    %v8288 = vand.u32 %v8287, 4294901760
    %8289 = vmatpush1.msra.mxu0 %v8288
    %8290 = vmatprep.subr.mxu0 0.0
    %v8291 = vand.u32 %v5841, 4294901760
    %v8292 = vsub.f32 %v5841, %v8291
    %v8293 = vand.u32 %v8292, 4294901760
    %v8294 = vsub.f32 %v8292, %v8293
    %v8295 = vand.u32 %v8294, 4294901760
    %8296 = vmatpush1.msra.mxu0 %v8295
    %8297 = vmatprep.subr.mxu0 0.0
    %v8298 = vand.u32 %v5842, 4294901760
    %v8299 = vsub.f32 %v5842, %v8298
    %v8300 = vand.u32 %v8299, 4294901760
    %v8301 = vsub.f32 %v8299, %v8300
    %v8302 = vand.u32 %v8301, 4294901760
    %8303 = vmatpush1.msra.mxu0 %v8302
    %8304 = vmatprep.subr.mxu0 0.0
    %v8305 = vand.u32 %v5843, 4294901760
    %v8306 = vsub.f32 %v5843, %v8305
    %v8307 = vand.u32 %v8306, 4294901760
    %v8308 = vsub.f32 %v8306, %v8307
    %v8309 = vand.u32 %v8308, 4294901760
    %8310 = vmatpush1.msra.mxu0 %v8309
    %8311 = vmatprep.subr.mxu0 0.0
    %v8312 = vand.u32 %v5844, 4294901760
    %v8313 = vsub.f32 %v5844, %v8312
    %v8314 = vand.u32 %v8313, 4294901760
    %v8315 = vsub.f32 %v8313, %v8314
    %v8316 = vand.u32 %v8315, 4294901760
    %8317 = vmatpush1.msra.mxu0 %v8316
    %8318 = vmatprep.subr.mxu0 0.0
    %v8319 = vand.u32 %v5845, 4294901760
    %v8320 = vsub.f32 %v5845, %v8319
    %v8321 = vand.u32 %v8320, 4294901760
    %v8322 = vsub.f32 %v8320, %v8321
    %v8323 = vand.u32 %v8322, 4294901760
    %8324 = vmatpush1.msra.mxu0 %v8323
    %8325 = vmatprep.subr.mxu0 0.0
    %v8326 = vand.u32 %v5846, 4294901760
    %v8327 = vsub.f32 %v5846, %v8326
    %v8328 = vand.u32 %v8327, 4294901760
    %v8329 = vsub.f32 %v8327, %v8328
    %v8330 = vand.u32 %v8329, 4294901760
    %8331 = vmatpush1.msra.mxu0 %v8330
    %8332 = vmatprep.subr.mxu0 0.0
    %v8333 = vand.u32 %v5847, 4294901760
    %v8334 = vsub.f32 %v5847, %v8333
    %v8335 = vand.u32 %v8334, 4294901760
    %v8336 = vsub.f32 %v8334, %v8335
    %v8337 = vand.u32 %v8336, 4294901760
    %8338 = vmatpush1.msra.mxu0 %v8337
    %8339 = vmatprep.subr.mxu0 0.0
    %v8340 = vand.u32 %v5848, 4294901760
    %v8341 = vsub.f32 %v5848, %v8340
    %v8342 = vand.u32 %v8341, 4294901760
    %v8343 = vsub.f32 %v8341, %v8342
    %v8344 = vand.u32 %v8343, 4294901760
    %8345 = vmatpush1.msra.mxu0 %v8344
    %8346 = vmatprep.subr.mxu0 0.0
    %v8347 = vand.u32 %v5849, 4294901760
    %v8348 = vsub.f32 %v5849, %v8347
    %v8349 = vand.u32 %v8348, 4294901760
    %v8350 = vsub.f32 %v8348, %v8349
    %v8351 = vand.u32 %v8350, 4294901760
    %8352 = vmatpush1.msra.mxu0 %v8351
    %8353 = vmatprep.subr.mxu0 0.0
    %8354 = vmatpush1.msra.mxu0 0.0
    %8355 = vmatprep.subr.mxu0 0.0
    %8356 = vmatpush1.msra.mxu0 0.0
    %8357 = vmatprep.subr.mxu0 0.0
    %8358 = vmatpush1.msra.mxu0 0.0
    %8359 = vmatprep.subr.mxu0 0.0
    %8360 = vmatpush1.msra.mxu0 0.0
    %8361 = vmatprep.subr.mxu0 0.0
    %8362 = vmatpush1.msra.mxu0 0.0
    %8363 = vmatprep.subr.mxu0 0.0
    %8364 = vmatpush1.msra.mxu0 0.0
    %8365 = vmatprep.subr.mxu0 0.0
    %8366 = vmatpush1.msra.mxu0 0.0
    %8367 = vmatprep.subr.mxu0 0.0
    %8368 = vmatpush1.msra.mxu0 0.0
    %8369 = vmatprep.subr.mxu0 0.0
    %8370 = vmatpush1.msra.mxu0 0.0
    %8371 = vmatprep.subr.mxu0 0.0
    %8372 = vmatpush1.msra.mxu0 0.0
    %8373 = vmatprep.subr.mxu0 0.0
    %8374 = vmatpush1.msra.mxu0 0.0
    %8375 = vmatprep.subr.mxu0 0.0
    %8376 = vmatpush1.msra.mxu0 0.0
    %8377 = vmatprep.subr.mxu0 0.0
    %8378 = vmatpush1.msra.mxu0 0.0
    %8379 = vmatprep.subr.mxu0 0.0
    %8380 = vmatpush1.msra.mxu0 0.0
    %8381 = vmatprep.subr.mxu0 0.0
    %8382 = vmatpush1.msra.mxu0 0.0
    %8383 = vmatprep.subr.mxu0 0.0
    %8384 = vmatpush1.msra.mxu0 0.0
    %8385 = vmatprep.mubr.f32.mxu0 0.0
    %v8386 = vand.u32 %v8131, 4294901760
    %8387 = vmatmul.mubr.f32.gmra.mrb[0].mxu0 %v8386
    %v8388 = vpop.f32.mrb[0].mxu0
    %v8389 = vadd.f32 %v8228, %v8388
    %v8390 = vpop.f32.mrb[0].mxu0
    %8391 = vmatprep.mubr.f32.mxu0 0.0
    %v8392 = vand.u32 %v8137, 4294901760
    %8393 = vmatmul.mubr.f32.gmra.mrb[0].mxu0 %v8392
    %v8394 = vpop.f32.mrb[0].mxu0
    %v8395 = vadd.f32 %v8238, %v8394
    %v8396 = vpop.f32.mrb[0].mxu0
    %8397 = vdwg.mxu0
    %8398 = vmatprep.subr.mxu0 0.0
    %v8399 = vand.u32 %v5834, 4294901760
    %v8400 = vsub.f32 %v5834, %v8399
    %8401 = vmatpush1.msra.mxu0 %v8400
    %8402 = vmatprep.subr.mxu0 0.0
    %v8403 = vand.u32 %v5835, 4294901760
    %v8404 = vsub.f32 %v5835, %v8403
    %8405 = vmatpush1.msra.mxu0 %v8404
    %8406 = vmatprep.subr.mxu0 0.0
    %v8407 = vand.u32 %v5836, 4294901760
    %v8408 = vsub.f32 %v5836, %v8407
    %8409 = vmatpush1.msra.mxu0 %v8408
    %8410 = vmatprep.subr.mxu0 0.0
    %v8411 = vand.u32 %v5837, 4294901760
    %v8412 = vsub.f32 %v5837, %v8411
    %8413 = vmatpush1.msra.mxu0 %v8412
    %8414 = vmatprep.subr.mxu0 0.0
    %v8415 = vand.u32 %v5838, 4294901760
    %v8416 = vsub.f32 %v5838, %v8415
    %8417 = vmatpush1.msra.mxu0 %v8416
    %8418 = vmatprep.subr.mxu0 0.0
    %v8419 = vand.u32 %v5839, 4294901760
    %v8420 = vsub.f32 %v5839, %v8419
    %8421 = vmatpush1.msra.mxu0 %v8420
    %8422 = vmatprep.subr.mxu0 0.0
    %v8423 = vand.u32 %v5840, 4294901760
    %v8424 = vsub.f32 %v5840, %v8423
    %8425 = vmatpush1.msra.mxu0 %v8424
    %8426 = vmatprep.subr.mxu0 0.0
    %v8427 = vand.u32 %v5841, 4294901760
    %v8428 = vsub.f32 %v5841, %v8427
    %8429 = vmatpush1.msra.mxu0 %v8428
    %8430 = vmatprep.subr.mxu0 0.0
    %v8431 = vand.u32 %v5842, 4294901760
    %v8432 = vsub.f32 %v5842, %v8431
    %8433 = vmatpush1.msra.mxu0 %v8432
    %8434 = vmatprep.subr.mxu0 0.0
    %v8435 = vand.u32 %v5843, 4294901760
    %v8436 = vsub.f32 %v5843, %v8435
    %8437 = vmatpush1.msra.mxu0 %v8436
    %8438 = vmatprep.subr.mxu0 0.0
    %v8439 = vand.u32 %v5844, 4294901760
    %v8440 = vsub.f32 %v5844, %v8439
    %8441 = vmatpush1.msra.mxu0 %v8440
    %8442 = vmatprep.subr.mxu0 0.0
    %v8443 = vand.u32 %v5845, 4294901760
    %v8444 = vsub.f32 %v5845, %v8443
    %8445 = vmatpush1.msra.mxu0 %v8444
    %8446 = vmatprep.subr.mxu0 0.0
    %v8447 = vand.u32 %v5846, 4294901760
    %v8448 = vsub.f32 %v5846, %v8447
    %8449 = vmatpush1.msra.mxu0 %v8448
    %8450 = vmatprep.subr.mxu0 0.0
    %v8451 = vand.u32 %v5847, 4294901760
    %v8452 = vsub.f32 %v5847, %v8451
    %8453 = vmatpush1.msra.mxu0 %v8452
    %8454 = vmatprep.subr.mxu0 0.0
    %v8455 = vand.u32 %v5848, 4294901760
    %v8456 = vsub.f32 %v5848, %v8455
    %8457 = vmatpush1.msra.mxu0 %v8456
    %8458 = vmatprep.subr.mxu0 0.0
    %v8459 = vand.u32 %v5849, 4294901760
    %v8460 = vsub.f32 %v5849, %v8459
    %8461 = vmatpush1.msra.mxu0 %v8460
    %8462 = vmatprep.subr.mxu0 0.0
    %8463 = vmatpush1.msra.mxu0 0.0
    %8464 = vmatprep.subr.mxu0 0.0
    %8465 = vmatpush1.msra.mxu0 0.0
    %8466 = vmatprep.subr.mxu0 0.0
    %8467 = vmatpush1.msra.mxu0 0.0
    %8468 = vmatprep.subr.mxu0 0.0
    %8469 = vmatpush1.msra.mxu0 0.0
    %8470 = vmatprep.subr.mxu0 0.0
    %8471 = vmatpush1.msra.mxu0 0.0
    %8472 = vmatprep.subr.mxu0 0.0
    %8473 = vmatpush1.msra.mxu0 0.0
    %8474 = vmatprep.subr.mxu0 0.0
    %8475 = vmatpush1.msra.mxu0 0.0
    %8476 = vmatprep.subr.mxu0 0.0
    %8477 = vmatpush1.msra.mxu0 0.0
    %8478 = vmatprep.subr.mxu0 0.0
    %8479 = vmatpush1.msra.mxu0 0.0
    %8480 = vmatprep.subr.mxu0 0.0
    %8481 = vmatpush1.msra.mxu0 0.0
    %8482 = vmatprep.subr.mxu0 0.0
    %8483 = vmatpush1.msra.mxu0 0.0
    %8484 = vmatprep.subr.mxu0 0.0
    %8485 = vmatpush1.msra.mxu0 0.0
    %8486 = vmatprep.subr.mxu0 0.0
    %8487 = vmatpush1.msra.mxu0 0.0
    %8488 = vmatprep.subr.mxu0 0.0
    %8489 = vmatpush1.msra.mxu0 0.0
    %8490 = vmatprep.subr.mxu0 0.0
    %8491 = vmatpush1.msra.mxu0 0.0
    %8492 = vmatprep.subr.mxu0 0.0
    %8493 = vmatpush1.msra.mxu0 0.0
    %8494 = vmatprep.mubr.f32.mxu0 0.0
    %v8495 = vand.u32 %v8131, 4294901760
    %v8496 = vsub.f32 %v8131, %v8495
    %8497 = vmatmul.mubr.f32.gmra.mrb[0].mxu0 %v8496
    %v8498 = vpop.f32.mrb[0].mxu0
    %v8499 = vadd.f32 %v8389, %v8498
    %v8500 = vpop.f32.mrb[0].mxu0
    %8501 = vmatprep.mubr.f32.mxu0 0.0
    %v8502 = vand.u32 %v8137, 4294901760
    %v8503 = vsub.f32 %v8137, %v8502
    %8504 = vmatmul.mubr.f32.gmra.mrb[0].mxu0 %v8503
    %v8505 = vpop.f32.mrb[0].mxu0
    %v8506 = vadd.f32 %v8395, %v8505
    %v8507 = vpop.f32.mrb[0].mxu0
    %8508 = vdwg.mxu0
    %8509 = vmatprep.subr.mxu0 0.0
    %v8510 = vand.u32 %v5834, 4294901760
    %8511 = vmatpush1.msra.mxu0 %v8510
    %8512 = vmatprep.subr.mxu0 0.0
    %v8513 = vand.u32 %v5835, 4294901760
    %8514 = vmatpush1.msra.mxu0 %v8513
    %8515 = vmatprep.subr.mxu0 0.0
    %v8516 = vand.u32 %v5836, 4294901760
    %8517 = vmatpush1.msra.mxu0 %v8516
    %8518 = vmatprep.subr.mxu0 0.0
    %v8519 = vand.u32 %v5837, 4294901760
    %8520 = vmatpush1.msra.mxu0 %v8519
    %8521 = vmatprep.subr.mxu0 0.0
    %v8522 = vand.u32 %v5838, 4294901760
    %8523 = vmatpush1.msra.mxu0 %v8522
    %8524 = vmatprep.subr.mxu0 0.0
    %v8525 = vand.u32 %v5839, 4294901760
    %8526 = vmatpush1.msra.mxu0 %v8525
    %8527 = vmatprep.subr.mxu0 0.0
    %v8528 = vand.u32 %v5840, 4294901760
    %8529 = vmatpush1.msra.mxu0 %v8528
    %8530 = vmatprep.subr.mxu0 0.0
    %v8531 = vand.u32 %v5841, 4294901760
    %8532 = vmatpush1.msra.mxu0 %v8531
    %8533 = vmatprep.subr.mxu0 0.0
    %v8534 = vand.u32 %v5842, 4294901760
    %8535 = vmatpush1.msra.mxu0 %v8534
    %8536 = vmatprep.subr.mxu0 0.0
    %v8537 = vand.u32 %v5843, 4294901760
    %8538 = vmatpush1.msra.mxu0 %v8537
    %8539 = vmatprep.subr.mxu0 0.0
    %v8540 = vand.u32 %v5844, 4294901760
    %8541 = vmatpush1.msra.mxu0 %v8540
    %8542 = vmatprep.subr.mxu0 0.0
    %v8543 = vand.u32 %v5845, 4294901760
    %8544 = vmatpush1.msra.mxu0 %v8543
    %8545 = vmatprep.subr.mxu0 0.0
    %v8546 = vand.u32 %v5846, 4294901760
    %8547 = vmatpush1.msra.mxu0 %v8546
    %8548 = vmatprep.subr.mxu0 0.0
    %v8549 = vand.u32 %v5847, 4294901760
    %8550 = vmatpush1.msra.mxu0 %v8549
    %8551 = vmatprep.subr.mxu0 0.0
    %v8552 = vand.u32 %v5848, 4294901760
    %8553 = vmatpush1.msra.mxu0 %v8552
    %8554 = vmatprep.subr.mxu0 0.0
    %v8555 = vand.u32 %v5849, 4294901760
    %8556 = vmatpush1.msra.mxu0 %v8555
    %8557 = vmatprep.subr.mxu0 0.0
    %8558 = vmatpush1.msra.mxu0 0.0
    %8559 = vmatprep.subr.mxu0 0.0
    %8560 = vmatpush1.msra.mxu0 0.0
    %8561 = vmatprep.subr.mxu0 0.0
    %8562 = vmatpush1.msra.mxu0 0.0
    %8563 = vmatprep.subr.mxu0 0.0
    %8564 = vmatpush1.msra.mxu0 0.0
    %8565 = vmatprep.subr.mxu0 0.0
    %8566 = vmatpush1.msra.mxu0 0.0
    %8567 = vmatprep.subr.mxu0 0.0
    %8568 = vmatpush1.msra.mxu0 0.0
    %8569 = vmatprep.subr.mxu0 0.0
    %8570 = vmatpush1.msra.mxu0 0.0
    %8571 = vmatprep.subr.mxu0 0.0
    %8572 = vmatpush1.msra.mxu0 0.0
    %8573 = vmatprep.subr.mxu0 0.0
    %8574 = vmatpush1.msra.mxu0 0.0
    %8575 = vmatprep.subr.mxu0 0.0
    %8576 = vmatpush1.msra.mxu0 0.0
    %8577 = vmatprep.subr.mxu0 0.0
    %8578 = vmatpush1.msra.mxu0 0.0
    %8579 = vmatprep.subr.mxu0 0.0
    %8580 = vmatpush1.msra.mxu0 0.0
    %8581 = vmatprep.subr.mxu0 0.0
    %8582 = vmatpush1.msra.mxu0 0.0
    %8583 = vmatprep.subr.mxu0 0.0
    %8584 = vmatpush1.msra.mxu0 0.0
    %8585 = vmatprep.subr.mxu0 0.0
    %8586 = vmatpush1.msra.mxu0 0.0
    %8587 = vmatprep.subr.mxu0 0.0
    %8588 = vmatpush1.msra.mxu0 0.0
    %8589 = vmatprep.mubr.f32.mxu0 0.0
    %v8590 = vand.u32 %v8131, 4294901760
    %v8591 = vsub.f32 %v8131, %v8590
    %v8592 = vand.u32 %v8591, 4294901760
    %8593 = vmatmul.mubr.f32.gmra.mrb[0].mxu0 %v8592
    %v8594 = vpop.f32.mrb[0].mxu0
    %v8595 = vadd.f32 %v8499, %v8594
    %v8596 = vpop.f32.mrb[0].mxu0
    %8597 = vmatprep.mubr.f32.mxu0 0.0
    %v8598 = vand.u32 %v8137, 4294901760
    %v8599 = vsub.f32 %v8137, %v8598
    %v8600 = vand.u32 %v8599, 4294901760
    %8601 = vmatmul.mubr.f32.gmra.mrb[0].mxu0 %v8600
    %v8602 = vpop.f32.mrb[0].mxu0
    %v8603 = vadd.f32 %v8506, %v8602
    %v8604 = vpop.f32.mrb[0].mxu0
    %8605 = vdwg.mxu0
    %8606 = vmatprep.subr.mxu0 0.0
    %v8607 = vand.u32 %v5834, 4294901760
    %v8608 = vsub.f32 %v5834, %v8607
    %v8609 = vand.u32 %v8608, 4294901760
    %8610 = vmatpush1.msra.mxu0 %v8609
    %8611 = vmatprep.subr.mxu0 0.0
    %v8612 = vand.u32 %v5835, 4294901760
    %v8613 = vsub.f32 %v5835, %v8612
    %v8614 = vand.u32 %v8613, 4294901760
    %8615 = vmatpush1.msra.mxu0 %v8614
    %8616 = vmatprep.subr.mxu0 0.0
    %v8617 = vand.u32 %v5836, 4294901760
    %v8618 = vsub.f32 %v5836, %v8617
    %v8619 = vand.u32 %v8618, 4294901760
    %8620 = vmatpush1.msra.mxu0 %v8619
    %8621 = vmatprep.subr.mxu0 0.0
    %v8622 = vand.u32 %v5837, 4294901760
    %v8623 = vsub.f32 %v5837, %v8622
    %v8624 = vand.u32 %v8623, 4294901760
    %8625 = vmatpush1.msra.mxu0 %v8624
    %8626 = vmatprep.subr.mxu0 0.0
    %v8627 = vand.u32 %v5838, 4294901760
    %v8628 = vsub.f32 %v5838, %v8627
    %v8629 = vand.u32 %v8628, 4294901760
    %8630 = vmatpush1.msra.mxu0 %v8629
    %8631 = vmatprep.subr.mxu0 0.0
    %v8632 = vand.u32 %v5839, 4294901760
    %v8633 = vsub.f32 %v5839, %v8632
    %v8634 = vand.u32 %v8633, 4294901760
    %8635 = vmatpush1.msra.mxu0 %v8634
    %8636 = vmatprep.subr.mxu0 0.0
    %v8637 = vand.u32 %v5840, 4294901760
    %v8638 = vsub.f32 %v5840, %v8637
    %v8639 = vand.u32 %v8638, 4294901760
    %8640 = vmatpush1.msra.mxu0 %v8639
    %8641 = vmatprep.subr.mxu0 0.0
    %v8642 = vand.u32 %v5841, 4294901760
    %v8643 = vsub.f32 %v5841, %v8642
    %v8644 = vand.u32 %v8643, 4294901760
    %8645 = vmatpush1.msra.mxu0 %v8644
    %8646 = vmatprep.subr.mxu0 0.0
    %v8647 = vand.u32 %v5842, 4294901760
    %v8648 = vsub.f32 %v5842, %v8647
    %v8649 = vand.u32 %v8648, 4294901760
    %8650 = vmatpush1.msra.mxu0 %v8649
    %8651 = vmatprep.subr.mxu0 0.0
    %v8652 = vand.u32 %v5843, 4294901760
    %v8653 = vsub.f32 %v5843, %v8652
    %v8654 = vand.u32 %v8653, 4294901760
    %8655 = vmatpush1.msra.mxu0 %v8654
    %8656 = vmatprep.subr.mxu0 0.0
    %v8657 = vand.u32 %v5844, 4294901760
    %v8658 = vsub.f32 %v5844, %v8657
    %v8659 = vand.u32 %v8658, 4294901760
    %8660 = vmatpush1.msra.mxu0 %v8659
    %8661 = vmatprep.subr.mxu0 0.0
    %v8662 = vand.u32 %v5845, 4294901760
    %v8663 = vsub.f32 %v5845, %v8662
    %v8664 = vand.u32 %v8663, 4294901760
    %8665 = vmatpush1.msra.mxu0 %v8664
    %8666 = vmatprep.subr.mxu0 0.0
    %v8667 = vand.u32 %v5846, 4294901760
    %v8668 = vsub.f32 %v5846, %v8667
    %v8669 = vand.u32 %v8668, 4294901760
    %8670 = vmatpush1.msra.mxu0 %v8669
    %8671 = vmatprep.subr.mxu0 0.0
    %v8672 = vand.u32 %v5847, 4294901760
    %v8673 = vsub.f32 %v5847, %v8672
    %v8674 = vand.u32 %v8673, 4294901760
    %8675 = vmatpush1.msra.mxu0 %v8674
    %8676 = vmatprep.subr.mxu0 0.0
    %v8677 = vand.u32 %v5848, 4294901760
    %v8678 = vsub.f32 %v5848, %v8677
    %v8679 = vand.u32 %v8678, 4294901760
    %8680 = vmatpush1.msra.mxu0 %v8679
    %8681 = vmatprep.subr.mxu0 0.0
    %v8682 = vand.u32 %v5849, 4294901760
    %v8683 = vsub.f32 %v5849, %v8682
    %v8684 = vand.u32 %v8683, 4294901760
    %8685 = vmatpush1.msra.mxu0 %v8684
    %8686 = vmatprep.subr.mxu0 0.0
    %8687 = vmatpush1.msra.mxu0 0.0
    %8688 = vmatprep.subr.mxu0 0.0
    %8689 = vmatpush1.msra.mxu0 0.0
    %8690 = vmatprep.subr.mxu0 0.0
    %8691 = vmatpush1.msra.mxu0 0.0
    %8692 = vmatprep.subr.mxu0 0.0
    %8693 = vmatpush1.msra.mxu0 0.0
    %8694 = vmatprep.subr.mxu0 0.0
    %8695 = vmatpush1.msra.mxu0 0.0
    %8696 = vmatprep.subr.mxu0 0.0
    %8697 = vmatpush1.msra.mxu0 0.0
    %8698 = vmatprep.subr.mxu0 0.0
    %8699 = vmatpush1.msra.mxu0 0.0
    %8700 = vmatprep.subr.mxu0 0.0
    %8701 = vmatpush1.msra.mxu0 0.0
    %8702 = vmatprep.subr.mxu0 0.0
    %8703 = vmatpush1.msra.mxu0 0.0
    %8704 = vmatprep.subr.mxu0 0.0
    %8705 = vmatpush1.msra.mxu0 0.0
    %8706 = vmatprep.subr.mxu0 0.0
    %8707 = vmatpush1.msra.mxu0 0.0
    %8708 = vmatprep.subr.mxu0 0.0
    %8709 = vmatpush1.msra.mxu0 0.0
    %8710 = vmatprep.subr.mxu0 0.0
    %8711 = vmatpush1.msra.mxu0 0.0
    %8712 = vmatprep.subr.mxu0 0.0
    %8713 = vmatpush1.msra.mxu0 0.0
    %8714 = vmatprep.subr.mxu0 0.0
    %8715 = vmatpush1.msra.mxu0 0.0
    %8716 = vmatprep.subr.mxu0 0.0
    %8717 = vmatpush1.msra.mxu0 0.0
    %8718 = vmatprep.mubr.f32.mxu0 0.0
    %v8719 = vand.u32 %v8131, 4294901760
    %8720 = vmatmul.mubr.f32.gmra.mrb[0].mxu0 %v8719
    %v8721 = vpop.f32.mrb[0].mxu0
    %v8722 = vadd.f32 %v8595, %v8721
    %v8723 = vpop.f32.mrb[0].mxu0
    %8724 = vmatprep.mubr.f32.mxu0 0.0
    %v8725 = vand.u32 %v8137, 4294901760
    %8726 = vmatmul.mubr.f32.gmra.mrb[0].mxu0 %v8725
    %v8727 = vpop.f32.mrb[0].mxu0
    %v8728 = vadd.f32 %v8603, %v8727
    %v8729 = vpop.f32.mrb[0].mxu0
    %8730 = vdwg.mxu0
    %8731 = vmatprep.subr.mxu0 0.0
    %v8732 = vand.u32 %v5834, 4294901760
    %8733 = vmatpush1.msra.mxu0 %v8732
    %8734 = vmatprep.subr.mxu0 0.0
    %v8735 = vand.u32 %v5835, 4294901760
    %8736 = vmatpush1.msra.mxu0 %v8735
    %8737 = vmatprep.subr.mxu0 0.0
    %v8738 = vand.u32 %v5836, 4294901760
    %8739 = vmatpush1.msra.mxu0 %v8738
    %8740 = vmatprep.subr.mxu0 0.0
    %v8741 = vand.u32 %v5837, 4294901760
    %8742 = vmatpush1.msra.mxu0 %v8741
    %8743 = vmatprep.subr.mxu0 0.0
    %v8744 = vand.u32 %v5838, 4294901760
    %8745 = vmatpush1.msra.mxu0 %v8744
    %8746 = vmatprep.subr.mxu0 0.0
    %v8747 = vand.u32 %v5839, 4294901760
    %8748 = vmatpush1.msra.mxu0 %v8747
    %8749 = vmatprep.subr.mxu0 0.0
    %v8750 = vand.u32 %v5840, 4294901760
    %8751 = vmatpush1.msra.mxu0 %v8750
    %8752 = vmatprep.subr.mxu0 0.0
    %v8753 = vand.u32 %v5841, 4294901760
    %8754 = vmatpush1.msra.mxu0 %v8753
    %8755 = vmatprep.subr.mxu0 0.0
    %v8756 = vand.u32 %v5842, 4294901760
    %8757 = vmatpush1.msra.mxu0 %v8756
    %8758 = vmatprep.subr.mxu0 0.0
    %v8759 = vand.u32 %v5843, 4294901760
    %8760 = vmatpush1.msra.mxu0 %v8759
    %8761 = vmatprep.subr.mxu0 0.0
    %v8762 = vand.u32 %v5844, 4294901760
    %8763 = vmatpush1.msra.mxu0 %v8762
    %8764 = vmatprep.subr.mxu0 0.0
    %v8765 = vand.u32 %v5845, 4294901760
    %8766 = vmatpush1.msra.mxu0 %v8765
    %8767 = vmatprep.subr.mxu0 0.0
    %v8768 = vand.u32 %v5846, 4294901760
    %8769 = vmatpush1.msra.mxu0 %v8768
    %8770 = vmatprep.subr.mxu0 0.0
    %v8771 = vand.u32 %v5847, 4294901760
    %8772 = vmatpush1.msra.mxu0 %v8771
    %8773 = vmatprep.subr.mxu0 0.0
    %v8774 = vand.u32 %v5848, 4294901760
    %8775 = vmatpush1.msra.mxu0 %v8774
    %8776 = vmatprep.subr.mxu0 0.0
    %v8777 = vand.u32 %v5849, 4294901760
    %8778 = vmatpush1.msra.mxu0 %v8777
    %8779 = vmatprep.subr.mxu0 0.0
    %8780 = vmatpush1.msra.mxu0 0.0
    %8781 = vmatprep.subr.mxu0 0.0
    %8782 = vmatpush1.msra.mxu0 0.0
    %8783 = vmatprep.subr.mxu0 0.0
    %8784 = vmatpush1.msra.mxu0 0.0
    %8785 = vmatprep.subr.mxu0 0.0
    %8786 = vmatpush1.msra.mxu0 0.0
    %8787 = vmatprep.subr.mxu0 0.0
    %8788 = vmatpush1.msra.mxu0 0.0
    %8789 = vmatprep.subr.mxu0 0.0
    %8790 = vmatpush1.msra.mxu0 0.0
    %8791 = vmatprep.subr.mxu0 0.0
    %8792 = vmatpush1.msra.mxu0 0.0
    %8793 = vmatprep.subr.mxu0 0.0
    %8794 = vmatpush1.msra.mxu0 0.0
    %8795 = vmatprep.subr.mxu0 0.0
    %8796 = vmatpush1.msra.mxu0 0.0
    %8797 = vmatprep.subr.mxu0 0.0
    %8798 = vmatpush1.msra.mxu0 0.0
    %8799 = vmatprep.subr.mxu0 0.0
    %8800 = vmatpush1.msra.mxu0 0.0
    %8801 = vmatprep.subr.mxu0 0.0
    %8802 = vmatpush1.msra.mxu0 0.0
    %8803 = vmatprep.subr.mxu0 0.0
    %8804 = vmatpush1.msra.mxu0 0.0
    %8805 = vmatprep.subr.mxu0 0.0
    %8806 = vmatpush1.msra.mxu0 0.0
    %8807 = vmatprep.subr.mxu0 0.0
    %8808 = vmatpush1.msra.mxu0 0.0
    %8809 = vmatprep.subr.mxu0 0.0
    %8810 = vmatpush1.msra.mxu0 0.0
    %8811 = vmatprep.mubr.f32.mxu0 0.0
    %v8812 = vand.u32 %v8131, 4294901760
    %8813 = vmatmul.mubr.f32.gmra.mrb[0].mxu0 %v8812
    %v8814 = vpop.f32.mrb[0].mxu0
    %v8815 = vadd.f32 %v8722, %v8814
    %v8816 = vpop.f32.mrb[0].mxu0
    %8817 = vmatprep.mubr.f32.mxu0 0.0
    %v8818 = vand.u32 %v8137, 4294901760
    %8819 = vmatmul.mubr.f32.gmra.mrb[0].mxu0 %v8818
    %v8820 = vpop.f32.mrb[0].mxu0
    %v8821 = vadd.f32 %v8728, %v8820
    %v8822 = vpop.f32.mrb[0].mxu0
    %8823 = vdwg.mxu0
    %v8824 = vxor.u32 %v8815, 2147483648
    %v8825 = vxor.u32 %v8821, 2147483648
    %v8826 = vmul.f32 %v8824, 1.442695
    %v8827 = vpow.pop %v8826
    %v8828 = vmul.f32 %v8825, 1.442695
    %v8829 = vpow.pop %v8828
    %v8830 = vadd.f32 %v8827, 1.0
    %v8831 = vadd.f32 %v8829, 1.0
    %v8832 = vrcp.pop %v8830
    %v8833 = vmul.f32 1.0, %v8832
    %v8834 = vrcp.pop %v8831
    %v8835 = vmul.f32 1.0, %v8834
    %v8836 = vmul.f32 %v8833, %v8131
    %v8837 = vmul.f32 %v8835, %v8137
    %v8838 = vld [vmem:[#allocation19] sm:$0xff]
    %v8839 = vld [vmem:[#allocation19 + $0x8] sm:$0xff]
    %v8840 = vld [vmem:[#allocation19 + $0x10] sm:$0xff]
    %v8841 = vld [vmem:[#allocation19 + $0x18] sm:$0xff]
    %v8842 = vld [vmem:[#allocation19 + $0x20] sm:$0xff]
    %v8843 = vld [vmem:[#allocation19 + $0x28] sm:$0xff]
    %v8844 = vld [vmem:[#allocation19 + $0x30] sm:$0xff]
    %v8845 = vld [vmem:[#allocation19 + $0x38] sm:$0xff]
    %v8846 = vld [vmem:[#allocation19 + $0x40] sm:$0xff]
    %v8847 = vld [vmem:[#allocation19 + $0x48] sm:$0xff]
    %v8848 = vld [vmem:[#allocation19 + $0x50] sm:$0xff]
    %v8849 = vld [vmem:[#allocation19 + $0x58] sm:$0xff]
    %v8850 = vld [vmem:[#allocation19 + $0x60] sm:$0xff]
    %v8851 = vld [vmem:[#allocation19 + $0x68] sm:$0xff]
    %v8852 = vld [vmem:[#allocation19 + $0x70] sm:$0xff]
    %v8853 = vld [vmem:[#allocation19 + $0x78] sm:$0xff]
    %v8854 = vld [vmem:[%s14] sm:$0x1]
    %v8856 = vlaneseq
    %v8857 = vshrl.u32 %v8856, 7
    %v8858 = vsub.s32 0, %v8857
    %v8859 = vrot.slane %v8854, %v8858
    %8861 = vmatprep.subr.mxu0 0.0
    %v8862 = vand.u32 %v8838, 4294901760
    %8863 = vmatpush1.msra.mxu0 %v8862
    %8864 = vmatprep.subr.mxu0 0.0
    %v8865 = vand.u32 %v8839, 4294901760
    %8866 = vmatpush1.msra.mxu0 %v8865
    %8867 = vmatprep.subr.mxu0 0.0
    %v8868 = vand.u32 %v8840, 4294901760
    %8869 = vmatpush1.msra.mxu0 %v8868
    %8870 = vmatprep.subr.mxu0 0.0
    %v8871 = vand.u32 %v8841, 4294901760
    %8872 = vmatpush1.msra.mxu0 %v8871
    %8873 = vmatprep.subr.mxu0 0.0
    %v8874 = vand.u32 %v8842, 4294901760
    %8875 = vmatpush1.msra.mxu0 %v8874
    %8876 = vmatprep.subr.mxu0 0.0
    %v8877 = vand.u32 %v8843, 4294901760
    %8878 = vmatpush1.msra.mxu0 %v8877
    %8879 = vmatprep.subr.mxu0 0.0
    %v8880 = vand.u32 %v8844, 4294901760
    %8881 = vmatpush1.msra.mxu0 %v8880
    %8882 = vmatprep.subr.mxu0 0.0
    %v8883 = vand.u32 %v8845, 4294901760
    %8884 = vmatpush1.msra.mxu0 %v8883
    %8885 = vmatprep.subr.mxu0 0.0
    %v8886 = vand.u32 %v8846, 4294901760
    %8887 = vmatpush1.msra.mxu0 %v8886
    %8888 = vmatprep.subr.mxu0 0.0
    %v8889 = vand.u32 %v8847, 4294901760
    %8890 = vmatpush1.msra.mxu0 %v8889
    %8891 = vmatprep.subr.mxu0 0.0
    %v8892 = vand.u32 %v8848, 4294901760
    %8893 = vmatpush1.msra.mxu0 %v8892
    %8894 = vmatprep.subr.mxu0 0.0
    %v8895 = vand.u32 %v8849, 4294901760
    %8896 = vmatpush1.msra.mxu0 %v8895
    %8897 = vmatprep.subr.mxu0 0.0
    %v8898 = vand.u32 %v8850, 4294901760
    %8899 = vmatpush1.msra.mxu0 %v8898
    %8900 = vmatprep.subr.mxu0 0.0
    %v8901 = vand.u32 %v8851, 4294901760
    %8902 = vmatpush1.msra.mxu0 %v8901
    %8903 = vmatprep.subr.mxu0 0.0
    %v8904 = vand.u32 %v8852, 4294901760
    %8905 = vmatpush1.msra.mxu0 %v8904
    %8906 = vmatprep.subr.mxu0 0.0
    %v8907 = vand.u32 %v8853, 4294901760
    %8908 = vmatpush1.msra.mxu0 %v8907
    %8909 = vmatprep.subr.mxu0 0.0
    %8910 = vmatpush1.msra.mxu0 0.0
    %8911 = vmatprep.subr.mxu0 0.0
    %8912 = vmatpush1.msra.mxu0 0.0
    %8913 = vmatprep.subr.mxu0 0.0
    %8914 = vmatpush1.msra.mxu0 0.0
    %8915 = vmatprep.subr.mxu0 0.0
    %8916 = vmatpush1.msra.mxu0 0.0
    %8917 = vmatprep.subr.mxu0 0.0
    %8918 = vmatpush1.msra.mxu0 0.0
    %8919 = vmatprep.subr.mxu0 0.0
    %8920 = vmatpush1.msra.mxu0 0.0
    %8921 = vmatprep.subr.mxu0 0.0
    %8922 = vmatpush1.msra.mxu0 0.0
    %8923 = vmatprep.subr.mxu0 0.0
    %8924 = vmatpush1.msra.mxu0 0.0
    %8925 = vmatprep.subr.mxu0 0.0
    %8926 = vmatpush1.msra.mxu0 0.0
    %8927 = vmatprep.subr.mxu0 0.0
    %8928 = vmatpush1.msra.mxu0 0.0
    %8929 = vmatprep.subr.mxu0 0.0
    %8930 = vmatpush1.msra.mxu0 0.0
    %8931 = vmatprep.subr.mxu0 0.0
    %8932 = vmatpush1.msra.mxu0 0.0
    %8933 = vmatprep.subr.mxu0 0.0
    %8934 = vmatpush1.msra.mxu0 0.0
    %8935 = vmatprep.subr.mxu0 0.0
    %8936 = vmatpush1.msra.mxu0 0.0
    %8937 = vmatprep.subr.mxu0 0.0
    %8938 = vmatpush1.msra.mxu0 0.0
    %8939 = vmatprep.subr.mxu0 0.0
    %8940 = vmatpush1.msra.mxu0 0.0
    %8941 = vmatprep.mubr.f32.mxu0 0.0
    %v8942 = vand.u32 %v8836, 4294901760
    %v8943 = vsub.f32 %v8836, %v8942
    %v8944 = vand.u32 %v8943, 4294901760
    %v8945 = vsub.f32 %v8943, %v8944
    %v8946 = vand.u32 %v8945, 4294901760
    %8947 = vmatmul.mubr.f32.gmra.mrb[0].mxu0 %v8946
    %v8948 = vpop.f32.mrb[0].mxu0
    %v8949 = vadd.f32 %v8859, %v8948
    %v8950 = vpop.f32.mrb[0].mxu0
    %8951 = vmatprep.mubr.f32.mxu0 0.0
    %v8952 = vand.u32 %v8837, 4294901760
    %v8953 = vsub.f32 %v8837, %v8952
    %v8954 = vand.u32 %v8953, 4294901760
    %v8955 = vsub.f32 %v8953, %v8954
    %v8956 = vand.u32 %v8955, 4294901760
    %8957 = vmatmul.mubr.f32.gmra.mrb[0].mxu0 %v8956
    %v8958 = vpop.f32.mrb[0].mxu0
    %v8959 = vadd.f32 %v8859, %v8958
    %v8960 = vpop.f32.mrb[0].mxu0
    %8961 = vdwg.mxu0
    %8962 = vmatprep.subr.mxu0 0.0
    %v8963 = vand.u32 %v8838, 4294901760
    %v8964 = vsub.f32 %v8838, %v8963
    %v8965 = vand.u32 %v8964, 4294901760
    %v8966 = vsub.f32 %v8964, %v8965
    %v8967 = vand.u32 %v8966, 4294901760
    %8968 = vmatpush1.msra.mxu0 %v8967
    %8969 = vmatprep.subr.mxu0 0.0
    %v8970 = vand.u32 %v8839, 4294901760
    %v8971 = vsub.f32 %v8839, %v8970
    %v8972 = vand.u32 %v8971, 4294901760
    %v8973 = vsub.f32 %v8971, %v8972
    %v8974 = vand.u32 %v8973, 4294901760
    %8975 = vmatpush1.msra.mxu0 %v8974
    %8976 = vmatprep.subr.mxu0 0.0
    %v8977 = vand.u32 %v8840, 4294901760
    %v8978 = vsub.f32 %v8840, %v8977
    %v8979 = vand.u32 %v8978, 4294901760
    %v8980 = vsub.f32 %v8978, %v8979
    %v8981 = vand.u32 %v8980, 4294901760
    %8982 = vmatpush1.msra.mxu0 %v8981
    %8983 = vmatprep.subr.mxu0 0.0
    %v8984 = vand.u32 %v8841, 4294901760
    %v8985 = vsub.f32 %v8841, %v8984
    %v8986 = vand.u32 %v8985, 4294901760
    %v8987 = vsub.f32 %v8985, %v8986
    %v8988 = vand.u32 %v8987, 4294901760
    %8989 = vmatpush1.msra.mxu0 %v8988
    %8990 = vmatprep.subr.mxu0 0.0
    %v8991 = vand.u32 %v8842, 4294901760
    %v8992 = vsub.f32 %v8842, %v8991
    %v8993 = vand.u32 %v8992, 4294901760
    %v8994 = vsub.f32 %v8992, %v8993
    %v8995 = vand.u32 %v8994, 4294901760
    %8996 = vmatpush1.msra.mxu0 %v8995
    %8997 = vmatprep.subr.mxu0 0.0
    %v8998 = vand.u32 %v8843, 4294901760
    %v8999 = vsub.f32 %v8843, %v8998
    %v9000 = vand.u32 %v8999, 4294901760
    %v9001 = vsub.f32 %v8999, %v9000
    %v9002 = vand.u32 %v9001, 4294901760
    %9003 = vmatpush1.msra.mxu0 %v9002
    %9004 = vmatprep.subr.mxu0 0.0
    %v9005 = vand.u32 %v8844, 4294901760
    %v9006 = vsub.f32 %v8844, %v9005
    %v9007 = vand.u32 %v9006, 4294901760
    %v9008 = vsub.f32 %v9006, %v9007
    %v9009 = vand.u32 %v9008, 4294901760
    %9010 = vmatpush1.msra.mxu0 %v9009
    %9011 = vmatprep.subr.mxu0 0.0
    %v9012 = vand.u32 %v8845, 4294901760
    %v9013 = vsub.f32 %v8845, %v9012
    %v9014 = vand.u32 %v9013, 4294901760
    %v9015 = vsub.f32 %v9013, %v9014
    %v9016 = vand.u32 %v9015, 4294901760
    %9017 = vmatpush1.msra.mxu0 %v9016
    %9018 = vmatprep.subr.mxu0 0.0
    %v9019 = vand.u32 %v8846, 4294901760
    %v9020 = vsub.f32 %v8846, %v9019
    %v9021 = vand.u32 %v9020, 4294901760
    %v9022 = vsub.f32 %v9020, %v9021
    %v9023 = vand.u32 %v9022, 4294901760
    %9024 = vmatpush1.msra.mxu0 %v9023
    %9025 = vmatprep.subr.mxu0 0.0
    %v9026 = vand.u32 %v8847, 4294901760
    %v9027 = vsub.f32 %v8847, %v9026
    %v9028 = vand.u32 %v9027, 4294901760
    %v9029 = vsub.f32 %v9027, %v9028
    %v9030 = vand.u32 %v9029, 4294901760
    %9031 = vmatpush1.msra.mxu0 %v9030
    %9032 = vmatprep.subr.mxu0 0.0
    %v9033 = vand.u32 %v8848, 4294901760
    %v9034 = vsub.f32 %v8848, %v9033
    %v9035 = vand.u32 %v9034, 4294901760
    %v9036 = vsub.f32 %v9034, %v9035
    %v9037 = vand.u32 %v9036, 4294901760
    %9038 = vmatpush1.msra.mxu0 %v9037
    %9039 = vmatprep.subr.mxu0 0.0
    %v9040 = vand.u32 %v8849, 4294901760
    %v9041 = vsub.f32 %v8849, %v9040
    %v9042 = vand.u32 %v9041, 4294901760
    %v9043 = vsub.f32 %v9041, %v9042
    %v9044 = vand.u32 %v9043, 4294901760
    %9045 = vmatpush1.msra.mxu0 %v9044
    %9046 = vmatprep.subr.mxu0 0.0
    %v9047 = vand.u32 %v8850, 4294901760
    %v9048 = vsub.f32 %v8850, %v9047
    %v9049 = vand.u32 %v9048, 4294901760
    %v9050 = vsub.f32 %v9048, %v9049
    %v9051 = vand.u32 %v9050, 4294901760
    %9052 = vmatpush1.msra.mxu0 %v9051
    %9053 = vmatprep.subr.mxu0 0.0
    %v9054 = vand.u32 %v8851, 4294901760
    %v9055 = vsub.f32 %v8851, %v9054
    %v9056 = vand.u32 %v9055, 4294901760
    %v9057 = vsub.f32 %v9055, %v9056
    %v9058 = vand.u32 %v9057, 4294901760
    %9059 = vmatpush1.msra.mxu0 %v9058
    %9060 = vmatprep.subr.mxu0 0.0
    %v9061 = vand.u32 %v8852, 4294901760
    %v9062 = vsub.f32 %v8852, %v9061
    %v9063 = vand.u32 %v9062, 4294901760
    %v9064 = vsub.f32 %v9062, %v9063
    %v9065 = vand.u32 %v9064, 4294901760
    %9066 = vmatpush1.msra.mxu0 %v9065
    %9067 = vmatprep.subr.mxu0 0.0
    %v9068 = vand.u32 %v8853, 4294901760
    %v9069 = vsub.f32 %v8853, %v9068
    %v9070 = vand.u32 %v9069, 4294901760
    %v9071 = vsub.f32 %v9069, %v9070
    %v9072 = vand.u32 %v9071, 4294901760
    %9073 = vmatpush1.msra.mxu0 %v9072
    %9074 = vmatprep.subr.mxu0 0.0
    %9075 = vmatpush1.msra.mxu0 0.0
    %9076 = vmatprep.subr.mxu0 0.0
    %9077 = vmatpush1.msra.mxu0 0.0
    %9078 = vmatprep.subr.mxu0 0.0
    %9079 = vmatpush1.msra.mxu0 0.0
    %9080 = vmatprep.subr.mxu0 0.0
    %9081 = vmatpush1.msra.mxu0 0.0
    %9082 = vmatprep.subr.mxu0 0.0
    %9083 = vmatpush1.msra.mxu0 0.0
    %9084 = vmatprep.subr.mxu0 0.0
    %9085 = vmatpush1.msra.mxu0 0.0
    %9086 = vmatprep.subr.mxu0 0.0
    %9087 = vmatpush1.msra.mxu0 0.0
    %9088 = vmatprep.subr.mxu0 0.0
    %9089 = vmatpush1.msra.mxu0 0.0
    %9090 = vmatprep.subr.mxu0 0.0
    %9091 = vmatpush1.msra.mxu0 0.0
    %9092 = vmatprep.subr.mxu0 0.0
    %9093 = vmatpush1.msra.mxu0 0.0
    %9094 = vmatprep.subr.mxu0 0.0
    %9095 = vmatpush1.msra.mxu0 0.0
    %9096 = vmatprep.subr.mxu0 0.0
    %9097 = vmatpush1.msra.mxu0 0.0
    %9098 = vmatprep.subr.mxu0 0.0
    %9099 = vmatpush1.msra.mxu0 0.0
    %9100 = vmatprep.subr.mxu0 0.0
    %9101 = vmatpush1.msra.mxu0 0.0
    %9102 = vmatprep.subr.mxu0 0.0
    %9103 = vmatpush1.msra.mxu0 0.0
    %9104 = vmatprep.subr.mxu0 0.0
    %9105 = vmatpush1.msra.mxu0 0.0
    %9106 = vmatprep.mubr.f32.mxu0 0.0
    %v9107 = vand.u32 %v8836, 4294901760
    %9108 = vmatmul.mubr.f32.gmra.mrb[0].mxu0 %v9107
    %v9109 = vpop.f32.mrb[0].mxu0
    %v9110 = vadd.f32 %v8949, %v9109
    %v9111 = vpop.f32.mrb[0].mxu0
    %9112 = vmatprep.mubr.f32.mxu0 0.0
    %v9113 = vand.u32 %v8837, 4294901760
    %9114 = vmatmul.mubr.f32.gmra.mrb[0].mxu0 %v9113
    %v9115 = vpop.f32.mrb[0].mxu0
    %v9116 = vadd.f32 %v8959, %v9115
    %v9117 = vpop.f32.mrb[0].mxu0
    %9118 = vdwg.mxu0
    %9119 = vmatprep.subr.mxu0 0.0
    %v9120 = vand.u32 %v8838, 4294901760
    %v9121 = vsub.f32 %v8838, %v9120
    %9122 = vmatpush1.msra.mxu0 %v9121
    %9123 = vmatprep.subr.mxu0 0.0
    %v9124 = vand.u32 %v8839, 4294901760
    %v9125 = vsub.f32 %v8839, %v9124
    %9126 = vmatpush1.msra.mxu0 %v9125
    %9127 = vmatprep.subr.mxu0 0.0
    %v9128 = vand.u32 %v8840, 4294901760
    %v9129 = vsub.f32 %v8840, %v9128
    %9130 = vmatpush1.msra.mxu0 %v9129
    %9131 = vmatprep.subr.mxu0 0.0
    %v9132 = vand.u32 %v8841, 4294901760
    %v9133 = vsub.f32 %v8841, %v9132
    %9134 = vmatpush1.msra.mxu0 %v9133
    %9135 = vmatprep.subr.mxu0 0.0
    %v9136 = vand.u32 %v8842, 4294901760
    %v9137 = vsub.f32 %v8842, %v9136
    %9138 = vmatpush1.msra.mxu0 %v9137
    %9139 = vmatprep.subr.mxu0 0.0
    %v9140 = vand.u32 %v8843, 4294901760
    %v9141 = vsub.f32 %v8843, %v9140
    %9142 = vmatpush1.msra.mxu0 %v9141
    %9143 = vmatprep.subr.mxu0 0.0
    %v9144 = vand.u32 %v8844, 4294901760
    %v9145 = vsub.f32 %v8844, %v9144
    %9146 = vmatpush1.msra.mxu0 %v9145
    %9147 = vmatprep.subr.mxu0 0.0
    %v9148 = vand.u32 %v8845, 4294901760
    %v9149 = vsub.f32 %v8845, %v9148
    %9150 = vmatpush1.msra.mxu0 %v9149
    %9151 = vmatprep.subr.mxu0 0.0
    %v9152 = vand.u32 %v8846, 4294901760
    %v9153 = vsub.f32 %v8846, %v9152
    %9154 = vmatpush1.msra.mxu0 %v9153
    %9155 = vmatprep.subr.mxu0 0.0
    %v9156 = vand.u32 %v8847, 4294901760
    %v9157 = vsub.f32 %v8847, %v9156
    %9158 = vmatpush1.msra.mxu0 %v9157
    %9159 = vmatprep.subr.mxu0 0.0
    %v9160 = vand.u32 %v8848, 4294901760
    %v9161 = vsub.f32 %v8848, %v9160
    %9162 = vmatpush1.msra.mxu0 %v9161
    %9163 = vmatprep.subr.mxu0 0.0
    %v9164 = vand.u32 %v8849, 4294901760
    %v9165 = vsub.f32 %v8849, %v9164
    %9166 = vmatpush1.msra.mxu0 %v9165
    %9167 = vmatprep.subr.mxu0 0.0
    %v9168 = vand.u32 %v8850, 4294901760
    %v9169 = vsub.f32 %v8850, %v9168
    %9170 = vmatpush1.msra.mxu0 %v9169
    %9171 = vmatprep.subr.mxu0 0.0
    %v9172 = vand.u32 %v8851, 4294901760
    %v9173 = vsub.f32 %v8851, %v9172
    %9174 = vmatpush1.msra.mxu0 %v9173
    %9175 = vmatprep.subr.mxu0 0.0
    %v9176 = vand.u32 %v8852, 4294901760
    %v9177 = vsub.f32 %v8852, %v9176
    %9178 = vmatpush1.msra.mxu0 %v9177
    %9179 = vmatprep.subr.mxu0 0.0
    %v9180 = vand.u32 %v8853, 4294901760
    %v9181 = vsub.f32 %v8853, %v9180
    %9182 = vmatpush1.msra.mxu0 %v9181
    %9183 = vmatprep.subr.mxu0 0.0
    %9184 = vmatpush1.msra.mxu0 0.0
    %9185 = vmatprep.subr.mxu0 0.0
    %9186 = vmatpush1.msra.mxu0 0.0
    %9187 = vmatprep.subr.mxu0 0.0
    %9188 = vmatpush1.msra.mxu0 0.0
    %9189 = vmatprep.subr.mxu0 0.0
    %9190 = vmatpush1.msra.mxu0 0.0
    %9191 = vmatprep.subr.mxu0 0.0
    %9192 = vmatpush1.msra.mxu0 0.0
    %9193 = vmatprep.subr.mxu0 0.0
    %9194 = vmatpush1.msra.mxu0 0.0
    %9195 = vmatprep.subr.mxu0 0.0
    %9196 = vmatpush1.msra.mxu0 0.0
    %9197 = vmatprep.subr.mxu0 0.0
    %9198 = vmatpush1.msra.mxu0 0.0
    %9199 = vmatprep.subr.mxu0 0.0
    %9200 = vmatpush1.msra.mxu0 0.0
    %9201 = vmatprep.subr.mxu0 0.0
    %9202 = vmatpush1.msra.mxu0 0.0
    %9203 = vmatprep.subr.mxu0 0.0
    %9204 = vmatpush1.msra.mxu0 0.0
    %9205 = vmatprep.subr.mxu0 0.0
    %9206 = vmatpush1.msra.mxu0 0.0
    %9207 = vmatprep.subr.mxu0 0.0
    %9208 = vmatpush1.msra.mxu0 0.0
    %9209 = vmatprep.subr.mxu0 0.0
    %9210 = vmatpush1.msra.mxu0 0.0
    %9211 = vmatprep.subr.mxu0 0.0
    %9212 = vmatpush1.msra.mxu0 0.0
    %9213 = vmatprep.subr.mxu0 0.0
    %9214 = vmatpush1.msra.mxu0 0.0
    %9215 = vmatprep.mubr.f32.mxu0 0.0
    %v9216 = vand.u32 %v8836, 4294901760
    %v9217 = vsub.f32 %v8836, %v9216
    %9218 = vmatmul.mubr.f32.gmra.mrb[0].mxu0 %v9217
    %v9219 = vpop.f32.mrb[0].mxu0
    %v9220 = vadd.f32 %v9110, %v9219
    %v9221 = vpop.f32.mrb[0].mxu0
    %9222 = vmatprep.mubr.f32.mxu0 0.0
    %v9223 = vand.u32 %v8837, 4294901760
    %v9224 = vsub.f32 %v8837, %v9223
    %9225 = vmatmul.mubr.f32.gmra.mrb[0].mxu0 %v9224
    %v9226 = vpop.f32.mrb[0].mxu0
    %v9227 = vadd.f32 %v9116, %v9226
    %v9228 = vpop.f32.mrb[0].mxu0
    %9229 = vdwg.mxu0
    %9230 = vmatprep.subr.mxu0 0.0
    %v9231 = vand.u32 %v8838, 4294901760
    %9232 = vmatpush1.msra.mxu0 %v9231
    %9233 = vmatprep.subr.mxu0 0.0
    %v9234 = vand.u32 %v8839, 4294901760
    %9235 = vmatpush1.msra.mxu0 %v9234
    %9236 = vmatprep.subr.mxu0 0.0
    %v9237 = vand.u32 %v8840, 4294901760
    %9238 = vmatpush1.msra.mxu0 %v9237
    %9239 = vmatprep.subr.mxu0 0.0
    %v9240 = vand.u32 %v8841, 4294901760
    %9241 = vmatpush1.msra.mxu0 %v9240
    %9242 = vmatprep.subr.mxu0 0.0
    %v9243 = vand.u32 %v8842, 4294901760
    %9244 = vmatpush1.msra.mxu0 %v9243
    %9245 = vmatprep.subr.mxu0 0.0
    %v9246 = vand.u32 %v8843, 4294901760
    %9247 = vmatpush1.msra.mxu0 %v9246
    %9248 = vmatprep.subr.mxu0 0.0
    %v9249 = vand.u32 %v8844, 4294901760
    %9250 = vmatpush1.msra.mxu0 %v9249
    %9251 = vmatprep.subr.mxu0 0.0
    %v9252 = vand.u32 %v8845, 4294901760
    %9253 = vmatpush1.msra.mxu0 %v9252
    %9254 = vmatprep.subr.mxu0 0.0
    %v9255 = vand.u32 %v8846, 4294901760
    %9256 = vmatpush1.msra.mxu0 %v9255
    %9257 = vmatprep.subr.mxu0 0.0
    %v9258 = vand.u32 %v8847, 4294901760
    %9259 = vmatpush1.msra.mxu0 %v9258
    %9260 = vmatprep.subr.mxu0 0.0
    %v9261 = vand.u32 %v8848, 4294901760
    %9262 = vmatpush1.msra.mxu0 %v9261
    %9263 = vmatprep.subr.mxu0 0.0
    %v9264 = vand.u32 %v8849, 4294901760
    %9265 = vmatpush1.msra.mxu0 %v9264
    %9266 = vmatprep.subr.mxu0 0.0
    %v9267 = vand.u32 %v8850, 4294901760
    %9268 = vmatpush1.msra.mxu0 %v9267
    %9269 = vmatprep.subr.mxu0 0.0
    %v9270 = vand.u32 %v8851, 4294901760
    %9271 = vmatpush1.msra.mxu0 %v9270
    %9272 = vmatprep.subr.mxu0 0.0
    %v9273 = vand.u32 %v8852, 4294901760
    %9274 = vmatpush1.msra.mxu0 %v9273
    %9275 = vmatprep.subr.mxu0 0.0
    %v9276 = vand.u32 %v8853, 4294901760
    %9277 = vmatpush1.msra.mxu0 %v9276
    %9278 = vmatprep.subr.mxu0 0.0
    %9279 = vmatpush1.msra.mxu0 0.0
    %9280 = vmatprep.subr.mxu0 0.0
    %9281 = vmatpush1.msra.mxu0 0.0
    %9282 = vmatprep.subr.mxu0 0.0
    %9283 = vmatpush1.msra.mxu0 0.0
    %9284 = vmatprep.subr.mxu0 0.0
    %9285 = vmatpush1.msra.mxu0 0.0
    %9286 = vmatprep.subr.mxu0 0.0
    %9287 = vmatpush1.msra.mxu0 0.0
    %9288 = vmatprep.subr.mxu0 0.0
    %9289 = vmatpush1.msra.mxu0 0.0
    %9290 = vmatprep.subr.mxu0 0.0
    %9291 = vmatpush1.msra.mxu0 0.0
    %9292 = vmatprep.subr.mxu0 0.0
    %9293 = vmatpush1.msra.mxu0 0.0
    %9294 = vmatprep.subr.mxu0 0.0
    %9295 = vmatpush1.msra.mxu0 0.0
    %9296 = vmatprep.subr.mxu0 0.0
    %9297 = vmatpush1.msra.mxu0 0.0
    %9298 = vmatprep.subr.mxu0 0.0
    %9299 = vmatpush1.msra.mxu0 0.0
    %9300 = vmatprep.subr.mxu0 0.0
    %9301 = vmatpush1.msra.mxu0 0.0
    %9302 = vmatprep.subr.mxu0 0.0
    %9303 = vmatpush1.msra.mxu0 0.0
    %9304 = vmatprep.subr.mxu0 0.0
    %9305 = vmatpush1.msra.mxu0 0.0
    %9306 = vmatprep.subr.mxu0 0.0
    %9307 = vmatpush1.msra.mxu0 0.0
    %9308 = vmatprep.subr.mxu0 0.0
    %9309 = vmatpush1.msra.mxu0 0.0
    %9310 = vmatprep.mubr.f32.mxu0 0.0
    %v9311 = vand.u32 %v8836, 4294901760
    %v9312 = vsub.f32 %v8836, %v9311
    %v9313 = vand.u32 %v9312, 4294901760
    %9314 = vmatmul.mubr.f32.gmra.mrb[0].mxu0 %v9313
    %v9315 = vpop.f32.mrb[0].mxu0
    %v9316 = vadd.f32 %v9220, %v9315
    %v9317 = vpop.f32.mrb[0].mxu0
    %9318 = vmatprep.mubr.f32.mxu0 0.0
    %v9319 = vand.u32 %v8837, 4294901760
    %v9320 = vsub.f32 %v8837, %v9319
    %v9321 = vand.u32 %v9320, 4294901760
    %9322 = vmatmul.mubr.f32.gmra.mrb[0].mxu0 %v9321
    %v9323 = vpop.f32.mrb[0].mxu0
    %v9324 = vadd.f32 %v9227, %v9323
    %v9325 = vpop.f32.mrb[0].mxu0
    %9326 = vdwg.mxu0
    %9327 = vmatprep.subr.mxu0 0.0
    %v9328 = vand.u32 %v8838, 4294901760
    %v9329 = vsub.f32 %v8838, %v9328
    %v9330 = vand.u32 %v9329, 4294901760
    %9331 = vmatpush1.msra.mxu0 %v9330
    %9332 = vmatprep.subr.mxu0 0.0
    %v9333 = vand.u32 %v8839, 4294901760
    %v9334 = vsub.f32 %v8839, %v9333
    %v9335 = vand.u32 %v9334, 4294901760
    %9336 = vmatpush1.msra.mxu0 %v9335
    %9337 = vmatprep.subr.mxu0 0.0
    %v9338 = vand.u32 %v8840, 4294901760
    %v9339 = vsub.f32 %v8840, %v9338
    %v9340 = vand.u32 %v9339, 4294901760
    %9341 = vmatpush1.msra.mxu0 %v9340
    %9342 = vmatprep.subr.mxu0 0.0
    %v9343 = vand.u32 %v8841, 4294901760
    %v9344 = vsub.f32 %v8841, %v9343
    %v9345 = vand.u32 %v9344, 4294901760
    %9346 = vmatpush1.msra.mxu0 %v9345
    %9347 = vmatprep.subr.mxu0 0.0
    %v9348 = vand.u32 %v8842, 4294901760
    %v9349 = vsub.f32 %v8842, %v9348
    %v9350 = vand.u32 %v9349, 4294901760
    %9351 = vmatpush1.msra.mxu0 %v9350
    %9352 = vmatprep.subr.mxu0 0.0
    %v9353 = vand.u32 %v8843, 4294901760
    %v9354 = vsub.f32 %v8843, %v9353
    %v9355 = vand.u32 %v9354, 4294901760
    %9356 = vmatpush1.msra.mxu0 %v9355
    %9357 = vmatprep.subr.mxu0 0.0
    %v9358 = vand.u32 %v8844, 4294901760
    %v9359 = vsub.f32 %v8844, %v9358
    %v9360 = vand.u32 %v9359, 4294901760
    %9361 = vmatpush1.msra.mxu0 %v9360
    %9362 = vmatprep.subr.mxu0 0.0
    %v9363 = vand.u32 %v8845, 4294901760
    %v9364 = vsub.f32 %v8845, %v9363
    %v9365 = vand.u32 %v9364, 4294901760
    %9366 = vmatpush1.msra.mxu0 %v9365
    %9367 = vmatprep.subr.mxu0 0.0
    %v9368 = vand.u32 %v8846, 4294901760
    %v9369 = vsub.f32 %v8846, %v9368
    %v9370 = vand.u32 %v9369, 4294901760
    %9371 = vmatpush1.msra.mxu0 %v9370
    %9372 = vmatprep.subr.mxu0 0.0
    %v9373 = vand.u32 %v8847, 4294901760
    %v9374 = vsub.f32 %v8847, %v9373
    %v9375 = vand.u32 %v9374, 4294901760
    %9376 = vmatpush1.msra.mxu0 %v9375
    %9377 = vmatprep.subr.mxu0 0.0
    %v9378 = vand.u32 %v8848, 4294901760
    %v9379 = vsub.f32 %v8848, %v9378
    %v9380 = vand.u32 %v9379, 4294901760
    %9381 = vmatpush1.msra.mxu0 %v9380
    %9382 = vmatprep.subr.mxu0 0.0
    %v9383 = vand.u32 %v8849, 4294901760
    %v9384 = vsub.f32 %v8849, %v9383
    %v9385 = vand.u32 %v9384, 4294901760
    %9386 = vmatpush1.msra.mxu0 %v9385
    %9387 = vmatprep.subr.mxu0 0.0
    %v9388 = vand.u32 %v8850, 4294901760
    %v9389 = vsub.f32 %v8850, %v9388
    %v9390 = vand.u32 %v9389, 4294901760
    %9391 = vmatpush1.msra.mxu0 %v9390
    %9392 = vmatprep.subr.mxu0 0.0
    %v9393 = vand.u32 %v8851, 4294901760
    %v9394 = vsub.f32 %v8851, %v9393
    %v9395 = vand.u32 %v9394, 4294901760
    %9396 = vmatpush1.msra.mxu0 %v9395
    %9397 = vmatprep.subr.mxu0 0.0
    %v9398 = vand.u32 %v8852, 4294901760
    %v9399 = vsub.f32 %v8852, %v9398
    %v9400 = vand.u32 %v9399, 4294901760
    %9401 = vmatpush1.msra.mxu0 %v9400
    %9402 = vmatprep.subr.mxu0 0.0
    %v9403 = vand.u32 %v8853, 4294901760
    %v9404 = vsub.f32 %v8853, %v9403
    %v9405 = vand.u32 %v9404, 4294901760
    %9406 = vmatpush1.msra.mxu0 %v9405
    %9407 = vmatprep.subr.mxu0 0.0
    %9408 = vmatpush1.msra.mxu0 0.0
    %9409 = vmatprep.subr.mxu0 0.0
    %9410 = vmatpush1.msra.mxu0 0.0
    %9411 = vmatprep.subr.mxu0 0.0
    %9412 = vmatpush1.msra.mxu0 0.0
    %9413 = vmatprep.subr.mxu0 0.0
    %9414 = vmatpush1.msra.mxu0 0.0
    %9415 = vmatprep.subr.mxu0 0.0
    %9416 = vmatpush1.msra.mxu0 0.0
    %9417 = vmatprep.subr.mxu0 0.0
    %9418 = vmatpush1.msra.mxu0 0.0
    %9419 = vmatprep.subr.mxu0 0.0
    %9420 = vmatpush1.msra.mxu0 0.0
    %9421 = vmatprep.subr.mxu0 0.0
    %9422 = vmatpush1.msra.mxu0 0.0
    %9423 = vmatprep.subr.mxu0 0.0
    %9424 = vmatpush1.msra.mxu0 0.0
    %9425 = vmatprep.subr.mxu0 0.0
    %9426 = vmatpush1.msra.mxu0 0.0
    %9427 = vmatprep.subr.mxu0 0.0
    %9428 = vmatpush1.msra.mxu0 0.0
    %9429 = vmatprep.subr.mxu0 0.0
    %9430 = vmatpush1.msra.mxu0 0.0
    %9431 = vmatprep.subr.mxu0 0.0
    %9432 = vmatpush1.msra.mxu0 0.0
    %9433 = vmatprep.subr.mxu0 0.0
    %9434 = vmatpush1.msra.mxu0 0.0
    %9435 = vmatprep.subr.mxu0 0.0
    %9436 = vmatpush1.msra.mxu0 0.0
    %9437 = vmatprep.subr.mxu0 0.0
    %9438 = vmatpush1.msra.mxu0 0.0
    %9439 = vmatprep.mubr.f32.mxu0 0.0
    %v9440 = vand.u32 %v8836, 4294901760
    %9441 = vmatmul.mubr.f32.gmra.mrb[0].mxu0 %v9440
    %v9442 = vpop.f32.mrb[0].mxu0
    %v9443 = vadd.f32 %v9316, %v9442
    %v9444 = vpop.f32.mrb[0].mxu0
    %9445 = vmatprep.mubr.f32.mxu0 0.0
    %v9446 = vand.u32 %v8837, 4294901760
    %9447 = vmatmul.mubr.f32.gmra.mrb[0].mxu0 %v9446
    %v9448 = vpop.f32.mrb[0].mxu0
    %v9449 = vadd.f32 %v9324, %v9448
    %v9450 = vpop.f32.mrb[0].mxu0
    %9451 = vdwg.mxu0
    %9452 = vmatprep.subr.mxu0 0.0
    %v9453 = vand.u32 %v8838, 4294901760
    %9454 = vmatpush1.msra.mxu0 %v9453
    %9455 = vmatprep.subr.mxu0 0.0
    %v9456 = vand.u32 %v8839, 4294901760
    %9457 = vmatpush1.msra.mxu0 %v9456
    %9458 = vmatprep.subr.mxu0 0.0
    %v9459 = vand.u32 %v8840, 4294901760
    %9460 = vmatpush1.msra.mxu0 %v9459
    %9461 = vmatprep.subr.mxu0 0.0
    %v9462 = vand.u32 %v8841, 4294901760
    %9463 = vmatpush1.msra.mxu0 %v9462
    %9464 = vmatprep.subr.mxu0 0.0
    %v9465 = vand.u32 %v8842, 4294901760
    %9466 = vmatpush1.msra.mxu0 %v9465
    %9467 = vmatprep.subr.mxu0 0.0
    %v9468 = vand.u32 %v8843, 4294901760
    %9469 = vmatpush1.msra.mxu0 %v9468
    %9470 = vmatprep.subr.mxu0 0.0
    %v9471 = vand.u32 %v8844, 4294901760
    %9472 = vmatpush1.msra.mxu0 %v9471
    %9473 = vmatprep.subr.mxu0 0.0
    %v9474 = vand.u32 %v8845, 4294901760
    %9475 = vmatpush1.msra.mxu0 %v9474
    %9476 = vmatprep.subr.mxu0 0.0
    %v9477 = vand.u32 %v8846, 4294901760
    %9478 = vmatpush1.msra.mxu0 %v9477
    %9479 = vmatprep.subr.mxu0 0.0
    %v9480 = vand.u32 %v8847, 4294901760
    %9481 = vmatpush1.msra.mxu0 %v9480
    %9482 = vmatprep.subr.mxu0 0.0
    %v9483 = vand.u32 %v8848, 4294901760
    %9484 = vmatpush1.msra.mxu0 %v9483
    %9485 = vmatprep.subr.mxu0 0.0
    %v9486 = vand.u32 %v8849, 4294901760
    %9487 = vmatpush1.msra.mxu0 %v9486
    %9488 = vmatprep.subr.mxu0 0.0
    %v9489 = vand.u32 %v8850, 4294901760
    %9490 = vmatpush1.msra.mxu0 %v9489
    %9491 = vmatprep.subr.mxu0 0.0
    %v9492 = vand.u32 %v8851, 4294901760
    %9493 = vmatpush1.msra.mxu0 %v9492
    %9494 = vmatprep.subr.mxu0 0.0
    %v9495 = vand.u32 %v8852, 4294901760
    %9496 = vmatpush1.msra.mxu0 %v9495
    %9497 = vmatprep.subr.mxu0 0.0
    %v9498 = vand.u32 %v8853, 4294901760
    %9499 = vmatpush1.msra.mxu0 %v9498
    %9500 = vmatprep.subr.mxu0 0.0
    %9501 = vmatpush1.msra.mxu0 0.0
    %9502 = vmatprep.subr.mxu0 0.0
    %9503 = vmatpush1.msra.mxu0 0.0
    %9504 = vmatprep.subr.mxu0 0.0
    %9505 = vmatpush1.msra.mxu0 0.0
    %9506 = vmatprep.subr.mxu0 0.0
    %9507 = vmatpush1.msra.mxu0 0.0
    %9508 = vmatprep.subr.mxu0 0.0
    %9509 = vmatpush1.msra.mxu0 0.0
    %9510 = vmatprep.subr.mxu0 0.0
    %9511 = vmatpush1.msra.mxu0 0.0
    %9512 = vmatprep.subr.mxu0 0.0
    %9513 = vmatpush1.msra.mxu0 0.0
    %9514 = vmatprep.subr.mxu0 0.0
    %9515 = vmatpush1.msra.mxu0 0.0
    %9516 = vmatprep.subr.mxu0 0.0
    %9517 = vmatpush1.msra.mxu0 0.0
    %9518 = vmatprep.subr.mxu0 0.0
    %9519 = vmatpush1.msra.mxu0 0.0
    %9520 = vmatprep.subr.mxu0 0.0
    %9521 = vmatpush1.msra.mxu0 0.0
    %9522 = vmatprep.subr.mxu0 0.0
    %9523 = vmatpush1.msra.mxu0 0.0
    %9524 = vmatprep.subr.mxu0 0.0
    %9525 = vmatpush1.msra.mxu0 0.0
    %9526 = vmatprep.subr.mxu0 0.0
    %9527 = vmatpush1.msra.mxu0 0.0
    %9528 = vmatprep.subr.mxu0 0.0
    %9529 = vmatpush1.msra.mxu0 0.0
    %9530 = vmatprep.subr.mxu0 0.0
    %9531 = vmatpush1.msra.mxu0 0.0
    %9532 = vmatprep.mubr.f32.mxu0 0.0
    %v9533 = vand.u32 %v8836, 4294901760
    %9534 = vmatmul.mubr.f32.gmra.mrb[0].mxu0 %v9533
    %v9535 = vpop.f32.mrb[0].mxu0
    %v9536 = vadd.f32 %v9443, %v9535
    %v9537 = vpop.f32.mrb[0].mxu0
    %9538 = vmatprep.mubr.f32.mxu0 0.0
    %v9539 = vand.u32 %v8837, 4294901760
    %9540 = vmatmul.mubr.f32.gmra.mrb[0].mxu0 %v9539
    %v9541 = vpop.f32.mrb[0].mxu0
    %v9542 = vadd.f32 %v9449, %v9541
    %v9543 = vpop.f32.mrb[0].mxu0
    %9544 = vdwg.mxu0
    %9545 = vst [vmem:[#allocation20] sm:$0xff] %v9536
    %9546 = vst [vmem:[#allocation20 + $0x8] sm:$0xff] %v9542
    // Predicated region
    $region106: #{tpu_custom_call.1} parent=1 // pred_check
      _
    $region107: #{tpu_custom_call.1} parent=1 // pred_check_branch
      %9548 = sbr.rel (0) target = $region109
    $region108: #{tpu_custom_call.1} parent=1 // pred_region
      %s9550 = ssub.s32 256, 256
      %9551 = vsyncadd [#allocation4], %s9550
      %s9552 = sshll.u32 [#allocation20], 4
      %s9553 = int_to_ptr.vmem [resolvable:$true] %s9552
      %9558 = dma.vmem_to_hbm [thread:$0]  %s9553, 256, %s15, [#allocation4], 128, 128, 8
    $region109: #{tpu_custom_call.1} parent=1 // pred_fallthru
      _
    // Predicated region
    $region110: #{tpu_custom_call.1} parent=1 // pred_check
      _
    $region111: #{tpu_custom_call.1} parent=1 // pred_check_branch
      %9560 = sbr.rel (0) target = $region113
    $region112: #{tpu_custom_call.1} parent=1 // pred_region
      %9561 = dma.done [#allocation4], 256
    $region113: #{tpu_custom_call.1} parent=1 // pred_fallthru
      _
    %9562 = vsyncpa [#allocation3], 1
    %9563 = vsyncpa [#allocation6], 1
    %9564 = vsyncpa [#allocation9], 1
    %9565 = vsyncpa [#allocation12], 1
    %9566 = vsyncpa [#allocation15], 1
    %9567 = vsyncpa [#allocation18], 1
    %9568 = vsyncpa [#allocation4], 1

</llo_original>
